<compile_context>
chip_gen: v5e
topology: v5e:2x2
jax: 0.10.0
libtpu: 0.0.40
codegen_flags: <defaults>
</compile_context>

<pallas_src>
import functools
import math

import jax
import jax.numpy as jnp
import numpy as np
from jax.experimental import pallas as pl
from jax.experimental.pallas import tpu as pltpu

SIGMA_INIT = 0.017


# ----------------------------------------------------------------------------
# Fused kernel: conv1 + conv2 + conv3 + flatten + noisy dueling head.
# One grid step processes `bsz` samples; all intermediates stay in VMEM/vregs.
# ----------------------------------------------------------------------------
def _dqn_kernel(xe_ref, xo_ref, w1_ref, b1_ref, w2_ref, b2_ref,
                w3_ref, b3_ref, wh1_ref, bh1_ref, wh2_ref, bh2_ref, o_ref,
                *, bsz, h4, oh1, ow1e, ow1o, oh2, ow2, oh3, ow3, n_actions):
    f32, bf16 = jnp.float32, jnp.bfloat16
    dot = functools.partial(jnp.dot, preferred_element_type=f32)

    w1, b1 = w1_ref[...], b1_ref[...]
    w2, b2 = w2_ref[...], b2_ref[...]
    w3, b3 = w3_ref[...], b3_ref[...]

    flat_rows = []
    for b in range(bsz):
        # ---- conv1: 8x8 / stride 4 == 2x2 / stride 1 over the s2d(4) input.
        # One tap-merged (OW1, 4*C*16) matmul per output row; result rows
        # [0:ow1e] are the even output columns, [ow1e:] the odd ones -- exactly
        # the width-s2d(2) layout the stride-2 conv2 wants (no strided slices).
        re = [xe_ref[b, r] for r in range(h4)]          # (W4h, C*16) bf16
        ro = [xo_ref[b, r] for r in range(h4)]
        h1_rows = []
        for r in range(oh1):
            ae, ao, be, bo = re[r], ro[r], re[r + 1], ro[r + 1]
            pe = jnp.concatenate(
                [ae[0:ow1e], ao[0:ow1e], be[0:ow1e], bo[0:ow1e]], axis=1)
            po = jnp.concatenate(
                [ao[0:ow1o], ae[1:1 + ow1o], bo[0:ow1o], be[1:1 + ow1o]], axis=1)
            patch = jnp.concatenate([pe, po], axis=0)   # (OW1, 4*C*16) bf16
            h1_rows.append(
                jnp.maximum(dot(patch, w1) + b1, 0.0).astype(bf16))  # (OW1, 32)

        # ---- conv2: 4x4 / stride 2, all 16 taps merged along K (= 512).
        starts2 = (0, ow1e, 1, ow1e + 1)                # h1 row offsets for kw=0..3
        h2_rows = []
        for p in range(oh2):
            taps = []
            for kh in range(4):
                row = h1_rows[2 * p + kh]
                for kw in range(4):
                    s = starts2[kw]
                    taps.append(row[s:s + ow2])
            patch = jnp.concatenate(taps, axis=1)       # (OW2, 512) bf16
            h2_rows.append(
                jnp.maximum(dot(patch, w2) + b2, 0.0).astype(bf16))  # (OW2, 64)

        # ---- conv3: 3x3 / stride 1, all 9 taps merged along K (= 576).
        h3_rows = []
        for p in range(oh3):
            taps = []
            for kh in range(3):
                row = h2_rows[p + kh]
                for kw in range(3):
                    taps.append(row[kw:kw + ow3])
            patch = jnp.concatenate(taps, axis=1)       # (OW3, 576) bf16
            h3_rows.append(
                jnp.maximum(dot(patch, w3) + b3, 0.0).astype(bf16))  # (OW3, 64)

        # ---- flatten (h, w, c) into one (1, flat) feature row.
        pieces = [h3_rows[p][x:x + 1, :] for p in range(oh3) for x in range(ow3)]
        flat_rows.append(pieces[0] if len(pieces) == 1
                         else jnp.concatenate(pieces, axis=1))

    feats = flat_rows[0] if bsz == 1 else jnp.concatenate(flat_rows, axis=0)

    # ---- noisy dueling head: two batched matmuls for the whole block.
    hidden = jnp.maximum(dot(feats, wh1_ref[...]) + bh1_ref[...], 0.0)  # (B, 512)
    q_av = dot(hidden.astype(bf16), wh2_ref[...]) + bh2_ref[...]        # (B, A+1)
    adv = q_av[:, :n_actions]
    val = q_av[:, n_actions:n_actions + 1]
    o_ref[...] = val + adv - jnp.mean(adv, axis=1, keepdims=True)


# ----------------------------------------------------------------------------
# Host-side weight repacking into the kernel's tap-merged layouts.
# ----------------------------------------------------------------------------
def prepare_conv_params(p):
    f32, bf16 = jnp.float32, jnp.bfloat16

    # conv1 (32, C, 8, 8) -> (4*C*16, 32); the /256 input scale is folded in.
    w1 = p["c1_w"].astype(f32)
    oc1, c1 = w1.shape[0], w1.shape[1]
    w1 = w1.transpose(2, 3, 1, 0).reshape(2, 4, 2, 4, c1, oc1)   # (i,dy,j,dx,c,oc)
    w1 = w1.transpose(0, 2, 4, 1, 3, 5).reshape(4 * c1 * 16, oc1) / 256.0
    b1 = p["c1_b"].reshape(1, oc1).astype(f32)

    # conv2 (64, 32, 4, 4) -> (16*32, 64), K order (kh, kw, c).
    w2 = p["c2_w"].astype(f32)
    oc2, c2 = w2.shape[0], w2.shape[1]
    w2 = w2.transpose(2, 3, 1, 0).reshape(16 * c2, oc2)
    b2 = p["c2_b"].reshape(1, oc2).astype(f32)

    # conv3 (64, 64, 3, 3) -> (9*64, 64), K order (kh, kw, c).
    w3 = p["c3_w"].astype(f32)
    oc3, c3 = w3.shape[0], w3.shape[1]
    w3 = w3.transpose(2, 3, 1, 0).reshape(9 * c3, oc3)
    b3 = p["c3_b"].reshape(1, oc3).astype(f32)

    return dict(w1=w1.astype(bf16), b1=b1, w2=w2.astype(bf16), b2=b2,
                w3=w3.astype(bf16), b3=b3)


# ----------------------------------------------------------------------------
# Parameter init (torch-style distributions) and noisy-layer sampling.
# ----------------------------------------------------------------------------
def _uniform(key, shape, bound):
    return jax.random.uniform(key, shape, jnp.float32, -bound, bound)


def init_params(key, f_shape, n_actions, flat_dim):
    c_in = f_shape[0]
    ks = jax.random.split(key, 14)
    p = {}
    p["c1_w"] = _uniform(ks[0], (32, c_in, 8, 8), 1.0 / math.sqrt(c_in * 64))
    p["c1_b"] = _uniform(ks[1], (32,), 1.0 / math.sqrt(c_in * 64))
    p["c2_w"] = _uniform(ks[2], (64, 32, 4, 4), 1.0 / math.sqrt(32 * 16))
    p["c2_b"] = _uniform(ks[3], (64,), 1.0 / math.sqrt(32 * 16))
    p["c3_w"] = _uniform(ks[4], (64, 64, 3, 3), 1.0 / math.sqrt(64 * 9))
    p["c3_b"] = _uniform(ks[5], (64,), 1.0 / math.sqrt(64 * 9))

    def noisy(kw, kb, in_f, out_f):
        std = math.sqrt(3.0 / in_f)
        return dict(w=_uniform(kw, (in_f, out_f), std),      # (in, out): no runtime .T
                    b=_uniform(kb, (out_f,), std),
                    sw=jnp.full((in_f, out_f), SIGMA_INIT, jnp.float32),
                    sb=jnp.full((out_f,), SIGMA_INIT, jnp.float32))

    p["adv1"] = noisy(ks[6], ks[7], flat_dim, 256)
    p["adv2"] = noisy(ks[8], ks[9], 256, n_actions)
    p["val1"] = noisy(ks[10], ks[11], flat_dim, 256)
    p["val2"] = noisy(ks[12], ks[13], 256, 1)
    return p


def noisy_effective(key, layer):
    """w + sigma_w*eps_w, b + sigma_b*eps_b with fresh N(0,1) per forward
    (independent-noise NoisyLinear, exactly like the PyTorch module)."""
    kw, kb = jax.random.split(key)
    w = layer["w"] + layer["sw"] * jax.random.normal(kw, layer["w"].shape, jnp.float32)
    b = layer["b"] + layer["sb"] * jax.random.normal(kb, layer["b"].shape, jnp.float32)
    return w, b


# ----------------------------------------------------------------------------
# Forward pass.
# ----------------------------------------------------------------------------
@functools.partial(jax.jit, static_argnames=("n_actions", "block_b"))
def duel_noisy_dqn_forward(conv_kp, params, x, noise_key, *, n_actions, block_b=8):
    """x: (N, C, H, W) uint8.  Returns Q-values (N, n_actions) f32."""
    f32, bf16 = jnp.float32, jnp.bfloat16
    N, C, H, W = x.shape
    assert H % 4 == 0 and W % 4 == 0, "input spatial size must be a multiple of 4"
    H4, W4 = H // 4, W // 4
    OH1, OW1 = H4 - 1, W4 - 1
    # TODO(synk): odd conv1 output sizes (PyTorch floors the stride-2 conv) would
    # need a trailing crop here; Pong (84x84 -> 20x20) and the demo are even.
    assert OH1 % 2 == 0 and OW1 % 2 == 0 and OH1 >= 8 and OW1 >= 8
    OH2, OW2 = OH1 // 2 - 1, OW1 // 2 - 1
    OH3, OW3 = OH2 - 2, OW2 - 2
    CS = C * 16
    flat_dim = OH3 * OW3 * 64
    assert params["adv1"]["w"].shape[0] == flat_dim

    # Space-to-depth(4) + even/odd column split of the input: a same-size
    # permutation (no im2col expansion) done once in XLA; 0..255 is exact in
    # bf16 and the /256 scale is folded into w1.
    xs = x.astype(bf16).reshape(N, C, H4, 4, W4, 4)
    xs = xs.transpose(0, 2, 4, 1, 3, 5).reshape(N, H4, W4, CS)
    xs = jnp.pad(xs, ((0, 0), (0, 0), (0, 1), (0, 0)))    # W4 is odd -> make even
    xs_e = xs[:, :, 0::2, :]
    xs_o = xs[:, :, 1::2, :]

    # Batch blocking: keep >= 2 grid steps when the batch allows, so a v7x
    # megacore can split the "parallel" grid across both TensorCores.
    bb = max(1, min(int(block_b), N))
    if N >= 2 and bb > N // 2:
        bb = max(1, N // 2)
    n_blk = (N + bb - 1) // bb
    Np = n_blk * bb
    if Np != N:
        pad = ((0, Np - N), (0, 0), (0, 0), (0, 0))
        xs_e = jnp.pad(xs_e, pad)
        xs_o = jnp.pad(xs_o, pad)

    # Fresh per-forward noisy head weights, packed for the fused kernel:
    # layer 1 = concatenated [adv | val] (flat, 512), layer 2 = block-diagonal
    # (512, A+1) with columns [adv..., val].
    k1, k2, k3, k4 = jax.random.split(noise_key, 4)
    wa1, ba1 = noisy_effective(k1, params["adv1"])
    wa2, ba2 = noisy_effective(k2, params["adv2"])
    wv1, bv1 = noisy_effective(k3, params["val1"])
    wv2, bv2 = noisy_effective(k4, params["val2"])
    wh1 = jnp.concatenate([wa1, wv1], axis=1).astype(bf16)            # (flat, 512)
    bh1 = jnp.concatenate([ba1, bv1]).reshape(1, 512).astype(f32)
    wh2 = jnp.concatenate(
        [jnp.concatenate([wa2, jnp.zeros((256, 1), f32)], axis=1),
         jnp.concatenate([jnp.zeros((256, n_actions), f32), wv2], axis=1)],
        axis=0).astype(bf16)                                          # (512, A+1)
    bh2 = jnp.concatenate([ba2, bv2]).reshape(1, n_actions + 1).astype(f32)

    kern = functools.partial(
        _dqn_kernel, bsz=bb, h4=H4, oh1=OH1, ow1e=OW1 // 2, ow1o=OW1 // 2,
        oh2=OH2, ow2=OW2, oh3=OH3, ow3=OW3, n_actions=n_actions)

    def const(a):
        nd = a.ndim
        return pl.BlockSpec(a.shape, lambda i: (0,) * nd)

    w1, b1 = conv_kp["w1"], conv_kp["b1"]
    w2, b2 = conv_kp["w2"], conv_kp["b2"]
    w3, b3 = conv_kp["w3"], conv_kp["b3"]

    out = pl.pallas_call(
        kern,
        out_shape=jax.ShapeDtypeStruct((n_blk, bb, n_actions), jnp.float32),
        grid=(n_blk,),
        in_specs=[
            pl.BlockSpec((bb,) + xs_e.shape[1:], lambda i: (i, 0, 0, 0)),
            pl.BlockSpec((bb,) + xs_o.shape[1:], lambda i: (i, 0, 0, 0)),
            const(w1), const(b1), const(w2), const(b2), const(w3), const(b3),
            const(wh1), const(bh1), const(wh2), const(bh2),
        ],
        out_specs=pl.BlockSpec((None, bb, n_actions), lambda i: (i, 0, 0)),
        compiler_params=pltpu.CompilerParams(
            dimension_semantics=("parallel",)),
    )(xs_e, xs_o, w1, b1, w2, b2, w3, b3, wh1, bh1, wh2, bh2)
    return out.reshape(Np, n_actions)[:N]


# ----------------------------------------------------------------------------
# Pure-JAX f32 reference (mirrors the PyTorch DuelNoisyDQN forward).
# ----------------------------------------------------------------------------
def reference_forward(params, x, noise_key):
    dn = ("NCHW", "OIHW", "NCHW")
    h = x.astype(jnp.float32) / 256.0
    h = jax.lax.conv_general_dilated(h, params["c1_w"], (4, 4), "VALID",
                                     dimension_numbers=dn)
    h = jax.nn.relu(h + params["c1_b"][None, :, None, None])
    h = jax.lax.conv_general_dilated(h, params["c2_w"], (2, 2), "VALID",
                                     dimension_numbers=dn)
    h = jax.nn.relu(h + params["c2_b"][None, :, None, None])
    h = jax.lax.conv_general_dilated(h, params["c3_w"], (1, 1), "VALID",
                                     dimension_numbers=dn)
    h = jax.nn.relu(h + params["c3_b"][None, :, None, None])
    # flatten in (h, w, c) order -- the layout the freshly-initialised head
    # weights use (importing torch weights would permute wh1 rows instead).
    h = jnp.transpose(h, (0, 2, 3, 1)).reshape(x.shape[0], -1)
    k1, k2, k3, k4 = jax.random.split(noise_key, 4)
    wa1, ba1 = noisy_effective(k1, params["adv1"])
    wa2, ba2 = noisy_effective(k2, params["adv2"])
    wv1, bv1 = noisy_effective(k3, params["val1"])
    wv2, bv2 = noisy_effective(k4, params["val2"])
    adv = jax.nn.relu(h @ wa1 + ba1) @ wa2 + ba2
    val = jax.nn.relu(h @ wv1 + bv1) @ wv2 + bv2
    return val + adv - jnp.mean(adv, axis=1, keepdims=True)


# ----------------------------------------------------------------------------
if __name__ == "__main__":
    # Smallest sizes that exercise every path (multi-row conv3, flatten with
    # several pieces, batch blocking with a 2-step grid).
    batch, channels, spatial, n_actions = 4, 4, 44, 6
    f_shape = (channels, spatial, spatial)

    oh1 = (spatial - 8) // 4 + 1        # 10
    oh2 = (oh1 - 4) // 2 + 1            # 4
    oh3 = oh2 - 2                       # 2
    flat_dim = 64 * oh3 * oh3           # 256

    key = jax.random.PRNGKey(0)
    k_params, k_input, k_noise = jax.random.split(key, 3)

    params = init_params(k_params, f_shape, n_actions, flat_dim)
    conv_kp = prepare_conv_params(params)
    x = jax.random.randint(k_input, (batch,) + f_shape, 0, 256,
                           jnp.int32).astype(jnp.uint8)

    out = duel_noisy_dqn_forward(conv_kp, params, x, k_noise,
                                 n_actions=n_actions, block_b=8)
    out = jax.block_until_ready(out)
    assert out.shape == (batch, n_actions), out.shape
    assert out.dtype == jnp.float32, out.dtype
    assert bool(jnp.all(jnp.isfinite(out)))

    ref = jax.block_until_ready(reference_forward(params, x, k_noise))
    np.testing.assert_allclose(np.asarray(out), np.asarray(ref),
                               rtol=3e-2, atol=3e-2)
    print("KERNEL_OK")
</pallas_src>

<mosaic_0001>
module attributes {stable_mosaic.version = 11 : i64} {
  func.func @_dqn_kernel(%arg0: i32, %arg1: memref<2x11x6x64xbf16, #tpu.memory_space<vmem>>, %arg2: memref<2x11x6x64xbf16, #tpu.memory_space<vmem>>, %arg3: memref<256x32xbf16, #tpu.memory_space<vmem>>, %arg4: memref<1x32xf32, #tpu.memory_space<vmem>>, %arg5: memref<512x64xbf16, #tpu.memory_space<vmem>>, %arg6: memref<1x64xf32, #tpu.memory_space<vmem>>, %arg7: memref<576x64xbf16, #tpu.memory_space<vmem>>, %arg8: memref<1x64xf32, #tpu.memory_space<vmem>>, %arg9: memref<256x512xbf16, #tpu.memory_space<vmem>>, %arg10: memref<1x512xf32, #tpu.memory_space<vmem>>, %arg11: memref<512x7xbf16, #tpu.memory_space<vmem>>, %arg12: memref<1x7xf32, #tpu.memory_space<vmem>>, %arg13: memref<1x2x6xf32, #tpu.memory_space<vmem>>) attributes {dimension_semantics = [#tpu.dimension_semantics<parallel>], iteration_bounds = array<i64: 2>, scalar_prefetch = 0 : i64, scratch_operands = 0 : i64, tpu.core_type = #tpu.core_type<tc>, window_params = [{transform_indices = @transform_0, window_bounds = array<i64: 2, 11, 6, 64>}, {transform_indices = @transform_1, window_bounds = array<i64: 2, 11, 6, 64>}, {pipeline_mode = #tpu.pipeline_mode<synchronous>, transform_indices = @transform_2, window_bounds = array<i64: 256, 32>}, {pipeline_mode = #tpu.pipeline_mode<synchronous>, transform_indices = @transform_3, window_bounds = array<i64: 1, 32>}, {pipeline_mode = #tpu.pipeline_mode<synchronous>, transform_indices = @transform_4, window_bounds = array<i64: 512, 64>}, {pipeline_mode = #tpu.pipeline_mode<synchronous>, transform_indices = @transform_5, window_bounds = array<i64: 1, 64>}, {pipeline_mode = #tpu.pipeline_mode<synchronous>, transform_indices = @transform_6, window_bounds = array<i64: 576, 64>}, {pipeline_mode = #tpu.pipeline_mode<synchronous>, transform_indices = @transform_7, window_bounds = array<i64: 1, 64>}, {pipeline_mode = #tpu.pipeline_mode<synchronous>, transform_indices = @transform_8, window_bounds = array<i64: 256, 512>}, {pipeline_mode = #tpu.pipeline_mode<synchronous>, transform_indices = @transform_9, window_bounds = array<i64: 1, 512>}, {pipeline_mode = #tpu.pipeline_mode<synchronous>, transform_indices = @transform_10, window_bounds = array<i64: 512, 7>}, {pipeline_mode = #tpu.pipeline_mode<synchronous>, transform_indices = @transform_11, window_bounds = array<i64: 1, 7>}, {transform_indices = @transform_12, window_bounds = array<i64: 1, 2, 6>}]} {
    %c0 = arith.constant 0 : index
    %c0_0 = arith.constant 0 : index
    %0 = vector.load %arg3[%c0, %c0_0] : memref<256x32xbf16, #tpu.memory_space<vmem>>, vector<256x32xbf16>
    %c0_1 = arith.constant 0 : index
    %c0_2 = arith.constant 0 : index
    %1 = vector.load %arg4[%c0_1, %c0_2] : memref<1x32xf32, #tpu.memory_space<vmem>>, vector<1x32xf32>
    %c0_3 = arith.constant 0 : index
    %c0_4 = arith.constant 0 : index
    %2 = vector.load %arg5[%c0_3, %c0_4] : memref<512x64xbf16, #tpu.memory_space<vmem>>, vector<512x64xbf16>
    %c0_5 = arith.constant 0 : index
    %c0_6 = arith.constant 0 : index
    %3 = vector.load %arg6[%c0_5, %c0_6] : memref<1x64xf32, #tpu.memory_space<vmem>>, vector<1x64xf32>
    %c0_7 = arith.constant 0 : index
    %c0_8 = arith.constant 0 : index
    %4 = vector.load %arg7[%c0_7, %c0_8] : memref<576x64xbf16, #tpu.memory_space<vmem>>, vector<576x64xbf16>
    %c0_9 = arith.constant 0 : index
    %c0_10 = arith.constant 0 : index
    %5 = vector.load %arg8[%c0_9, %c0_10] : memref<1x64xf32, #tpu.memory_space<vmem>>, vector<1x64xf32>
    %c0_11 = arith.constant 0 : index
    %c0_12 = arith.constant 0 : index
    %c0_13 = arith.constant 0 : index
    %c0_14 = arith.constant 0 : index
    %6 = vector.load %arg1[%c0_11, %c0_12, %c0_13, %c0_14] : memref<2x11x6x64xbf16, #tpu.memory_space<vmem>>, vector<1x1x6x64xbf16>
    %7 = vector.shape_cast %6 : vector<1x1x6x64xbf16> to vector<6x64xbf16>
    %c0_15 = arith.constant 0 : index
    %c1 = arith.constant 1 : index
    %c0_16 = arith.constant 0 : index
    %c0_17 = arith.constant 0 : index
    %8 = vector.load %arg1[%c0_15, %c1, %c0_16, %c0_17] : memref<2x11x6x64xbf16, #tpu.memory_space<vmem>>, vector<1x1x6x64xbf16>
    %9 = vector.shape_cast %8 : vector<1x1x6x64xbf16> to vector<6x64xbf16>
    %c0_18 = arith.constant 0 : index
    %c2 = arith.constant 2 : index
    %c0_19 = arith.constant 0 : index
    %c0_20 = arith.constant 0 : index
    %10 = vector.load %arg1[%c0_18, %c2, %c0_19, %c0_20] : memref<2x11x6x64xbf16, #tpu.memory_space<vmem>>, vector<1x1x6x64xbf16>
    %11 = vector.shape_cast %10 : vector<1x1x6x64xbf16> to vector<6x64xbf16>
    %c0_21 = arith.constant 0 : index
    %c3 = arith.constant 3 : index
    %c0_22 = arith.constant 0 : index
    %c0_23 = arith.constant 0 : index
    %12 = vector.load %arg1[%c0_21, %c3, %c0_22, %c0_23] : memref<2x11x6x64xbf16, #tpu.memory_space<vmem>>, vector<1x1x6x64xbf16>
    %13 = vector.shape_cast %12 : vector<1x1x6x64xbf16> to vector<6x64xbf16>
    %c0_24 = arith.constant 0 : index
    %c4 = arith.constant 4 : index
    %c0_25 = arith.constant 0 : index
    %c0_26 = arith.constant 0 : index
    %14 = vector.load %arg1[%c0_24, %c4, %c0_25, %c0_26] : memref<2x11x6x64xbf16, #tpu.memory_space<vmem>>, vector<1x1x6x64xbf16>
    %15 = vector.shape_cast %14 : vector<1x1x6x64xbf16> to vector<6x64xbf16>
    %c0_27 = arith.constant 0 : index
    %c5 = arith.constant 5 : index
    %c0_28 = arith.constant 0 : index
    %c0_29 = arith.constant 0 : index
    %16 = vector.load %arg1[%c0_27, %c5, %c0_28, %c0_29] : memref<2x11x6x64xbf16, #tpu.memory_space<vmem>>, vector<1x1x6x64xbf16>
    %17 = vector.shape_cast %16 : vector<1x1x6x64xbf16> to vector<6x64xbf16>
    %c0_30 = arith.constant 0 : index
    %c6 = arith.constant 6 : index
    %c0_31 = arith.constant 0 : index
    %c0_32 = arith.constant 0 : index
    %18 = vector.load %arg1[%c0_30, %c6, %c0_31, %c0_32] : memref<2x11x6x64xbf16, #tpu.memory_space<vmem>>, vector<1x1x6x64xbf16>
    %19 = vector.shape_cast %18 : vector<1x1x6x64xbf16> to vector<6x64xbf16>
    %c0_33 = arith.constant 0 : index
    %c7 = arith.constant 7 : index
    %c0_34 = arith.constant 0 : index
    %c0_35 = arith.constant 0 : index
    %20 = vector.load %arg1[%c0_33, %c7, %c0_34, %c0_35] : memref<2x11x6x64xbf16, #tpu.memory_space<vmem>>, vector<1x1x6x64xbf16>
    %21 = vector.shape_cast %20 : vector<1x1x6x64xbf16> to vector<6x64xbf16>
    %c0_36 = arith.constant 0 : index
    %c8 = arith.constant 8 : index
    %c0_37 = arith.constant 0 : index
    %c0_38 = arith.constant 0 : index
    %22 = vector.load %arg1[%c0_36, %c8, %c0_37, %c0_38] : memref<2x11x6x64xbf16, #tpu.memory_space<vmem>>, vector<1x1x6x64xbf16>
    %23 = vector.shape_cast %22 : vector<1x1x6x64xbf16> to vector<6x64xbf16>
    %c0_39 = arith.constant 0 : index
    %c9 = arith.constant 9 : index
    %c0_40 = arith.constant 0 : index
    %c0_41 = arith.constant 0 : index
    %24 = vector.load %arg1[%c0_39, %c9, %c0_40, %c0_41] : memref<2x11x6x64xbf16, #tpu.memory_space<vmem>>, vector<1x1x6x64xbf16>
    %25 = vector.shape_cast %24 : vector<1x1x6x64xbf16> to vector<6x64xbf16>
    %c0_42 = arith.constant 0 : index
    %c10 = arith.constant 10 : index
    %c0_43 = arith.constant 0 : index
    %c0_44 = arith.constant 0 : index
    %26 = vector.load %arg1[%c0_42, %c10, %c0_43, %c0_44] : memref<2x11x6x64xbf16, #tpu.memory_space<vmem>>, vector<1x1x6x64xbf16>
    %27 = vector.shape_cast %26 : vector<1x1x6x64xbf16> to vector<6x64xbf16>
    %c0_45 = arith.constant 0 : index
    %c0_46 = arith.constant 0 : index
    %c0_47 = arith.constant 0 : index
    %c0_48 = arith.constant 0 : index
    %28 = vector.load %arg2[%c0_45, %c0_46, %c0_47, %c0_48] : memref<2x11x6x64xbf16, #tpu.memory_space<vmem>>, vector<1x1x6x64xbf16>
    %29 = vector.shape_cast %28 : vector<1x1x6x64xbf16> to vector<6x64xbf16>
    %c0_49 = arith.constant 0 : index
    %c1_50 = arith.constant 1 : index
    %c0_51 = arith.constant 0 : index
    %c0_52 = arith.constant 0 : index
    %30 = vector.load %arg2[%c0_49, %c1_50, %c0_51, %c0_52] : memref<2x11x6x64xbf16, #tpu.memory_space<vmem>>, vector<1x1x6x64xbf16>
    %31 = vector.shape_cast %30 : vector<1x1x6x64xbf16> to vector<6x64xbf16>
    %c0_53 = arith.constant 0 : index
    %c2_54 = arith.constant 2 : index
    %c0_55 = arith.constant 0 : index
    %c0_56 = arith.constant 0 : index
    %32 = vector.load %arg2[%c0_53, %c2_54, %c0_55, %c0_56] : memref<2x11x6x64xbf16, #tpu.memory_space<vmem>>, vector<1x1x6x64xbf16>
    %33 = vector.shape_cast %32 : vector<1x1x6x64xbf16> to vector<6x64xbf16>
    %c0_57 = arith.constant 0 : index
    %c3_58 = arith.constant 3 : index
    %c0_59 = arith.constant 0 : index
    %c0_60 = arith.constant 0 : index
    %34 = vector.load %arg2[%c0_57, %c3_58, %c0_59, %c0_60] : memref<2x11x6x64xbf16, #tpu.memory_space<vmem>>, vector<1x1x6x64xbf16>
    %35 = vector.shape_cast %34 : vector<1x1x6x64xbf16> to vector<6x64xbf16>
    %c0_61 = arith.constant 0 : index
    %c4_62 = arith.constant 4 : index
    %c0_63 = arith.constant 0 : index
    %c0_64 = arith.constant 0 : index
    %36 = vector.load %arg2[%c0_61, %c4_62, %c0_63, %c0_64] : memref<2x11x6x64xbf16, #tpu.memory_space<vmem>>, vector<1x1x6x64xbf16>
    %37 = vector.shape_cast %36 : vector<1x1x6x64xbf16> to vector<6x64xbf16>
    %c0_65 = arith.constant 0 : index
    %c5_66 = arith.constant 5 : index
    %c0_67 = arith.constant 0 : index
    %c0_68 = arith.constant 0 : index
    %38 = vector.load %arg2[%c0_65, %c5_66, %c0_67, %c0_68] : memref<2x11x6x64xbf16, #tpu.memory_space<vmem>>, vector<1x1x6x64xbf16>
    %39 = vector.shape_cast %38 : vector<1x1x6x64xbf16> to vector<6x64xbf16>
    %c0_69 = arith.constant 0 : index
    %c6_70 = arith.constant 6 : index
    %c0_71 = arith.constant 0 : index
    %c0_72 = arith.constant 0 : index
    %40 = vector.load %arg2[%c0_69, %c6_70, %c0_71, %c0_72] : memref<2x11x6x64xbf16, #tpu.memory_space<vmem>>, vector<1x1x6x64xbf16>
    %41 = vector.shape_cast %40 : vector<1x1x6x64xbf16> to vector<6x64xbf16>
    %c0_73 = arith.constant 0 : index
    %c7_74 = arith.constant 7 : index
    %c0_75 = arith.constant 0 : index
    %c0_76 = arith.constant 0 : index
    %42 = vector.load %arg2[%c0_73, %c7_74, %c0_75, %c0_76] : memref<2x11x6x64xbf16, #tpu.memory_space<vmem>>, vector<1x1x6x64xbf16>
    %43 = vector.shape_cast %42 : vector<1x1x6x64xbf16> to vector<6x64xbf16>
    %c0_77 = arith.constant 0 : index
    %c8_78 = arith.constant 8 : index
    %c0_79 = arith.constant 0 : index
    %c0_80 = arith.constant 0 : index
    %44 = vector.load %arg2[%c0_77, %c8_78, %c0_79, %c0_80] : memref<2x11x6x64xbf16, #tpu.memory_space<vmem>>, vector<1x1x6x64xbf16>
    %45 = vector.shape_cast %44 : vector<1x1x6x64xbf16> to vector<6x64xbf16>
    %c0_81 = arith.constant 0 : index
    %c9_82 = arith.constant 9 : index
    %c0_83 = arith.constant 0 : index
    %c0_84 = arith.constant 0 : index
    %46 = vector.load %arg2[%c0_81, %c9_82, %c0_83, %c0_84] : memref<2x11x6x64xbf16, #tpu.memory_space<vmem>>, vector<1x1x6x64xbf16>
    %47 = vector.shape_cast %46 : vector<1x1x6x64xbf16> to vector<6x64xbf16>
    %c0_85 = arith.constant 0 : index
    %c10_86 = arith.constant 10 : index
    %c0_87 = arith.constant 0 : index
    %c0_88 = arith.constant 0 : index
    %48 = vector.load %arg2[%c0_85, %c10_86, %c0_87, %c0_88] : memref<2x11x6x64xbf16, #tpu.memory_space<vmem>>, vector<1x1x6x64xbf16>
    %49 = vector.shape_cast %48 : vector<1x1x6x64xbf16> to vector<6x64xbf16>
    %50 = vector.extract_strided_slice %7 {offsets = [0, 0], sizes = [5, 64], strides = [1, 1]} : vector<6x64xbf16> to vector<5x64xbf16>
    %51 = vector.extract_strided_slice %29 {offsets = [0, 0], sizes = [5, 64], strides = [1, 1]} : vector<6x64xbf16> to vector<5x64xbf16>
    %52 = vector.extract_strided_slice %9 {offsets = [0, 0], sizes = [5, 64], strides = [1, 1]} : vector<6x64xbf16> to vector<5x64xbf16>
    %53 = vector.extract_strided_slice %31 {offsets = [0, 0], sizes = [5, 64], strides = [1, 1]} : vector<6x64xbf16> to vector<5x64xbf16>
    %54 = tpu.concatenate %50, %51, %52, %53 in 1 : vector<5x64xbf16>, vector<5x64xbf16>, vector<5x64xbf16>, vector<5x64xbf16> -> vector<5x256xbf16>
    %55 = vector.extract_strided_slice %29 {offsets = [0, 0], sizes = [5, 64], strides = [1, 1]} : vector<6x64xbf16> to vector<5x64xbf16>
    %56 = vector.extract_strided_slice %7 {offsets = [1, 0], sizes = [5, 64], strides = [1, 1]} : vector<6x64xbf16> to vector<5x64xbf16>
    %57 = vector.extract_strided_slice %31 {offsets = [0, 0], sizes = [5, 64], strides = [1, 1]} : vector<6x64xbf16> to vector<5x64xbf16>
    %58 = vector.extract_strided_slice %9 {offsets = [1, 0], sizes = [5, 64], strides = [1, 1]} : vector<6x64xbf16> to vector<5x64xbf16>
    %59 = tpu.concatenate %55, %56, %57, %58 in 1 : vector<5x64xbf16>, vector<5x64xbf16>, vector<5x64xbf16>, vector<5x64xbf16> -> vector<5x256xbf16>
    %60 = tpu.concatenate %54, %59 in 0 : vector<5x256xbf16>, vector<5x256xbf16> -> vector<10x256xbf16>
    %cst = arith.constant dense<0.000000e+00> : vector<10x32xf32>
    %61 = tpu.matmul %60, %0, %cst {dimension_numbers = #tpu.dot_dimension_numbers<[1], [0], [0], [1], [0, 0, 1, 1], [], []>} : vector<10x256xbf16>, vector<256x32xbf16>, vector<10x32xf32> -> vector<10x32xf32>
    %62 = vector.broadcast %1 : vector<1x32xf32> to vector<10x32xf32>
    %63 = arith.addf %61, %62 : vector<10x32xf32>
    %cst_89 = arith.constant 0.000000e+00 : f32
    %64 = vector.broadcast %cst_89 : f32 to vector<10x32xf32>
    %65 = arith.maximumf %63, %64 : vector<10x32xf32>
    %66 = arith.truncf %65 : vector<10x32xf32> to vector<10x32xbf16>
    %67 = vector.extract_strided_slice %9 {offsets = [0, 0], sizes = [5, 64], strides = [1, 1]} : vector<6x64xbf16> to vector<5x64xbf16>
    %68 = vector.extract_strided_slice %31 {offsets = [0, 0], sizes = [5, 64], strides = [1, 1]} : vector<6x64xbf16> to vector<5x64xbf16>
    %69 = vector.extract_strided_slice %11 {offsets = [0, 0], sizes = [5, 64], strides = [1, 1]} : vector<6x64xbf16> to vector<5x64xbf16>
    %70 = vector.extract_strided_slice %33 {offsets = [0, 0], sizes = [5, 64], strides = [1, 1]} : vector<6x64xbf16> to vector<5x64xbf16>
    %71 = tpu.concatenate %67, %68, %69, %70 in 1 : vector<5x64xbf16>, vector<5x64xbf16>, vector<5x64xbf16>, vector<5x64xbf16> -> vector<5x256xbf16>
    %72 = vector.extract_strided_slice %31 {offsets = [0, 0], sizes = [5, 64], strides = [1, 1]} : vector<6x64xbf16> to vector<5x64xbf16>
    %73 = vector.extract_strided_slice %9 {offsets = [1, 0], sizes = [5, 64], strides = [1, 1]} : vector<6x64xbf16> to vector<5x64xbf16>
    %74 = vector.extract_strided_slice %33 {offsets = [0, 0], sizes = [5, 64], strides = [1, 1]} : vector<6x64xbf16> to vector<5x64xbf16>
    %75 = vector.extract_strided_slice %11 {offsets = [1, 0], sizes = [5, 64], strides = [1, 1]} : vector<6x64xbf16> to vector<5x64xbf16>
    %76 = tpu.concatenate %72, %73, %74, %75 in 1 : vector<5x64xbf16>, vector<5x64xbf16>, vector<5x64xbf16>, vector<5x64xbf16> -> vector<5x256xbf16>
    %77 = tpu.concatenate %71, %76 in 0 : vector<5x256xbf16>, vector<5x256xbf16> -> vector<10x256xbf16>
    %cst_90 = arith.constant dense<0.000000e+00> : vector<10x32xf32>
    %78 = tpu.matmul %77, %0, %cst_90 {dimension_numbers = #tpu.dot_dimension_numbers<[1], [0], [0], [1], [0, 0, 1, 1], [], []>} : vector<10x256xbf16>, vector<256x32xbf16>, vector<10x32xf32> -> vector<10x32xf32>
    %79 = vector.broadcast %1 : vector<1x32xf32> to vector<10x32xf32>
    %80 = arith.addf %78, %79 : vector<10x32xf32>
    %cst_91 = arith.constant 0.000000e+00 : f32
    %81 = vector.broadcast %cst_91 : f32 to vector<10x32xf32>
    %82 = arith.maximumf %80, %81 : vector<10x32xf32>
    %83 = arith.truncf %82 : vector<10x32xf32> to vector<10x32xbf16>
    %84 = vector.extract_strided_slice %11 {offsets = [0, 0], sizes = [5, 64], strides = [1, 1]} : vector<6x64xbf16> to vector<5x64xbf16>
    %85 = vector.extract_strided_slice %33 {offsets = [0, 0], sizes = [5, 64], strides = [1, 1]} : vector<6x64xbf16> to vector<5x64xbf16>
    %86 = vector.extract_strided_slice %13 {offsets = [0, 0], sizes = [5, 64], strides = [1, 1]} : vector<6x64xbf16> to vector<5x64xbf16>
    %87 = vector.extract_strided_slice %35 {offsets = [0, 0], sizes = [5, 64], strides = [1, 1]} : vector<6x64xbf16> to vector<5x64xbf16>
    %88 = tpu.concatenate %84, %85, %86, %87 in 1 : vector<5x64xbf16>, vector<5x64xbf16>, vector<5x64xbf16>, vector<5x64xbf16> -> vector<5x256xbf16>
    %89 = vector.extract_strided_slice %33 {offsets = [0, 0], sizes = [5, 64], strides = [1, 1]} : vector<6x64xbf16> to vector<5x64xbf16>
    %90 = vector.extract_strided_slice %11 {offsets = [1, 0], sizes = [5, 64], strides = [1, 1]} : vector<6x64xbf16> to vector<5x64xbf16>
    %91 = vector.extract_strided_slice %35 {offsets = [0, 0], sizes = [5, 64], strides = [1, 1]} : vector<6x64xbf16> to vector<5x64xbf16>
    %92 = vector.extract_strided_slice %13 {offsets = [1, 0], sizes = [5, 64], strides = [1, 1]} : vector<6x64xbf16> to vector<5x64xbf16>
    %93 = tpu.concatenate %89, %90, %91, %92 in 1 : vector<5x64xbf16>, vector<5x64xbf16>, vector<5x64xbf16>, vector<5x64xbf16> -> vector<5x256xbf16>
    %94 = tpu.concatenate %88, %93 in 0 : vector<5x256xbf16>, vector<5x256xbf16> -> vector<10x256xbf16>
    %cst_92 = arith.constant dense<0.000000e+00> : vector<10x32xf32>
    %95 = tpu.matmul %94, %0, %cst_92 {dimension_numbers = #tpu.dot_dimension_numbers<[1], [0], [0], [1], [0, 0, 1, 1], [], []>} : vector<10x256xbf16>, vector<256x32xbf16>, vector<10x32xf32> -> vector<10x32xf32>
    %96 = vector.broadcast %1 : vector<1x32xf32> to vector<10x32xf32>
    %97 = arith.addf %95, %96 : vector<10x32xf32>
    %cst_93 = arith.constant 0.000000e+00 : f32
    %98 = vector.broadcast %cst_93 : f32 to vector<10x32xf32>
    %99 = arith.maximumf %97, %98 : vector<10x32xf32>
    %100 = arith.truncf %99 : vector<10x32xf32> to vector<10x32xbf16>
    %101 = vector.extract_strided_slice %13 {offsets = [0, 0], sizes = [5, 64], strides = [1, 1]} : vector<6x64xbf16> to vector<5x64xbf16>
    %102 = vector.extract_strided_slice %35 {offsets = [0, 0], sizes = [5, 64], strides = [1, 1]} : vector<6x64xbf16> to vector<5x64xbf16>
    %103 = vector.extract_strided_slice %15 {offsets = [0, 0], sizes = [5, 64], strides = [1, 1]} : vector<6x64xbf16> to vector<5x64xbf16>
    %104 = vector.extract_strided_slice %37 {offsets = [0, 0], sizes = [5, 64], strides = [1, 1]} : vector<6x64xbf16> to vector<5x64xbf16>
    %105 = tpu.concatenate %101, %102, %103, %104 in 1 : vector<5x64xbf16>, vector<5x64xbf16>, vector<5x64xbf16>, vector<5x64xbf16> -> vector<5x256xbf16>
    %106 = vector.extract_strided_slice %35 {offsets = [0, 0], sizes = [5, 64], strides = [1, 1]} : vector<6x64xbf16> to vector<5x64xbf16>
    %107 = vector.extract_strided_slice %13 {offsets = [1, 0], sizes = [5, 64], strides = [1, 1]} : vector<6x64xbf16> to vector<5x64xbf16>
    %108 = vector.extract_strided_slice %37 {offsets = [0, 0], sizes = [5, 64], strides = [1, 1]} : vector<6x64xbf16> to vector<5x64xbf16>
    %109 = vector.extract_strided_slice %15 {offsets = [1, 0], sizes = [5, 64], strides = [1, 1]} : vector<6x64xbf16> to vector<5x64xbf16>
    %110 = tpu.concatenate %106, %107, %108, %109 in 1 : vector<5x64xbf16>, vector<5x64xbf16>, vector<5x64xbf16>, vector<5x64xbf16> -> vector<5x256xbf16>
    %111 = tpu.concatenate %105, %110 in 0 : vector<5x256xbf16>, vector<5x256xbf16> -> vector<10x256xbf16>
    %cst_94 = arith.constant dense<0.000000e+00> : vector<10x32xf32>
    %112 = tpu.matmul %111, %0, %cst_94 {dimension_numbers = #tpu.dot_dimension_numbers<[1], [0], [0], [1], [0, 0, 1, 1], [], []>} : vector<10x256xbf16>, vector<256x32xbf16>, vector<10x32xf32> -> vector<10x32xf32>
    %113 = vector.broadcast %1 : vector<1x32xf32> to vector<10x32xf32>
    %114 = arith.addf %112, %113 : vector<10x32xf32>
    %cst_95 = arith.constant 0.000000e+00 : f32
    %115 = vector.broadcast %cst_95 : f32 to vector<10x32xf32>
    %116 = arith.maximumf %114, %115 : vector<10x32xf32>
    %117 = arith.truncf %116 : vector<10x32xf32> to vector<10x32xbf16>
    %118 = vector.extract_strided_slice %15 {offsets = [0, 0], sizes = [5, 64], strides = [1, 1]} : vector<6x64xbf16> to vector<5x64xbf16>
    %119 = vector.extract_strided_slice %37 {offsets = [0, 0], sizes = [5, 64], strides = [1, 1]} : vector<6x64xbf16> to vector<5x64xbf16>
    %120 = vector.extract_strided_slice %17 {offsets = [0, 0], sizes = [5, 64], strides = [1, 1]} : vector<6x64xbf16> to vector<5x64xbf16>
    %121 = vector.extract_strided_slice %39 {offsets = [0, 0], sizes = [5, 64], strides = [1, 1]} : vector<6x64xbf16> to vector<5x64xbf16>
    %122 = tpu.concatenate %118, %119, %120, %121 in 1 : vector<5x64xbf16>, vector<5x64xbf16>, vector<5x64xbf16>, vector<5x64xbf16> -> vector<5x256xbf16>
    %123 = vector.extract_strided_slice %37 {offsets = [0, 0], sizes = [5, 64], strides = [1, 1]} : vector<6x64xbf16> to vector<5x64xbf16>
    %124 = vector.extract_strided_slice %15 {offsets = [1, 0], sizes = [5, 64], strides = [1, 1]} : vector<6x64xbf16> to vector<5x64xbf16>
    %125 = vector.extract_strided_slice %39 {offsets = [0, 0], sizes = [5, 64], strides = [1, 1]} : vector<6x64xbf16> to vector<5x64xbf16>
    %126 = vector.extract_strided_slice %17 {offsets = [1, 0], sizes = [5, 64], strides = [1, 1]} : vector<6x64xbf16> to vector<5x64xbf16>
    %127 = tpu.concatenate %123, %124, %125, %126 in 1 : vector<5x64xbf16>, vector<5x64xbf16>, vector<5x64xbf16>, vector<5x64xbf16> -> vector<5x256xbf16>
    %128 = tpu.concatenate %122, %127 in 0 : vector<5x256xbf16>, vector<5x256xbf16> -> vector<10x256xbf16>
    %cst_96 = arith.constant dense<0.000000e+00> : vector<10x32xf32>
    %129 = tpu.matmul %128, %0, %cst_96 {dimension_numbers = #tpu.dot_dimension_numbers<[1], [0], [0], [1], [0, 0, 1, 1], [], []>} : vector<10x256xbf16>, vector<256x32xbf16>, vector<10x32xf32> -> vector<10x32xf32>
    %130 = vector.broadcast %1 : vector<1x32xf32> to vector<10x32xf32>
    %131 = arith.addf %129, %130 : vector<10x32xf32>
    %cst_97 = arith.constant 0.000000e+00 : f32
    %132 = vector.broadcast %cst_97 : f32 to vector<10x32xf32>
    %133 = arith.maximumf %131, %132 : vector<10x32xf32>
    %134 = arith.truncf %133 : vector<10x32xf32> to vector<10x32xbf16>
    %135 = vector.extract_strided_slice %17 {offsets = [0, 0], sizes = [5, 64], strides = [1, 1]} : vector<6x64xbf16> to vector<5x64xbf16>
    %136 = vector.extract_strided_slice %39 {offsets = [0, 0], sizes = [5, 64], strides = [1, 1]} : vector<6x64xbf16> to vector<5x64xbf16>
    %137 = vector.extract_strided_slice %19 {offsets = [0, 0], sizes = [5, 64], strides = [1, 1]} : vector<6x64xbf16> to vector<5x64xbf16>
    %138 = vector.extract_strided_slice %41 {offsets = [0, 0], sizes = [5, 64], strides = [1, 1]} : vector<6x64xbf16> to vector<5x64xbf16>
    %139 = tpu.concatenate %135, %136, %137, %138 in 1 : vector<5x64xbf16>, vector<5x64xbf16>, vector<5x64xbf16>, vector<5x64xbf16> -> vector<5x256xbf16>
    %140 = vector.extract_strided_slice %39 {offsets = [0, 0], sizes = [5, 64], strides = [1, 1]} : vector<6x64xbf16> to vector<5x64xbf16>
    %141 = vector.extract_strided_slice %17 {offsets = [1, 0], sizes = [5, 64], strides = [1, 1]} : vector<6x64xbf16> to vector<5x64xbf16>
    %142 = vector.extract_strided_slice %41 {offsets = [0, 0], sizes = [5, 64], strides = [1, 1]} : vector<6x64xbf16> to vector<5x64xbf16>
    %143 = vector.extract_strided_slice %19 {offsets = [1, 0], sizes = [5, 64], strides = [1, 1]} : vector<6x64xbf16> to vector<5x64xbf16>
    %144 = tpu.concatenate %140, %141, %142, %143 in 1 : vector<5x64xbf16>, vector<5x64xbf16>, vector<5x64xbf16>, vector<5x64xbf16> -> vector<5x256xbf16>
    %145 = tpu.concatenate %139, %144 in 0 : vector<5x256xbf16>, vector<5x256xbf16> -> vector<10x256xbf16>
    %cst_98 = arith.constant dense<0.000000e+00> : vector<10x32xf32>
    %146 = tpu.matmul %145, %0, %cst_98 {dimension_numbers = #tpu.dot_dimension_numbers<[1], [0], [0], [1], [0, 0, 1, 1], [], []>} : vector<10x256xbf16>, vector<256x32xbf16>, vector<10x32xf32> -> vector<10x32xf32>
    %147 = vector.broadcast %1 : vector<1x32xf32> to vector<10x32xf32>
    %148 = arith.addf %146, %147 : vector<10x32xf32>
    %cst_99 = arith.constant 0.000000e+00 : f32
    %149 = vector.broadcast %cst_99 : f32 to vector<10x32xf32>
    %150 = arith.maximumf %148, %149 : vector<10x32xf32>
    %151 = arith.truncf %150 : vector<10x32xf32> to vector<10x32xbf16>
    %152 = vector.extract_strided_slice %19 {offsets = [0, 0], sizes = [5, 64], strides = [1, 1]} : vector<6x64xbf16> to vector<5x64xbf16>
    %153 = vector.extract_strided_slice %41 {offsets = [0, 0], sizes = [5, 64], strides = [1, 1]} : vector<6x64xbf16> to vector<5x64xbf16>
    %154 = vector.extract_strided_slice %21 {offsets = [0, 0], sizes = [5, 64], strides = [1, 1]} : vector<6x64xbf16> to vector<5x64xbf16>
    %155 = vector.extract_strided_slice %43 {offsets = [0, 0], sizes = [5, 64], strides = [1, 1]} : vector<6x64xbf16> to vector<5x64xbf16>
    %156 = tpu.concatenate %152, %153, %154, %155 in 1 : vector<5x64xbf16>, vector<5x64xbf16>, vector<5x64xbf16>, vector<5x64xbf16> -> vector<5x256xbf16>
    %157 = vector.extract_strided_slice %41 {offsets = [0, 0], sizes = [5, 64], strides = [1, 1]} : vector<6x64xbf16> to vector<5x64xbf16>
    %158 = vector.extract_strided_slice %19 {offsets = [1, 0], sizes = [5, 64], strides = [1, 1]} : vector<6x64xbf16> to vector<5x64xbf16>
    %159 = vector.extract_strided_slice %43 {offsets = [0, 0], sizes = [5, 64], strides = [1, 1]} : vector<6x64xbf16> to vector<5x64xbf16>
    %160 = vector.extract_strided_slice %21 {offsets = [1, 0], sizes = [5, 64], strides = [1, 1]} : vector<6x64xbf16> to vector<5x64xbf16>
    %161 = tpu.concatenate %157, %158, %159, %160 in 1 : vector<5x64xbf16>, vector<5x64xbf16>, vector<5x64xbf16>, vector<5x64xbf16> -> vector<5x256xbf16>
    %162 = tpu.concatenate %156, %161 in 0 : vector<5x256xbf16>, vector<5x256xbf16> -> vector<10x256xbf16>
    %cst_100 = arith.constant dense<0.000000e+00> : vector<10x32xf32>
    %163 = tpu.matmul %162, %0, %cst_100 {dimension_numbers = #tpu.dot_dimension_numbers<[1], [0], [0], [1], [0, 0, 1, 1], [], []>} : vector<10x256xbf16>, vector<256x32xbf16>, vector<10x32xf32> -> vector<10x32xf32>
    %164 = vector.broadcast %1 : vector<1x32xf32> to vector<10x32xf32>
    %165 = arith.addf %163, %164 : vector<10x32xf32>
    %cst_101 = arith.constant 0.000000e+00 : f32
    %166 = vector.broadcast %cst_101 : f32 to vector<10x32xf32>
    %167 = arith.maximumf %165, %166 : vector<10x32xf32>
    %168 = arith.truncf %167 : vector<10x32xf32> to vector<10x32xbf16>
    %169 = vector.extract_strided_slice %21 {offsets = [0, 0], sizes = [5, 64], strides = [1, 1]} : vector<6x64xbf16> to vector<5x64xbf16>
    %170 = vector.extract_strided_slice %43 {offsets = [0, 0], sizes = [5, 64], strides = [1, 1]} : vector<6x64xbf16> to vector<5x64xbf16>
    %171 = vector.extract_strided_slice %23 {offsets = [0, 0], sizes = [5, 64], strides = [1, 1]} : vector<6x64xbf16> to vector<5x64xbf16>
    %172 = vector.extract_strided_slice %45 {offsets = [0, 0], sizes = [5, 64], strides = [1, 1]} : vector<6x64xbf16> to vector<5x64xbf16>
    %173 = tpu.concatenate %169, %170, %171, %172 in 1 : vector<5x64xbf16>, vector<5x64xbf16>, vector<5x64xbf16>, vector<5x64xbf16> -> vector<5x256xbf16>
    %174 = vector.extract_strided_slice %43 {offsets = [0, 0], sizes = [5, 64], strides = [1, 1]} : vector<6x64xbf16> to vector<5x64xbf16>
    %175 = vector.extract_strided_slice %21 {offsets = [1, 0], sizes = [5, 64], strides = [1, 1]} : vector<6x64xbf16> to vector<5x64xbf16>
    %176 = vector.extract_strided_slice %45 {offsets = [0, 0], sizes = [5, 64], strides = [1, 1]} : vector<6x64xbf16> to vector<5x64xbf16>
    %177 = vector.extract_strided_slice %23 {offsets = [1, 0], sizes = [5, 64], strides = [1, 1]} : vector<6x64xbf16> to vector<5x64xbf16>
    %178 = tpu.concatenate %174, %175, %176, %177 in 1 : vector<5x64xbf16>, vector<5x64xbf16>, vector<5x64xbf16>, vector<5x64xbf16> -> vector<5x256xbf16>
    %179 = tpu.concatenate %173, %178 in 0 : vector<5x256xbf16>, vector<5x256xbf16> -> vector<10x256xbf16>
    %cst_102 = arith.constant dense<0.000000e+00> : vector<10x32xf32>
    %180 = tpu.matmul %179, %0, %cst_102 {dimension_numbers = #tpu.dot_dimension_numbers<[1], [0], [0], [1], [0, 0, 1, 1], [], []>} : vector<10x256xbf16>, vector<256x32xbf16>, vector<10x32xf32> -> vector<10x32xf32>
    %181 = vector.broadcast %1 : vector<1x32xf32> to vector<10x32xf32>
    %182 = arith.addf %180, %181 : vector<10x32xf32>
    %cst_103 = arith.constant 0.000000e+00 : f32
    %183 = vector.broadcast %cst_103 : f32 to vector<10x32xf32>
    %184 = arith.maximumf %182, %183 : vector<10x32xf32>
    %185 = arith.truncf %184 : vector<10x32xf32> to vector<10x32xbf16>
    %186 = vector.extract_strided_slice %23 {offsets = [0, 0], sizes = [5, 64], strides = [1, 1]} : vector<6x64xbf16> to vector<5x64xbf16>
    %187 = vector.extract_strided_slice %45 {offsets = [0, 0], sizes = [5, 64], strides = [1, 1]} : vector<6x64xbf16> to vector<5x64xbf16>
    %188 = vector.extract_strided_slice %25 {offsets = [0, 0], sizes = [5, 64], strides = [1, 1]} : vector<6x64xbf16> to vector<5x64xbf16>
    %189 = vector.extract_strided_slice %47 {offsets = [0, 0], sizes = [5, 64], strides = [1, 1]} : vector<6x64xbf16> to vector<5x64xbf16>
    %190 = tpu.concatenate %186, %187, %188, %189 in 1 : vector<5x64xbf16>, vector<5x64xbf16>, vector<5x64xbf16>, vector<5x64xbf16> -> vector<5x256xbf16>
    %191 = vector.extract_strided_slice %45 {offsets = [0, 0], sizes = [5, 64], strides = [1, 1]} : vector<6x64xbf16> to vector<5x64xbf16>
    %192 = vector.extract_strided_slice %23 {offsets = [1, 0], sizes = [5, 64], strides = [1, 1]} : vector<6x64xbf16> to vector<5x64xbf16>
    %193 = vector.extract_strided_slice %47 {offsets = [0, 0], sizes = [5, 64], strides = [1, 1]} : vector<6x64xbf16> to vector<5x64xbf16>
    %194 = vector.extract_strided_slice %25 {offsets = [1, 0], sizes = [5, 64], strides = [1, 1]} : vector<6x64xbf16> to vector<5x64xbf16>
    %195 = tpu.concatenate %191, %192, %193, %194 in 1 : vector<5x64xbf16>, vector<5x64xbf16>, vector<5x64xbf16>, vector<5x64xbf16> -> vector<5x256xbf16>
    %196 = tpu.concatenate %190, %195 in 0 : vector<5x256xbf16>, vector<5x256xbf16> -> vector<10x256xbf16>
    %cst_104 = arith.constant dense<0.000000e+00> : vector<10x32xf32>
    %197 = tpu.matmul %196, %0, %cst_104 {dimension_numbers = #tpu.dot_dimension_numbers<[1], [0], [0], [1], [0, 0, 1, 1], [], []>} : vector<10x256xbf16>, vector<256x32xbf16>, vector<10x32xf32> -> vector<10x32xf32>
    %198 = vector.broadcast %1 : vector<1x32xf32> to vector<10x32xf32>
    %199 = arith.addf %197, %198 : vector<10x32xf32>
    %cst_105 = arith.constant 0.000000e+00 : f32
    %200 = vector.broadcast %cst_105 : f32 to vector<10x32xf32>
    %201 = arith.maximumf %199, %200 : vector<10x32xf32>
    %202 = arith.truncf %201 : vector<10x32xf32> to vector<10x32xbf16>
    %203 = vector.extract_strided_slice %25 {offsets = [0, 0], sizes = [5, 64], strides = [1, 1]} : vector<6x64xbf16> to vector<5x64xbf16>
    %204 = vector.extract_strided_slice %47 {offsets = [0, 0], sizes = [5, 64], strides = [1, 1]} : vector<6x64xbf16> to vector<5x64xbf16>
    %205 = vector.extract_strided_slice %27 {offsets = [0, 0], sizes = [5, 64], strides = [1, 1]} : vector<6x64xbf16> to vector<5x64xbf16>
    %206 = vector.extract_strided_slice %49 {offsets = [0, 0], sizes = [5, 64], strides = [1, 1]} : vector<6x64xbf16> to vector<5x64xbf16>
    %207 = tpu.concatenate %203, %204, %205, %206 in 1 : vector<5x64xbf16>, vector<5x64xbf16>, vector<5x64xbf16>, vector<5x64xbf16> -> vector<5x256xbf16>
    %208 = vector.extract_strided_slice %47 {offsets = [0, 0], sizes = [5, 64], strides = [1, 1]} : vector<6x64xbf16> to vector<5x64xbf16>
    %209 = vector.extract_strided_slice %25 {offsets = [1, 0], sizes = [5, 64], strides = [1, 1]} : vector<6x64xbf16> to vector<5x64xbf16>
    %210 = vector.extract_strided_slice %49 {offsets = [0, 0], sizes = [5, 64], strides = [1, 1]} : vector<6x64xbf16> to vector<5x64xbf16>
    %211 = vector.extract_strided_slice %27 {offsets = [1, 0], sizes = [5, 64], strides = [1, 1]} : vector<6x64xbf16> to vector<5x64xbf16>
    %212 = tpu.concatenate %208, %209, %210, %211 in 1 : vector<5x64xbf16>, vector<5x64xbf16>, vector<5x64xbf16>, vector<5x64xbf16> -> vector<5x256xbf16>
    %213 = tpu.concatenate %207, %212 in 0 : vector<5x256xbf16>, vector<5x256xbf16> -> vector<10x256xbf16>
    %cst_106 = arith.constant dense<0.000000e+00> : vector<10x32xf32>
    %214 = tpu.matmul %213, %0, %cst_106 {dimension_numbers = #tpu.dot_dimension_numbers<[1], [0], [0], [1], [0, 0, 1, 1], [], []>} : vector<10x256xbf16>, vector<256x32xbf16>, vector<10x32xf32> -> vector<10x32xf32>
    %215 = vector.broadcast %1 : vector<1x32xf32> to vector<10x32xf32>
    %216 = arith.addf %214, %215 : vector<10x32xf32>
    %cst_107 = arith.constant 0.000000e+00 : f32
    %217 = vector.broadcast %cst_107 : f32 to vector<10x32xf32>
    %218 = arith.maximumf %216, %217 : vector<10x32xf32>
    %219 = arith.truncf %218 : vector<10x32xf32> to vector<10x32xbf16>
    %220 = vector.extract_strided_slice %66 {offsets = [0, 0], sizes = [4, 32], strides = [1, 1]} : vector<10x32xbf16> to vector<4x32xbf16>
    %221 = vector.extract_strided_slice %66 {offsets = [5, 0], sizes = [4, 32], strides = [1, 1]} : vector<10x32xbf16> to vector<4x32xbf16>
    %222 = vector.extract_strided_slice %66 {offsets = [1, 0], sizes = [4, 32], strides = [1, 1]} : vector<10x32xbf16> to vector<4x32xbf16>
    %223 = vector.extract_strided_slice %66 {offsets = [6, 0], sizes = [4, 32], strides = [1, 1]} : vector<10x32xbf16> to vector<4x32xbf16>
    %224 = vector.extract_strided_slice %83 {offsets = [0, 0], sizes = [4, 32], strides = [1, 1]} : vector<10x32xbf16> to vector<4x32xbf16>
    %225 = vector.extract_strided_slice %83 {offsets = [5, 0], sizes = [4, 32], strides = [1, 1]} : vector<10x32xbf16> to vector<4x32xbf16>
    %226 = vector.extract_strided_slice %83 {offsets = [1, 0], sizes = [4, 32], strides = [1, 1]} : vector<10x32xbf16> to vector<4x32xbf16>
    %227 = vector.extract_strided_slice %83 {offsets = [6, 0], sizes = [4, 32], strides = [1, 1]} : vector<10x32xbf16> to vector<4x32xbf16>
    %228 = vector.extract_strided_slice %100 {offsets = [0, 0], sizes = [4, 32], strides = [1, 1]} : vector<10x32xbf16> to vector<4x32xbf16>
    %229 = vector.extract_strided_slice %100 {offsets = [5, 0], sizes = [4, 32], strides = [1, 1]} : vector<10x32xbf16> to vector<4x32xbf16>
    %230 = vector.extract_strided_slice %100 {offsets = [1, 0], sizes = [4, 32], strides = [1, 1]} : vector<10x32xbf16> to vector<4x32xbf16>
    %231 = vector.extract_strided_slice %100 {offsets = [6, 0], sizes = [4, 32], strides = [1, 1]} : vector<10x32xbf16> to vector<4x32xbf16>
    %232 = vector.extract_strided_slice %117 {offsets = [0, 0], sizes = [4, 32], strides = [1, 1]} : vector<10x32xbf16> to vector<4x32xbf16>
    %233 = vector.extract_strided_slice %117 {offsets = [5, 0], sizes = [4, 32], strides = [1, 1]} : vector<10x32xbf16> to vector<4x32xbf16>
    %234 = vector.extract_strided_slice %117 {offsets = [1, 0], sizes = [4, 32], strides = [1, 1]} : vector<10x32xbf16> to vector<4x32xbf16>
    %235 = vector.extract_strided_slice %117 {offsets = [6, 0], sizes = [4, 32], strides = [1, 1]} : vector<10x32xbf16> to vector<4x32xbf16>
    %236 = tpu.concatenate %220, %221, %222, %223, %224, %225, %226, %227, %228, %229, %230, %231, %232, %233, %234, %235 in 1 : vector<4x32xbf16>, vector<4x32xbf16>, vector<4x32xbf16>, vector<4x32xbf16>, vector<4x32xbf16>, vector<4x32xbf16>, vector<4x32xbf16>, vector<4x32xbf16>, vector<4x32xbf16>, vector<4x32xbf16>, vector<4x32xbf16>, vector<4x32xbf16>, vector<4x32xbf16>, vector<4x32xbf16>, vector<4x32xbf16>, vector<4x32xbf16> -> vector<4x512xbf16>
    %cst_108 = arith.constant dense<0.000000e+00> : vector<4x64xf32>
    %237 = tpu.matmul %236, %2, %cst_108 {dimension_numbers = #tpu.dot_dimension_numbers<[1], [0], [0], [1], [0, 0, 1, 1], [], []>} : vector<4x512xbf16>, vector<512x64xbf16>, vector<4x64xf32> -> vector<4x64xf32>
    %238 = vector.broadcast %3 : vector<1x64xf32> to vector<4x64xf32>
    %239 = arith.addf %237, %238 : vector<4x64xf32>
    %cst_109 = arith.constant 0.000000e+00 : f32
    %240 = vector.broadcast %cst_109 : f32 to vector<4x64xf32>
    %241 = arith.maximumf %239, %240 : vector<4x64xf32>
    %242 = arith.truncf %241 : vector<4x64xf32> to vector<4x64xbf16>
    %243 = vector.extract_strided_slice %100 {offsets = [0, 0], sizes = [4, 32], strides = [1, 1]} : vector<10x32xbf16> to vector<4x32xbf16>
    %244 = vector.extract_strided_slice %100 {offsets = [5, 0], sizes = [4, 32], strides = [1, 1]} : vector<10x32xbf16> to vector<4x32xbf16>
    %245 = vector.extract_strided_slice %100 {offsets = [1, 0], sizes = [4, 32], strides = [1, 1]} : vector<10x32xbf16> to vector<4x32xbf16>
    %246 = vector.extract_strided_slice %100 {offsets = [6, 0], sizes = [4, 32], strides = [1, 1]} : vector<10x32xbf16> to vector<4x32xbf16>
    %247 = vector.extract_strided_slice %117 {offsets = [0, 0], sizes = [4, 32], strides = [1, 1]} : vector<10x32xbf16> to vector<4x32xbf16>
    %248 = vector.extract_strided_slice %117 {offsets = [5, 0], sizes = [4, 32], strides = [1, 1]} : vector<10x32xbf16> to vector<4x32xbf16>
    %249 = vector.extract_strided_slice %117 {offsets = [1, 0], sizes = [4, 32], strides = [1, 1]} : vector<10x32xbf16> to vector<4x32xbf16>
    %250 = vector.extract_strided_slice %117 {offsets = [6, 0], sizes = [4, 32], strides = [1, 1]} : vector<10x32xbf16> to vector<4x32xbf16>
    %251 = vector.extract_strided_slice %134 {offsets = [0, 0], sizes = [4, 32], strides = [1, 1]} : vector<10x32xbf16> to vector<4x32xbf16>
    %252 = vector.extract_strided_slice %134 {offsets = [5, 0], sizes = [4, 32], strides = [1, 1]} : vector<10x32xbf16> to vector<4x32xbf16>
    %253 = vector.extract_strided_slice %134 {offsets = [1, 0], sizes = [4, 32], strides = [1, 1]} : vector<10x32xbf16> to vector<4x32xbf16>
    %254 = vector.extract_strided_slice %134 {offsets = [6, 0], sizes = [4, 32], strides = [1, 1]} : vector<10x32xbf16> to vector<4x32xbf16>
    %255 = vector.extract_strided_slice %151 {offsets = [0, 0], sizes = [4, 32], strides = [1, 1]} : vector<10x32xbf16> to vector<4x32xbf16>
    %256 = vector.extract_strided_slice %151 {offsets = [5, 0], sizes = [4, 32], strides = [1, 1]} : vector<10x32xbf16> to vector<4x32xbf16>
    %257 = vector.extract_strided_slice %151 {offsets = [1, 0], sizes = [4, 32], strides = [1, 1]} : vector<10x32xbf16> to vector<4x32xbf16>
    %258 = vector.extract_strided_slice %151 {offsets = [6, 0], sizes = [4, 32], strides = [1, 1]} : vector<10x32xbf16> to vector<4x32xbf16>
    %259 = tpu.concatenate %243, %244, %245, %246, %247, %248, %249, %250, %251, %252, %253, %254, %255, %256, %257, %258 in 1 : vector<4x32xbf16>, vector<4x32xbf16>, vector<4x32xbf16>, vector<4x32xbf16>, vector<4x32xbf16>, vector<4x32xbf16>, vector<4x32xbf16>, vector<4x32xbf16>, vector<4x32xbf16>, vector<4x32xbf16>, vector<4x32xbf16>, vector<4x32xbf16>, vector<4x32xbf16>, vector<4x32xbf16>, vector<4x32xbf16>, vector<4x32xbf16> -> vector<4x512xbf16>
    %cst_110 = arith.constant dense<0.000000e+00> : vector<4x64xf32>
    %260 = tpu.matmul %259, %2, %cst_110 {dimension_numbers = #tpu.dot_dimension_numbers<[1], [0], [0], [1], [0, 0, 1, 1], [], []>} : vector<4x512xbf16>, vector<512x64xbf16>, vector<4x64xf32> -> vector<4x64xf32>
    %261 = vector.broadcast %3 : vector<1x64xf32> to vector<4x64xf32>
    %262 = arith.addf %260, %261 : vector<4x64xf32>
    %cst_111 = arith.constant 0.000000e+00 : f32
    %263 = vector.broadcast %cst_111 : f32 to vector<4x64xf32>
    %264 = arith.maximumf %262, %263 : vector<4x64xf32>
    %265 = arith.truncf %264 : vector<4x64xf32> to vector<4x64xbf16>
    %266 = vector.extract_strided_slice %134 {offsets = [0, 0], sizes = [4, 32], strides = [1, 1]} : vector<10x32xbf16> to vector<4x32xbf16>
    %267 = vector.extract_strided_slice %134 {offsets = [5, 0], sizes = [4, 32], strides = [1, 1]} : vector<10x32xbf16> to vector<4x32xbf16>
    %268 = vector.extract_strided_slice %134 {offsets = [1, 0], sizes = [4, 32], strides = [1, 1]} : vector<10x32xbf16> to vector<4x32xbf16>
    %269 = vector.extract_strided_slice %134 {offsets = [6, 0], sizes = [4, 32], strides = [1, 1]} : vector<10x32xbf16> to vector<4x32xbf16>
    %270 = vector.extract_strided_slice %151 {offsets = [0, 0], sizes = [4, 32], strides = [1, 1]} : vector<10x32xbf16> to vector<4x32xbf16>
    %271 = vector.extract_strided_slice %151 {offsets = [5, 0], sizes = [4, 32], strides = [1, 1]} : vector<10x32xbf16> to vector<4x32xbf16>
    %272 = vector.extract_strided_slice %151 {offsets = [1, 0], sizes = [4, 32], strides = [1, 1]} : vector<10x32xbf16> to vector<4x32xbf16>
    %273 = vector.extract_strided_slice %151 {offsets = [6, 0], sizes = [4, 32], strides = [1, 1]} : vector<10x32xbf16> to vector<4x32xbf16>
    %274 = vector.extract_strided_slice %168 {offsets = [0, 0], sizes = [4, 32], strides = [1, 1]} : vector<10x32xbf16> to vector<4x32xbf16>
    %275 = vector.extract_strided_slice %168 {offsets = [5, 0], sizes = [4, 32], strides = [1, 1]} : vector<10x32xbf16> to vector<4x32xbf16>
    %276 = vector.extract_strided_slice %168 {offsets = [1, 0], sizes = [4, 32], strides = [1, 1]} : vector<10x32xbf16> to vector<4x32xbf16>
    %277 = vector.extract_strided_slice %168 {offsets = [6, 0], sizes = [4, 32], strides = [1, 1]} : vector<10x32xbf16> to vector<4x32xbf16>
    %278 = vector.extract_strided_slice %185 {offsets = [0, 0], sizes = [4, 32], strides = [1, 1]} : vector<10x32xbf16> to vector<4x32xbf16>
    %279 = vector.extract_strided_slice %185 {offsets = [5, 0], sizes = [4, 32], strides = [1, 1]} : vector<10x32xbf16> to vector<4x32xbf16>
    %280 = vector.extract_strided_slice %185 {offsets = [1, 0], sizes = [4, 32], strides = [1, 1]} : vector<10x32xbf16> to vector<4x32xbf16>
    %281 = vector.extract_strided_slice %185 {offsets = [6, 0], sizes = [4, 32], strides = [1, 1]} : vector<10x32xbf16> to vector<4x32xbf16>
    %282 = tpu.concatenate %266, %267, %268, %269, %270, %271, %272, %273, %274, %275, %276, %277, %278, %279, %280, %281 in 1 : vector<4x32xbf16>, vector<4x32xbf16>, vector<4x32xbf16>, vector<4x32xbf16>, vector<4x32xbf16>, vector<4x32xbf16>, vector<4x32xbf16>, vector<4x32xbf16>, vector<4x32xbf16>, vector<4x32xbf16>, vector<4x32xbf16>, vector<4x32xbf16>, vector<4x32xbf16>, vector<4x32xbf16>, vector<4x32xbf16>, vector<4x32xbf16> -> vector<4x512xbf16>
    %cst_112 = arith.constant dense<0.000000e+00> : vector<4x64xf32>
    %283 = tpu.matmul %282, %2, %cst_112 {dimension_numbers = #tpu.dot_dimension_numbers<[1], [0], [0], [1], [0, 0, 1, 1], [], []>} : vector<4x512xbf16>, vector<512x64xbf16>, vector<4x64xf32> -> vector<4x64xf32>
    %284 = vector.broadcast %3 : vector<1x64xf32> to vector<4x64xf32>
    %285 = arith.addf %283, %284 : vector<4x64xf32>
    %cst_113 = arith.constant 0.000000e+00 : f32
    %286 = vector.broadcast %cst_113 : f32 to vector<4x64xf32>
    %287 = arith.maximumf %285, %286 : vector<4x64xf32>
    %288 = arith.truncf %287 : vector<4x64xf32> to vector<4x64xbf16>
    %289 = vector.extract_strided_slice %168 {offsets = [0, 0], sizes = [4, 32], strides = [1, 1]} : vector<10x32xbf16> to vector<4x32xbf16>
    %290 = vector.extract_strided_slice %168 {offsets = [5, 0], sizes = [4, 32], strides = [1, 1]} : vector<10x32xbf16> to vector<4x32xbf16>
    %291 = vector.extract_strided_slice %168 {offsets = [1, 0], sizes = [4, 32], strides = [1, 1]} : vector<10x32xbf16> to vector<4x32xbf16>
    %292 = vector.extract_strided_slice %168 {offsets = [6, 0], sizes = [4, 32], strides = [1, 1]} : vector<10x32xbf16> to vector<4x32xbf16>
    %293 = vector.extract_strided_slice %185 {offsets = [0, 0], sizes = [4, 32], strides = [1, 1]} : vector<10x32xbf16> to vector<4x32xbf16>
    %294 = vector.extract_strided_slice %185 {offsets = [5, 0], sizes = [4, 32], strides = [1, 1]} : vector<10x32xbf16> to vector<4x32xbf16>
    %295 = vector.extract_strided_slice %185 {offsets = [1, 0], sizes = [4, 32], strides = [1, 1]} : vector<10x32xbf16> to vector<4x32xbf16>
    %296 = vector.extract_strided_slice %185 {offsets = [6, 0], sizes = [4, 32], strides = [1, 1]} : vector<10x32xbf16> to vector<4x32xbf16>
    %297 = vector.extract_strided_slice %202 {offsets = [0, 0], sizes = [4, 32], strides = [1, 1]} : vector<10x32xbf16> to vector<4x32xbf16>
    %298 = vector.extract_strided_slice %202 {offsets = [5, 0], sizes = [4, 32], strides = [1, 1]} : vector<10x32xbf16> to vector<4x32xbf16>
    %299 = vector.extract_strided_slice %202 {offsets = [1, 0], sizes = [4, 32], strides = [1, 1]} : vector<10x32xbf16> to vector<4x32xbf16>
    %300 = vector.extract_strided_slice %202 {offsets = [6, 0], sizes = [4, 32], strides = [1, 1]} : vector<10x32xbf16> to vector<4x32xbf16>
    %301 = vector.extract_strided_slice %219 {offsets = [0, 0], sizes = [4, 32], strides = [1, 1]} : vector<10x32xbf16> to vector<4x32xbf16>
    %302 = vector.extract_strided_slice %219 {offsets = [5, 0], sizes = [4, 32], strides = [1, 1]} : vector<10x32xbf16> to vector<4x32xbf16>
    %303 = vector.extract_strided_slice %219 {offsets = [1, 0], sizes = [4, 32], strides = [1, 1]} : vector<10x32xbf16> to vector<4x32xbf16>
    %304 = vector.extract_strided_slice %219 {offsets = [6, 0], sizes = [4, 32], strides = [1, 1]} : vector<10x32xbf16> to vector<4x32xbf16>
    %305 = tpu.concatenate %289, %290, %291, %292, %293, %294, %295, %296, %297, %298, %299, %300, %301, %302, %303, %304 in 1 : vector<4x32xbf16>, vector<4x32xbf16>, vector<4x32xbf16>, vector<4x32xbf16>, vector<4x32xbf16>, vector<4x32xbf16>, vector<4x32xbf16>, vector<4x32xbf16>, vector<4x32xbf16>, vector<4x32xbf16>, vector<4x32xbf16>, vector<4x32xbf16>, vector<4x32xbf16>, vector<4x32xbf16>, vector<4x32xbf16>, vector<4x32xbf16> -> vector<4x512xbf16>
    %cst_114 = arith.constant dense<0.000000e+00> : vector<4x64xf32>
    %306 = tpu.matmul %305, %2, %cst_114 {dimension_numbers = #tpu.dot_dimension_numbers<[1], [0], [0], [1], [0, 0, 1, 1], [], []>} : vector<4x512xbf16>, vector<512x64xbf16>, vector<4x64xf32> -> vector<4x64xf32>
    %307 = vector.broadcast %3 : vector<1x64xf32> to vector<4x64xf32>
    %308 = arith.addf %306, %307 : vector<4x64xf32>
    %cst_115 = arith.constant 0.000000e+00 : f32
    %309 = vector.broadcast %cst_115 : f32 to vector<4x64xf32>
    %310 = arith.maximumf %308, %309 : vector<4x64xf32>
    %311 = arith.truncf %310 : vector<4x64xf32> to vector<4x64xbf16>
    %312 = vector.extract_strided_slice %242 {offsets = [0, 0], sizes = [2, 64], strides = [1, 1]} : vector<4x64xbf16> to vector<2x64xbf16>
    %313 = vector.extract_strided_slice %242 {offsets = [1, 0], sizes = [2, 64], strides = [1, 1]} : vector<4x64xbf16> to vector<2x64xbf16>
    %314 = vector.extract_strided_slice %242 {offsets = [2, 0], sizes = [2, 64], strides = [1, 1]} : vector<4x64xbf16> to vector<2x64xbf16>
    %315 = vector.extract_strided_slice %265 {offsets = [0, 0], sizes = [2, 64], strides = [1, 1]} : vector<4x64xbf16> to vector<2x64xbf16>
    %316 = vector.extract_strided_slice %265 {offsets = [1, 0], sizes = [2, 64], strides = [1, 1]} : vector<4x64xbf16> to vector<2x64xbf16>
    %317 = vector.extract_strided_slice %265 {offsets = [2, 0], sizes = [2, 64], strides = [1, 1]} : vector<4x64xbf16> to vector<2x64xbf16>
    %318 = vector.extract_strided_slice %288 {offsets = [0, 0], sizes = [2, 64], strides = [1, 1]} : vector<4x64xbf16> to vector<2x64xbf16>
    %319 = vector.extract_strided_slice %288 {offsets = [1, 0], sizes = [2, 64], strides = [1, 1]} : vector<4x64xbf16> to vector<2x64xbf16>
    %320 = vector.extract_strided_slice %288 {offsets = [2, 0], sizes = [2, 64], strides = [1, 1]} : vector<4x64xbf16> to vector<2x64xbf16>
    %321 = tpu.concatenate %312, %313, %314, %315, %316, %317, %318, %319, %320 in 1 : vector<2x64xbf16>, vector<2x64xbf16>, vector<2x64xbf16>, vector<2x64xbf16>, vector<2x64xbf16>, vector<2x64xbf16>, vector<2x64xbf16>, vector<2x64xbf16>, vector<2x64xbf16> -> vector<2x576xbf16>
    %cst_116 = arith.constant dense<0.000000e+00> : vector<2x64xf32>
    %322 = tpu.matmul %321, %4, %cst_116 {dimension_numbers = #tpu.dot_dimension_numbers<[1], [0], [0], [1], [0, 0, 1, 1], [], []>} : vector<2x576xbf16>, vector<576x64xbf16>, vector<2x64xf32> -> vector<2x64xf32>
    %323 = vector.broadcast %5 : vector<1x64xf32> to vector<2x64xf32>
    %324 = arith.addf %322, %323 : vector<2x64xf32>
    %cst_117 = arith.constant 0.000000e+00 : f32
    %325 = vector.broadcast %cst_117 : f32 to vector<2x64xf32>
    %326 = arith.maximumf %324, %325 : vector<2x64xf32>
    %327 = arith.truncf %326 : vector<2x64xf32> to vector<2x64xbf16>
    %328 = vector.extract_strided_slice %265 {offsets = [0, 0], sizes = [2, 64], strides = [1, 1]} : vector<4x64xbf16> to vector<2x64xbf16>
    %329 = vector.extract_strided_slice %265 {offsets = [1, 0], sizes = [2, 64], strides = [1, 1]} : vector<4x64xbf16> to vector<2x64xbf16>
    %330 = vector.extract_strided_slice %265 {offsets = [2, 0], sizes = [2, 64], strides = [1, 1]} : vector<4x64xbf16> to vector<2x64xbf16>
    %331 = vector.extract_strided_slice %288 {offsets = [0, 0], sizes = [2, 64], strides = [1, 1]} : vector<4x64xbf16> to vector<2x64xbf16>
    %332 = vector.extract_strided_slice %288 {offsets = [1, 0], sizes = [2, 64], strides = [1, 1]} : vector<4x64xbf16> to vector<2x64xbf16>
    %333 = vector.extract_strided_slice %288 {offsets = [2, 0], sizes = [2, 64], strides = [1, 1]} : vector<4x64xbf16> to vector<2x64xbf16>
    %334 = vector.extract_strided_slice %311 {offsets = [0, 0], sizes = [2, 64], strides = [1, 1]} : vector<4x64xbf16> to vector<2x64xbf16>
    %335 = vector.extract_strided_slice %311 {offsets = [1, 0], sizes = [2, 64], strides = [1, 1]} : vector<4x64xbf16> to vector<2x64xbf16>
    %336 = vector.extract_strided_slice %311 {offsets = [2, 0], sizes = [2, 64], strides = [1, 1]} : vector<4x64xbf16> to vector<2x64xbf16>
    %337 = tpu.concatenate %328, %329, %330, %331, %332, %333, %334, %335, %336 in 1 : vector<2x64xbf16>, vector<2x64xbf16>, vector<2x64xbf16>, vector<2x64xbf16>, vector<2x64xbf16>, vector<2x64xbf16>, vector<2x64xbf16>, vector<2x64xbf16>, vector<2x64xbf16> -> vector<2x576xbf16>
    %cst_118 = arith.constant dense<0.000000e+00> : vector<2x64xf32>
    %338 = tpu.matmul %337, %4, %cst_118 {dimension_numbers = #tpu.dot_dimension_numbers<[1], [0], [0], [1], [0, 0, 1, 1], [], []>} : vector<2x576xbf16>, vector<576x64xbf16>, vector<2x64xf32> -> vector<2x64xf32>
    %339 = vector.broadcast %5 : vector<1x64xf32> to vector<2x64xf32>
    %340 = arith.addf %338, %339 : vector<2x64xf32>
    %cst_119 = arith.constant 0.000000e+00 : f32
    %341 = vector.broadcast %cst_119 : f32 to vector<2x64xf32>
    %342 = arith.maximumf %340, %341 : vector<2x64xf32>
    %343 = arith.truncf %342 : vector<2x64xf32> to vector<2x64xbf16>
    %344 = vector.extract_strided_slice %327 {offsets = [0, 0], sizes = [1, 64], strides = [1, 1]} : vector<2x64xbf16> to vector<1x64xbf16>
    %345 = vector.extract_strided_slice %327 {offsets = [1, 0], sizes = [1, 64], strides = [1, 1]} : vector<2x64xbf16> to vector<1x64xbf16>
    %346 = vector.extract_strided_slice %343 {offsets = [0, 0], sizes = [1, 64], strides = [1, 1]} : vector<2x64xbf16> to vector<1x64xbf16>
    %347 = vector.extract_strided_slice %343 {offsets = [1, 0], sizes = [1, 64], strides = [1, 1]} : vector<2x64xbf16> to vector<1x64xbf16>
    %348 = tpu.concatenate %344, %345, %346, %347 in 1 : vector<1x64xbf16>, vector<1x64xbf16>, vector<1x64xbf16>, vector<1x64xbf16> -> vector<1x256xbf16>
    %c1_120 = arith.constant 1 : index
    %c0_121 = arith.constant 0 : index
    %c0_122 = arith.constant 0 : index
    %c0_123 = arith.constant 0 : index
    %349 = vector.load %arg1[%c1_120, %c0_121, %c0_122, %c0_123] : memref<2x11x6x64xbf16, #tpu.memory_space<vmem>>, vector<1x1x6x64xbf16>
    %350 = vector.shape_cast %349 : vector<1x1x6x64xbf16> to vector<6x64xbf16>
    %c1_124 = arith.constant 1 : index
    %c1_125 = arith.constant 1 : index
    %c0_126 = arith.constant 0 : index
    %c0_127 = arith.constant 0 : index
    %351 = vector.load %arg1[%c1_124, %c1_125, %c0_126, %c0_127] : memref<2x11x6x64xbf16, #tpu.memory_space<vmem>>, vector<1x1x6x64xbf16>
    %352 = vector.shape_cast %351 : vector<1x1x6x64xbf16> to vector<6x64xbf16>
    %c1_128 = arith.constant 1 : index
    %c2_129 = arith.constant 2 : index
    %c0_130 = arith.constant 0 : index
    %c0_131 = arith.constant 0 : index
    %353 = vector.load %arg1[%c1_128, %c2_129, %c0_130, %c0_131] : memref<2x11x6x64xbf16, #tpu.memory_space<vmem>>, vector<1x1x6x64xbf16>
    %354 = vector.shape_cast %353 : vector<1x1x6x64xbf16> to vector<6x64xbf16>
    %c1_132 = arith.constant 1 : index
    %c3_133 = arith.constant 3 : index
    %c0_134 = arith.constant 0 : index
    %c0_135 = arith.constant 0 : index
    %355 = vector.load %arg1[%c1_132, %c3_133, %c0_134, %c0_135] : memref<2x11x6x64xbf16, #tpu.memory_space<vmem>>, vector<1x1x6x64xbf16>
    %356 = vector.shape_cast %355 : vector<1x1x6x64xbf16> to vector<6x64xbf16>
    %c1_136 = arith.constant 1 : index
    %c4_137 = arith.constant 4 : index
    %c0_138 = arith.constant 0 : index
    %c0_139 = arith.constant 0 : index
    %357 = vector.load %arg1[%c1_136, %c4_137, %c0_138, %c0_139] : memref<2x11x6x64xbf16, #tpu.memory_space<vmem>>, vector<1x1x6x64xbf16>
    %358 = vector.shape_cast %357 : vector<1x1x6x64xbf16> to vector<6x64xbf16>
    %c1_140 = arith.constant 1 : index
    %c5_141 = arith.constant 5 : index
    %c0_142 = arith.constant 0 : index
    %c0_143 = arith.constant 0 : index
    %359 = vector.load %arg1[%c1_140, %c5_141, %c0_142, %c0_143] : memref<2x11x6x64xbf16, #tpu.memory_space<vmem>>, vector<1x1x6x64xbf16>
    %360 = vector.shape_cast %359 : vector<1x1x6x64xbf16> to vector<6x64xbf16>
    %c1_144 = arith.constant 1 : index
    %c6_145 = arith.constant 6 : index
    %c0_146 = arith.constant 0 : index
    %c0_147 = arith.constant 0 : index
    %361 = vector.load %arg1[%c1_144, %c6_145, %c0_146, %c0_147] : memref<2x11x6x64xbf16, #tpu.memory_space<vmem>>, vector<1x1x6x64xbf16>
    %362 = vector.shape_cast %361 : vector<1x1x6x64xbf16> to vector<6x64xbf16>
    %c1_148 = arith.constant 1 : index
    %c7_149 = arith.constant 7 : index
    %c0_150 = arith.constant 0 : index
    %c0_151 = arith.constant 0 : index
    %363 = vector.load %arg1[%c1_148, %c7_149, %c0_150, %c0_151] : memref<2x11x6x64xbf16, #tpu.memory_space<vmem>>, vector<1x1x6x64xbf16>
    %364 = vector.shape_cast %363 : vector<1x1x6x64xbf16> to vector<6x64xbf16>
    %c1_152 = arith.constant 1 : index
    %c8_153 = arith.constant 8 : index
    %c0_154 = arith.constant 0 : index
    %c0_155 = arith.constant 0 : index
    %365 = vector.load %arg1[%c1_152, %c8_153, %c0_154, %c0_155] : memref<2x11x6x64xbf16, #tpu.memory_space<vmem>>, vector<1x1x6x64xbf16>
    %366 = vector.shape_cast %365 : vector<1x1x6x64xbf16> to vector<6x64xbf16>
    %c1_156 = arith.constant 1 : index
    %c9_157 = arith.constant 9 : index
    %c0_158 = arith.constant 0 : index
    %c0_159 = arith.constant 0 : index
    %367 = vector.load %arg1[%c1_156, %c9_157, %c0_158, %c0_159] : memref<2x11x6x64xbf16, #tpu.memory_space<vmem>>, vector<1x1x6x64xbf16>
    %368 = vector.shape_cast %367 : vector<1x1x6x64xbf16> to vector<6x64xbf16>
    %c1_160 = arith.constant 1 : index
    %c10_161 = arith.constant 10 : index
    %c0_162 = arith.constant 0 : index
    %c0_163 = arith.constant 0 : index
    %369 = vector.load %arg1[%c1_160, %c10_161, %c0_162, %c0_163] : memref<2x11x6x64xbf16, #tpu.memory_space<vmem>>, vector<1x1x6x64xbf16>
    %370 = vector.shape_cast %369 : vector<1x1x6x64xbf16> to vector<6x64xbf16>
    %c1_164 = arith.constant 1 : index
    %c0_165 = arith.constant 0 : index
    %c0_166 = arith.constant 0 : index
    %c0_167 = arith.constant 0 : index
    %371 = vector.load %arg2[%c1_164, %c0_165, %c0_166, %c0_167] : memref<2x11x6x64xbf16, #tpu.memory_space<vmem>>, vector<1x1x6x64xbf16>
    %372 = vector.shape_cast %371 : vector<1x1x6x64xbf16> to vector<6x64xbf16>
    %c1_168 = arith.constant 1 : index
    %c1_169 = arith.constant 1 : index
    %c0_170 = arith.constant 0 : index
    %c0_171 = arith.constant 0 : index
    %373 = vector.load %arg2[%c1_168, %c1_169, %c0_170, %c0_171] : memref<2x11x6x64xbf16, #tpu.memory_space<vmem>>, vector<1x1x6x64xbf16>
    %374 = vector.shape_cast %373 : vector<1x1x6x64xbf16> to vector<6x64xbf16>
    %c1_172 = arith.constant 1 : index
    %c2_173 = arith.constant 2 : index
    %c0_174 = arith.constant 0 : index
    %c0_175 = arith.constant 0 : index
    %375 = vector.load %arg2[%c1_172, %c2_173, %c0_174, %c0_175] : memref<2x11x6x64xbf16, #tpu.memory_space<vmem>>, vector<1x1x6x64xbf16>
    %376 = vector.shape_cast %375 : vector<1x1x6x64xbf16> to vector<6x64xbf16>
    %c1_176 = arith.constant 1 : index
    %c3_177 = arith.constant 3 : index
    %c0_178 = arith.constant 0 : index
    %c0_179 = arith.constant 0 : index
    %377 = vector.load %arg2[%c1_176, %c3_177, %c0_178, %c0_179] : memref<2x11x6x64xbf16, #tpu.memory_space<vmem>>, vector<1x1x6x64xbf16>
    %378 = vector.shape_cast %377 : vector<1x1x6x64xbf16> to vector<6x64xbf16>
    %c1_180 = arith.constant 1 : index
    %c4_181 = arith.constant 4 : index
    %c0_182 = arith.constant 0 : index
    %c0_183 = arith.constant 0 : index
    %379 = vector.load %arg2[%c1_180, %c4_181, %c0_182, %c0_183] : memref<2x11x6x64xbf16, #tpu.memory_space<vmem>>, vector<1x1x6x64xbf16>
    %380 = vector.shape_cast %379 : vector<1x1x6x64xbf16> to vector<6x64xbf16>
    %c1_184 = arith.constant 1 : index
    %c5_185 = arith.constant 5 : index
    %c0_186 = arith.constant 0 : index
    %c0_187 = arith.constant 0 : index
    %381 = vector.load %arg2[%c1_184, %c5_185, %c0_186, %c0_187] : memref<2x11x6x64xbf16, #tpu.memory_space<vmem>>, vector<1x1x6x64xbf16>
    %382 = vector.shape_cast %381 : vector<1x1x6x64xbf16> to vector<6x64xbf16>
    %c1_188 = arith.constant 1 : index
    %c6_189 = arith.constant 6 : index
    %c0_190 = arith.constant 0 : index
    %c0_191 = arith.constant 0 : index
    %383 = vector.load %arg2[%c1_188, %c6_189, %c0_190, %c0_191] : memref<2x11x6x64xbf16, #tpu.memory_space<vmem>>, vector<1x1x6x64xbf16>
    %384 = vector.shape_cast %383 : vector<1x1x6x64xbf16> to vector<6x64xbf16>
    %c1_192 = arith.constant 1 : index
    %c7_193 = arith.constant 7 : index
    %c0_194 = arith.constant 0 : index
    %c0_195 = arith.constant 0 : index
    %385 = vector.load %arg2[%c1_192, %c7_193, %c0_194, %c0_195] : memref<2x11x6x64xbf16, #tpu.memory_space<vmem>>, vector<1x1x6x64xbf16>
    %386 = vector.shape_cast %385 : vector<1x1x6x64xbf16> to vector<6x64xbf16>
    %c1_196 = arith.constant 1 : index
    %c8_197 = arith.constant 8 : index
    %c0_198 = arith.constant 0 : index
    %c0_199 = arith.constant 0 : index
    %387 = vector.load %arg2[%c1_196, %c8_197, %c0_198, %c0_199] : memref<2x11x6x64xbf16, #tpu.memory_space<vmem>>, vector<1x1x6x64xbf16>
    %388 = vector.shape_cast %387 : vector<1x1x6x64xbf16> to vector<6x64xbf16>
    %c1_200 = arith.constant 1 : index
    %c9_201 = arith.constant 9 : index
    %c0_202 = arith.constant 0 : index
    %c0_203 = arith.constant 0 : index
    %389 = vector.load %arg2[%c1_200, %c9_201, %c0_202, %c0_203] : memref<2x11x6x64xbf16, #tpu.memory_space<vmem>>, vector<1x1x6x64xbf16>
    %390 = vector.shape_cast %389 : vector<1x1x6x64xbf16> to vector<6x64xbf16>
    %c1_204 = arith.constant 1 : index
    %c10_205 = arith.constant 10 : index
    %c0_206 = arith.constant 0 : index
    %c0_207 = arith.constant 0 : index
    %391 = vector.load %arg2[%c1_204, %c10_205, %c0_206, %c0_207] : memref<2x11x6x64xbf16, #tpu.memory_space<vmem>>, vector<1x1x6x64xbf16>
    %392 = vector.shape_cast %391 : vector<1x1x6x64xbf16> to vector<6x64xbf16>
    %393 = vector.extract_strided_slice %350 {offsets = [0, 0], sizes = [5, 64], strides = [1, 1]} : vector<6x64xbf16> to vector<5x64xbf16>
    %394 = vector.extract_strided_slice %372 {offsets = [0, 0], sizes = [5, 64], strides = [1, 1]} : vector<6x64xbf16> to vector<5x64xbf16>
    %395 = vector.extract_strided_slice %352 {offsets = [0, 0], sizes = [5, 64], strides = [1, 1]} : vector<6x64xbf16> to vector<5x64xbf16>
    %396 = vector.extract_strided_slice %374 {offsets = [0, 0], sizes = [5, 64], strides = [1, 1]} : vector<6x64xbf16> to vector<5x64xbf16>
    %397 = tpu.concatenate %393, %394, %395, %396 in 1 : vector<5x64xbf16>, vector<5x64xbf16>, vector<5x64xbf16>, vector<5x64xbf16> -> vector<5x256xbf16>
    %398 = vector.extract_strided_slice %372 {offsets = [0, 0], sizes = [5, 64], strides = [1, 1]} : vector<6x64xbf16> to vector<5x64xbf16>
    %399 = vector.extract_strided_slice %350 {offsets = [1, 0], sizes = [5, 64], strides = [1, 1]} : vector<6x64xbf16> to vector<5x64xbf16>
    %400 = vector.extract_strided_slice %374 {offsets = [0, 0], sizes = [5, 64], strides = [1, 1]} : vector<6x64xbf16> to vector<5x64xbf16>
    %401 = vector.extract_strided_slice %352 {offsets = [1, 0], sizes = [5, 64], strides = [1, 1]} : vector<6x64xbf16> to vector<5x64xbf16>
    %402 = tpu.concatenate %398, %399, %400, %401 in 1 : vector<5x64xbf16>, vector<5x64xbf16>, vector<5x64xbf16>, vector<5x64xbf16> -> vector<5x256xbf16>
    %403 = tpu.concatenate %397, %402 in 0 : vector<5x256xbf16>, vector<5x256xbf16> -> vector<10x256xbf16>
    %cst_208 = arith.constant dense<0.000000e+00> : vector<10x32xf32>
    %404 = tpu.matmul %403, %0, %cst_208 {dimension_numbers = #tpu.dot_dimension_numbers<[1], [0], [0], [1], [0, 0, 1, 1], [], []>} : vector<10x256xbf16>, vector<256x32xbf16>, vector<10x32xf32> -> vector<10x32xf32>
    %405 = vector.broadcast %1 : vector<1x32xf32> to vector<10x32xf32>
    %406 = arith.addf %404, %405 : vector<10x32xf32>
    %cst_209 = arith.constant 0.000000e+00 : f32
    %407 = vector.broadcast %cst_209 : f32 to vector<10x32xf32>
    %408 = arith.maximumf %406, %407 : vector<10x32xf32>
    %409 = arith.truncf %408 : vector<10x32xf32> to vector<10x32xbf16>
    %410 = vector.extract_strided_slice %352 {offsets = [0, 0], sizes = [5, 64], strides = [1, 1]} : vector<6x64xbf16> to vector<5x64xbf16>
    %411 = vector.extract_strided_slice %374 {offsets = [0, 0], sizes = [5, 64], strides = [1, 1]} : vector<6x64xbf16> to vector<5x64xbf16>
    %412 = vector.extract_strided_slice %354 {offsets = [0, 0], sizes = [5, 64], strides = [1, 1]} : vector<6x64xbf16> to vector<5x64xbf16>
    %413 = vector.extract_strided_slice %376 {offsets = [0, 0], sizes = [5, 64], strides = [1, 1]} : vector<6x64xbf16> to vector<5x64xbf16>
    %414 = tpu.concatenate %410, %411, %412, %413 in 1 : vector<5x64xbf16>, vector<5x64xbf16>, vector<5x64xbf16>, vector<5x64xbf16> -> vector<5x256xbf16>
    %415 = vector.extract_strided_slice %374 {offsets = [0, 0], sizes = [5, 64], strides = [1, 1]} : vector<6x64xbf16> to vector<5x64xbf16>
    %416 = vector.extract_strided_slice %352 {offsets = [1, 0], sizes = [5, 64], strides = [1, 1]} : vector<6x64xbf16> to vector<5x64xbf16>
    %417 = vector.extract_strided_slice %376 {offsets = [0, 0], sizes = [5, 64], strides = [1, 1]} : vector<6x64xbf16> to vector<5x64xbf16>
    %418 = vector.extract_strided_slice %354 {offsets = [1, 0], sizes = [5, 64], strides = [1, 1]} : vector<6x64xbf16> to vector<5x64xbf16>
    %419 = tpu.concatenate %415, %416, %417, %418 in 1 : vector<5x64xbf16>, vector<5x64xbf16>, vector<5x64xbf16>, vector<5x64xbf16> -> vector<5x256xbf16>
    %420 = tpu.concatenate %414, %419 in 0 : vector<5x256xbf16>, vector<5x256xbf16> -> vector<10x256xbf16>
    %cst_210 = arith.constant dense<0.000000e+00> : vector<10x32xf32>
    %421 = tpu.matmul %420, %0, %cst_210 {dimension_numbers = #tpu.dot_dimension_numbers<[1], [0], [0], [1], [0, 0, 1, 1], [], []>} : vector<10x256xbf16>, vector<256x32xbf16>, vector<10x32xf32> -> vector<10x32xf32>
    %422 = vector.broadcast %1 : vector<1x32xf32> to vector<10x32xf32>
    %423 = arith.addf %421, %422 : vector<10x32xf32>
    %cst_211 = arith.constant 0.000000e+00 : f32
    %424 = vector.broadcast %cst_211 : f32 to vector<10x32xf32>
    %425 = arith.maximumf %423, %424 : vector<10x32xf32>
    %426 = arith.truncf %425 : vector<10x32xf32> to vector<10x32xbf16>
    %427 = vector.extract_strided_slice %354 {offsets = [0, 0], sizes = [5, 64], strides = [1, 1]} : vector<6x64xbf16> to vector<5x64xbf16>
    %428 = vector.extract_strided_slice %376 {offsets = [0, 0], sizes = [5, 64], strides = [1, 1]} : vector<6x64xbf16> to vector<5x64xbf16>
    %429 = vector.extract_strided_slice %356 {offsets = [0, 0], sizes = [5, 64], strides = [1, 1]} : vector<6x64xbf16> to vector<5x64xbf16>
    %430 = vector.extract_strided_slice %378 {offsets = [0, 0], sizes = [5, 64], strides = [1, 1]} : vector<6x64xbf16> to vector<5x64xbf16>
    %431 = tpu.concatenate %427, %428, %429, %430 in 1 : vector<5x64xbf16>, vector<5x64xbf16>, vector<5x64xbf16>, vector<5x64xbf16> -> vector<5x256xbf16>
    %432 = vector.extract_strided_slice %376 {offsets = [0, 0], sizes = [5, 64], strides = [1, 1]} : vector<6x64xbf16> to vector<5x64xbf16>
    %433 = vector.extract_strided_slice %354 {offsets = [1, 0], sizes = [5, 64], strides = [1, 1]} : vector<6x64xbf16> to vector<5x64xbf16>
    %434 = vector.extract_strided_slice %378 {offsets = [0, 0], sizes = [5, 64], strides = [1, 1]} : vector<6x64xbf16> to vector<5x64xbf16>
    %435 = vector.extract_strided_slice %356 {offsets = [1, 0], sizes = [5, 64], strides = [1, 1]} : vector<6x64xbf16> to vector<5x64xbf16>
    %436 = tpu.concatenate %432, %433, %434, %435 in 1 : vector<5x64xbf16>, vector<5x64xbf16>, vector<5x64xbf16>, vector<5x64xbf16> -> vector<5x256xbf16>
    %437 = tpu.concatenate %431, %436 in 0 : vector<5x256xbf16>, vector<5x256xbf16> -> vector<10x256xbf16>
    %cst_212 = arith.constant dense<0.000000e+00> : vector<10x32xf32>
    %438 = tpu.matmul %437, %0, %cst_212 {dimension_numbers = #tpu.dot_dimension_numbers<[1], [0], [0], [1], [0, 0, 1, 1], [], []>} : vector<10x256xbf16>, vector<256x32xbf16>, vector<10x32xf32> -> vector<10x32xf32>
    %439 = vector.broadcast %1 : vector<1x32xf32> to vector<10x32xf32>
    %440 = arith.addf %438, %439 : vector<10x32xf32>
    %cst_213 = arith.constant 0.000000e+00 : f32
    %441 = vector.broadcast %cst_213 : f32 to vector<10x32xf32>
    %442 = arith.maximumf %440, %441 : vector<10x32xf32>
    %443 = arith.truncf %442 : vector<10x32xf32> to vector<10x32xbf16>
    %444 = vector.extract_strided_slice %356 {offsets = [0, 0], sizes = [5, 64], strides = [1, 1]} : vector<6x64xbf16> to vector<5x64xbf16>
    %445 = vector.extract_strided_slice %378 {offsets = [0, 0], sizes = [5, 64], strides = [1, 1]} : vector<6x64xbf16> to vector<5x64xbf16>
    %446 = vector.extract_strided_slice %358 {offsets = [0, 0], sizes = [5, 64], strides = [1, 1]} : vector<6x64xbf16> to vector<5x64xbf16>
    %447 = vector.extract_strided_slice %380 {offsets = [0, 0], sizes = [5, 64], strides = [1, 1]} : vector<6x64xbf16> to vector<5x64xbf16>
    %448 = tpu.concatenate %444, %445, %446, %447 in 1 : vector<5x64xbf16>, vector<5x64xbf16>, vector<5x64xbf16>, vector<5x64xbf16> -> vector<5x256xbf16>
    %449 = vector.extract_strided_slice %378 {offsets = [0, 0], sizes = [5, 64], strides = [1, 1]} : vector<6x64xbf16> to vector<5x64xbf16>
    %450 = vector.extract_strided_slice %356 {offsets = [1, 0], sizes = [5, 64], strides = [1, 1]} : vector<6x64xbf16> to vector<5x64xbf16>
    %451 = vector.extract_strided_slice %380 {offsets = [0, 0], sizes = [5, 64], strides = [1, 1]} : vector<6x64xbf16> to vector<5x64xbf16>
    %452 = vector.extract_strided_slice %358 {offsets = [1, 0], sizes = [5, 64], strides = [1, 1]} : vector<6x64xbf16> to vector<5x64xbf16>
    %453 = tpu.concatenate %449, %450, %451, %452 in 1 : vector<5x64xbf16>, vector<5x64xbf16>, vector<5x64xbf16>, vector<5x64xbf16> -> vector<5x256xbf16>
    %454 = tpu.concatenate %448, %453 in 0 : vector<5x256xbf16>, vector<5x256xbf16> -> vector<10x256xbf16>
    %cst_214 = arith.constant dense<0.000000e+00> : vector<10x32xf32>
    %455 = tpu.matmul %454, %0, %cst_214 {dimension_numbers = #tpu.dot_dimension_numbers<[1], [0], [0], [1], [0, 0, 1, 1], [], []>} : vector<10x256xbf16>, vector<256x32xbf16>, vector<10x32xf32> -> vector<10x32xf32>
    %456 = vector.broadcast %1 : vector<1x32xf32> to vector<10x32xf32>
    %457 = arith.addf %455, %456 : vector<10x32xf32>
    %cst_215 = arith.constant 0.000000e+00 : f32
    %458 = vector.broadcast %cst_215 : f32 to vector<10x32xf32>
    %459 = arith.maximumf %457, %458 : vector<10x32xf32>
    %460 = arith.truncf %459 : vector<10x32xf32> to vector<10x32xbf16>
    %461 = vector.extract_strided_slice %358 {offsets = [0, 0], sizes = [5, 64], strides = [1, 1]} : vector<6x64xbf16> to vector<5x64xbf16>
    %462 = vector.extract_strided_slice %380 {offsets = [0, 0], sizes = [5, 64], strides = [1, 1]} : vector<6x64xbf16> to vector<5x64xbf16>
    %463 = vector.extract_strided_slice %360 {offsets = [0, 0], sizes = [5, 64], strides = [1, 1]} : vector<6x64xbf16> to vector<5x64xbf16>
    %464 = vector.extract_strided_slice %382 {offsets = [0, 0], sizes = [5, 64], strides = [1, 1]} : vector<6x64xbf16> to vector<5x64xbf16>
    %465 = tpu.concatenate %461, %462, %463, %464 in 1 : vector<5x64xbf16>, vector<5x64xbf16>, vector<5x64xbf16>, vector<5x64xbf16> -> vector<5x256xbf16>
    %466 = vector.extract_strided_slice %380 {offsets = [0, 0], sizes = [5, 64], strides = [1, 1]} : vector<6x64xbf16> to vector<5x64xbf16>
    %467 = vector.extract_strided_slice %358 {offsets = [1, 0], sizes = [5, 64], strides = [1, 1]} : vector<6x64xbf16> to vector<5x64xbf16>
    %468 = vector.extract_strided_slice %382 {offsets = [0, 0], sizes = [5, 64], strides = [1, 1]} : vector<6x64xbf16> to vector<5x64xbf16>
    %469 = vector.extract_strided_slice %360 {offsets = [1, 0], sizes = [5, 64], strides = [1, 1]} : vector<6x64xbf16> to vector<5x64xbf16>
    %470 = tpu.concatenate %466, %467, %468, %469 in 1 : vector<5x64xbf16>, vector<5x64xbf16>, vector<5x64xbf16>, vector<5x64xbf16> -> vector<5x256xbf16>
    %471 = tpu.concatenate %465, %470 in 0 : vector<5x256xbf16>, vector<5x256xbf16> -> vector<10x256xbf16>
    %cst_216 = arith.constant dense<0.000000e+00> : vector<10x32xf32>
    %472 = tpu.matmul %471, %0, %cst_216 {dimension_numbers = #tpu.dot_dimension_numbers<[1], [0], [0], [1], [0, 0, 1, 1], [], []>} : vector<10x256xbf16>, vector<256x32xbf16>, vector<10x32xf32> -> vector<10x32xf32>
    %473 = vector.broadcast %1 : vector<1x32xf32> to vector<10x32xf32>
    %474 = arith.addf %472, %473 : vector<10x32xf32>
    %cst_217 = arith.constant 0.000000e+00 : f32
    %475 = vector.broadcast %cst_217 : f32 to vector<10x32xf32>
    %476 = arith.maximumf %474, %475 : vector<10x32xf32>
    %477 = arith.truncf %476 : vector<10x32xf32> to vector<10x32xbf16>
    %478 = vector.extract_strided_slice %360 {offsets = [0, 0], sizes = [5, 64], strides = [1, 1]} : vector<6x64xbf16> to vector<5x64xbf16>
    %479 = vector.extract_strided_slice %382 {offsets = [0, 0], sizes = [5, 64], strides = [1, 1]} : vector<6x64xbf16> to vector<5x64xbf16>
    %480 = vector.extract_strided_slice %362 {offsets = [0, 0], sizes = [5, 64], strides = [1, 1]} : vector<6x64xbf16> to vector<5x64xbf16>
    %481 = vector.extract_strided_slice %384 {offsets = [0, 0], sizes = [5, 64], strides = [1, 1]} : vector<6x64xbf16> to vector<5x64xbf16>
    %482 = tpu.concatenate %478, %479, %480, %481 in 1 : vector<5x64xbf16>, vector<5x64xbf16>, vector<5x64xbf16>, vector<5x64xbf16> -> vector<5x256xbf16>
    %483 = vector.extract_strided_slice %382 {offsets = [0, 0], sizes = [5, 64], strides = [1, 1]} : vector<6x64xbf16> to vector<5x64xbf16>
    %484 = vector.extract_strided_slice %360 {offsets = [1, 0], sizes = [5, 64], strides = [1, 1]} : vector<6x64xbf16> to vector<5x64xbf16>
    %485 = vector.extract_strided_slice %384 {offsets = [0, 0], sizes = [5, 64], strides = [1, 1]} : vector<6x64xbf16> to vector<5x64xbf16>
    %486 = vector.extract_strided_slice %362 {offsets = [1, 0], sizes = [5, 64], strides = [1, 1]} : vector<6x64xbf16> to vector<5x64xbf16>
    %487 = tpu.concatenate %483, %484, %485, %486 in 1 : vector<5x64xbf16>, vector<5x64xbf16>, vector<5x64xbf16>, vector<5x64xbf16> -> vector<5x256xbf16>
    %488 = tpu.concatenate %482, %487 in 0 : vector<5x256xbf16>, vector<5x256xbf16> -> vector<10x256xbf16>
    %cst_218 = arith.constant dense<0.000000e+00> : vector<10x32xf32>
    %489 = tpu.matmul %488, %0, %cst_218 {dimension_numbers = #tpu.dot_dimension_numbers<[1], [0], [0], [1], [0, 0, 1, 1], [], []>} : vector<10x256xbf16>, vector<256x32xbf16>, vector<10x32xf32> -> vector<10x32xf32>
    %490 = vector.broadcast %1 : vector<1x32xf32> to vector<10x32xf32>
    %491 = arith.addf %489, %490 : vector<10x32xf32>
    %cst_219 = arith.constant 0.000000e+00 : f32
    %492 = vector.broadcast %cst_219 : f32 to vector<10x32xf32>
    %493 = arith.maximumf %491, %492 : vector<10x32xf32>
    %494 = arith.truncf %493 : vector<10x32xf32> to vector<10x32xbf16>
    %495 = vector.extract_strided_slice %362 {offsets = [0, 0], sizes = [5, 64], strides = [1, 1]} : vector<6x64xbf16> to vector<5x64xbf16>
    %496 = vector.extract_strided_slice %384 {offsets = [0, 0], sizes = [5, 64], strides = [1, 1]} : vector<6x64xbf16> to vector<5x64xbf16>
    %497 = vector.extract_strided_slice %364 {offsets = [0, 0], sizes = [5, 64], strides = [1, 1]} : vector<6x64xbf16> to vector<5x64xbf16>
    %498 = vector.extract_strided_slice %386 {offsets = [0, 0], sizes = [5, 64], strides = [1, 1]} : vector<6x64xbf16> to vector<5x64xbf16>
    %499 = tpu.concatenate %495, %496, %497, %498 in 1 : vector<5x64xbf16>, vector<5x64xbf16>, vector<5x64xbf16>, vector<5x64xbf16> -> vector<5x256xbf16>
    %500 = vector.extract_strided_slice %384 {offsets = [0, 0], sizes = [5, 64], strides = [1, 1]} : vector<6x64xbf16> to vector<5x64xbf16>
    %501 = vector.extract_strided_slice %362 {offsets = [1, 0], sizes = [5, 64], strides = [1, 1]} : vector<6x64xbf16> to vector<5x64xbf16>
    %502 = vector.extract_strided_slice %386 {offsets = [0, 0], sizes = [5, 64], strides = [1, 1]} : vector<6x64xbf16> to vector<5x64xbf16>
    %503 = vector.extract_strided_slice %364 {offsets = [1, 0], sizes = [5, 64], strides = [1, 1]} : vector<6x64xbf16> to vector<5x64xbf16>
    %504 = tpu.concatenate %500, %501, %502, %503 in 1 : vector<5x64xbf16>, vector<5x64xbf16>, vector<5x64xbf16>, vector<5x64xbf16> -> vector<5x256xbf16>
    %505 = tpu.concatenate %499, %504 in 0 : vector<5x256xbf16>, vector<5x256xbf16> -> vector<10x256xbf16>
    %cst_220 = arith.constant dense<0.000000e+00> : vector<10x32xf32>
    %506 = tpu.matmul %505, %0, %cst_220 {dimension_numbers = #tpu.dot_dimension_numbers<[1], [0], [0], [1], [0, 0, 1, 1], [], []>} : vector<10x256xbf16>, vector<256x32xbf16>, vector<10x32xf32> -> vector<10x32xf32>
    %507 = vector.broadcast %1 : vector<1x32xf32> to vector<10x32xf32>
    %508 = arith.addf %506, %507 : vector<10x32xf32>
    %cst_221 = arith.constant 0.000000e+00 : f32
    %509 = vector.broadcast %cst_221 : f32 to vector<10x32xf32>
    %510 = arith.maximumf %508, %509 : vector<10x32xf32>
    %511 = arith.truncf %510 : vector<10x32xf32> to vector<10x32xbf16>
    %512 = vector.extract_strided_slice %364 {offsets = [0, 0], sizes = [5, 64], strides = [1, 1]} : vector<6x64xbf16> to vector<5x64xbf16>
    %513 = vector.extract_strided_slice %386 {offsets = [0, 0], sizes = [5, 64], strides = [1, 1]} : vector<6x64xbf16> to vector<5x64xbf16>
    %514 = vector.extract_strided_slice %366 {offsets = [0, 0], sizes = [5, 64], strides = [1, 1]} : vector<6x64xbf16> to vector<5x64xbf16>
    %515 = vector.extract_strided_slice %388 {offsets = [0, 0], sizes = [5, 64], strides = [1, 1]} : vector<6x64xbf16> to vector<5x64xbf16>
    %516 = tpu.concatenate %512, %513, %514, %515 in 1 : vector<5x64xbf16>, vector<5x64xbf16>, vector<5x64xbf16>, vector<5x64xbf16> -> vector<5x256xbf16>
    %517 = vector.extract_strided_slice %386 {offsets = [0, 0], sizes = [5, 64], strides = [1, 1]} : vector<6x64xbf16> to vector<5x64xbf16>
    %518 = vector.extract_strided_slice %364 {offsets = [1, 0], sizes = [5, 64], strides = [1, 1]} : vector<6x64xbf16> to vector<5x64xbf16>
    %519 = vector.extract_strided_slice %388 {offsets = [0, 0], sizes = [5, 64], strides = [1, 1]} : vector<6x64xbf16> to vector<5x64xbf16>
    %520 = vector.extract_strided_slice %366 {offsets = [1, 0], sizes = [5, 64], strides = [1, 1]} : vector<6x64xbf16> to vector<5x64xbf16>
    %521 = tpu.concatenate %517, %518, %519, %520 in 1 : vector<5x64xbf16>, vector<5x64xbf16>, vector<5x64xbf16>, vector<5x64xbf16> -> vector<5x256xbf16>
    %522 = tpu.concatenate %516, %521 in 0 : vector<5x256xbf16>, vector<5x256xbf16> -> vector<10x256xbf16>
    %cst_222 = arith.constant dense<0.000000e+00> : vector<10x32xf32>
    %523 = tpu.matmul %522, %0, %cst_222 {dimension_numbers = #tpu.dot_dimension_numbers<[1], [0], [0], [1], [0, 0, 1, 1], [], []>} : vector<10x256xbf16>, vector<256x32xbf16>, vector<10x32xf32> -> vector<10x32xf32>
    %524 = vector.broadcast %1 : vector<1x32xf32> to vector<10x32xf32>
    %525 = arith.addf %523, %524 : vector<10x32xf32>
    %cst_223 = arith.constant 0.000000e+00 : f32
    %526 = vector.broadcast %cst_223 : f32 to vector<10x32xf32>
    %527 = arith.maximumf %525, %526 : vector<10x32xf32>
    %528 = arith.truncf %527 : vector<10x32xf32> to vector<10x32xbf16>
    %529 = vector.extract_strided_slice %366 {offsets = [0, 0], sizes = [5, 64], strides = [1, 1]} : vector<6x64xbf16> to vector<5x64xbf16>
    %530 = vector.extract_strided_slice %388 {offsets = [0, 0], sizes = [5, 64], strides = [1, 1]} : vector<6x64xbf16> to vector<5x64xbf16>
    %531 = vector.extract_strided_slice %368 {offsets = [0, 0], sizes = [5, 64], strides = [1, 1]} : vector<6x64xbf16> to vector<5x64xbf16>
    %532 = vector.extract_strided_slice %390 {offsets = [0, 0], sizes = [5, 64], strides = [1, 1]} : vector<6x64xbf16> to vector<5x64xbf16>
    %533 = tpu.concatenate %529, %530, %531, %532 in 1 : vector<5x64xbf16>, vector<5x64xbf16>, vector<5x64xbf16>, vector<5x64xbf16> -> vector<5x256xbf16>
    %534 = vector.extract_strided_slice %388 {offsets = [0, 0], sizes = [5, 64], strides = [1, 1]} : vector<6x64xbf16> to vector<5x64xbf16>
    %535 = vector.extract_strided_slice %366 {offsets = [1, 0], sizes = [5, 64], strides = [1, 1]} : vector<6x64xbf16> to vector<5x64xbf16>
    %536 = vector.extract_strided_slice %390 {offsets = [0, 0], sizes = [5, 64], strides = [1, 1]} : vector<6x64xbf16> to vector<5x64xbf16>
    %537 = vector.extract_strided_slice %368 {offsets = [1, 0], sizes = [5, 64], strides = [1, 1]} : vector<6x64xbf16> to vector<5x64xbf16>
    %538 = tpu.concatenate %534, %535, %536, %537 in 1 : vector<5x64xbf16>, vector<5x64xbf16>, vector<5x64xbf16>, vector<5x64xbf16> -> vector<5x256xbf16>
    %539 = tpu.concatenate %533, %538 in 0 : vector<5x256xbf16>, vector<5x256xbf16> -> vector<10x256xbf16>
    %cst_224 = arith.constant dense<0.000000e+00> : vector<10x32xf32>
    %540 = tpu.matmul %539, %0, %cst_224 {dimension_numbers = #tpu.dot_dimension_numbers<[1], [0], [0], [1], [0, 0, 1, 1], [], []>} : vector<10x256xbf16>, vector<256x32xbf16>, vector<10x32xf32> -> vector<10x32xf32>
    %541 = vector.broadcast %1 : vector<1x32xf32> to vector<10x32xf32>
    %542 = arith.addf %540, %541 : vector<10x32xf32>
    %cst_225 = arith.constant 0.000000e+00 : f32
    %543 = vector.broadcast %cst_225 : f32 to vector<10x32xf32>
    %544 = arith.maximumf %542, %543 : vector<10x32xf32>
    %545 = arith.truncf %544 : vector<10x32xf32> to vector<10x32xbf16>
    %546 = vector.extract_strided_slice %368 {offsets = [0, 0], sizes = [5, 64], strides = [1, 1]} : vector<6x64xbf16> to vector<5x64xbf16>
    %547 = vector.extract_strided_slice %390 {offsets = [0, 0], sizes = [5, 64], strides = [1, 1]} : vector<6x64xbf16> to vector<5x64xbf16>
    %548 = vector.extract_strided_slice %370 {offsets = [0, 0], sizes = [5, 64], strides = [1, 1]} : vector<6x64xbf16> to vector<5x64xbf16>
    %549 = vector.extract_strided_slice %392 {offsets = [0, 0], sizes = [5, 64], strides = [1, 1]} : vector<6x64xbf16> to vector<5x64xbf16>
    %550 = tpu.concatenate %546, %547, %548, %549 in 1 : vector<5x64xbf16>, vector<5x64xbf16>, vector<5x64xbf16>, vector<5x64xbf16> -> vector<5x256xbf16>
    %551 = vector.extract_strided_slice %390 {offsets = [0, 0], sizes = [5, 64], strides = [1, 1]} : vector<6x64xbf16> to vector<5x64xbf16>
    %552 = vector.extract_strided_slice %368 {offsets = [1, 0], sizes = [5, 64], strides = [1, 1]} : vector<6x64xbf16> to vector<5x64xbf16>
    %553 = vector.extract_strided_slice %392 {offsets = [0, 0], sizes = [5, 64], strides = [1, 1]} : vector<6x64xbf16> to vector<5x64xbf16>
    %554 = vector.extract_strided_slice %370 {offsets = [1, 0], sizes = [5, 64], strides = [1, 1]} : vector<6x64xbf16> to vector<5x64xbf16>
    %555 = tpu.concatenate %551, %552, %553, %554 in 1 : vector<5x64xbf16>, vector<5x64xbf16>, vector<5x64xbf16>, vector<5x64xbf16> -> vector<5x256xbf16>
    %556 = tpu.concatenate %550, %555 in 0 : vector<5x256xbf16>, vector<5x256xbf16> -> vector<10x256xbf16>
    %cst_226 = arith.constant dense<0.000000e+00> : vector<10x32xf32>
    %557 = tpu.matmul %556, %0, %cst_226 {dimension_numbers = #tpu.dot_dimension_numbers<[1], [0], [0], [1], [0, 0, 1, 1], [], []>} : vector<10x256xbf16>, vector<256x32xbf16>, vector<10x32xf32> -> vector<10x32xf32>
    %558 = vector.broadcast %1 : vector<1x32xf32> to vector<10x32xf32>
    %559 = arith.addf %557, %558 : vector<10x32xf32>
    %cst_227 = arith.constant 0.000000e+00 : f32
    %560 = vector.broadcast %cst_227 : f32 to vector<10x32xf32>
    %561 = arith.maximumf %559, %560 : vector<10x32xf32>
    %562 = arith.truncf %561 : vector<10x32xf32> to vector<10x32xbf16>
    %563 = vector.extract_strided_slice %409 {offsets = [0, 0], sizes = [4, 32], strides = [1, 1]} : vector<10x32xbf16> to vector<4x32xbf16>
    %564 = vector.extract_strided_slice %409 {offsets = [5, 0], sizes = [4, 32], strides = [1, 1]} : vector<10x32xbf16> to vector<4x32xbf16>
    %565 = vector.extract_strided_slice %409 {offsets = [1, 0], sizes = [4, 32], strides = [1, 1]} : vector<10x32xbf16> to vector<4x32xbf16>
    %566 = vector.extract_strided_slice %409 {offsets = [6, 0], sizes = [4, 32], strides = [1, 1]} : vector<10x32xbf16> to vector<4x32xbf16>
    %567 = vector.extract_strided_slice %426 {offsets = [0, 0], sizes = [4, 32], strides = [1, 1]} : vector<10x32xbf16> to vector<4x32xbf16>
    %568 = vector.extract_strided_slice %426 {offsets = [5, 0], sizes = [4, 32], strides = [1, 1]} : vector<10x32xbf16> to vector<4x32xbf16>
    %569 = vector.extract_strided_slice %426 {offsets = [1, 0], sizes = [4, 32], strides = [1, 1]} : vector<10x32xbf16> to vector<4x32xbf16>
    %570 = vector.extract_strided_slice %426 {offsets = [6, 0], sizes = [4, 32], strides = [1, 1]} : vector<10x32xbf16> to vector<4x32xbf16>
    %571 = vector.extract_strided_slice %443 {offsets = [0, 0], sizes = [4, 32], strides = [1, 1]} : vector<10x32xbf16> to vector<4x32xbf16>
    %572 = vector.extract_strided_slice %443 {offsets = [5, 0], sizes = [4, 32], strides = [1, 1]} : vector<10x32xbf16> to vector<4x32xbf16>
    %573 = vector.extract_strided_slice %443 {offsets = [1, 0], sizes = [4, 32], strides = [1, 1]} : vector<10x32xbf16> to vector<4x32xbf16>
    %574 = vector.extract_strided_slice %443 {offsets = [6, 0], sizes = [4, 32], strides = [1, 1]} : vector<10x32xbf16> to vector<4x32xbf16>
    %575 = vector.extract_strided_slice %460 {offsets = [0, 0], sizes = [4, 32], strides = [1, 1]} : vector<10x32xbf16> to vector<4x32xbf16>
    %576 = vector.extract_strided_slice %460 {offsets = [5, 0], sizes = [4, 32], strides = [1, 1]} : vector<10x32xbf16> to vector<4x32xbf16>
    %577 = vector.extract_strided_slice %460 {offsets = [1, 0], sizes = [4, 32], strides = [1, 1]} : vector<10x32xbf16> to vector<4x32xbf16>
    %578 = vector.extract_strided_slice %460 {offsets = [6, 0], sizes = [4, 32], strides = [1, 1]} : vector<10x32xbf16> to vector<4x32xbf16>
    %579 = tpu.concatenate %563, %564, %565, %566, %567, %568, %569, %570, %571, %572, %573, %574, %575, %576, %577, %578 in 1 : vector<4x32xbf16>, vector<4x32xbf16>, vector<4x32xbf16>, vector<4x32xbf16>, vector<4x32xbf16>, vector<4x32xbf16>, vector<4x32xbf16>, vector<4x32xbf16>, vector<4x32xbf16>, vector<4x32xbf16>, vector<4x32xbf16>, vector<4x32xbf16>, vector<4x32xbf16>, vector<4x32xbf16>, vector<4x32xbf16>, vector<4x32xbf16> -> vector<4x512xbf16>
    %cst_228 = arith.constant dense<0.000000e+00> : vector<4x64xf32>
    %580 = tpu.matmul %579, %2, %cst_228 {dimension_numbers = #tpu.dot_dimension_numbers<[1], [0], [0], [1], [0, 0, 1, 1], [], []>} : vector<4x512xbf16>, vector<512x64xbf16>, vector<4x64xf32> -> vector<4x64xf32>
    %581 = vector.broadcast %3 : vector<1x64xf32> to vector<4x64xf32>
    %582 = arith.addf %580, %581 : vector<4x64xf32>
    %cst_229 = arith.constant 0.000000e+00 : f32
    %583 = vector.broadcast %cst_229 : f32 to vector<4x64xf32>
    %584 = arith.maximumf %582, %583 : vector<4x64xf32>
    %585 = arith.truncf %584 : vector<4x64xf32> to vector<4x64xbf16>
    %586 = vector.extract_strided_slice %443 {offsets = [0, 0], sizes = [4, 32], strides = [1, 1]} : vector<10x32xbf16> to vector<4x32xbf16>
    %587 = vector.extract_strided_slice %443 {offsets = [5, 0], sizes = [4, 32], strides = [1, 1]} : vector<10x32xbf16> to vector<4x32xbf16>
    %588 = vector.extract_strided_slice %443 {offsets = [1, 0], sizes = [4, 32], strides = [1, 1]} : vector<10x32xbf16> to vector<4x32xbf16>
    %589 = vector.extract_strided_slice %443 {offsets = [6, 0], sizes = [4, 32], strides = [1, 1]} : vector<10x32xbf16> to vector<4x32xbf16>
    %590 = vector.extract_strided_slice %460 {offsets = [0, 0], sizes = [4, 32], strides = [1, 1]} : vector<10x32xbf16> to vector<4x32xbf16>
    %591 = vector.extract_strided_slice %460 {offsets = [5, 0], sizes = [4, 32], strides = [1, 1]} : vector<10x32xbf16> to vector<4x32xbf16>
    %592 = vector.extract_strided_slice %460 {offsets = [1, 0], sizes = [4, 32], strides = [1, 1]} : vector<10x32xbf16> to vector<4x32xbf16>
    %593 = vector.extract_strided_slice %460 {offsets = [6, 0], sizes = [4, 32], strides = [1, 1]} : vector<10x32xbf16> to vector<4x32xbf16>
    %594 = vector.extract_strided_slice %477 {offsets = [0, 0], sizes = [4, 32], strides = [1, 1]} : vector<10x32xbf16> to vector<4x32xbf16>
    %595 = vector.extract_strided_slice %477 {offsets = [5, 0], sizes = [4, 32], strides = [1, 1]} : vector<10x32xbf16> to vector<4x32xbf16>
    %596 = vector.extract_strided_slice %477 {offsets = [1, 0], sizes = [4, 32], strides = [1, 1]} : vector<10x32xbf16> to vector<4x32xbf16>
    %597 = vector.extract_strided_slice %477 {offsets = [6, 0], sizes = [4, 32], strides = [1, 1]} : vector<10x32xbf16> to vector<4x32xbf16>
    %598 = vector.extract_strided_slice %494 {offsets = [0, 0], sizes = [4, 32], strides = [1, 1]} : vector<10x32xbf16> to vector<4x32xbf16>
    %599 = vector.extract_strided_slice %494 {offsets = [5, 0], sizes = [4, 32], strides = [1, 1]} : vector<10x32xbf16> to vector<4x32xbf16>
    %600 = vector.extract_strided_slice %494 {offsets = [1, 0], sizes = [4, 32], strides = [1, 1]} : vector<10x32xbf16> to vector<4x32xbf16>
    %601 = vector.extract_strided_slice %494 {offsets = [6, 0], sizes = [4, 32], strides = [1, 1]} : vector<10x32xbf16> to vector<4x32xbf16>
    %602 = tpu.concatenate %586, %587, %588, %589, %590, %591, %592, %593, %594, %595, %596, %597, %598, %599, %600, %601 in 1 : vector<4x32xbf16>, vector<4x32xbf16>, vector<4x32xbf16>, vector<4x32xbf16>, vector<4x32xbf16>, vector<4x32xbf16>, vector<4x32xbf16>, vector<4x32xbf16>, vector<4x32xbf16>, vector<4x32xbf16>, vector<4x32xbf16>, vector<4x32xbf16>, vector<4x32xbf16>, vector<4x32xbf16>, vector<4x32xbf16>, vector<4x32xbf16> -> vector<4x512xbf16>
    %cst_230 = arith.constant dense<0.000000e+00> : vector<4x64xf32>
    %603 = tpu.matmul %602, %2, %cst_230 {dimension_numbers = #tpu.dot_dimension_numbers<[1], [0], [0], [1], [0, 0, 1, 1], [], []>} : vector<4x512xbf16>, vector<512x64xbf16>, vector<4x64xf32> -> vector<4x64xf32>
    %604 = vector.broadcast %3 : vector<1x64xf32> to vector<4x64xf32>
    %605 = arith.addf %603, %604 : vector<4x64xf32>
    %cst_231 = arith.constant 0.000000e+00 : f32
    %606 = vector.broadcast %cst_231 : f32 to vector<4x64xf32>
    %607 = arith.maximumf %605, %606 : vector<4x64xf32>
    %608 = arith.truncf %607 : vector<4x64xf32> to vector<4x64xbf16>
    %609 = vector.extract_strided_slice %477 {offsets = [0, 0], sizes = [4, 32], strides = [1, 1]} : vector<10x32xbf16> to vector<4x32xbf16>
    %610 = vector.extract_strided_slice %477 {offsets = [5, 0], sizes = [4, 32], strides = [1, 1]} : vector<10x32xbf16> to vector<4x32xbf16>
    %611 = vector.extract_strided_slice %477 {offsets = [1, 0], sizes = [4, 32], strides = [1, 1]} : vector<10x32xbf16> to vector<4x32xbf16>
    %612 = vector.extract_strided_slice %477 {offsets = [6, 0], sizes = [4, 32], strides = [1, 1]} : vector<10x32xbf16> to vector<4x32xbf16>
    %613 = vector.extract_strided_slice %494 {offsets = [0, 0], sizes = [4, 32], strides = [1, 1]} : vector<10x32xbf16> to vector<4x32xbf16>
    %614 = vector.extract_strided_slice %494 {offsets = [5, 0], sizes = [4, 32], strides = [1, 1]} : vector<10x32xbf16> to vector<4x32xbf16>
    %615 = vector.extract_strided_slice %494 {offsets = [1, 0], sizes = [4, 32], strides = [1, 1]} : vector<10x32xbf16> to vector<4x32xbf16>
    %616 = vector.extract_strided_slice %494 {offsets = [6, 0], sizes = [4, 32], strides = [1, 1]} : vector<10x32xbf16> to vector<4x32xbf16>
    %617 = vector.extract_strided_slice %511 {offsets = [0, 0], sizes = [4, 32], strides = [1, 1]} : vector<10x32xbf16> to vector<4x32xbf16>
    %618 = vector.extract_strided_slice %511 {offsets = [5, 0], sizes = [4, 32], strides = [1, 1]} : vector<10x32xbf16> to vector<4x32xbf16>
    %619 = vector.extract_strided_slice %511 {offsets = [1, 0], sizes = [4, 32], strides = [1, 1]} : vector<10x32xbf16> to vector<4x32xbf16>
    %620 = vector.extract_strided_slice %511 {offsets = [6, 0], sizes = [4, 32], strides = [1, 1]} : vector<10x32xbf16> to vector<4x32xbf16>
    %621 = vector.extract_strided_slice %528 {offsets = [0, 0], sizes = [4, 32], strides = [1, 1]} : vector<10x32xbf16> to vector<4x32xbf16>
    %622 = vector.extract_strided_slice %528 {offsets = [5, 0], sizes = [4, 32], strides = [1, 1]} : vector<10x32xbf16> to vector<4x32xbf16>
    %623 = vector.extract_strided_slice %528 {offsets = [1, 0], sizes = [4, 32], strides = [1, 1]} : vector<10x32xbf16> to vector<4x32xbf16>
    %624 = vector.extract_strided_slice %528 {offsets = [6, 0], sizes = [4, 32], strides = [1, 1]} : vector<10x32xbf16> to vector<4x32xbf16>
    %625 = tpu.concatenate %609, %610, %611, %612, %613, %614, %615, %616, %617, %618, %619, %620, %621, %622, %623, %624 in 1 : vector<4x32xbf16>, vector<4x32xbf16>, vector<4x32xbf16>, vector<4x32xbf16>, vector<4x32xbf16>, vector<4x32xbf16>, vector<4x32xbf16>, vector<4x32xbf16>, vector<4x32xbf16>, vector<4x32xbf16>, vector<4x32xbf16>, vector<4x32xbf16>, vector<4x32xbf16>, vector<4x32xbf16>, vector<4x32xbf16>, vector<4x32xbf16> -> vector<4x512xbf16>
    %cst_232 = arith.constant dense<0.000000e+00> : vector<4x64xf32>
    %626 = tpu.matmul %625, %2, %cst_232 {dimension_numbers = #tpu.dot_dimension_numbers<[1], [0], [0], [1], [0, 0, 1, 1], [], []>} : vector<4x512xbf16>, vector<512x64xbf16>, vector<4x64xf32> -> vector<4x64xf32>
    %627 = vector.broadcast %3 : vector<1x64xf32> to vector<4x64xf32>
    %628 = arith.addf %626, %627 : vector<4x64xf32>
    %cst_233 = arith.constant 0.000000e+00 : f32
    %629 = vector.broadcast %cst_233 : f32 to vector<4x64xf32>
    %630 = arith.maximumf %628, %629 : vector<4x64xf32>
    %631 = arith.truncf %630 : vector<4x64xf32> to vector<4x64xbf16>
    %632 = vector.extract_strided_slice %511 {offsets = [0, 0], sizes = [4, 32], strides = [1, 1]} : vector<10x32xbf16> to vector<4x32xbf16>
    %633 = vector.extract_strided_slice %511 {offsets = [5, 0], sizes = [4, 32], strides = [1, 1]} : vector<10x32xbf16> to vector<4x32xbf16>
    %634 = vector.extract_strided_slice %511 {offsets = [1, 0], sizes = [4, 32], strides = [1, 1]} : vector<10x32xbf16> to vector<4x32xbf16>
    %635 = vector.extract_strided_slice %511 {offsets = [6, 0], sizes = [4, 32], strides = [1, 1]} : vector<10x32xbf16> to vector<4x32xbf16>
    %636 = vector.extract_strided_slice %528 {offsets = [0, 0], sizes = [4, 32], strides = [1, 1]} : vector<10x32xbf16> to vector<4x32xbf16>
    %637 = vector.extract_strided_slice %528 {offsets = [5, 0], sizes = [4, 32], strides = [1, 1]} : vector<10x32xbf16> to vector<4x32xbf16>
    %638 = vector.extract_strided_slice %528 {offsets = [1, 0], sizes = [4, 32], strides = [1, 1]} : vector<10x32xbf16> to vector<4x32xbf16>
    %639 = vector.extract_strided_slice %528 {offsets = [6, 0], sizes = [4, 32], strides = [1, 1]} : vector<10x32xbf16> to vector<4x32xbf16>
    %640 = vector.extract_strided_slice %545 {offsets = [0, 0], sizes = [4, 32], strides = [1, 1]} : vector<10x32xbf16> to vector<4x32xbf16>
    %641 = vector.extract_strided_slice %545 {offsets = [5, 0], sizes = [4, 32], strides = [1, 1]} : vector<10x32xbf16> to vector<4x32xbf16>
    %642 = vector.extract_strided_slice %545 {offsets = [1, 0], sizes = [4, 32], strides = [1, 1]} : vector<10x32xbf16> to vector<4x32xbf16>
    %643 = vector.extract_strided_slice %545 {offsets = [6, 0], sizes = [4, 32], strides = [1, 1]} : vector<10x32xbf16> to vector<4x32xbf16>
    %644 = vector.extract_strided_slice %562 {offsets = [0, 0], sizes = [4, 32], strides = [1, 1]} : vector<10x32xbf16> to vector<4x32xbf16>
    %645 = vector.extract_strided_slice %562 {offsets = [5, 0], sizes = [4, 32], strides = [1, 1]} : vector<10x32xbf16> to vector<4x32xbf16>
    %646 = vector.extract_strided_slice %562 {offsets = [1, 0], sizes = [4, 32], strides = [1, 1]} : vector<10x32xbf16> to vector<4x32xbf16>
    %647 = vector.extract_strided_slice %562 {offsets = [6, 0], sizes = [4, 32], strides = [1, 1]} : vector<10x32xbf16> to vector<4x32xbf16>
    %648 = tpu.concatenate %632, %633, %634, %635, %636, %637, %638, %639, %640, %641, %642, %643, %644, %645, %646, %647 in 1 : vector<4x32xbf16>, vector<4x32xbf16>, vector<4x32xbf16>, vector<4x32xbf16>, vector<4x32xbf16>, vector<4x32xbf16>, vector<4x32xbf16>, vector<4x32xbf16>, vector<4x32xbf16>, vector<4x32xbf16>, vector<4x32xbf16>, vector<4x32xbf16>, vector<4x32xbf16>, vector<4x32xbf16>, vector<4x32xbf16>, vector<4x32xbf16> -> vector<4x512xbf16>
    %cst_234 = arith.constant dense<0.000000e+00> : vector<4x64xf32>
    %649 = tpu.matmul %648, %2, %cst_234 {dimension_numbers = #tpu.dot_dimension_numbers<[1], [0], [0], [1], [0, 0, 1, 1], [], []>} : vector<4x512xbf16>, vector<512x64xbf16>, vector<4x64xf32> -> vector<4x64xf32>
    %650 = vector.broadcast %3 : vector<1x64xf32> to vector<4x64xf32>
    %651 = arith.addf %649, %650 : vector<4x64xf32>
    %cst_235 = arith.constant 0.000000e+00 : f32
    %652 = vector.broadcast %cst_235 : f32 to vector<4x64xf32>
    %653 = arith.maximumf %651, %652 : vector<4x64xf32>
    %654 = arith.truncf %653 : vector<4x64xf32> to vector<4x64xbf16>
    %655 = vector.extract_strided_slice %585 {offsets = [0, 0], sizes = [2, 64], strides = [1, 1]} : vector<4x64xbf16> to vector<2x64xbf16>
    %656 = vector.extract_strided_slice %585 {offsets = [1, 0], sizes = [2, 64], strides = [1, 1]} : vector<4x64xbf16> to vector<2x64xbf16>
    %657 = vector.extract_strided_slice %585 {offsets = [2, 0], sizes = [2, 64], strides = [1, 1]} : vector<4x64xbf16> to vector<2x64xbf16>
    %658 = vector.extract_strided_slice %608 {offsets = [0, 0], sizes = [2, 64], strides = [1, 1]} : vector<4x64xbf16> to vector<2x64xbf16>
    %659 = vector.extract_strided_slice %608 {offsets = [1, 0], sizes = [2, 64], strides = [1, 1]} : vector<4x64xbf16> to vector<2x64xbf16>
    %660 = vector.extract_strided_slice %608 {offsets = [2, 0], sizes = [2, 64], strides = [1, 1]} : vector<4x64xbf16> to vector<2x64xbf16>
    %661 = vector.extract_strided_slice %631 {offsets = [0, 0], sizes = [2, 64], strides = [1, 1]} : vector<4x64xbf16> to vector<2x64xbf16>
    %662 = vector.extract_strided_slice %631 {offsets = [1, 0], sizes = [2, 64], strides = [1, 1]} : vector<4x64xbf16> to vector<2x64xbf16>
    %663 = vector.extract_strided_slice %631 {offsets = [2, 0], sizes = [2, 64], strides = [1, 1]} : vector<4x64xbf16> to vector<2x64xbf16>
    %664 = tpu.concatenate %655, %656, %657, %658, %659, %660, %661, %662, %663 in 1 : vector<2x64xbf16>, vector<2x64xbf16>, vector<2x64xbf16>, vector<2x64xbf16>, vector<2x64xbf16>, vector<2x64xbf16>, vector<2x64xbf16>, vector<2x64xbf16>, vector<2x64xbf16> -> vector<2x576xbf16>
    %cst_236 = arith.constant dense<0.000000e+00> : vector<2x64xf32>
    %665 = tpu.matmul %664, %4, %cst_236 {dimension_numbers = #tpu.dot_dimension_numbers<[1], [0], [0], [1], [0, 0, 1, 1], [], []>} : vector<2x576xbf16>, vector<576x64xbf16>, vector<2x64xf32> -> vector<2x64xf32>
    %666 = vector.broadcast %5 : vector<1x64xf32> to vector<2x64xf32>
    %667 = arith.addf %665, %666 : vector<2x64xf32>
    %cst_237 = arith.constant 0.000000e+00 : f32
    %668 = vector.broadcast %cst_237 : f32 to vector<2x64xf32>
    %669 = arith.maximumf %667, %668 : vector<2x64xf32>
    %670 = arith.truncf %669 : vector<2x64xf32> to vector<2x64xbf16>
    %671 = vector.extract_strided_slice %608 {offsets = [0, 0], sizes = [2, 64], strides = [1, 1]} : vector<4x64xbf16> to vector<2x64xbf16>
    %672 = vector.extract_strided_slice %608 {offsets = [1, 0], sizes = [2, 64], strides = [1, 1]} : vector<4x64xbf16> to vector<2x64xbf16>
    %673 = vector.extract_strided_slice %608 {offsets = [2, 0], sizes = [2, 64], strides = [1, 1]} : vector<4x64xbf16> to vector<2x64xbf16>
    %674 = vector.extract_strided_slice %631 {offsets = [0, 0], sizes = [2, 64], strides = [1, 1]} : vector<4x64xbf16> to vector<2x64xbf16>
    %675 = vector.extract_strided_slice %631 {offsets = [1, 0], sizes = [2, 64], strides = [1, 1]} : vector<4x64xbf16> to vector<2x64xbf16>
    %676 = vector.extract_strided_slice %631 {offsets = [2, 0], sizes = [2, 64], strides = [1, 1]} : vector<4x64xbf16> to vector<2x64xbf16>
    %677 = vector.extract_strided_slice %654 {offsets = [0, 0], sizes = [2, 64], strides = [1, 1]} : vector<4x64xbf16> to vector<2x64xbf16>
    %678 = vector.extract_strided_slice %654 {offsets = [1, 0], sizes = [2, 64], strides = [1, 1]} : vector<4x64xbf16> to vector<2x64xbf16>
    %679 = vector.extract_strided_slice %654 {offsets = [2, 0], sizes = [2, 64], strides = [1, 1]} : vector<4x64xbf16> to vector<2x64xbf16>
    %680 = tpu.concatenate %671, %672, %673, %674, %675, %676, %677, %678, %679 in 1 : vector<2x64xbf16>, vector<2x64xbf16>, vector<2x64xbf16>, vector<2x64xbf16>, vector<2x64xbf16>, vector<2x64xbf16>, vector<2x64xbf16>, vector<2x64xbf16>, vector<2x64xbf16> -> vector<2x576xbf16>
    %cst_238 = arith.constant dense<0.000000e+00> : vector<2x64xf32>
    %681 = tpu.matmul %680, %4, %cst_238 {dimension_numbers = #tpu.dot_dimension_numbers<[1], [0], [0], [1], [0, 0, 1, 1], [], []>} : vector<2x576xbf16>, vector<576x64xbf16>, vector<2x64xf32> -> vector<2x64xf32>
    %682 = vector.broadcast %5 : vector<1x64xf32> to vector<2x64xf32>
    %683 = arith.addf %681, %682 : vector<2x64xf32>
    %cst_239 = arith.constant 0.000000e+00 : f32
    %684 = vector.broadcast %cst_239 : f32 to vector<2x64xf32>
    %685 = arith.maximumf %683, %684 : vector<2x64xf32>
    %686 = arith.truncf %685 : vector<2x64xf32> to vector<2x64xbf16>
    %687 = vector.extract_strided_slice %670 {offsets = [0, 0], sizes = [1, 64], strides = [1, 1]} : vector<2x64xbf16> to vector<1x64xbf16>
    %688 = vector.extract_strided_slice %670 {offsets = [1, 0], sizes = [1, 64], strides = [1, 1]} : vector<2x64xbf16> to vector<1x64xbf16>
    %689 = vector.extract_strided_slice %686 {offsets = [0, 0], sizes = [1, 64], strides = [1, 1]} : vector<2x64xbf16> to vector<1x64xbf16>
    %690 = vector.extract_strided_slice %686 {offsets = [1, 0], sizes = [1, 64], strides = [1, 1]} : vector<2x64xbf16> to vector<1x64xbf16>
    %691 = tpu.concatenate %687, %688, %689, %690 in 1 : vector<1x64xbf16>, vector<1x64xbf16>, vector<1x64xbf16>, vector<1x64xbf16> -> vector<1x256xbf16>
    %692 = tpu.concatenate %348, %691 in 0 : vector<1x256xbf16>, vector<1x256xbf16> -> vector<2x256xbf16>
    %c0_240 = arith.constant 0 : index
    %c0_241 = arith.constant 0 : index
    %693 = vector.load %arg9[%c0_240, %c0_241] : memref<256x512xbf16, #tpu.memory_space<vmem>>, vector<256x512xbf16>
    %cst_242 = arith.constant dense<0.000000e+00> : vector<2x512xf32>
    %694 = tpu.matmul %692, %693, %cst_242 {dimension_numbers = #tpu.dot_dimension_numbers<[1], [0], [0], [1], [0, 0, 1, 1], [], []>} : vector<2x256xbf16>, vector<256x512xbf16>, vector<2x512xf32> -> vector<2x512xf32>
    %c0_243 = arith.constant 0 : index
    %c0_244 = arith.constant 0 : index
    %695 = vector.load %arg10[%c0_243, %c0_244] : memref<1x512xf32, #tpu.memory_space<vmem>>, vector<1x512xf32>
    %696 = vector.broadcast %695 : vector<1x512xf32> to vector<2x512xf32>
    %697 = arith.addf %694, %696 : vector<2x512xf32>
    %cst_245 = arith.constant 0.000000e+00 : f32
    %698 = vector.broadcast %cst_245 : f32 to vector<2x512xf32>
    %699 = arith.maximumf %697, %698 : vector<2x512xf32>
    %700 = arith.truncf %699 : vector<2x512xf32> to vector<2x512xbf16>
    %c0_246 = arith.constant 0 : index
    %c0_247 = arith.constant 0 : index
    %701 = vector.load %arg11[%c0_246, %c0_247] : memref<512x7xbf16, #tpu.memory_space<vmem>>, vector<512x7xbf16>
    %cst_248 = arith.constant dense<0.000000e+00> : vector<2x7xf32>
    %702 = tpu.matmul %700, %701, %cst_248 {dimension_numbers = #tpu.dot_dimension_numbers<[1], [0], [0], [1], [0, 0, 1, 1], [], []>} : vector<2x512xbf16>, vector<512x7xbf16>, vector<2x7xf32> -> vector<2x7xf32>
    %c0_249 = arith.constant 0 : index
    %c0_250 = arith.constant 0 : index
    %703 = vector.load %arg12[%c0_249, %c0_250] : memref<1x7xf32, #tpu.memory_space<vmem>>, vector<1x7xf32>
    %704 = vector.broadcast %703 : vector<1x7xf32> to vector<2x7xf32>
    %705 = arith.addf %702, %704 : vector<2x7xf32>
    %706 = vector.extract_strided_slice %705 {offsets = [0, 0], sizes = [2, 6], strides = [1, 1]} : vector<2x7xf32> to vector<2x6xf32>
    %707 = vector.extract_strided_slice %705 {offsets = [0, 6], sizes = [2, 1], strides = [1, 1]} : vector<2x7xf32> to vector<2x1xf32>
    %708 = vector.broadcast %707 : vector<2x1xf32> to vector<2x6xf32>
    %709 = arith.addf %708, %706 : vector<2x6xf32>
    %cst_251 = arith.constant dense<0.000000e+00> : vector<2xf32>
    %710 = vector.multi_reduction <add>, %706, %cst_251 [1] : vector<2x6xf32> to vector<2xf32>
    %711 = vector.shape_cast %710 : vector<2xf32> to vector<2x1xf32>
    %cst_252 = arith.constant 6.000000e+00 : f32
    %712 = vector.broadcast %cst_252 : f32 to vector<2x1xf32>
    %713 = arith.divf %711, %712 : vector<2x1xf32>
    %714 = vector.broadcast %713 : vector<2x1xf32> to vector<2x6xf32>
    %715 = arith.subf %709, %714 : vector<2x6xf32>
    %c0_253 = arith.constant 0 : index
    %c0_254 = arith.constant 0 : index
    %c0_255 = arith.constant 0 : index
    %716 = vector.load %arg13[%c0_253, %c0_254, %c0_255] : memref<1x2x6xf32, #tpu.memory_space<vmem>>, vector<1x2x6xf32>
    %717 = vector.shape_cast %716 : vector<1x2x6xf32> to vector<2x6xf32>
    %718 = vector.shape_cast %715 : vector<2x6xf32> to vector<1x2x6xf32>
    tpu.vector_store %arg13[%c0_253, %c0_254, %c0_255], %718 {strides = array<i32>} : memref<1x2x6xf32, #tpu.memory_space<vmem>>, vector<1x2x6xf32>,
    return
  }
  func.func @transform_0(%arg0: i32) -> (i32, i32, i32, i32) {
    %c0_i32 = arith.constant 0 : i32
    %c0_i32_0 = arith.constant 0 : i32
    %c0_i32_1 = arith.constant 0 : i32
    %c0_i32_2 = arith.constant 0 : i32
    return %arg0, %c0_i32, %c0_i32_0, %c0_i32_1 : i32, i32, i32, i32
  }
  func.func @transform_1(%arg0: i32) -> (i32, i32, i32, i32) {
    %c0_i32 = arith.constant 0 : i32
    %c0_i32_0 = arith.constant 0 : i32
    %c0_i32_1 = arith.constant 0 : i32
    %c0_i32_2 = arith.constant 0 : i32
    return %arg0, %c0_i32, %c0_i32_0, %c0_i32_1 : i32, i32, i32, i32
  }
  func.func @transform_2(%arg0: i32) -> (i32, i32) {
    %c0_i32 = arith.constant 0 : i32
    %c0_i32_0 = arith.constant 0 : i32
    %c0_i32_1 = arith.constant 0 : i32
    return %c0_i32, %c0_i32_0 : i32, i32
  }
  func.func @transform_3(%arg0: i32) -> (i32, i32) {
    %c0_i32 = arith.constant 0 : i32
    %c0_i32_0 = arith.constant 0 : i32
    %c0_i32_1 = arith.constant 0 : i32
    return %c0_i32, %c0_i32_0 : i32, i32
  }
  func.func @transform_4(%arg0: i32) -> (i32, i32) {
    %c0_i32 = arith.constant 0 : i32
    %c0_i32_0 = arith.constant 0 : i32
    %c0_i32_1 = arith.constant 0 : i32
    return %c0_i32, %c0_i32_0 : i32, i32
  }
  func.func @transform_5(%arg0: i32) -> (i32, i32) {
    %c0_i32 = arith.constant 0 : i32
    %c0_i32_0 = arith.constant 0 : i32
    %c0_i32_1 = arith.constant 0 : i32
    return %c0_i32, %c0_i32_0 : i32, i32
  }
  func.func @transform_6(%arg0: i32) -> (i32, i32) {
    %c0_i32 = arith.constant 0 : i32
    %c0_i32_0 = arith.constant 0 : i32
    %c0_i32_1 = arith.constant 0 : i32
    return %c0_i32, %c0_i32_0 : i32, i32
  }
  func.func @transform_7(%arg0: i32) -> (i32, i32) {
    %c0_i32 = arith.constant 0 : i32
    %c0_i32_0 = arith.constant 0 : i32
    %c0_i32_1 = arith.constant 0 : i32
    return %c0_i32, %c0_i32_0 : i32, i32
  }
  func.func @transform_8(%arg0: i32) -> (i32, i32) {
    %c0_i32 = arith.constant 0 : i32
    %c0_i32_0 = arith.constant 0 : i32
    %c0_i32_1 = arith.constant 0 : i32
    return %c0_i32, %c0_i32_0 : i32, i32
  }
  func.func @transform_9(%arg0: i32) -> (i32, i32) {
    %c0_i32 = arith.constant 0 : i32
    %c0_i32_0 = arith.constant 0 : i32
    %c0_i32_1 = arith.constant 0 : i32
    return %c0_i32, %c0_i32_0 : i32, i32
  }
  func.func @transform_10(%arg0: i32) -> (i32, i32) {
    %c0_i32 = arith.constant 0 : i32
    %c0_i32_0 = arith.constant 0 : i32
    %c0_i32_1 = arith.constant 0 : i32
    return %c0_i32, %c0_i32_0 : i32, i32
  }
  func.func @transform_11(%arg0: i32) -> (i32, i32) {
    %c0_i32 = arith.constant 0 : i32
    %c0_i32_0 = arith.constant 0 : i32
    %c0_i32_1 = arith.constant 0 : i32
    return %c0_i32, %c0_i32_0 : i32, i32
  }
  func.func @transform_12(%arg0: i32) -> (i32, i32, i32) {
    %c0_i32 = arith.constant 0 : i32
    %c0_i32_0 = arith.constant 0 : i32
    %c0_i32_1 = arith.constant 0 : i32
    return %arg0, %c0_i32, %c0_i32_0 : i32, i32, i32
  }
}

</mosaic_0001>

<llo_original>
// kernel: duel_noisy_dqn_forward.3
$region0: #{duel_noisy_dqn_forward.3}
  #allocation0 [shape = 'u32[]', space=smem, size = 0x4, offset = 0x4, fixed_abs, tag = 'smem constant byte address 0x4 - core index']
  #allocation1 [shape = 'u32[72,128]{1,0:T(1,128)}', space=vmem, size = 0x9000, scoped, tag = 'internal scratch']
  %s0 = inlined_call_operand.vmem [shape: bf16[4,11,6,64], index: 0, kind: input, shape index: {}]
  %s1 = inlined_call_operand.vmem [shape: bf16[4,11,6,64], index: 1, kind: input, shape index: {}]
  %s2 = inlined_call_operand.vmem [shape: bf16[256,32], index: 2, kind: input, shape index: {}]
  %s3 = inlined_call_operand.vmem [shape: f32[1,32], index: 3, kind: input, shape index: {}]
  %s4 = inlined_call_operand.vmem [shape: bf16[512,64], index: 4, kind: input, shape index: {}]
  %s5 = inlined_call_operand.vmem [shape: f32[1,64], index: 5, kind: input, shape index: {}]
  %s6 = inlined_call_operand.vmem [shape: bf16[576,64], index: 6, kind: input, shape index: {}]
  %s7 = inlined_call_operand.vmem [shape: f32[1,64], index: 7, kind: input, shape index: {}]
  %s8 = inlined_call_operand.vmem [shape: bf16[256,512], index: 8, kind: input, shape index: {}]
  %s9 = inlined_call_operand.vmem [shape: f32[1,512], index: 9, kind: input, shape index: {}]
  %s10 = inlined_call_operand.vmem [shape: bf16[512,7], index: 10, kind: input, shape index: {}]
  %s11 = inlined_call_operand.vmem [shape: f32[1,7], index: 11, kind: input, shape index: {}]
  %s12 = inlined_call_operand.hbm [shape: f32[2,2,6], index: 12, kind: output, shape index: {}]
  %s13 = sld [smem:[#allocation0]]
  $region81: #{duel_noisy_dqn_forward.3} parent=0
    _
  %s15 = ssub.s32 1, %s13
  %s16 = scalar_select 0, %s15, %s13
  $region1: #{duel_noisy_dqn_forward.3} parent=0
    #allocation2 [shape = 'u8[2048]{0}', space=vmem, size = 0x800, scoped, tag = 'output window, operand 0']
    #allocation3 [shape = 's32[2]{0}', space=sflag, size = 0x8, scoped, tag = 'scoped memory for duel_noisy_dqn_forward.3']
    %17 = vsyncpa [#allocation3], 0
    %s18 = scalar_lea.sflag [#allocation3], 1
    %19 = vsyncpa %s18, 0
    loop: start=0, step=1, limit=4
    $region2: #{duel_noisy_dqn_forward.3} parent=1 // loop_pre_header
      _
    $region3: #{duel_noisy_dqn_forward.3} parent=1 // loop_header
      %s21 = sphi 0, %s25
      %p22 = scmp.ge.s32.totalorder %s21, 4
      %s31 = sphi 0, %s33
      %s34 = sphi 0, %s31
      %s35 = sphi 0, %s34
      %s51 = sphi 0, %s35
      %s57 = sphi 0, %s59
      %s60 = sphi 0, %s57
      %s61 = sphi 0, %s60
      %s77 = sphi 0, %s61
      %s81 = sphi 0, %s81
      %s83 = sphi 0, %s81
      %s84 = sphi 0, %s83
      %s98 = sphi 0, %s84
      %s102 = sphi 0, %s102
      %s104 = sphi 0, %s102
      %s105 = sphi 0, %s104
      %s119 = sphi 0, %s105
      %s123 = sphi 0, %s123
      %s125 = sphi 0, %s123
      %s126 = sphi 0, %s125
      %s140 = sphi 0, %s126
      %s144 = sphi 0, %s144
      %s146 = sphi 0, %s144
      %s147 = sphi 0, %s146
      %s161 = sphi 0, %s147
      %s165 = sphi 0, %s165
      %s167 = sphi 0, %s165
      %s168 = sphi 0, %s167
      %s182 = sphi 0, %s168
      %s186 = sphi 0, %s186
      %s188 = sphi 0, %s186
      %s189 = sphi 0, %s188
      %s203 = sphi 0, %s189
      %s207 = sphi 0, %s207
      %s209 = sphi 0, %s207
      %s210 = sphi 0, %s209
      %s224 = sphi 0, %s210
      %s228 = sphi 0, %s228
      %s230 = sphi 0, %s228
      %s231 = sphi 0, %s230
      %s245 = sphi 0, %s231
      %s249 = sphi 0, %s249
      %s251 = sphi 0, %s249
      %s252 = sphi 0, %s251
      %s266 = sphi 0, %s252
      %s270 = sphi 0, %s270
      %s272 = sphi 0, %s270
      %s273 = sphi 0, %s272
      %s287 = sphi 0, %s273
      %s293 = sphi 0, %s295
      %s296 = sphi 0, %s293
      %s297 = sphi 0, %s296
      %s313 = sphi 0, %s297
    $region4: #{duel_noisy_dqn_forward.3} parent=1 // loop_header_branch
      %24 = sbr.rel (%p22) target = $region8
    $region5: #{duel_noisy_dqn_forward.3} parent=1 // loop_body
      %s26 = ssub.s32 %s21, 1
      %s27 = ssub.s32 %s21, 2
      %s28 = sadd.s32 %s21, 1
      %s29 = ssub.s32 %s21, %s28
      %p30 = scmp.eq.s32.totalorder %s29, 0
      %s32 = sadd.s32 %s31, 1
      %s33 = scalar_select %p30, %s31, %s32
      %p36 = pneg %p30
      %p37 = scmp.eq.s32.totalorder %s21, 1
      %p38 = por %p36, %p37
      %p39 = scmp.ne.s32.totalorder %s31, %s34
      %p40 = scmp.eq.s32.totalorder %s21, 0
      %p41 = por %p39, %p40
      %p42 = scmp.ne.s32.totalorder %s31, %s34
      %p43 = scmp.eq.s32.totalorder %s26, 1
      %p44 = por %p42, %p43
      %p45 = scmp.ne.s32.totalorder %s34, %s35
      %p46 = scmp.eq.s32.totalorder %s26, 0
      %p47 = por %p45, %p46
      %p48 = scmp.ne.s32.totalorder %s34, %s35
      %p49 = scmp.eq.s32.totalorder %s27, 1
      %p50 = por %p48, %p49
      %p52 = scmp.ne.s32.totalorder %s35, %s51
      %p53 = scmp.eq.s32.totalorder %s27, 0
      %p54 = por %p52, %p53
      %s55 = ssub.s32 %s21, %s28
      %p56 = scmp.eq.s32.totalorder %s55, 0
      %s58 = sadd.s32 %s57, 1
      %s59 = scalar_select %p56, %s57, %s58
      %p62 = pneg %p56
      %p63 = scmp.eq.s32.totalorder %s21, 1
      %p64 = por %p62, %p63
      %p65 = scmp.ne.s32.totalorder %s57, %s60
      %p66 = scmp.eq.s32.totalorder %s21, 0
      %p67 = por %p65, %p66
      %p68 = scmp.ne.s32.totalorder %s57, %s60
      %p69 = scmp.eq.s32.totalorder %s26, 1
      %p70 = por %p68, %p69
      %p71 = scmp.ne.s32.totalorder %s60, %s61
      %p72 = scmp.eq.s32.totalorder %s26, 0
      %p73 = por %p71, %p72
      %p74 = scmp.ne.s32.totalorder %s60, %s61
      %p75 = scmp.eq.s32.totalorder %s27, 1
      %p76 = por %p74, %p75
      %p78 = scmp.ne.s32.totalorder %s61, %s77
      %p79 = scmp.eq.s32.totalorder %s27, 0
      %p80 = por %p78, %p79
      %s82 = sadd.s32 %s81, 1
      %p85 = scmp.eq.s32.totalorder %s21, 1
      %p86 = scmp.ne.s32.totalorder %s81, %s83
      %p87 = scmp.eq.s32.totalorder %s21, 0
      %p88 = por %p86, %p87
      %p89 = scmp.ne.s32.totalorder %s81, %s83
      %p90 = scmp.eq.s32.totalorder %s26, 1
      %p91 = por %p89, %p90
      %p92 = scmp.ne.s32.totalorder %s83, %s84
      %p93 = scmp.eq.s32.totalorder %s26, 0
      %p94 = por %p92, %p93
      %p95 = scmp.ne.s32.totalorder %s83, %s84
      %p96 = scmp.eq.s32.totalorder %s27, 1
      %p97 = por %p95, %p96
      %p99 = scmp.ne.s32.totalorder %s84, %s98
      %p100 = scmp.eq.s32.totalorder %s27, 0
      %p101 = por %p99, %p100
      %s103 = sadd.s32 %s102, 1
      %p106 = scmp.eq.s32.totalorder %s21, 1
      %p107 = scmp.ne.s32.totalorder %s102, %s104
      %p108 = scmp.eq.s32.totalorder %s21, 0
      %p109 = por %p107, %p108
      %p110 = scmp.ne.s32.totalorder %s102, %s104
      %p111 = scmp.eq.s32.totalorder %s26, 1
      %p112 = por %p110, %p111
      %p113 = scmp.ne.s32.totalorder %s104, %s105
      %p114 = scmp.eq.s32.totalorder %s26, 0
      %p115 = por %p113, %p114
      %p116 = scmp.ne.s32.totalorder %s104, %s105
      %p117 = scmp.eq.s32.totalorder %s27, 1
      %p118 = por %p116, %p117
      %p120 = scmp.ne.s32.totalorder %s105, %s119
      %p121 = scmp.eq.s32.totalorder %s27, 0
      %p122 = por %p120, %p121
      %s124 = sadd.s32 %s123, 1
      %p127 = scmp.eq.s32.totalorder %s21, 1
      %p128 = scmp.ne.s32.totalorder %s123, %s125
      %p129 = scmp.eq.s32.totalorder %s21, 0
      %p130 = por %p128, %p129
      %p131 = scmp.ne.s32.totalorder %s123, %s125
      %p132 = scmp.eq.s32.totalorder %s26, 1
      %p133 = por %p131, %p132
      %p134 = scmp.ne.s32.totalorder %s125, %s126
      %p135 = scmp.eq.s32.totalorder %s26, 0
      %p136 = por %p134, %p135
      %p137 = scmp.ne.s32.totalorder %s125, %s126
      %p138 = scmp.eq.s32.totalorder %s27, 1
      %p139 = por %p137, %p138
      %p141 = scmp.ne.s32.totalorder %s126, %s140
      %p142 = scmp.eq.s32.totalorder %s27, 0
      %p143 = por %p141, %p142
      %s145 = sadd.s32 %s144, 1
      %p148 = scmp.eq.s32.totalorder %s21, 1
      %p149 = scmp.ne.s32.totalorder %s144, %s146
      %p150 = scmp.eq.s32.totalorder %s21, 0
      %p151 = por %p149, %p150
      %p152 = scmp.ne.s32.totalorder %s144, %s146
      %p153 = scmp.eq.s32.totalorder %s26, 1
      %p154 = por %p152, %p153
      %p155 = scmp.ne.s32.totalorder %s146, %s147
      %p156 = scmp.eq.s32.totalorder %s26, 0
      %p157 = por %p155, %p156
      %p158 = scmp.ne.s32.totalorder %s146, %s147
      %p159 = scmp.eq.s32.totalorder %s27, 1
      %p160 = por %p158, %p159
      %p162 = scmp.ne.s32.totalorder %s147, %s161
      %p163 = scmp.eq.s32.totalorder %s27, 0
      %p164 = por %p162, %p163
      %s166 = sadd.s32 %s165, 1
      %p169 = scmp.eq.s32.totalorder %s21, 1
      %p170 = scmp.ne.s32.totalorder %s165, %s167
      %p171 = scmp.eq.s32.totalorder %s21, 0
      %p172 = por %p170, %p171
      %p173 = scmp.ne.s32.totalorder %s165, %s167
      %p174 = scmp.eq.s32.totalorder %s26, 1
      %p175 = por %p173, %p174
      %p176 = scmp.ne.s32.totalorder %s167, %s168
      %p177 = scmp.eq.s32.totalorder %s26, 0
      %p178 = por %p176, %p177
      %p179 = scmp.ne.s32.totalorder %s167, %s168
      %p180 = scmp.eq.s32.totalorder %s27, 1
      %p181 = por %p179, %p180
      %p183 = scmp.ne.s32.totalorder %s168, %s182
      %p184 = scmp.eq.s32.totalorder %s27, 0
      %p185 = por %p183, %p184
      %s187 = sadd.s32 %s186, 1
      %p190 = scmp.eq.s32.totalorder %s21, 1
      %p191 = scmp.ne.s32.totalorder %s186, %s188
      %p192 = scmp.eq.s32.totalorder %s21, 0
      %p193 = por %p191, %p192
      %p194 = scmp.ne.s32.totalorder %s186, %s188
      %p195 = scmp.eq.s32.totalorder %s26, 1
      %p196 = por %p194, %p195
      %p197 = scmp.ne.s32.totalorder %s188, %s189
      %p198 = scmp.eq.s32.totalorder %s26, 0
      %p199 = por %p197, %p198
      %p200 = scmp.ne.s32.totalorder %s188, %s189
      %p201 = scmp.eq.s32.totalorder %s27, 1
      %p202 = por %p200, %p201
      %p204 = scmp.ne.s32.totalorder %s189, %s203
      %p205 = scmp.eq.s32.totalorder %s27, 0
      %p206 = por %p204, %p205
      %s208 = sadd.s32 %s207, 1
      %p211 = scmp.eq.s32.totalorder %s21, 1
      %p212 = scmp.ne.s32.totalorder %s207, %s209
      %p213 = scmp.eq.s32.totalorder %s21, 0
      %p214 = por %p212, %p213
      %p215 = scmp.ne.s32.totalorder %s207, %s209
      %p216 = scmp.eq.s32.totalorder %s26, 1
      %p217 = por %p215, %p216
      %p218 = scmp.ne.s32.totalorder %s209, %s210
      %p219 = scmp.eq.s32.totalorder %s26, 0
      %p220 = por %p218, %p219
      %p221 = scmp.ne.s32.totalorder %s209, %s210
      %p222 = scmp.eq.s32.totalorder %s27, 1
      %p223 = por %p221, %p222
      %p225 = scmp.ne.s32.totalorder %s210, %s224
      %p226 = scmp.eq.s32.totalorder %s27, 0
      %p227 = por %p225, %p226
      %s229 = sadd.s32 %s228, 1
      %p232 = scmp.eq.s32.totalorder %s21, 1
      %p233 = scmp.ne.s32.totalorder %s228, %s230
      %p234 = scmp.eq.s32.totalorder %s21, 0
      %p235 = por %p233, %p234
      %p236 = scmp.ne.s32.totalorder %s228, %s230
      %p237 = scmp.eq.s32.totalorder %s26, 1
      %p238 = por %p236, %p237
      %p239 = scmp.ne.s32.totalorder %s230, %s231
      %p240 = scmp.eq.s32.totalorder %s26, 0
      %p241 = por %p239, %p240
      %p242 = scmp.ne.s32.totalorder %s230, %s231
      %p243 = scmp.eq.s32.totalorder %s27, 1
      %p244 = por %p242, %p243
      %p246 = scmp.ne.s32.totalorder %s231, %s245
      %p247 = scmp.eq.s32.totalorder %s27, 0
      %p248 = por %p246, %p247
      %s250 = sadd.s32 %s249, 1
      %p253 = scmp.eq.s32.totalorder %s21, 1
      %p254 = scmp.ne.s32.totalorder %s249, %s251
      %p255 = scmp.eq.s32.totalorder %s21, 0
      %p256 = por %p254, %p255
      %p257 = scmp.ne.s32.totalorder %s249, %s251
      %p258 = scmp.eq.s32.totalorder %s26, 1
      %p259 = por %p257, %p258
      %p260 = scmp.ne.s32.totalorder %s251, %s252
      %p261 = scmp.eq.s32.totalorder %s26, 0
      %p262 = por %p260, %p261
      %p263 = scmp.ne.s32.totalorder %s251, %s252
      %p264 = scmp.eq.s32.totalorder %s27, 1
      %p265 = por %p263, %p264
      %p267 = scmp.ne.s32.totalorder %s252, %s266
      %p268 = scmp.eq.s32.totalorder %s27, 0
      %p269 = por %p267, %p268
      %s271 = sadd.s32 %s270, 1
      %p274 = scmp.eq.s32.totalorder %s21, 1
      %p275 = scmp.ne.s32.totalorder %s270, %s272
      %p276 = scmp.eq.s32.totalorder %s21, 0
      %p277 = por %p275, %p276
      %p278 = scmp.ne.s32.totalorder %s270, %s272
      %p279 = scmp.eq.s32.totalorder %s26, 1
      %p280 = por %p278, %p279
      %p281 = scmp.ne.s32.totalorder %s272, %s273
      %p282 = scmp.eq.s32.totalorder %s26, 0
      %p283 = por %p281, %p282
      %p284 = scmp.ne.s32.totalorder %s272, %s273
      %p285 = scmp.eq.s32.totalorder %s27, 1
      %p286 = por %p284, %p285
      %p288 = scmp.ne.s32.totalorder %s273, %s287
      %p289 = scmp.eq.s32.totalorder %s27, 0
      %p290 = por %p288, %p289
      %s291 = ssub.s32 %s21, %s28
      %p292 = scmp.eq.s32.totalorder %s291, 0
      %s294 = sadd.s32 %s293, 1
      %s295 = scalar_select %p292, %s293, %s294
      %p298 = pneg %p292
      %p299 = scmp.eq.s32.totalorder %s21, 1
      %p300 = por %p298, %p299
      %p301 = scmp.ne.s32.totalorder %s293, %s296
      %p302 = scmp.eq.s32.totalorder %s21, 0
      %p303 = por %p301, %p302
      %p304 = scmp.ne.s32.totalorder %s293, %s296
      %p305 = scmp.eq.s32.totalorder %s26, 1
      %p306 = por %p304, %p305
      %p307 = scmp.ne.s32.totalorder %s296, %s297
      %p308 = scmp.eq.s32.totalorder %s26, 0
      %p309 = por %p307, %p308
      %p310 = scmp.ne.s32.totalorder %s296, %s297
      %p311 = scmp.eq.s32.totalorder %s27, 1
      %p312 = por %p310, %p311
      %p314 = scmp.ne.s32.totalorder %s297, %s313
      %p315 = scmp.eq.s32.totalorder %s27, 0
      %p316 = por %p314, %p315
      %p317 = scmp.le.s32.totalorder 1, %s21
      %p318 = scmp.lt.s32.totalorder %s21, 3
      %p319 = pnand %p317, %p318
      %p320 = pneg %p319
      // Predicated region
      $region9: #{duel_noisy_dqn_forward.3} parent=5 // pred_check
        _
      $region10: #{duel_noisy_dqn_forward.3} parent=5 // pred_check_branch
        %322 = sbr.rel (%p319) target = $region12
      $region11: #{duel_noisy_dqn_forward.3} parent=5 // pred_region
        %s323 = ssub.s32 %s21, 1
        // Predicated region
        $region13: #{duel_noisy_dqn_forward.3} parent=11 // pred_check
          %p324 = pneg %p94
        $region14: #{duel_noisy_dqn_forward.3} parent=11 // pred_check_branch
          %326 = sbr.rel (%p324) target = $region16
        $region15: #{duel_noisy_dqn_forward.3} parent=11 // pred_region
          _
        $region16: #{duel_noisy_dqn_forward.3} parent=11 // pred_fallthru
          _
        // Predicated region
        $region17: #{duel_noisy_dqn_forward.3} parent=11 // pred_check
          %p327 = pneg %p115
        $region18: #{duel_noisy_dqn_forward.3} parent=11 // pred_check_branch
          %329 = sbr.rel (%p327) target = $region20
        $region19: #{duel_noisy_dqn_forward.3} parent=11 // pred_region
          _
        $region20: #{duel_noisy_dqn_forward.3} parent=11 // pred_fallthru
          _
        // Predicated region
        $region21: #{duel_noisy_dqn_forward.3} parent=11 // pred_check
          %p330 = pneg %p136
        $region22: #{duel_noisy_dqn_forward.3} parent=11 // pred_check_branch
          %332 = sbr.rel (%p330) target = $region24
        $region23: #{duel_noisy_dqn_forward.3} parent=11 // pred_region
          _
        $region24: #{duel_noisy_dqn_forward.3} parent=11 // pred_fallthru
          _
        // Predicated region
        $region25: #{duel_noisy_dqn_forward.3} parent=11 // pred_check
          %p333 = pneg %p157
        $region26: #{duel_noisy_dqn_forward.3} parent=11 // pred_check_branch
          %335 = sbr.rel (%p333) target = $region28
        $region27: #{duel_noisy_dqn_forward.3} parent=11 // pred_region
          _
        $region28: #{duel_noisy_dqn_forward.3} parent=11 // pred_fallthru
          _
        // Predicated region
        $region29: #{duel_noisy_dqn_forward.3} parent=11 // pred_check
          %p336 = pneg %p178
        $region30: #{duel_noisy_dqn_forward.3} parent=11 // pred_check_branch
          %338 = sbr.rel (%p336) target = $region32
        $region31: #{duel_noisy_dqn_forward.3} parent=11 // pred_region
          _
        $region32: #{duel_noisy_dqn_forward.3} parent=11 // pred_fallthru
          _
        // Predicated region
        $region33: #{duel_noisy_dqn_forward.3} parent=11 // pred_check
          %p339 = pneg %p199
        $region34: #{duel_noisy_dqn_forward.3} parent=11 // pred_check_branch
          %341 = sbr.rel (%p339) target = $region36
        $region35: #{duel_noisy_dqn_forward.3} parent=11 // pred_region
          _
        $region36: #{duel_noisy_dqn_forward.3} parent=11 // pred_fallthru
          _
        // Predicated region
        $region37: #{duel_noisy_dqn_forward.3} parent=11 // pred_check
          %p342 = pneg %p220
        $region38: #{duel_noisy_dqn_forward.3} parent=11 // pred_check_branch
          %344 = sbr.rel (%p342) target = $region40
        $region39: #{duel_noisy_dqn_forward.3} parent=11 // pred_region
          _
        $region40: #{duel_noisy_dqn_forward.3} parent=11 // pred_fallthru
          _
        // Predicated region
        $region41: #{duel_noisy_dqn_forward.3} parent=11 // pred_check
          %p345 = pneg %p241
        $region42: #{duel_noisy_dqn_forward.3} parent=11 // pred_check_branch
          %347 = sbr.rel (%p345) target = $region44
        $region43: #{duel_noisy_dqn_forward.3} parent=11 // pred_region
          _
        $region44: #{duel_noisy_dqn_forward.3} parent=11 // pred_fallthru
          _
        // Predicated region
        $region45: #{duel_noisy_dqn_forward.3} parent=11 // pred_check
          %p348 = pneg %p262
        $region46: #{duel_noisy_dqn_forward.3} parent=11 // pred_check_branch
          %350 = sbr.rel (%p348) target = $region48
        $region47: #{duel_noisy_dqn_forward.3} parent=11 // pred_region
          _
        $region48: #{duel_noisy_dqn_forward.3} parent=11 // pred_fallthru
          _
        // Predicated region
        $region49: #{duel_noisy_dqn_forward.3} parent=11 // pred_check
          %p351 = pneg %p283
        $region50: #{duel_noisy_dqn_forward.3} parent=11 // pred_check_branch
          %353 = sbr.rel (%p351) target = $region52
        $region51: #{duel_noisy_dqn_forward.3} parent=11 // pred_region
          _
        $region52: #{duel_noisy_dqn_forward.3} parent=11 // pred_fallthru
          _
      $region12: #{duel_noisy_dqn_forward.3} parent=5 // pred_fallthru
        _
      %p354 = scmp.lt.s32.totalorder %s21, 2
      // Predicated region
      $region53: #{duel_noisy_dqn_forward.3} parent=5 // pred_check
        %p355 = pneg %p354
      $region54: #{duel_noisy_dqn_forward.3} parent=5 // pred_check_branch
        %357 = sbr.rel (%p355) target = $region56
      $region55: #{duel_noisy_dqn_forward.3} parent=5 // pred_region
        // Predicated region
        $region57: #{duel_noisy_dqn_forward.3} parent=55 // pred_check
          %p358 = pneg %p41
        $region58: #{duel_noisy_dqn_forward.3} parent=55 // pred_check_branch
          %360 = sbr.rel (%p358) target = $region60
        $region59: #{duel_noisy_dqn_forward.3} parent=55 // pred_region
          %s361 = smul.u32 2, %s21
          %p362 = scmp.lt.s32.totalorder %s361, 3
          %s363 = scalar_select %p362, %s361, 3
          %s364 = smul.addr %s363, 11
          %s365 = smul.addr %s364, 4
          %s366 = scalar_lea.vmem %s0, %s365
          %s367 = smul.u32 2, %s21
        $region60: #{duel_noisy_dqn_forward.3} parent=55 // pred_fallthru
          _
        // Predicated region
        $region61: #{duel_noisy_dqn_forward.3} parent=55 // pred_check
          %p368 = pneg %p67
        $region62: #{duel_noisy_dqn_forward.3} parent=55 // pred_check_branch
          %370 = sbr.rel (%p368) target = $region64
        $region63: #{duel_noisy_dqn_forward.3} parent=55 // pred_region
          %s371 = smul.u32 2, %s21
          %p372 = scmp.lt.s32.totalorder %s371, 3
          %s373 = scalar_select %p372, %s371, 3
          %s374 = smul.addr %s373, 11
          %s375 = smul.addr %s374, 4
          %s376 = scalar_lea.vmem %s1, %s375
          %s377 = smul.u32 2, %s21
        $region64: #{duel_noisy_dqn_forward.3} parent=55 // pred_fallthru
          _
      $region56: #{duel_noisy_dqn_forward.3} parent=5 // pred_fallthru
        _
      %p378 = scmp.le.s32.totalorder 1, %s21
      %p379 = scmp.lt.s32.totalorder %s21, 3
      %p380 = pnand %p378, %p379
      %p381 = pneg %p380
      // Predicated region
      $region65: #{duel_noisy_dqn_forward.3} parent=5 // pred_check
        _
      $region66: #{duel_noisy_dqn_forward.3} parent=5 // pred_check_branch
        %383 = sbr.rel (%p380) target = $region68
      $region67: #{duel_noisy_dqn_forward.3} parent=5 // pred_region
        %s384 = ssub.s32 %s21, 1
        %s385 = smul.u32 2, %s26
        %p386 = scmp.lt.s32.totalorder %s385, 3
        %s387 = scalar_select %p386, %s385, 3
        %s388 = smul.addr %s387, 11
        %s389 = smul.addr %s388, 4
        %s390 = scalar_lea.vmem %s0, %s389
        %p391 = pneg %p47
        %p392 = pneg %p44
        %s393 = smul.u32 2, %s26
        %p394 = scmp.lt.s32.totalorder %s393, 3
        %s395 = scalar_select %p394, %s393, 3
        %s396 = smul.addr %s395, 11
        %s397 = smul.addr %s396, 4
        %s398 = scalar_lea.vmem %s1, %s397
        %p399 = pneg %p73
        %p400 = pneg %p70
        %p401 = pneg %p94
        %p402 = pneg %p91
        %p403 = pneg %p115
        %p404 = pneg %p112
        %p405 = pneg %p136
        %p406 = pneg %p133
        %p407 = pneg %p157
        %p408 = pneg %p154
        %p409 = pneg %p178
        %p410 = pneg %p175
        %p411 = pneg %p199
        %p412 = pneg %p196
        %p413 = pneg %p220
        %p414 = pneg %p217
        %p415 = pneg %p241
        %p416 = pneg %p238
        %p417 = pneg %p262
        %p418 = pneg %p259
        %p419 = pneg %p283
        %p420 = pneg %p280
        %p421 = pneg %p309
        %p422 = pneg %p306
        %s423 = sand.u32 %s296, 1
        %s424 = scalar_lea.sflag [#allocation3], %s423
        %s425 = sand.u32 %s296, 1
        %s426 = smul.addr %s425, 2
        %s427 = scalar_lea.vmem [#allocation2], %s426
        %s428 = smul.u32 2, %s26
        %p429 = scmp.lt.s32.totalorder %s428, 3
        %s430 = scalar_select %p429, %s428, 3
        %s431 = smul.addr %s430, 11
        %s432 = smul.addr %s431, 4
        %s433 = scalar_lea.vmem %s0, %s432
        %s434 = smul.u32 2, %s26
        %s435 = smul.u32 2, %s26
        %p436 = scmp.lt.s32.totalorder %s435, 3
        %s437 = scalar_select %p436, %s435, 3
        %s438 = smul.addr %s437, 11
        %s439 = smul.addr %s438, 4
        %s440 = scalar_lea.vmem %s1, %s439
        %s441 = smul.u32 2, %s26
        %v443 = vld [vmem:[%s2] sm:$0xf]
        %v444 = vld [vmem:[%s2 + $0x4] sm:$0xf]
        %v445 = vld [vmem:[%s2 + $0x8] sm:$0xf]
        %v446 = vld [vmem:[%s2 + $0xc] sm:$0xf]
        %v447 = vld [vmem:[%s2 + $0x10] sm:$0xf]
        %v448 = vld [vmem:[%s2 + $0x14] sm:$0xf]
        %v449 = vld [vmem:[%s2 + $0x18] sm:$0xf]
        %v450 = vld [vmem:[%s2 + $0x1c] sm:$0xf]
        %v451 = vld [vmem:[%s2 + $0x20] sm:$0xf]
        %v452 = vld [vmem:[%s2 + $0x24] sm:$0xf]
        %v453 = vld [vmem:[%s2 + $0x28] sm:$0xf]
        %v454 = vld [vmem:[%s2 + $0x2c] sm:$0xf]
        %v455 = vld [vmem:[%s2 + $0x30] sm:$0xf]
        %v456 = vld [vmem:[%s2 + $0x34] sm:$0xf]
        %v457 = vld [vmem:[%s2 + $0x38] sm:$0xf]
        %v458 = vld [vmem:[%s2 + $0x3c] sm:$0xf]
        %v459 = vld [vmem:[%s2 + $0x40] sm:$0xf]
        %v460 = vld [vmem:[%s2 + $0x44] sm:$0xf]
        %v461 = vld [vmem:[%s2 + $0x48] sm:$0xf]
        %v462 = vld [vmem:[%s2 + $0x4c] sm:$0xf]
        %v463 = vld [vmem:[%s2 + $0x50] sm:$0xf]
        %v464 = vld [vmem:[%s2 + $0x54] sm:$0xf]
        %v465 = vld [vmem:[%s2 + $0x58] sm:$0xf]
        %v466 = vld [vmem:[%s2 + $0x5c] sm:$0xf]
        %v467 = vld [vmem:[%s2 + $0x60] sm:$0xf]
        %v468 = vld [vmem:[%s2 + $0x64] sm:$0xf]
        %v469 = vld [vmem:[%s2 + $0x68] sm:$0xf]
        %v470 = vld [vmem:[%s2 + $0x6c] sm:$0xf]
        %v471 = vld [vmem:[%s2 + $0x70] sm:$0xf]
        %v472 = vld [vmem:[%s2 + $0x74] sm:$0xf]
        %v473 = vld [vmem:[%s2 + $0x78] sm:$0xf]
        %v474 = vld [vmem:[%s2 + $0x7c] sm:$0xf]
        %v475 = vld [vmem:[%s3] sm:$0x1]
        %v476 = vld [vmem:[%s4] sm:$0xf]
        %v477 = vld [vmem:[%s4 + $0x4] sm:$0xf]
        %v478 = vld [vmem:[%s4 + $0x8] sm:$0xf]
        %v479 = vld [vmem:[%s4 + $0xc] sm:$0xf]
        %v480 = vld [vmem:[%s4 + $0x10] sm:$0xf]
        %v481 = vld [vmem:[%s4 + $0x14] sm:$0xf]
        %v482 = vld [vmem:[%s4 + $0x18] sm:$0xf]
        %v483 = vld [vmem:[%s4 + $0x1c] sm:$0xf]
        %v484 = vld [vmem:[%s4 + $0x20] sm:$0xf]
        %v485 = vld [vmem:[%s4 + $0x24] sm:$0xf]
        %v486 = vld [vmem:[%s4 + $0x28] sm:$0xf]
        %v487 = vld [vmem:[%s4 + $0x2c] sm:$0xf]
        %v488 = vld [vmem:[%s4 + $0x30] sm:$0xf]
        %v489 = vld [vmem:[%s4 + $0x34] sm:$0xf]
        %v490 = vld [vmem:[%s4 + $0x38] sm:$0xf]
        %v491 = vld [vmem:[%s4 + $0x3c] sm:$0xf]
        %v492 = vld [vmem:[%s4 + $0x40] sm:$0xf]
        %v493 = vld [vmem:[%s4 + $0x44] sm:$0xf]
        %v494 = vld [vmem:[%s4 + $0x48] sm:$0xf]
        %v495 = vld [vmem:[%s4 + $0x4c] sm:$0xf]
        %v496 = vld [vmem:[%s4 + $0x50] sm:$0xf]
        %v497 = vld [vmem:[%s4 + $0x54] sm:$0xf]
        %v498 = vld [vmem:[%s4 + $0x58] sm:$0xf]
        %v499 = vld [vmem:[%s4 + $0x5c] sm:$0xf]
        %v500 = vld [vmem:[%s4 + $0x60] sm:$0xf]
        %v501 = vld [vmem:[%s4 + $0x64] sm:$0xf]
        %v502 = vld [vmem:[%s4 + $0x68] sm:$0xf]
        %v503 = vld [vmem:[%s4 + $0x6c] sm:$0xf]
        %v504 = vld [vmem:[%s4 + $0x70] sm:$0xf]
        %v505 = vld [vmem:[%s4 + $0x74] sm:$0xf]
        %v506 = vld [vmem:[%s4 + $0x78] sm:$0xf]
        %v507 = vld [vmem:[%s4 + $0x7c] sm:$0xf]
        %v508 = vld [vmem:[%s4 + $0x80] sm:$0xf]
        %v509 = vld [vmem:[%s4 + $0x84] sm:$0xf]
        %v510 = vld [vmem:[%s4 + $0x88] sm:$0xf]
        %v511 = vld [vmem:[%s4 + $0x8c] sm:$0xf]
        %v512 = vld [vmem:[%s4 + $0x90] sm:$0xf]
        %v513 = vld [vmem:[%s4 + $0x94] sm:$0xf]
        %v514 = vld [vmem:[%s4 + $0x98] sm:$0xf]
        %v515 = vld [vmem:[%s4 + $0x9c] sm:$0xf]
        %v516 = vld [vmem:[%s4 + $0xa0] sm:$0xf]
        %v517 = vld [vmem:[%s4 + $0xa4] sm:$0xf]
        %v518 = vld [vmem:[%s4 + $0xa8] sm:$0xf]
        %v519 = vld [vmem:[%s4 + $0xac] sm:$0xf]
        %v520 = vld [vmem:[%s4 + $0xb0] sm:$0xf]
        %v521 = vld [vmem:[%s4 + $0xb4] sm:$0xf]
        %v522 = vld [vmem:[%s4 + $0xb8] sm:$0xf]
        %v523 = vld [vmem:[%s4 + $0xbc] sm:$0xf]
        %v524 = vld [vmem:[%s4 + $0xc0] sm:$0xf]
        %v525 = vld [vmem:[%s4 + $0xc4] sm:$0xf]
        %v526 = vld [vmem:[%s4 + $0xc8] sm:$0xf]
        %v527 = vld [vmem:[%s4 + $0xcc] sm:$0xf]
        %v528 = vld [vmem:[%s4 + $0xd0] sm:$0xf]
        %v529 = vld [vmem:[%s4 + $0xd4] sm:$0xf]
        %v530 = vld [vmem:[%s4 + $0xd8] sm:$0xf]
        %v531 = vld [vmem:[%s4 + $0xdc] sm:$0xf]
        %v532 = vld [vmem:[%s4 + $0xe0] sm:$0xf]
        %v533 = vld [vmem:[%s4 + $0xe4] sm:$0xf]
        %v534 = vld [vmem:[%s4 + $0xe8] sm:$0xf]
        %v535 = vld [vmem:[%s4 + $0xec] sm:$0xf]
        %v536 = vld [vmem:[%s4 + $0xf0] sm:$0xf]
        %v537 = vld [vmem:[%s4 + $0xf4] sm:$0xf]
        %v538 = vld [vmem:[%s4 + $0xf8] sm:$0xf]
        %v539 = vld [vmem:[%s4 + $0xfc] sm:$0xf]
        %v540 = vld [vmem:[%s5] sm:$0x1]
        %v541 = vld [vmem:[%s6] sm:$0xf]
        %v542 = vld [vmem:[%s6 + $0x4] sm:$0xf]
        %v543 = vld [vmem:[%s6 + $0x8] sm:$0xf]
        %v544 = vld [vmem:[%s6 + $0xc] sm:$0xf]
        %v545 = vld [vmem:[%s6 + $0x10] sm:$0xf]
        %v546 = vld [vmem:[%s6 + $0x14] sm:$0xf]
        %v547 = vld [vmem:[%s6 + $0x18] sm:$0xf]
        %v548 = vld [vmem:[%s6 + $0x1c] sm:$0xf]
        %v549 = vld [vmem:[%s6 + $0x20] sm:$0xf]
        %v550 = vld [vmem:[%s6 + $0x24] sm:$0xf]
        %v551 = vld [vmem:[%s6 + $0x28] sm:$0xf]
        %v552 = vld [vmem:[%s6 + $0x2c] sm:$0xf]
        %v553 = vld [vmem:[%s6 + $0x30] sm:$0xf]
        %v554 = vld [vmem:[%s6 + $0x34] sm:$0xf]
        %v555 = vld [vmem:[%s6 + $0x38] sm:$0xf]
        %v556 = vld [vmem:[%s6 + $0x3c] sm:$0xf]
        %v557 = vld [vmem:[%s6 + $0x40] sm:$0xf]
        %v558 = vld [vmem:[%s6 + $0x44] sm:$0xf]
        %v559 = vld [vmem:[%s6 + $0x48] sm:$0xf]
        %v560 = vld [vmem:[%s6 + $0x4c] sm:$0xf]
        %v561 = vld [vmem:[%s6 + $0x50] sm:$0xf]
        %v562 = vld [vmem:[%s6 + $0x54] sm:$0xf]
        %v563 = vld [vmem:[%s6 + $0x58] sm:$0xf]
        %v564 = vld [vmem:[%s6 + $0x5c] sm:$0xf]
        %v565 = vld [vmem:[%s6 + $0x60] sm:$0xf]
        %v566 = vld [vmem:[%s6 + $0x64] sm:$0xf]
        %v567 = vld [vmem:[%s6 + $0x68] sm:$0xf]
        %v568 = vld [vmem:[%s6 + $0x6c] sm:$0xf]
        %v569 = vld [vmem:[%s6 + $0x70] sm:$0xf]
        %v570 = vld [vmem:[%s6 + $0x74] sm:$0xf]
        %v571 = vld [vmem:[%s6 + $0x78] sm:$0xf]
        %v572 = vld [vmem:[%s6 + $0x7c] sm:$0xf]
        %v573 = vld [vmem:[%s6 + $0x80] sm:$0xf]
        %v574 = vld [vmem:[%s6 + $0x84] sm:$0xf]
        %v575 = vld [vmem:[%s6 + $0x88] sm:$0xf]
        %v576 = vld [vmem:[%s6 + $0x8c] sm:$0xf]
        %v577 = vld [vmem:[%s6 + $0x90] sm:$0xf]
        %v578 = vld [vmem:[%s6 + $0x94] sm:$0xf]
        %v579 = vld [vmem:[%s6 + $0x98] sm:$0xf]
        %v580 = vld [vmem:[%s6 + $0x9c] sm:$0xf]
        %v581 = vld [vmem:[%s6 + $0xa0] sm:$0xf]
        %v582 = vld [vmem:[%s6 + $0xa4] sm:$0xf]
        %v583 = vld [vmem:[%s6 + $0xa8] sm:$0xf]
        %v584 = vld [vmem:[%s6 + $0xac] sm:$0xf]
        %v585 = vld [vmem:[%s6 + $0xb0] sm:$0xf]
        %v586 = vld [vmem:[%s6 + $0xb4] sm:$0xf]
        %v587 = vld [vmem:[%s6 + $0xb8] sm:$0xf]
        %v588 = vld [vmem:[%s6 + $0xbc] sm:$0xf]
        %v589 = vld [vmem:[%s6 + $0xc0] sm:$0xf]
        %v590 = vld [vmem:[%s6 + $0xc4] sm:$0xf]
        %v591 = vld [vmem:[%s6 + $0xc8] sm:$0xf]
        %v592 = vld [vmem:[%s6 + $0xcc] sm:$0xf]
        %v593 = vld [vmem:[%s6 + $0xd0] sm:$0xf]
        %v594 = vld [vmem:[%s6 + $0xd4] sm:$0xf]
        %v595 = vld [vmem:[%s6 + $0xd8] sm:$0xf]
        %v596 = vld [vmem:[%s6 + $0xdc] sm:$0xf]
        %v597 = vld [vmem:[%s6 + $0xe0] sm:$0xf]
        %v598 = vld [vmem:[%s6 + $0xe4] sm:$0xf]
        %v599 = vld [vmem:[%s6 + $0xe8] sm:$0xf]
        %v600 = vld [vmem:[%s6 + $0xec] sm:$0xf]
        %v601 = vld [vmem:[%s6 + $0xf0] sm:$0xf]
        %v602 = vld [vmem:[%s6 + $0xf4] sm:$0xf]
        %v603 = vld [vmem:[%s6 + $0xf8] sm:$0xf]
        %v604 = vld [vmem:[%s6 + $0xfc] sm:$0xf]
        %v605 = vld [vmem:[%s6 + $0x100] sm:$0xf]
        %v606 = vld [vmem:[%s6 + $0x104] sm:$0xf]
        %v607 = vld [vmem:[%s6 + $0x108] sm:$0xf]
        %v608 = vld [vmem:[%s6 + $0x10c] sm:$0xf]
        %v609 = vld [vmem:[%s6 + $0x110] sm:$0xf]
        %v610 = vld [vmem:[%s6 + $0x114] sm:$0xf]
        %v611 = vld [vmem:[%s6 + $0x118] sm:$0xf]
        %v612 = vld [vmem:[%s6 + $0x11c] sm:$0xf]
        %v613 = vld [vmem:[%s7] sm:$0x1]
        %v614 = vld [vmem:[%s433] sm:$0x7]
        %s615 = scalar_lea.vmem %s433, 4
        %v616 = vld [vmem:[%s615] sm:$0x7]
        %s617 = scalar_lea.vmem %s433, 8
        %v618 = vld [vmem:[%s617] sm:$0x7]
        %s619 = scalar_lea.vmem %s433, 12
        %v620 = vld [vmem:[%s619] sm:$0x7]
        %s621 = scalar_lea.vmem %s433, 16
        %v622 = vld [vmem:[%s621] sm:$0x7]
        %s623 = scalar_lea.vmem %s433, 20
        %v624 = vld [vmem:[%s623] sm:$0x7]
        %s625 = scalar_lea.vmem %s433, 24
        %v626 = vld [vmem:[%s625] sm:$0x7]
        %s627 = scalar_lea.vmem %s433, 28
        %v628 = vld [vmem:[%s627] sm:$0x7]
        %s629 = scalar_lea.vmem %s433, 32
        %v630 = vld [vmem:[%s629] sm:$0x7]
        %s631 = scalar_lea.vmem %s433, 36
        %v632 = vld [vmem:[%s631] sm:$0x7]
        %s633 = scalar_lea.vmem %s433, 40
        %v634 = vld [vmem:[%s633] sm:$0x7]
        %v635 = vld [vmem:[%s440] sm:$0x7]
        %s636 = scalar_lea.vmem %s440, 4
        %v637 = vld [vmem:[%s636] sm:$0x7]
        %s638 = scalar_lea.vmem %s440, 8
        %v639 = vld [vmem:[%s638] sm:$0x7]
        %s640 = scalar_lea.vmem %s440, 12
        %v641 = vld [vmem:[%s640] sm:$0x7]
        %s642 = scalar_lea.vmem %s440, 16
        %v643 = vld [vmem:[%s642] sm:$0x7]
        %s644 = scalar_lea.vmem %s440, 20
        %v645 = vld [vmem:[%s644] sm:$0x7]
        %s646 = scalar_lea.vmem %s440, 24
        %v647 = vld [vmem:[%s646] sm:$0x7]
        %s648 = scalar_lea.vmem %s440, 28
        %v649 = vld [vmem:[%s648] sm:$0x7]
        %s650 = scalar_lea.vmem %s440, 32
        %v651 = vld [vmem:[%s650] sm:$0x7]
        %s652 = scalar_lea.vmem %s440, 36
        %v653 = vld [vmem:[%s652] sm:$0x7]
        %s654 = scalar_lea.vmem %s440, 40
        %v655 = vld [vmem:[%s654] sm:$0x7]
        %v657 = vunpack.c.l.b16 %v635
        %v658 = vpack.c.b16 %v657, %v657
        %659 = vrot.lane.b32.xlu0 %v658, 64
        %v660 = vpop.permute.xlu0 %659
        %v662 = vunpack.c.l.b16 %v637
        %v663 = vpack.c.b16 %v662, %v662
        %664 = vrot.lane.b32.xlu0 %v663, 64
        %v665 = vpop.permute.xlu0 %664
        %vm666 = vcmask 523264
        %v669 = vsel %vm666, %v614, %v660
        %v673 = vsel %vm666, %v616, %v665
        %v676 = vunpack.c.l.b16 %v614
        %v677 = vpack.c.b16 %v676, %v676
        %v679 = vshrl.u32 %v677, 16
        %v681 = vshll.u32 %v677, 16
        %v683 = vrot.slane %v681, 1
        %v684 = vor.u32 %v679, %v683
        %685 = vrot.lane.b32.xlu0 %v684, 64
        %v686 = vpop.permute.xlu0 %685
        %v688 = vunpack.c.l.b16 %v616
        %v689 = vpack.c.b16 %v688, %v688
        %v691 = vshrl.u32 %v689, 16
        %v693 = vshll.u32 %v689, 16
        %v695 = vrot.slane %v693, 1
        %v696 = vor.u32 %v691, %v695
        %697 = vrot.lane.b32.xlu0 %v696, 64
        %v698 = vpop.permute.xlu0 %697
        %v701 = vsel %vm666, %v635, %v686
        %v704 = vsel %vm666, %v637, %v698
        %v705 = vshrl.u32 %v701, 16
        %v707 = vrot.slane %v705, 5
        %v708 = vshll.u32 %v701, 16
        %v710 = vrot.slane %v708, 6
        %v711 = vor.u32 %v707, %v710
        %v712 = vshrl.u32 %v704, 16
        %v714 = vrot.slane %v712, 5
        %v715 = vshll.u32 %v704, 16
        %v717 = vrot.slane %v715, 6
        %v718 = vor.u32 %v714, %v717
        %vm721 = vcmask 1042432
        %vm722 = vsmask.f32 2304
        %vm723 = vmand %vm721, %vm722
        %v724 = vsel %vm723, %v669, %v711
        %v725 = vsel %vm723, %v673, %v718
        %v727 = vperm.slane %v475, 0
        %v761 = vunpack.c.l.b16 %v443
        %v762 = vunpack.c.l.b16 %v444
        %v763 = vunpack.c.l.b16 %v445
        %v764 = vunpack.c.l.b16 %v446
        %v765 = vunpack.c.l.b16 %v447
        %v766 = vunpack.c.l.b16 %v448
        %v767 = vunpack.c.l.b16 %v449
        %v768 = vunpack.c.l.b16 %v450
        %v769 = vunpack.c.l.b16 %v451
        %v770 = vunpack.c.l.b16 %v452
        %v771 = vunpack.c.l.b16 %v453
        %v772 = vunpack.c.l.b16 %v454
        %v773 = vunpack.c.l.b16 %v455
        %v774 = vunpack.c.l.b16 %v456
        %v775 = vunpack.c.l.b16 %v457
        %v776 = vunpack.c.l.b16 %v458
        %v777 = vunpack.c.l.b16 %v459
        %v778 = vunpack.c.l.b16 %v460
        %v779 = vunpack.c.l.b16 %v461
        %v780 = vunpack.c.l.b16 %v462
        %v781 = vunpack.c.l.b16 %v463
        %v782 = vunpack.c.l.b16 %v464
        %v783 = vunpack.c.l.b16 %v465
        %v784 = vunpack.c.l.b16 %v466
        %v785 = vunpack.c.l.b16 %v467
        %v786 = vunpack.c.l.b16 %v468
        %v787 = vunpack.c.l.b16 %v469
        %v788 = vunpack.c.l.b16 %v470
        %v789 = vunpack.c.l.b16 %v471
        %v790 = vunpack.c.l.b16 %v472
        %v791 = vunpack.c.l.b16 %v473
        %v792 = vunpack.c.l.b16 %v474
        %v793 = vpack.c.b16 %v762, %v761
        %v794 = vpack.c.b16 %v764, %v763
        %v795 = vpack.c.b16 %v766, %v765
        %v796 = vpack.c.b16 %v768, %v767
        %v797 = vpack.c.b16 %v770, %v769
        %v798 = vpack.c.b16 %v772, %v771
        %v799 = vpack.c.b16 %v774, %v773
        %v800 = vpack.c.b16 %v776, %v775
        %v801 = vpack.c.b16 %v778, %v777
        %v802 = vpack.c.b16 %v780, %v779
        %v803 = vpack.c.b16 %v782, %v781
        %v804 = vpack.c.b16 %v784, %v783
        %v805 = vpack.c.b16 %v786, %v785
        %v806 = vpack.c.b16 %v788, %v787
        %v807 = vpack.c.b16 %v790, %v789
        %v808 = vpack.c.b16 %v792, %v791
        %825 = vmatpush.bf16.msra.mxu0 %v800
        %826 = vmatpush.bf16.msra.mxu0 %v799
        %827 = vmatpush.bf16.msra.mxu0 %v798
        %828 = vmatpush.bf16.msra.mxu0 %v797
        %829 = vmatpush.bf16.msra.mxu0 %v796
        %830 = vmatpush.bf16.msra.mxu0 %v795
        %831 = vmatpush.bf16.msra.mxu0 %v794
        %832 = vmatpush.bf16.msra.mxu0 %v793
        %833 = vmatmul.bf16.gmra.mxu0 %v724
        %v834 = vpop.f32.mrf.mxu0
        %v835 = vadd.f32 %v727, %v834
        %v836 = vpop.f32.mrf.mxu0
        %v837 = vadd.f32 %v727, %v836
        %838 = vdwg.mxu0
        %839 = vmatpush.bf16.msra.mxu0 %v808
        %840 = vmatpush.bf16.msra.mxu0 %v807
        %841 = vmatpush.bf16.msra.mxu0 %v806
        %842 = vmatpush.bf16.msra.mxu0 %v805
        %843 = vmatpush.bf16.msra.mxu0 %v804
        %844 = vmatpush.bf16.msra.mxu0 %v803
        %845 = vmatpush.bf16.msra.mxu0 %v802
        %846 = vmatpush.bf16.msra.mxu0 %v801
        %847 = vmatmul.bf16.gmra.mxu0 %v725
        %v848 = vpop.f32.mrf.mxu0
        %v849 = vadd.f32 %v835, %v848
        %v850 = vpop.f32.mrf.mxu0
        %v851 = vadd.f32 %v837, %v850
        %852 = vdwg.mxu0
        %v853 = vmax.f32 %v849, 0.0
        %v854 = vmax.f32 %v851, 0.0
        %v855 = vpack.c.bf16 %v853, %v853
        %v856 = vpack.c.bf16 %v854, %v854
        %v858 = vunpack.c.l.b16 %v639
        %v859 = vpack.c.b16 %v858, %v858
        %860 = vrot.lane.b32.xlu0 %v859, 64
        %v861 = vpop.permute.xlu0 %860
        %v864 = vsel %vm666, %v618, %v861
        %v867 = vunpack.c.l.b16 %v618
        %v868 = vpack.c.b16 %v867, %v867
        %v870 = vshrl.u32 %v868, 16
        %v872 = vshll.u32 %v868, 16
        %v874 = vrot.slane %v872, 1
        %v875 = vor.u32 %v870, %v874
        %876 = vrot.lane.b32.xlu0 %v875, 64
        %v877 = vpop.permute.xlu0 %876
        %v880 = vsel %vm666, %v639, %v877
        %v881 = vshrl.u32 %v880, 16
        %v883 = vrot.slane %v881, 5
        %v884 = vshll.u32 %v880, 16
        %v886 = vrot.slane %v884, 6
        %v887 = vor.u32 %v883, %v886
        %v889 = vsel %vm723, %v864, %v887
        %890 = vmatpush.bf16.msra.mxu0 %v800
        %891 = vmatpush.bf16.msra.mxu0 %v799
        %892 = vmatpush.bf16.msra.mxu0 %v798
        %893 = vmatpush.bf16.msra.mxu0 %v797
        %894 = vmatpush.bf16.msra.mxu0 %v796
        %895 = vmatpush.bf16.msra.mxu0 %v795
        %896 = vmatpush.bf16.msra.mxu0 %v794
        %897 = vmatpush.bf16.msra.mxu0 %v793
        %898 = vmatmul.bf16.gmra.mxu0 %v725
        %v899 = vpop.f32.mrf.mxu0
        %v900 = vadd.f32 %v727, %v899
        %v901 = vpop.f32.mrf.mxu0
        %v902 = vadd.f32 %v727, %v901
        %903 = vdwg.mxu0
        %904 = vmatpush.bf16.msra.mxu0 %v808
        %905 = vmatpush.bf16.msra.mxu0 %v807
        %906 = vmatpush.bf16.msra.mxu0 %v806
        %907 = vmatpush.bf16.msra.mxu0 %v805
        %908 = vmatpush.bf16.msra.mxu0 %v804
        %909 = vmatpush.bf16.msra.mxu0 %v803
        %910 = vmatpush.bf16.msra.mxu0 %v802
        %911 = vmatpush.bf16.msra.mxu0 %v801
        %912 = vmatmul.bf16.gmra.mxu0 %v889
        %v913 = vpop.f32.mrf.mxu0
        %v914 = vadd.f32 %v900, %v913
        %v915 = vpop.f32.mrf.mxu0
        %v916 = vadd.f32 %v902, %v915
        %917 = vdwg.mxu0
        %v918 = vmax.f32 %v914, 0.0
        %v919 = vmax.f32 %v916, 0.0
        %v920 = vpack.c.bf16 %v918, %v918
        %v921 = vpack.c.bf16 %v919, %v919
        %v923 = vunpack.c.l.b16 %v641
        %v924 = vpack.c.b16 %v923, %v923
        %925 = vrot.lane.b32.xlu0 %v924, 64
        %v926 = vpop.permute.xlu0 %925
        %v929 = vsel %vm666, %v620, %v926
        %v932 = vunpack.c.l.b16 %v620
        %v933 = vpack.c.b16 %v932, %v932
        %v935 = vshrl.u32 %v933, 16
        %v937 = vshll.u32 %v933, 16
        %v939 = vrot.slane %v937, 1
        %v940 = vor.u32 %v935, %v939
        %941 = vrot.lane.b32.xlu0 %v940, 64
        %v942 = vpop.permute.xlu0 %941
        %v945 = vsel %vm666, %v641, %v942
        %v946 = vshrl.u32 %v945, 16
        %v948 = vrot.slane %v946, 5
        %v949 = vshll.u32 %v945, 16
        %v951 = vrot.slane %v949, 6
        %v952 = vor.u32 %v948, %v951
        %v954 = vsel %vm723, %v929, %v952
        %955 = vmatpush.bf16.msra.mxu0 %v800
        %956 = vmatpush.bf16.msra.mxu0 %v799
        %957 = vmatpush.bf16.msra.mxu0 %v798
        %958 = vmatpush.bf16.msra.mxu0 %v797
        %959 = vmatpush.bf16.msra.mxu0 %v796
        %960 = vmatpush.bf16.msra.mxu0 %v795
        %961 = vmatpush.bf16.msra.mxu0 %v794
        %962 = vmatpush.bf16.msra.mxu0 %v793
        %963 = vmatmul.bf16.gmra.mxu0 %v889
        %v964 = vpop.f32.mrf.mxu0
        %v965 = vadd.f32 %v727, %v964
        %v966 = vpop.f32.mrf.mxu0
        %v967 = vadd.f32 %v727, %v966
        %968 = vdwg.mxu0
        %969 = vmatpush.bf16.msra.mxu0 %v808
        %970 = vmatpush.bf16.msra.mxu0 %v807
        %971 = vmatpush.bf16.msra.mxu0 %v806
        %972 = vmatpush.bf16.msra.mxu0 %v805
        %973 = vmatpush.bf16.msra.mxu0 %v804
        %974 = vmatpush.bf16.msra.mxu0 %v803
        %975 = vmatpush.bf16.msra.mxu0 %v802
        %976 = vmatpush.bf16.msra.mxu0 %v801
        %977 = vmatmul.bf16.gmra.mxu0 %v954
        %v978 = vpop.f32.mrf.mxu0
        %v979 = vadd.f32 %v965, %v978
        %v980 = vpop.f32.mrf.mxu0
        %v981 = vadd.f32 %v967, %v980
        %982 = vdwg.mxu0
        %v983 = vmax.f32 %v979, 0.0
        %v984 = vmax.f32 %v981, 0.0
        %v985 = vpack.c.bf16 %v983, %v983
        %v986 = vpack.c.bf16 %v984, %v984
        %v988 = vunpack.c.l.b16 %v643
        %v989 = vpack.c.b16 %v988, %v988
        %990 = vrot.lane.b32.xlu0 %v989, 64
        %v991 = vpop.permute.xlu0 %990
        %v994 = vsel %vm666, %v622, %v991
        %v997 = vunpack.c.l.b16 %v622
        %v998 = vpack.c.b16 %v997, %v997
        %v1000 = vshrl.u32 %v998, 16
        %v1002 = vshll.u32 %v998, 16
        %v1004 = vrot.slane %v1002, 1
        %v1005 = vor.u32 %v1000, %v1004
        %1006 = vrot.lane.b32.xlu0 %v1005, 64
        %v1007 = vpop.permute.xlu0 %1006
        %v1010 = vsel %vm666, %v643, %v1007
        %v1011 = vshrl.u32 %v1010, 16
        %v1013 = vrot.slane %v1011, 5
        %v1014 = vshll.u32 %v1010, 16
        %v1016 = vrot.slane %v1014, 6
        %v1017 = vor.u32 %v1013, %v1016
        %v1019 = vsel %vm723, %v994, %v1017
        %1020 = vmatpush.bf16.msra.mxu0 %v800
        %1021 = vmatpush.bf16.msra.mxu0 %v799
        %1022 = vmatpush.bf16.msra.mxu0 %v798
        %1023 = vmatpush.bf16.msra.mxu0 %v797
        %1024 = vmatpush.bf16.msra.mxu0 %v796
        %1025 = vmatpush.bf16.msra.mxu0 %v795
        %1026 = vmatpush.bf16.msra.mxu0 %v794
        %1027 = vmatpush.bf16.msra.mxu0 %v793
        %1028 = vmatmul.bf16.gmra.mxu0 %v954
        %v1029 = vpop.f32.mrf.mxu0
        %v1030 = vadd.f32 %v727, %v1029
        %v1031 = vpop.f32.mrf.mxu0
        %v1032 = vadd.f32 %v727, %v1031
        %1033 = vdwg.mxu0
        %1034 = vmatpush.bf16.msra.mxu0 %v808
        %1035 = vmatpush.bf16.msra.mxu0 %v807
        %1036 = vmatpush.bf16.msra.mxu0 %v806
        %1037 = vmatpush.bf16.msra.mxu0 %v805
        %1038 = vmatpush.bf16.msra.mxu0 %v804
        %1039 = vmatpush.bf16.msra.mxu0 %v803
        %1040 = vmatpush.bf16.msra.mxu0 %v802
        %1041 = vmatpush.bf16.msra.mxu0 %v801
        %1042 = vmatmul.bf16.gmra.mxu0 %v1019
        %v1043 = vpop.f32.mrf.mxu0
        %v1044 = vadd.f32 %v1030, %v1043
        %v1045 = vpop.f32.mrf.mxu0
        %v1046 = vadd.f32 %v1032, %v1045
        %1047 = vdwg.mxu0
        %v1048 = vmax.f32 %v1044, 0.0
        %v1049 = vmax.f32 %v1046, 0.0
        %v1050 = vpack.c.bf16 %v1048, %v1048
        %v1051 = vpack.c.bf16 %v1049, %v1049
        %v1053 = vunpack.c.l.b16 %v645
        %v1054 = vpack.c.b16 %v1053, %v1053
        %1055 = vrot.lane.b32.xlu0 %v1054, 64
        %v1056 = vpop.permute.xlu0 %1055
        %v1059 = vsel %vm666, %v624, %v1056
        %v1062 = vunpack.c.l.b16 %v624
        %v1063 = vpack.c.b16 %v1062, %v1062
        %v1065 = vshrl.u32 %v1063, 16
        %v1067 = vshll.u32 %v1063, 16
        %v1069 = vrot.slane %v1067, 1
        %v1070 = vor.u32 %v1065, %v1069
        %1071 = vrot.lane.b32.xlu0 %v1070, 64
        %v1072 = vpop.permute.xlu0 %1071
        %v1075 = vsel %vm666, %v645, %v1072
        %v1076 = vshrl.u32 %v1075, 16
        %v1078 = vrot.slane %v1076, 5
        %v1079 = vshll.u32 %v1075, 16
        %v1081 = vrot.slane %v1079, 6
        %v1082 = vor.u32 %v1078, %v1081
        %v1084 = vsel %vm723, %v1059, %v1082
        %1085 = vmatpush.bf16.msra.mxu0 %v800
        %1086 = vmatpush.bf16.msra.mxu0 %v799
        %1087 = vmatpush.bf16.msra.mxu0 %v798
        %1088 = vmatpush.bf16.msra.mxu0 %v797
        %1089 = vmatpush.bf16.msra.mxu0 %v796
        %1090 = vmatpush.bf16.msra.mxu0 %v795
        %1091 = vmatpush.bf16.msra.mxu0 %v794
        %1092 = vmatpush.bf16.msra.mxu0 %v793
        %1093 = vmatmul.bf16.gmra.mxu0 %v1019
        %v1094 = vpop.f32.mrf.mxu0
        %v1095 = vadd.f32 %v727, %v1094
        %v1096 = vpop.f32.mrf.mxu0
        %v1097 = vadd.f32 %v727, %v1096
        %1098 = vdwg.mxu0
        %1099 = vmatpush.bf16.msra.mxu0 %v808
        %1100 = vmatpush.bf16.msra.mxu0 %v807
        %1101 = vmatpush.bf16.msra.mxu0 %v806
        %1102 = vmatpush.bf16.msra.mxu0 %v805
        %1103 = vmatpush.bf16.msra.mxu0 %v804
        %1104 = vmatpush.bf16.msra.mxu0 %v803
        %1105 = vmatpush.bf16.msra.mxu0 %v802
        %1106 = vmatpush.bf16.msra.mxu0 %v801
        %1107 = vmatmul.bf16.gmra.mxu0 %v1084
        %v1108 = vpop.f32.mrf.mxu0
        %v1109 = vadd.f32 %v1095, %v1108
        %v1110 = vpop.f32.mrf.mxu0
        %v1111 = vadd.f32 %v1097, %v1110
        %1112 = vdwg.mxu0
        %v1113 = vmax.f32 %v1109, 0.0
        %v1114 = vmax.f32 %v1111, 0.0
        %v1115 = vpack.c.bf16 %v1113, %v1113
        %v1116 = vpack.c.bf16 %v1114, %v1114
        %v1118 = vunpack.c.l.b16 %v647
        %v1119 = vpack.c.b16 %v1118, %v1118
        %1120 = vrot.lane.b32.xlu0 %v1119, 64
        %v1121 = vpop.permute.xlu0 %1120
        %v1124 = vsel %vm666, %v626, %v1121
        %v1127 = vunpack.c.l.b16 %v626
        %v1128 = vpack.c.b16 %v1127, %v1127
        %v1130 = vshrl.u32 %v1128, 16
        %v1132 = vshll.u32 %v1128, 16
        %v1134 = vrot.slane %v1132, 1
        %v1135 = vor.u32 %v1130, %v1134
        %1136 = vrot.lane.b32.xlu0 %v1135, 64
        %v1137 = vpop.permute.xlu0 %1136
        %v1140 = vsel %vm666, %v647, %v1137
        %v1141 = vshrl.u32 %v1140, 16
        %v1143 = vrot.slane %v1141, 5
        %v1144 = vshll.u32 %v1140, 16
        %v1146 = vrot.slane %v1144, 6
        %v1147 = vor.u32 %v1143, %v1146
        %v1149 = vsel %vm723, %v1124, %v1147
        %1150 = vmatpush.bf16.msra.mxu0 %v800
        %1151 = vmatpush.bf16.msra.mxu0 %v799
        %1152 = vmatpush.bf16.msra.mxu0 %v798
        %1153 = vmatpush.bf16.msra.mxu0 %v797
        %1154 = vmatpush.bf16.msra.mxu0 %v796
        %1155 = vmatpush.bf16.msra.mxu0 %v795
        %1156 = vmatpush.bf16.msra.mxu0 %v794
        %1157 = vmatpush.bf16.msra.mxu0 %v793
        %1158 = vmatmul.bf16.gmra.mxu0 %v1084
        %v1159 = vpop.f32.mrf.mxu0
        %v1160 = vadd.f32 %v727, %v1159
        %v1161 = vpop.f32.mrf.mxu0
        %v1162 = vadd.f32 %v727, %v1161
        %1163 = vdwg.mxu0
        %1164 = vmatpush.bf16.msra.mxu0 %v808
        %1165 = vmatpush.bf16.msra.mxu0 %v807
        %1166 = vmatpush.bf16.msra.mxu0 %v806
        %1167 = vmatpush.bf16.msra.mxu0 %v805
        %1168 = vmatpush.bf16.msra.mxu0 %v804
        %1169 = vmatpush.bf16.msra.mxu0 %v803
        %1170 = vmatpush.bf16.msra.mxu0 %v802
        %1171 = vmatpush.bf16.msra.mxu0 %v801
        %1172 = vmatmul.bf16.gmra.mxu0 %v1149
        %v1173 = vpop.f32.mrf.mxu0
        %v1174 = vadd.f32 %v1160, %v1173
        %v1175 = vpop.f32.mrf.mxu0
        %v1176 = vadd.f32 %v1162, %v1175
        %1177 = vdwg.mxu0
        %v1178 = vmax.f32 %v1174, 0.0
        %v1179 = vmax.f32 %v1176, 0.0
        %v1180 = vpack.c.bf16 %v1178, %v1178
        %v1181 = vpack.c.bf16 %v1179, %v1179
        %v1183 = vunpack.c.l.b16 %v649
        %v1184 = vpack.c.b16 %v1183, %v1183
        %1185 = vrot.lane.b32.xlu0 %v1184, 64
        %v1186 = vpop.permute.xlu0 %1185
        %v1189 = vsel %vm666, %v628, %v1186
        %v1192 = vunpack.c.l.b16 %v628
        %v1193 = vpack.c.b16 %v1192, %v1192
        %v1195 = vshrl.u32 %v1193, 16
        %v1197 = vshll.u32 %v1193, 16
        %v1199 = vrot.slane %v1197, 1
        %v1200 = vor.u32 %v1195, %v1199
        %1201 = vrot.lane.b32.xlu0 %v1200, 64
        %v1202 = vpop.permute.xlu0 %1201
        %v1205 = vsel %vm666, %v649, %v1202
        %v1206 = vshrl.u32 %v1205, 16
        %v1208 = vrot.slane %v1206, 5
        %v1209 = vshll.u32 %v1205, 16
        %v1211 = vrot.slane %v1209, 6
        %v1212 = vor.u32 %v1208, %v1211
        %v1214 = vsel %vm723, %v1189, %v1212
        %1215 = vmatpush.bf16.msra.mxu0 %v800
        %1216 = vmatpush.bf16.msra.mxu0 %v799
        %1217 = vmatpush.bf16.msra.mxu0 %v798
        %1218 = vmatpush.bf16.msra.mxu0 %v797
        %1219 = vmatpush.bf16.msra.mxu0 %v796
        %1220 = vmatpush.bf16.msra.mxu0 %v795
        %1221 = vmatpush.bf16.msra.mxu0 %v794
        %1222 = vmatpush.bf16.msra.mxu0 %v793
        %1223 = vmatmul.bf16.gmra.mxu0 %v1149
        %v1224 = vpop.f32.mrf.mxu0
        %v1225 = vadd.f32 %v727, %v1224
        %v1226 = vpop.f32.mrf.mxu0
        %v1227 = vadd.f32 %v727, %v1226
        %1228 = vdwg.mxu0
        %1229 = vmatpush.bf16.msra.mxu0 %v808
        %1230 = vmatpush.bf16.msra.mxu0 %v807
        %1231 = vmatpush.bf16.msra.mxu0 %v806
        %1232 = vmatpush.bf16.msra.mxu0 %v805
        %1233 = vmatpush.bf16.msra.mxu0 %v804
        %1234 = vmatpush.bf16.msra.mxu0 %v803
        %1235 = vmatpush.bf16.msra.mxu0 %v802
        %1236 = vmatpush.bf16.msra.mxu0 %v801
        %1237 = vmatmul.bf16.gmra.mxu0 %v1214
        %v1238 = vpop.f32.mrf.mxu0
        %v1239 = vadd.f32 %v1225, %v1238
        %v1240 = vpop.f32.mrf.mxu0
        %v1241 = vadd.f32 %v1227, %v1240
        %1242 = vdwg.mxu0
        %v1243 = vmax.f32 %v1239, 0.0
        %v1244 = vmax.f32 %v1241, 0.0
        %v1245 = vpack.c.bf16 %v1243, %v1243
        %v1246 = vpack.c.bf16 %v1244, %v1244
        %v1248 = vunpack.c.l.b16 %v651
        %v1249 = vpack.c.b16 %v1248, %v1248
        %1250 = vrot.lane.b32.xlu0 %v1249, 64
        %v1251 = vpop.permute.xlu0 %1250
        %v1254 = vsel %vm666, %v630, %v1251
        %v1257 = vunpack.c.l.b16 %v630
        %v1258 = vpack.c.b16 %v1257, %v1257
        %v1260 = vshrl.u32 %v1258, 16
        %v1262 = vshll.u32 %v1258, 16
        %v1264 = vrot.slane %v1262, 1
        %v1265 = vor.u32 %v1260, %v1264
        %1266 = vrot.lane.b32.xlu0 %v1265, 64
        %v1267 = vpop.permute.xlu0 %1266
        %v1270 = vsel %vm666, %v651, %v1267
        %v1271 = vshrl.u32 %v1270, 16
        %v1273 = vrot.slane %v1271, 5
        %v1274 = vshll.u32 %v1270, 16
        %v1276 = vrot.slane %v1274, 6
        %v1277 = vor.u32 %v1273, %v1276
        %v1279 = vsel %vm723, %v1254, %v1277
        %1280 = vmatpush.bf16.msra.mxu0 %v800
        %1281 = vmatpush.bf16.msra.mxu0 %v799
        %1282 = vmatpush.bf16.msra.mxu0 %v798
        %1283 = vmatpush.bf16.msra.mxu0 %v797
        %1284 = vmatpush.bf16.msra.mxu0 %v796
        %1285 = vmatpush.bf16.msra.mxu0 %v795
        %1286 = vmatpush.bf16.msra.mxu0 %v794
        %1287 = vmatpush.bf16.msra.mxu0 %v793
        %1288 = vmatmul.bf16.gmra.mxu0 %v1214
        %v1289 = vpop.f32.mrf.mxu0
        %v1290 = vadd.f32 %v727, %v1289
        %v1291 = vpop.f32.mrf.mxu0
        %v1292 = vadd.f32 %v727, %v1291
        %1293 = vdwg.mxu0
        %1294 = vmatpush.bf16.msra.mxu0 %v808
        %1295 = vmatpush.bf16.msra.mxu0 %v807
        %1296 = vmatpush.bf16.msra.mxu0 %v806
        %1297 = vmatpush.bf16.msra.mxu0 %v805
        %1298 = vmatpush.bf16.msra.mxu0 %v804
        %1299 = vmatpush.bf16.msra.mxu0 %v803
        %1300 = vmatpush.bf16.msra.mxu0 %v802
        %1301 = vmatpush.bf16.msra.mxu0 %v801
        %1302 = vmatmul.bf16.gmra.mxu0 %v1279
        %v1303 = vpop.f32.mrf.mxu0
        %v1304 = vadd.f32 %v1290, %v1303
        %v1305 = vpop.f32.mrf.mxu0
        %v1306 = vadd.f32 %v1292, %v1305
        %1307 = vdwg.mxu0
        %v1308 = vmax.f32 %v1304, 0.0
        %v1309 = vmax.f32 %v1306, 0.0
        %v1310 = vpack.c.bf16 %v1308, %v1308
        %v1311 = vpack.c.bf16 %v1309, %v1309
        %v1313 = vunpack.c.l.b16 %v653
        %v1314 = vpack.c.b16 %v1313, %v1313
        %1315 = vrot.lane.b32.xlu0 %v1314, 64
        %v1316 = vpop.permute.xlu0 %1315
        %v1319 = vsel %vm666, %v632, %v1316
        %v1322 = vunpack.c.l.b16 %v632
        %v1323 = vpack.c.b16 %v1322, %v1322
        %v1325 = vshrl.u32 %v1323, 16
        %v1327 = vshll.u32 %v1323, 16
        %v1329 = vrot.slane %v1327, 1
        %v1330 = vor.u32 %v1325, %v1329
        %1331 = vrot.lane.b32.xlu0 %v1330, 64
        %v1332 = vpop.permute.xlu0 %1331
        %v1335 = vsel %vm666, %v653, %v1332
        %v1336 = vshrl.u32 %v1335, 16
        %v1338 = vrot.slane %v1336, 5
        %v1339 = vshll.u32 %v1335, 16
        %v1341 = vrot.slane %v1339, 6
        %v1342 = vor.u32 %v1338, %v1341
        %v1344 = vsel %vm723, %v1319, %v1342
        %1345 = vmatpush.bf16.msra.mxu0 %v800
        %1346 = vmatpush.bf16.msra.mxu0 %v799
        %1347 = vmatpush.bf16.msra.mxu0 %v798
        %1348 = vmatpush.bf16.msra.mxu0 %v797
        %1349 = vmatpush.bf16.msra.mxu0 %v796
        %1350 = vmatpush.bf16.msra.mxu0 %v795
        %1351 = vmatpush.bf16.msra.mxu0 %v794
        %1352 = vmatpush.bf16.msra.mxu0 %v793
        %1353 = vmatmul.bf16.gmra.mxu0 %v1279
        %v1354 = vpop.f32.mrf.mxu0
        %v1355 = vadd.f32 %v727, %v1354
        %v1356 = vpop.f32.mrf.mxu0
        %v1357 = vadd.f32 %v727, %v1356
        %1358 = vdwg.mxu0
        %1359 = vmatpush.bf16.msra.mxu0 %v808
        %1360 = vmatpush.bf16.msra.mxu0 %v807
        %1361 = vmatpush.bf16.msra.mxu0 %v806
        %1362 = vmatpush.bf16.msra.mxu0 %v805
        %1363 = vmatpush.bf16.msra.mxu0 %v804
        %1364 = vmatpush.bf16.msra.mxu0 %v803
        %1365 = vmatpush.bf16.msra.mxu0 %v802
        %1366 = vmatpush.bf16.msra.mxu0 %v801
        %1367 = vmatmul.bf16.gmra.mxu0 %v1344
        %v1368 = vpop.f32.mrf.mxu0
        %v1369 = vadd.f32 %v1355, %v1368
        %v1370 = vpop.f32.mrf.mxu0
        %v1371 = vadd.f32 %v1357, %v1370
        %1372 = vdwg.mxu0
        %v1373 = vmax.f32 %v1369, 0.0
        %v1374 = vmax.f32 %v1371, 0.0
        %v1375 = vpack.c.bf16 %v1373, %v1373
        %v1376 = vpack.c.bf16 %v1374, %v1374
        %v1378 = vunpack.c.l.b16 %v655
        %v1379 = vpack.c.b16 %v1378, %v1378
        %1380 = vrot.lane.b32.xlu0 %v1379, 64
        %v1381 = vpop.permute.xlu0 %1380
        %v1384 = vsel %vm666, %v634, %v1381
        %v1387 = vunpack.c.l.b16 %v634
        %v1388 = vpack.c.b16 %v1387, %v1387
        %v1390 = vshrl.u32 %v1388, 16
        %v1392 = vshll.u32 %v1388, 16
        %v1394 = vrot.slane %v1392, 1
        %v1395 = vor.u32 %v1390, %v1394
        %1396 = vrot.lane.b32.xlu0 %v1395, 64
        %v1397 = vpop.permute.xlu0 %1396
        %v1400 = vsel %vm666, %v655, %v1397
        %v1401 = vshrl.u32 %v1400, 16
        %v1403 = vrot.slane %v1401, 5
        %v1404 = vshll.u32 %v1400, 16
        %v1406 = vrot.slane %v1404, 6
        %v1407 = vor.u32 %v1403, %v1406
        %v1409 = vsel %vm723, %v1384, %v1407
        %1410 = vmatpush.bf16.msra.mxu0 %v800
        %1411 = vmatpush.bf16.msra.mxu0 %v799
        %1412 = vmatpush.bf16.msra.mxu0 %v798
        %1413 = vmatpush.bf16.msra.mxu0 %v797
        %1414 = vmatpush.bf16.msra.mxu0 %v796
        %1415 = vmatpush.bf16.msra.mxu0 %v795
        %1416 = vmatpush.bf16.msra.mxu0 %v794
        %1417 = vmatpush.bf16.msra.mxu0 %v793
        %1418 = vmatmul.bf16.gmra.mxu0 %v1344
        %v1419 = vpop.f32.mrf.mxu0
        %v1420 = vadd.f32 %v727, %v1419
        %v1421 = vpop.f32.mrf.mxu0
        %v1422 = vadd.f32 %v727, %v1421
        %1423 = vdwg.mxu0
        %1424 = vmatpush.bf16.msra.mxu0 %v808
        %1425 = vmatpush.bf16.msra.mxu0 %v807
        %1426 = vmatpush.bf16.msra.mxu0 %v806
        %1427 = vmatpush.bf16.msra.mxu0 %v805
        %1428 = vmatpush.bf16.msra.mxu0 %v804
        %1429 = vmatpush.bf16.msra.mxu0 %v803
        %1430 = vmatpush.bf16.msra.mxu0 %v802
        %1431 = vmatpush.bf16.msra.mxu0 %v801
        %1432 = vmatmul.bf16.gmra.mxu0 %v1409
        %v1433 = vpop.f32.mrf.mxu0
        %v1434 = vadd.f32 %v1420, %v1433
        %v1435 = vpop.f32.mrf.mxu0
        %v1436 = vadd.f32 %v1422, %v1435
        %1437 = vdwg.mxu0
        %v1438 = vmax.f32 %v1434, 0.0
        %v1439 = vmax.f32 %v1436, 0.0
        %v1440 = vpack.c.bf16 %v1438, %v1438
        %v1441 = vpack.c.bf16 %v1439, %v1439
        %v1444 = vunpack.c.l.b16 %v855
        %v1445 = vunpack.c.l.b16 %v856
        %v1446 = vpack.c.b16 %v1445, %v1444
        %v1448 = vshrl.u32 %v1446, 16
        %v1450 = vrot.slane %v1448, 2
        %v1451 = vshll.u32 %v1446, 16
        %v1453 = vrot.slane %v1451, 3
        %v1454 = vor.u32 %v1450, %v1453
        %1455 = vrot.lane.b32.xlu0 %v1454, 32
        %v1456 = vpop.permute.xlu0 %1455
        %v1457 = vpack.c.b16 %v1444, %v1444
        %v1459 = vshrl.u32 %v1457, 16
        %v1461 = vshll.u32 %v1457, 16
        %v1463 = vrot.slane %v1461, 1
        %v1464 = vor.u32 %v1459, %v1463
        %1465 = vrot.lane.b32.xlu0 %v1464, 64
        %v1466 = vpop.permute.xlu0 %1465
        %v1467 = vrot.slane %v1446, 3
        %1468 = vrot.lane.b32.xlu0 %v1467, 96
        %v1469 = vpop.permute.xlu0 %1468
        %v1472 = vunpack.c.l.b16 %v920
        %v1473 = vunpack.c.l.b16 %v921
        %v1474 = vpack.c.b16 %v1473, %v1472
        %v1476 = vshrl.u32 %v1474, 16
        %v1478 = vrot.slane %v1476, 2
        %v1479 = vshll.u32 %v1474, 16
        %v1481 = vrot.slane %v1479, 3
        %v1482 = vor.u32 %v1478, %v1481
        %1483 = vrot.lane.b32.xlu0 %v1482, 32
        %v1484 = vpop.permute.xlu0 %1483
        %v1485 = vpack.c.b16 %v1472, %v1472
        %v1487 = vshrl.u32 %v1485, 16
        %v1489 = vshll.u32 %v1485, 16
        %v1491 = vrot.slane %v1489, 1
        %v1492 = vor.u32 %v1487, %v1491
        %1493 = vrot.lane.b32.xlu0 %v1492, 64
        %v1494 = vpop.permute.xlu0 %1493
        %v1495 = vrot.slane %v1474, 3
        %1496 = vrot.lane.b32.xlu0 %v1495, 96
        %v1497 = vpop.permute.xlu0 %1496
        %v1500 = vunpack.c.l.b16 %v985
        %v1501 = vunpack.c.l.b16 %v986
        %v1502 = vpack.c.b16 %v1501, %v1500
        %v1504 = vshrl.u32 %v1502, 16
        %v1506 = vrot.slane %v1504, 2
        %v1507 = vshll.u32 %v1502, 16
        %v1509 = vrot.slane %v1507, 3
        %v1510 = vor.u32 %v1506, %v1509
        %1511 = vrot.lane.b32.xlu0 %v1510, 32
        %v1512 = vpop.permute.xlu0 %1511
        %v1513 = vpack.c.b16 %v1500, %v1500
        %v1515 = vshrl.u32 %v1513, 16
        %v1517 = vshll.u32 %v1513, 16
        %v1519 = vrot.slane %v1517, 1
        %v1520 = vor.u32 %v1515, %v1519
        %1521 = vrot.lane.b32.xlu0 %v1520, 64
        %v1522 = vpop.permute.xlu0 %1521
        %v1523 = vrot.slane %v1502, 3
        %1524 = vrot.lane.b32.xlu0 %v1523, 96
        %v1525 = vpop.permute.xlu0 %1524
        %v1528 = vunpack.c.l.b16 %v1050
        %v1529 = vunpack.c.l.b16 %v1051
        %v1530 = vpack.c.b16 %v1529, %v1528
        %v1532 = vshrl.u32 %v1530, 16
        %v1534 = vrot.slane %v1532, 2
        %v1535 = vshll.u32 %v1530, 16
        %v1537 = vrot.slane %v1535, 3
        %v1538 = vor.u32 %v1534, %v1537
        %1539 = vrot.lane.b32.xlu0 %v1538, 32
        %v1540 = vpop.permute.xlu0 %1539
        %v1541 = vpack.c.b16 %v1528, %v1528
        %v1543 = vshrl.u32 %v1541, 16
        %v1545 = vshll.u32 %v1541, 16
        %v1547 = vrot.slane %v1545, 1
        %v1548 = vor.u32 %v1543, %v1547
        %1549 = vrot.lane.b32.xlu0 %v1548, 64
        %v1550 = vpop.permute.xlu0 %1549
        %v1551 = vrot.slane %v1530, 3
        %1552 = vrot.lane.b32.xlu0 %v1551, 96
        %v1553 = vpop.permute.xlu0 %1552
        %vm1554 = vcmask 261120
        %v1557 = vsel %vm1554, %v855, %v1456
        %v1559 = vsel %vm666, %v1557, %v1466
        %vm1560 = vcmask 785408
        %v1562 = vsel %vm1560, %v1559, %v1469
        %v1566 = vsel %vm1554, %v920, %v1484
        %v1568 = vsel %vm666, %v1566, %v1494
        %v1570 = vsel %vm1560, %v1568, %v1497
        %v1574 = vsel %vm1554, %v985, %v1512
        %v1576 = vsel %vm666, %v1574, %v1522
        %v1578 = vsel %vm1560, %v1576, %v1525
        %v1582 = vsel %vm1554, %v1050, %v1540
        %v1584 = vsel %vm666, %v1582, %v1550
        %v1586 = vsel %vm1560, %v1584, %v1553
        %v1589 = vperm.slane %v540, 0
        %v1655 = vunpack.c.l.b16 %v476
        %v1656 = vunpack.c.l.b16 %v477
        %v1657 = vunpack.c.l.b16 %v478
        %v1658 = vunpack.c.l.b16 %v479
        %v1659 = vunpack.c.l.b16 %v480
        %v1660 = vunpack.c.l.b16 %v481
        %v1661 = vunpack.c.l.b16 %v482
        %v1662 = vunpack.c.l.b16 %v483
        %v1663 = vunpack.c.l.b16 %v484
        %v1664 = vunpack.c.l.b16 %v485
        %v1665 = vunpack.c.l.b16 %v486
        %v1666 = vunpack.c.l.b16 %v487
        %v1667 = vunpack.c.l.b16 %v488
        %v1668 = vunpack.c.l.b16 %v489
        %v1669 = vunpack.c.l.b16 %v490
        %v1670 = vunpack.c.l.b16 %v491
        %v1671 = vunpack.c.l.b16 %v492
        %v1672 = vunpack.c.l.b16 %v493
        %v1673 = vunpack.c.l.b16 %v494
        %v1674 = vunpack.c.l.b16 %v495
        %v1675 = vunpack.c.l.b16 %v496
        %v1676 = vunpack.c.l.b16 %v497
        %v1677 = vunpack.c.l.b16 %v498
        %v1678 = vunpack.c.l.b16 %v499
        %v1679 = vunpack.c.l.b16 %v500
        %v1680 = vunpack.c.l.b16 %v501
        %v1681 = vunpack.c.l.b16 %v502
        %v1682 = vunpack.c.l.b16 %v503
        %v1683 = vunpack.c.l.b16 %v504
        %v1684 = vunpack.c.l.b16 %v505
        %v1685 = vunpack.c.l.b16 %v506
        %v1686 = vunpack.c.l.b16 %v507
        %v1687 = vunpack.c.l.b16 %v508
        %v1688 = vunpack.c.l.b16 %v509
        %v1689 = vunpack.c.l.b16 %v510
        %v1690 = vunpack.c.l.b16 %v511
        %v1691 = vunpack.c.l.b16 %v512
        %v1692 = vunpack.c.l.b16 %v513
        %v1693 = vunpack.c.l.b16 %v514
        %v1694 = vunpack.c.l.b16 %v515
        %v1695 = vunpack.c.l.b16 %v516
        %v1696 = vunpack.c.l.b16 %v517
        %v1697 = vunpack.c.l.b16 %v518
        %v1698 = vunpack.c.l.b16 %v519
        %v1699 = vunpack.c.l.b16 %v520
        %v1700 = vunpack.c.l.b16 %v521
        %v1701 = vunpack.c.l.b16 %v522
        %v1702 = vunpack.c.l.b16 %v523
        %v1703 = vunpack.c.l.b16 %v524
        %v1704 = vunpack.c.l.b16 %v525
        %v1705 = vunpack.c.l.b16 %v526
        %v1706 = vunpack.c.l.b16 %v527
        %v1707 = vunpack.c.l.b16 %v528
        %v1708 = vunpack.c.l.b16 %v529
        %v1709 = vunpack.c.l.b16 %v530
        %v1710 = vunpack.c.l.b16 %v531
        %v1711 = vunpack.c.l.b16 %v532
        %v1712 = vunpack.c.l.b16 %v533
        %v1713 = vunpack.c.l.b16 %v534
        %v1714 = vunpack.c.l.b16 %v535
        %v1715 = vunpack.c.l.b16 %v536
        %v1716 = vunpack.c.l.b16 %v537
        %v1717 = vunpack.c.l.b16 %v538
        %v1718 = vunpack.c.l.b16 %v539
        %v1719 = vpack.c.b16 %v1656, %v1655
        %v1720 = vpack.c.b16 %v1658, %v1657
        %v1721 = vpack.c.b16 %v1660, %v1659
        %v1722 = vpack.c.b16 %v1662, %v1661
        %v1723 = vpack.c.b16 %v1664, %v1663
        %v1724 = vpack.c.b16 %v1666, %v1665
        %v1725 = vpack.c.b16 %v1668, %v1667
        %v1726 = vpack.c.b16 %v1670, %v1669
        %v1727 = vpack.c.b16 %v1672, %v1671
        %v1728 = vpack.c.b16 %v1674, %v1673
        %v1729 = vpack.c.b16 %v1676, %v1675
        %v1730 = vpack.c.b16 %v1678, %v1677
        %v1731 = vpack.c.b16 %v1680, %v1679
        %v1732 = vpack.c.b16 %v1682, %v1681
        %v1733 = vpack.c.b16 %v1684, %v1683
        %v1734 = vpack.c.b16 %v1686, %v1685
        %v1735 = vpack.c.b16 %v1688, %v1687
        %v1736 = vpack.c.b16 %v1690, %v1689
        %v1737 = vpack.c.b16 %v1692, %v1691
        %v1738 = vpack.c.b16 %v1694, %v1693
        %v1739 = vpack.c.b16 %v1696, %v1695
        %v1740 = vpack.c.b16 %v1698, %v1697
        %v1741 = vpack.c.b16 %v1700, %v1699
        %v1742 = vpack.c.b16 %v1702, %v1701
        %v1743 = vpack.c.b16 %v1704, %v1703
        %v1744 = vpack.c.b16 %v1706, %v1705
        %v1745 = vpack.c.b16 %v1708, %v1707
        %v1746 = vpack.c.b16 %v1710, %v1709
        %v1747 = vpack.c.b16 %v1712, %v1711
        %v1748 = vpack.c.b16 %v1714, %v1713
        %v1749 = vpack.c.b16 %v1716, %v1715
        %v1750 = vpack.c.b16 %v1718, %v1717
        %1783 = vmatpush.bf16.msra.mxu0 %v1726
        %1784 = vmatpush.bf16.msra.mxu0 %v1725
        %1785 = vmatpush.bf16.msra.mxu0 %v1724
        %1786 = vmatpush.bf16.msra.mxu0 %v1723
        %1787 = vmatpush.bf16.msra.mxu0 %v1722
        %1788 = vmatpush.bf16.msra.mxu0 %v1721
        %1789 = vmatpush.bf16.msra.mxu0 %v1720
        %1790 = vmatpush.bf16.msra.mxu0 %v1719
        %1791 = vmatmul.bf16.gmra.mxu0 %v1562
        %v1792 = vpop.f32.mrf.mxu0
        %v1793 = vadd.f32 %v1589, %v1792
        %v1794 = vpop.f32.mrf.mxu0
        %1795 = vdwg.mxu0
        %1796 = vmatpush.bf16.msra.mxu0 %v1734
        %1797 = vmatpush.bf16.msra.mxu0 %v1733
        %1798 = vmatpush.bf16.msra.mxu0 %v1732
        %1799 = vmatpush.bf16.msra.mxu0 %v1731
        %1800 = vmatpush.bf16.msra.mxu0 %v1730
        %1801 = vmatpush.bf16.msra.mxu0 %v1729
        %1802 = vmatpush.bf16.msra.mxu0 %v1728
        %1803 = vmatpush.bf16.msra.mxu0 %v1727
        %1804 = vmatmul.bf16.gmra.mxu0 %v1570
        %v1805 = vpop.f32.mrf.mxu0
        %v1806 = vadd.f32 %v1793, %v1805
        %v1807 = vpop.f32.mrf.mxu0
        %1808 = vdwg.mxu0
        %1809 = vmatpush.bf16.msra.mxu0 %v1742
        %1810 = vmatpush.bf16.msra.mxu0 %v1741
        %1811 = vmatpush.bf16.msra.mxu0 %v1740
        %1812 = vmatpush.bf16.msra.mxu0 %v1739
        %1813 = vmatpush.bf16.msra.mxu0 %v1738
        %1814 = vmatpush.bf16.msra.mxu0 %v1737
        %1815 = vmatpush.bf16.msra.mxu0 %v1736
        %1816 = vmatpush.bf16.msra.mxu0 %v1735
        %1817 = vmatmul.bf16.gmra.mxu0 %v1578
        %v1818 = vpop.f32.mrf.mxu0
        %v1819 = vadd.f32 %v1806, %v1818
        %v1820 = vpop.f32.mrf.mxu0
        %1821 = vdwg.mxu0
        %1822 = vmatpush.bf16.msra.mxu0 %v1750
        %1823 = vmatpush.bf16.msra.mxu0 %v1749
        %1824 = vmatpush.bf16.msra.mxu0 %v1748
        %1825 = vmatpush.bf16.msra.mxu0 %v1747
        %1826 = vmatpush.bf16.msra.mxu0 %v1746
        %1827 = vmatpush.bf16.msra.mxu0 %v1745
        %1828 = vmatpush.bf16.msra.mxu0 %v1744
        %1829 = vmatpush.bf16.msra.mxu0 %v1743
        %1830 = vmatmul.bf16.gmra.mxu0 %v1586
        %v1831 = vpop.f32.mrf.mxu0
        %v1832 = vadd.f32 %v1819, %v1831
        %v1833 = vpop.f32.mrf.mxu0
        %1834 = vdwg.mxu0
        %v1835 = vmax.f32 %v1832, 0.0
        %v1836 = vpack.c.bf16 %v1835, %v1835
        %v1839 = vunpack.c.l.b16 %v1115
        %v1840 = vunpack.c.l.b16 %v1116
        %v1841 = vpack.c.b16 %v1840, %v1839
        %v1843 = vshrl.u32 %v1841, 16
        %v1845 = vrot.slane %v1843, 2
        %v1846 = vshll.u32 %v1841, 16
        %v1848 = vrot.slane %v1846, 3
        %v1849 = vor.u32 %v1845, %v1848
        %1850 = vrot.lane.b32.xlu0 %v1849, 32
        %v1851 = vpop.permute.xlu0 %1850
        %v1852 = vpack.c.b16 %v1839, %v1839
        %v1854 = vshrl.u32 %v1852, 16
        %v1856 = vshll.u32 %v1852, 16
        %v1858 = vrot.slane %v1856, 1
        %v1859 = vor.u32 %v1854, %v1858
        %1860 = vrot.lane.b32.xlu0 %v1859, 64
        %v1861 = vpop.permute.xlu0 %1860
        %v1862 = vrot.slane %v1841, 3
        %1863 = vrot.lane.b32.xlu0 %v1862, 96
        %v1864 = vpop.permute.xlu0 %1863
        %v1867 = vunpack.c.l.b16 %v1180
        %v1868 = vunpack.c.l.b16 %v1181
        %v1869 = vpack.c.b16 %v1868, %v1867
        %v1871 = vshrl.u32 %v1869, 16
        %v1873 = vrot.slane %v1871, 2
        %v1874 = vshll.u32 %v1869, 16
        %v1876 = vrot.slane %v1874, 3
        %v1877 = vor.u32 %v1873, %v1876
        %1878 = vrot.lane.b32.xlu0 %v1877, 32
        %v1879 = vpop.permute.xlu0 %1878
        %v1880 = vpack.c.b16 %v1867, %v1867
        %v1882 = vshrl.u32 %v1880, 16
        %v1884 = vshll.u32 %v1880, 16
        %v1886 = vrot.slane %v1884, 1
        %v1887 = vor.u32 %v1882, %v1886
        %1888 = vrot.lane.b32.xlu0 %v1887, 64
        %v1889 = vpop.permute.xlu0 %1888
        %v1890 = vrot.slane %v1869, 3
        %1891 = vrot.lane.b32.xlu0 %v1890, 96
        %v1892 = vpop.permute.xlu0 %1891
        %v1895 = vsel %vm1554, %v1115, %v1851
        %v1897 = vsel %vm666, %v1895, %v1861
        %v1899 = vsel %vm1560, %v1897, %v1864
        %v1903 = vsel %vm1554, %v1180, %v1879
        %v1905 = vsel %vm666, %v1903, %v1889
        %v1907 = vsel %vm1560, %v1905, %v1892
        %1909 = vmatpush.bf16.msra.mxu0 %v1726
        %1910 = vmatpush.bf16.msra.mxu0 %v1725
        %1911 = vmatpush.bf16.msra.mxu0 %v1724
        %1912 = vmatpush.bf16.msra.mxu0 %v1723
        %1913 = vmatpush.bf16.msra.mxu0 %v1722
        %1914 = vmatpush.bf16.msra.mxu0 %v1721
        %1915 = vmatpush.bf16.msra.mxu0 %v1720
        %1916 = vmatpush.bf16.msra.mxu0 %v1719
        %1917 = vmatmul.bf16.gmra.mxu0 %v1578
        %v1918 = vpop.f32.mrf.mxu0
        %v1919 = vadd.f32 %v1589, %v1918
        %v1920 = vpop.f32.mrf.mxu0
        %1921 = vdwg.mxu0
        %1922 = vmatpush.bf16.msra.mxu0 %v1734
        %1923 = vmatpush.bf16.msra.mxu0 %v1733
        %1924 = vmatpush.bf16.msra.mxu0 %v1732
        %1925 = vmatpush.bf16.msra.mxu0 %v1731
        %1926 = vmatpush.bf16.msra.mxu0 %v1730
        %1927 = vmatpush.bf16.msra.mxu0 %v1729
        %1928 = vmatpush.bf16.msra.mxu0 %v1728
        %1929 = vmatpush.bf16.msra.mxu0 %v1727
        %1930 = vmatmul.bf16.gmra.mxu0 %v1586
        %v1931 = vpop.f32.mrf.mxu0
        %v1932 = vadd.f32 %v1919, %v1931
        %v1933 = vpop.f32.mrf.mxu0
        %1934 = vdwg.mxu0
        %1935 = vmatpush.bf16.msra.mxu0 %v1742
        %1936 = vmatpush.bf16.msra.mxu0 %v1741
        %1937 = vmatpush.bf16.msra.mxu0 %v1740
        %1938 = vmatpush.bf16.msra.mxu0 %v1739
        %1939 = vmatpush.bf16.msra.mxu0 %v1738
        %1940 = vmatpush.bf16.msra.mxu0 %v1737
        %1941 = vmatpush.bf16.msra.mxu0 %v1736
        %1942 = vmatpush.bf16.msra.mxu0 %v1735
        %1943 = vmatmul.bf16.gmra.mxu0 %v1899
        %v1944 = vpop.f32.mrf.mxu0
        %v1945 = vadd.f32 %v1932, %v1944
        %v1946 = vpop.f32.mrf.mxu0
        %1947 = vdwg.mxu0
        %1948 = vmatpush.bf16.msra.mxu0 %v1750
        %1949 = vmatpush.bf16.msra.mxu0 %v1749
        %1950 = vmatpush.bf16.msra.mxu0 %v1748
        %1951 = vmatpush.bf16.msra.mxu0 %v1747
        %1952 = vmatpush.bf16.msra.mxu0 %v1746
        %1953 = vmatpush.bf16.msra.mxu0 %v1745
        %1954 = vmatpush.bf16.msra.mxu0 %v1744
        %1955 = vmatpush.bf16.msra.mxu0 %v1743
        %1956 = vmatmul.bf16.gmra.mxu0 %v1907
        %v1957 = vpop.f32.mrf.mxu0
        %v1958 = vadd.f32 %v1945, %v1957
        %v1959 = vpop.f32.mrf.mxu0
        %1960 = vdwg.mxu0
        %v1961 = vmax.f32 %v1958, 0.0
        %v1962 = vpack.c.bf16 %v1961, %v1961
        %v1965 = vunpack.c.l.b16 %v1245
        %v1966 = vunpack.c.l.b16 %v1246
        %v1967 = vpack.c.b16 %v1966, %v1965
        %v1969 = vshrl.u32 %v1967, 16
        %v1971 = vrot.slane %v1969, 2
        %v1972 = vshll.u32 %v1967, 16
        %v1974 = vrot.slane %v1972, 3
        %v1975 = vor.u32 %v1971, %v1974
        %1976 = vrot.lane.b32.xlu0 %v1975, 32
        %v1977 = vpop.permute.xlu0 %1976
        %v1978 = vpack.c.b16 %v1965, %v1965
        %v1980 = vshrl.u32 %v1978, 16
        %v1982 = vshll.u32 %v1978, 16
        %v1984 = vrot.slane %v1982, 1
        %v1985 = vor.u32 %v1980, %v1984
        %1986 = vrot.lane.b32.xlu0 %v1985, 64
        %v1987 = vpop.permute.xlu0 %1986
        %v1988 = vrot.slane %v1967, 3
        %1989 = vrot.lane.b32.xlu0 %v1988, 96
        %v1990 = vpop.permute.xlu0 %1989
        %v1993 = vunpack.c.l.b16 %v1310
        %v1994 = vunpack.c.l.b16 %v1311
        %v1995 = vpack.c.b16 %v1994, %v1993
        %v1997 = vshrl.u32 %v1995, 16
        %v1999 = vrot.slane %v1997, 2
        %v2000 = vshll.u32 %v1995, 16
        %v2002 = vrot.slane %v2000, 3
        %v2003 = vor.u32 %v1999, %v2002
        %2004 = vrot.lane.b32.xlu0 %v2003, 32
        %v2005 = vpop.permute.xlu0 %2004
        %v2006 = vpack.c.b16 %v1993, %v1993
        %v2008 = vshrl.u32 %v2006, 16
        %v2010 = vshll.u32 %v2006, 16
        %v2012 = vrot.slane %v2010, 1
        %v2013 = vor.u32 %v2008, %v2012
        %2014 = vrot.lane.b32.xlu0 %v2013, 64
        %v2015 = vpop.permute.xlu0 %2014
        %v2016 = vrot.slane %v1995, 3
        %2017 = vrot.lane.b32.xlu0 %v2016, 96
        %v2018 = vpop.permute.xlu0 %2017
        %v2021 = vsel %vm1554, %v1245, %v1977
        %v2023 = vsel %vm666, %v2021, %v1987
        %v2025 = vsel %vm1560, %v2023, %v1990
        %v2029 = vsel %vm1554, %v1310, %v2005
        %v2031 = vsel %vm666, %v2029, %v2015
        %v2033 = vsel %vm1560, %v2031, %v2018
        %2035 = vmatpush.bf16.msra.mxu0 %v1726
        %2036 = vmatpush.bf16.msra.mxu0 %v1725
        %2037 = vmatpush.bf16.msra.mxu0 %v1724
        %2038 = vmatpush.bf16.msra.mxu0 %v1723
        %2039 = vmatpush.bf16.msra.mxu0 %v1722
        %2040 = vmatpush.bf16.msra.mxu0 %v1721
        %2041 = vmatpush.bf16.msra.mxu0 %v1720
        %2042 = vmatpush.bf16.msra.mxu0 %v1719
        %2043 = vmatmul.bf16.gmra.mxu0 %v1899
        %v2044 = vpop.f32.mrf.mxu0
        %v2045 = vadd.f32 %v1589, %v2044
        %v2046 = vpop.f32.mrf.mxu0
        %2047 = vdwg.mxu0
        %2048 = vmatpush.bf16.msra.mxu0 %v1734
        %2049 = vmatpush.bf16.msra.mxu0 %v1733
        %2050 = vmatpush.bf16.msra.mxu0 %v1732
        %2051 = vmatpush.bf16.msra.mxu0 %v1731
        %2052 = vmatpush.bf16.msra.mxu0 %v1730
        %2053 = vmatpush.bf16.msra.mxu0 %v1729
        %2054 = vmatpush.bf16.msra.mxu0 %v1728
        %2055 = vmatpush.bf16.msra.mxu0 %v1727
        %2056 = vmatmul.bf16.gmra.mxu0 %v1907
        %v2057 = vpop.f32.mrf.mxu0
        %v2058 = vadd.f32 %v2045, %v2057
        %v2059 = vpop.f32.mrf.mxu0
        %2060 = vdwg.mxu0
        %2061 = vmatpush.bf16.msra.mxu0 %v1742
        %2062 = vmatpush.bf16.msra.mxu0 %v1741
        %2063 = vmatpush.bf16.msra.mxu0 %v1740
        %2064 = vmatpush.bf16.msra.mxu0 %v1739
        %2065 = vmatpush.bf16.msra.mxu0 %v1738
        %2066 = vmatpush.bf16.msra.mxu0 %v1737
        %2067 = vmatpush.bf16.msra.mxu0 %v1736
        %2068 = vmatpush.bf16.msra.mxu0 %v1735
        %2069 = vmatmul.bf16.gmra.mxu0 %v2025
        %v2070 = vpop.f32.mrf.mxu0
        %v2071 = vadd.f32 %v2058, %v2070
        %v2072 = vpop.f32.mrf.mxu0
        %2073 = vdwg.mxu0
        %2074 = vmatpush.bf16.msra.mxu0 %v1750
        %2075 = vmatpush.bf16.msra.mxu0 %v1749
        %2076 = vmatpush.bf16.msra.mxu0 %v1748
        %2077 = vmatpush.bf16.msra.mxu0 %v1747
        %2078 = vmatpush.bf16.msra.mxu0 %v1746
        %2079 = vmatpush.bf16.msra.mxu0 %v1745
        %2080 = vmatpush.bf16.msra.mxu0 %v1744
        %2081 = vmatpush.bf16.msra.mxu0 %v1743
        %2082 = vmatmul.bf16.gmra.mxu0 %v2033
        %v2083 = vpop.f32.mrf.mxu0
        %v2084 = vadd.f32 %v2071, %v2083
        %v2085 = vpop.f32.mrf.mxu0
        %2086 = vdwg.mxu0
        %v2087 = vmax.f32 %v2084, 0.0
        %v2088 = vpack.c.bf16 %v2087, %v2087
        %v2091 = vunpack.c.l.b16 %v1375
        %v2092 = vunpack.c.l.b16 %v1376
        %v2093 = vpack.c.b16 %v2092, %v2091
        %v2095 = vshrl.u32 %v2093, 16
        %v2097 = vrot.slane %v2095, 2
        %v2098 = vshll.u32 %v2093, 16
        %v2100 = vrot.slane %v2098, 3
        %v2101 = vor.u32 %v2097, %v2100
        %2102 = vrot.lane.b32.xlu0 %v2101, 32
        %v2103 = vpop.permute.xlu0 %2102
        %v2104 = vpack.c.b16 %v2091, %v2091
        %v2106 = vshrl.u32 %v2104, 16
        %v2108 = vshll.u32 %v2104, 16
        %v2110 = vrot.slane %v2108, 1
        %v2111 = vor.u32 %v2106, %v2110
        %2112 = vrot.lane.b32.xlu0 %v2111, 64
        %v2113 = vpop.permute.xlu0 %2112
        %v2114 = vrot.slane %v2093, 3
        %2115 = vrot.lane.b32.xlu0 %v2114, 96
        %v2116 = vpop.permute.xlu0 %2115
        %v2119 = vunpack.c.l.b16 %v1440
        %v2120 = vunpack.c.l.b16 %v1441
        %v2121 = vpack.c.b16 %v2120, %v2119
        %v2123 = vshrl.u32 %v2121, 16
        %v2125 = vrot.slane %v2123, 2
        %v2126 = vshll.u32 %v2121, 16
        %v2128 = vrot.slane %v2126, 3
        %v2129 = vor.u32 %v2125, %v2128
        %2130 = vrot.lane.b32.xlu0 %v2129, 32
        %v2131 = vpop.permute.xlu0 %2130
        %v2132 = vpack.c.b16 %v2119, %v2119
        %v2134 = vshrl.u32 %v2132, 16
        %v2136 = vshll.u32 %v2132, 16
        %v2138 = vrot.slane %v2136, 1
        %v2139 = vor.u32 %v2134, %v2138
        %2140 = vrot.lane.b32.xlu0 %v2139, 64
        %v2141 = vpop.permute.xlu0 %2140
        %v2142 = vrot.slane %v2121, 3
        %2143 = vrot.lane.b32.xlu0 %v2142, 96
        %v2144 = vpop.permute.xlu0 %2143
        %v2147 = vsel %vm1554, %v1375, %v2103
        %v2149 = vsel %vm666, %v2147, %v2113
        %v2151 = vsel %vm1560, %v2149, %v2116
        %v2155 = vsel %vm1554, %v1440, %v2131
        %v2157 = vsel %vm666, %v2155, %v2141
        %v2159 = vsel %vm1560, %v2157, %v2144
        %2161 = vmatpush.bf16.msra.mxu0 %v1726
        %2162 = vmatpush.bf16.msra.mxu0 %v1725
        %2163 = vmatpush.bf16.msra.mxu0 %v1724
        %2164 = vmatpush.bf16.msra.mxu0 %v1723
        %2165 = vmatpush.bf16.msra.mxu0 %v1722
        %2166 = vmatpush.bf16.msra.mxu0 %v1721
        %2167 = vmatpush.bf16.msra.mxu0 %v1720
        %2168 = vmatpush.bf16.msra.mxu0 %v1719
        %2169 = vmatmul.bf16.gmra.mxu0 %v2025
        %v2170 = vpop.f32.mrf.mxu0
        %v2171 = vadd.f32 %v1589, %v2170
        %v2172 = vpop.f32.mrf.mxu0
        %2173 = vdwg.mxu0
        %2174 = vmatpush.bf16.msra.mxu0 %v1734
        %2175 = vmatpush.bf16.msra.mxu0 %v1733
        %2176 = vmatpush.bf16.msra.mxu0 %v1732
        %2177 = vmatpush.bf16.msra.mxu0 %v1731
        %2178 = vmatpush.bf16.msra.mxu0 %v1730
        %2179 = vmatpush.bf16.msra.mxu0 %v1729
        %2180 = vmatpush.bf16.msra.mxu0 %v1728
        %2181 = vmatpush.bf16.msra.mxu0 %v1727
        %2182 = vmatmul.bf16.gmra.mxu0 %v2033
        %v2183 = vpop.f32.mrf.mxu0
        %v2184 = vadd.f32 %v2171, %v2183
        %v2185 = vpop.f32.mrf.mxu0
        %2186 = vdwg.mxu0
        %2187 = vmatpush.bf16.msra.mxu0 %v1742
        %2188 = vmatpush.bf16.msra.mxu0 %v1741
        %2189 = vmatpush.bf16.msra.mxu0 %v1740
        %2190 = vmatpush.bf16.msra.mxu0 %v1739
        %2191 = vmatpush.bf16.msra.mxu0 %v1738
        %2192 = vmatpush.bf16.msra.mxu0 %v1737
        %2193 = vmatpush.bf16.msra.mxu0 %v1736
        %2194 = vmatpush.bf16.msra.mxu0 %v1735
        %2195 = vmatmul.bf16.gmra.mxu0 %v2151
        %v2196 = vpop.f32.mrf.mxu0
        %v2197 = vadd.f32 %v2184, %v2196
        %v2198 = vpop.f32.mrf.mxu0
        %2199 = vdwg.mxu0
        %2200 = vmatpush.bf16.msra.mxu0 %v1750
        %2201 = vmatpush.bf16.msra.mxu0 %v1749
        %2202 = vmatpush.bf16.msra.mxu0 %v1748
        %2203 = vmatpush.bf16.msra.mxu0 %v1747
        %2204 = vmatpush.bf16.msra.mxu0 %v1746
        %2205 = vmatpush.bf16.msra.mxu0 %v1745
        %2206 = vmatpush.bf16.msra.mxu0 %v1744
        %2207 = vmatpush.bf16.msra.mxu0 %v1743
        %2208 = vmatmul.bf16.gmra.mxu0 %v2159
        %v2209 = vpop.f32.mrf.mxu0
        %v2210 = vadd.f32 %v2197, %v2209
        %v2211 = vpop.f32.mrf.mxu0
        %2212 = vdwg.mxu0
        %v2213 = vmax.f32 %v2210, 0.0
        %v2214 = vpack.c.bf16 %v2213, %v2213
        %v2216 = vunpack.c.l.b16 %v1836
        %v2217 = vpack.c.b16 %v2216, %v2216
        %v2219 = vshrl.u32 %v2217, 16
        %v2221 = vshll.u32 %v2217, 16
        %v2223 = vrot.slane %v2221, 1
        %v2224 = vor.u32 %v2219, %v2223
        %2225 = vrot.lane.b32.xlu0 %v2224, 64
        %v2226 = vpop.permute.xlu0 %2225
        %v2227 = vrot.slane %v2217, 1
        %v2229 = vunpack.c.l.b16 %v1962
        %v2230 = vpack.c.b16 %v2229, %v2229
        %2231 = vrot.lane.b32.xlu0 %v2230, 64
        %v2232 = vpop.permute.xlu0 %2231
        %v2234 = vshrl.u32 %v2230, 16
        %v2236 = vshll.u32 %v2230, 16
        %v2238 = vrot.slane %v2236, 1
        %v2239 = vor.u32 %v2234, %v2238
        %v2240 = vrot.slane %v2230, 1
        %2241 = vrot.lane.b32.xlu0 %v2240, 64
        %v2242 = vpop.permute.xlu0 %2241
        %v2244 = vunpack.c.l.b16 %v2088
        %v2245 = vpack.c.b16 %v2244, %v2244
        %v2247 = vshrl.u32 %v2245, 16
        %v2249 = vshll.u32 %v2245, 16
        %v2251 = vrot.slane %v2249, 1
        %v2252 = vor.u32 %v2247, %v2251
        %2253 = vrot.lane.b32.xlu0 %v2252, 64
        %v2254 = vpop.permute.xlu0 %2253
        %v2255 = vrot.slane %v2245, 1
        %v2258 = vsel %vm666, %v1836, %v2226
        %v2262 = vsel %vm666, %v2227, %v2232
        %v2266 = vsel %vm666, %v2239, %v2242
        %v2270 = vsel %vm666, %v2088, %v2254
        %v2273 = vperm.slane %v613, 0
        %v2347 = vunpack.c.l.b16 %v541
        %v2348 = vunpack.c.l.b16 %v542
        %v2349 = vunpack.c.l.b16 %v543
        %v2350 = vunpack.c.l.b16 %v544
        %v2351 = vunpack.c.l.b16 %v545
        %v2352 = vunpack.c.l.b16 %v546
        %v2353 = vunpack.c.l.b16 %v547
        %v2354 = vunpack.c.l.b16 %v548
        %v2355 = vunpack.c.l.b16 %v549
        %v2356 = vunpack.c.l.b16 %v550
        %v2357 = vunpack.c.l.b16 %v551
        %v2358 = vunpack.c.l.b16 %v552
        %v2359 = vunpack.c.l.b16 %v553
        %v2360 = vunpack.c.l.b16 %v554
        %v2361 = vunpack.c.l.b16 %v555
        %v2362 = vunpack.c.l.b16 %v556
        %v2363 = vunpack.c.l.b16 %v557
        %v2364 = vunpack.c.l.b16 %v558
        %v2365 = vunpack.c.l.b16 %v559
        %v2366 = vunpack.c.l.b16 %v560
        %v2367 = vunpack.c.l.b16 %v561
        %v2368 = vunpack.c.l.b16 %v562
        %v2369 = vunpack.c.l.b16 %v563
        %v2370 = vunpack.c.l.b16 %v564
        %v2371 = vunpack.c.l.b16 %v565
        %v2372 = vunpack.c.l.b16 %v566
        %v2373 = vunpack.c.l.b16 %v567
        %v2374 = vunpack.c.l.b16 %v568
        %v2375 = vunpack.c.l.b16 %v569
        %v2376 = vunpack.c.l.b16 %v570
        %v2377 = vunpack.c.l.b16 %v571
        %v2378 = vunpack.c.l.b16 %v572
        %v2379 = vunpack.c.l.b16 %v573
        %v2380 = vunpack.c.l.b16 %v574
        %v2381 = vunpack.c.l.b16 %v575
        %v2382 = vunpack.c.l.b16 %v576
        %v2383 = vunpack.c.l.b16 %v577
        %v2384 = vunpack.c.l.b16 %v578
        %v2385 = vunpack.c.l.b16 %v579
        %v2386 = vunpack.c.l.b16 %v580
        %v2387 = vunpack.c.l.b16 %v581
        %v2388 = vunpack.c.l.b16 %v582
        %v2389 = vunpack.c.l.b16 %v583
        %v2390 = vunpack.c.l.b16 %v584
        %v2391 = vunpack.c.l.b16 %v585
        %v2392 = vunpack.c.l.b16 %v586
        %v2393 = vunpack.c.l.b16 %v587
        %v2394 = vunpack.c.l.b16 %v588
        %v2395 = vunpack.c.l.b16 %v589
        %v2396 = vunpack.c.l.b16 %v590
        %v2397 = vunpack.c.l.b16 %v591
        %v2398 = vunpack.c.l.b16 %v592
        %v2399 = vunpack.c.l.b16 %v593
        %v2400 = vunpack.c.l.b16 %v594
        %v2401 = vunpack.c.l.b16 %v595
        %v2402 = vunpack.c.l.b16 %v596
        %v2403 = vunpack.c.l.b16 %v597
        %v2404 = vunpack.c.l.b16 %v598
        %v2405 = vunpack.c.l.b16 %v599
        %v2406 = vunpack.c.l.b16 %v600
        %v2407 = vunpack.c.l.b16 %v601
        %v2408 = vunpack.c.l.b16 %v602
        %v2409 = vunpack.c.l.b16 %v603
        %v2410 = vunpack.c.l.b16 %v604
        %v2411 = vunpack.c.l.b16 %v605
        %v2412 = vunpack.c.l.b16 %v606
        %v2413 = vunpack.c.l.b16 %v607
        %v2414 = vunpack.c.l.b16 %v608
        %v2415 = vunpack.c.l.b16 %v609
        %v2416 = vunpack.c.l.b16 %v610
        %v2417 = vunpack.c.l.b16 %v611
        %v2418 = vunpack.c.l.b16 %v612
        %v2419 = vpack.c.b16 %v2348, %v2347
        %v2420 = vpack.c.b16 %v2350, %v2349
        %v2421 = vpack.c.b16 %v2352, %v2351
        %v2422 = vpack.c.b16 %v2354, %v2353
        %v2423 = vpack.c.b16 %v2356, %v2355
        %v2424 = vpack.c.b16 %v2358, %v2357
        %v2425 = vpack.c.b16 %v2360, %v2359
        %v2426 = vpack.c.b16 %v2362, %v2361
        %v2427 = vpack.c.b16 %v2364, %v2363
        %v2428 = vpack.c.b16 %v2366, %v2365
        %v2429 = vpack.c.b16 %v2368, %v2367
        %v2430 = vpack.c.b16 %v2370, %v2369
        %v2431 = vpack.c.b16 %v2372, %v2371
        %v2432 = vpack.c.b16 %v2374, %v2373
        %v2433 = vpack.c.b16 %v2376, %v2375
        %v2434 = vpack.c.b16 %v2378, %v2377
        %v2435 = vpack.c.b16 %v2380, %v2379
        %v2436 = vpack.c.b16 %v2382, %v2381
        %v2437 = vpack.c.b16 %v2384, %v2383
        %v2438 = vpack.c.b16 %v2386, %v2385
        %v2439 = vpack.c.b16 %v2388, %v2387
        %v2440 = vpack.c.b16 %v2390, %v2389
        %v2441 = vpack.c.b16 %v2392, %v2391
        %v2442 = vpack.c.b16 %v2394, %v2393
        %v2443 = vpack.c.b16 %v2396, %v2395
        %v2444 = vpack.c.b16 %v2398, %v2397
        %v2445 = vpack.c.b16 %v2400, %v2399
        %v2446 = vpack.c.b16 %v2402, %v2401
        %v2447 = vpack.c.b16 %v2404, %v2403
        %v2448 = vpack.c.b16 %v2406, %v2405
        %v2449 = vpack.c.b16 %v2408, %v2407
        %v2450 = vpack.c.b16 %v2410, %v2409
        %v2451 = vpack.c.b16 %v2412, %v2411
        %v2452 = vpack.c.b16 %v2414, %v2413
        %v2453 = vpack.c.b16 %v2416, %v2415
        %v2454 = vpack.c.b16 %v2418, %v2417
        %v2492 = vsel %vm666, %v2255, 0
        %2494 = vmatpush.bf16.msra.mxu0 %v2426
        %2495 = vmatpush.bf16.msra.mxu0 %v2425
        %2496 = vmatpush.bf16.msra.mxu0 %v2424
        %2497 = vmatpush.bf16.msra.mxu0 %v2423
        %2498 = vmatpush.bf16.msra.mxu0 %v2422
        %2499 = vmatpush.bf16.msra.mxu0 %v2421
        %2500 = vmatpush.bf16.msra.mxu0 %v2420
        %2501 = vmatpush.bf16.msra.mxu0 %v2419
        %2502 = vmatmul.bf16.gmra.mxu0 %v2258
        %v2503 = vpop.f32.mrf.mxu0
        %v2504 = vadd.f32 %v2273, %v2503
        %v2505 = vpop.f32.mrf.mxu0
        %2506 = vdwg.mxu0
        %2507 = vmatpush.bf16.msra.mxu0 %v2434
        %2508 = vmatpush.bf16.msra.mxu0 %v2433
        %2509 = vmatpush.bf16.msra.mxu0 %v2432
        %2510 = vmatpush.bf16.msra.mxu0 %v2431
        %2511 = vmatpush.bf16.msra.mxu0 %v2430
        %2512 = vmatpush.bf16.msra.mxu0 %v2429
        %2513 = vmatpush.bf16.msra.mxu0 %v2428
        %2514 = vmatpush.bf16.msra.mxu0 %v2427
        %2515 = vmatmul.bf16.gmra.mxu0 %v2262
        %v2516 = vpop.f32.mrf.mxu0
        %v2517 = vadd.f32 %v2504, %v2516
        %v2518 = vpop.f32.mrf.mxu0
        %2519 = vdwg.mxu0
        %2520 = vmatpush.bf16.msra.mxu0 %v2442
        %2521 = vmatpush.bf16.msra.mxu0 %v2441
        %2522 = vmatpush.bf16.msra.mxu0 %v2440
        %2523 = vmatpush.bf16.msra.mxu0 %v2439
        %2524 = vmatpush.bf16.msra.mxu0 %v2438
        %2525 = vmatpush.bf16.msra.mxu0 %v2437
        %2526 = vmatpush.bf16.msra.mxu0 %v2436
        %2527 = vmatpush.bf16.msra.mxu0 %v2435
        %2528 = vmatmul.bf16.gmra.mxu0 %v2266
        %v2529 = vpop.f32.mrf.mxu0
        %v2530 = vadd.f32 %v2517, %v2529
        %v2531 = vpop.f32.mrf.mxu0
        %2532 = vdwg.mxu0
        %2533 = vmatpush.bf16.msra.mxu0 %v2450
        %2534 = vmatpush.bf16.msra.mxu0 %v2449
        %2535 = vmatpush.bf16.msra.mxu0 %v2448
        %2536 = vmatpush.bf16.msra.mxu0 %v2447
        %2537 = vmatpush.bf16.msra.mxu0 %v2446
        %2538 = vmatpush.bf16.msra.mxu0 %v2445
        %2539 = vmatpush.bf16.msra.mxu0 %v2444
        %2540 = vmatpush.bf16.msra.mxu0 %v2443
        %2541 = vmatmul.bf16.gmra.mxu0 %v2270
        %v2542 = vpop.f32.mrf.mxu0
        %v2543 = vadd.f32 %v2530, %v2542
        %v2544 = vpop.f32.mrf.mxu0
        %2545 = vdwg.mxu0
        %2546 = vmatpush.bf16.msra.mxu0 0
        %2547 = vmatpush.bf16.msra.mxu0 0
        %2548 = vmatpush.bf16.msra.mxu0 0
        %2549 = vmatpush.bf16.msra.mxu0 0
        %2550 = vmatpush.bf16.msra.mxu0 %v2454
        %2551 = vmatpush.bf16.msra.mxu0 %v2453
        %2552 = vmatpush.bf16.msra.mxu0 %v2452
        %2553 = vmatpush.bf16.msra.mxu0 %v2451
        %2554 = vmatmul.bf16.gmra.mxu0 %v2492
        %v2555 = vpop.f32.mrf.mxu0
        %v2556 = vadd.f32 %v2543, %v2555
        %v2557 = vpop.f32.mrf.mxu0
        %2558 = vdwg.mxu0
        %v2559 = vmax.f32 %v2556, 0.0
        %v2560 = vpack.c.bf16 %v2559, %v2559
        %2561 = vrot.lane.b32.xlu0 %v2239, 64
        %v2562 = vpop.permute.xlu0 %2561
        %2563 = vrot.lane.b32.xlu0 %v2245, 64
        %v2564 = vpop.permute.xlu0 %2563
        %2565 = vrot.lane.b32.xlu0 %v2255, 64
        %v2566 = vpop.permute.xlu0 %2565
        %v2568 = vunpack.c.l.b16 %v2214
        %v2569 = vpack.c.b16 %v2568, %v2568
        %v2571 = vshrl.u32 %v2569, 16
        %v2573 = vshll.u32 %v2569, 16
        %v2575 = vrot.slane %v2573, 1
        %v2576 = vor.u32 %v2571, %v2575
        %2577 = vrot.lane.b32.xlu0 %v2576, 64
        %v2578 = vpop.permute.xlu0 %2577
        %v2579 = vrot.slane %v2569, 1
        %v2582 = vsel %vm666, %v1962, %v2562
        %v2586 = vsel %vm666, %v2240, %v2564
        %v2590 = vsel %vm666, %v2252, %v2566
        %v2594 = vsel %vm666, %v2214, %v2578
        %v2597 = vsel %vm666, %v2579, 0
        %2599 = vmatpush.bf16.msra.mxu0 %v2426
        %2600 = vmatpush.bf16.msra.mxu0 %v2425
        %2601 = vmatpush.bf16.msra.mxu0 %v2424
        %2602 = vmatpush.bf16.msra.mxu0 %v2423
        %2603 = vmatpush.bf16.msra.mxu0 %v2422
        %2604 = vmatpush.bf16.msra.mxu0 %v2421
        %2605 = vmatpush.bf16.msra.mxu0 %v2420
        %2606 = vmatpush.bf16.msra.mxu0 %v2419
        %2607 = vmatmul.bf16.gmra.mxu0 %v2582
        %v2608 = vpop.f32.mrf.mxu0
        %v2609 = vadd.f32 %v2273, %v2608
        %v2610 = vpop.f32.mrf.mxu0
        %2611 = vdwg.mxu0
        %2612 = vmatpush.bf16.msra.mxu0 %v2434
        %2613 = vmatpush.bf16.msra.mxu0 %v2433
        %2614 = vmatpush.bf16.msra.mxu0 %v2432
        %2615 = vmatpush.bf16.msra.mxu0 %v2431
        %2616 = vmatpush.bf16.msra.mxu0 %v2430
        %2617 = vmatpush.bf16.msra.mxu0 %v2429
        %2618 = vmatpush.bf16.msra.mxu0 %v2428
        %2619 = vmatpush.bf16.msra.mxu0 %v2427
        %2620 = vmatmul.bf16.gmra.mxu0 %v2586
        %v2621 = vpop.f32.mrf.mxu0
        %v2622 = vadd.f32 %v2609, %v2621
        %v2623 = vpop.f32.mrf.mxu0
        %2624 = vdwg.mxu0
        %2625 = vmatpush.bf16.msra.mxu0 %v2442
        %2626 = vmatpush.bf16.msra.mxu0 %v2441
        %2627 = vmatpush.bf16.msra.mxu0 %v2440
        %2628 = vmatpush.bf16.msra.mxu0 %v2439
        %2629 = vmatpush.bf16.msra.mxu0 %v2438
        %2630 = vmatpush.bf16.msra.mxu0 %v2437
        %2631 = vmatpush.bf16.msra.mxu0 %v2436
        %2632 = vmatpush.bf16.msra.mxu0 %v2435
        %2633 = vmatmul.bf16.gmra.mxu0 %v2590
        %v2634 = vpop.f32.mrf.mxu0
        %v2635 = vadd.f32 %v2622, %v2634
        %v2636 = vpop.f32.mrf.mxu0
        %2637 = vdwg.mxu0
        %2638 = vmatpush.bf16.msra.mxu0 %v2450
        %2639 = vmatpush.bf16.msra.mxu0 %v2449
        %2640 = vmatpush.bf16.msra.mxu0 %v2448
        %2641 = vmatpush.bf16.msra.mxu0 %v2447
        %2642 = vmatpush.bf16.msra.mxu0 %v2446
        %2643 = vmatpush.bf16.msra.mxu0 %v2445
        %2644 = vmatpush.bf16.msra.mxu0 %v2444
        %2645 = vmatpush.bf16.msra.mxu0 %v2443
        %2646 = vmatmul.bf16.gmra.mxu0 %v2594
        %v2647 = vpop.f32.mrf.mxu0
        %v2648 = vadd.f32 %v2635, %v2647
        %v2649 = vpop.f32.mrf.mxu0
        %2650 = vdwg.mxu0
        %2651 = vmatpush.bf16.msra.mxu0 0
        %2652 = vmatpush.bf16.msra.mxu0 0
        %2653 = vmatpush.bf16.msra.mxu0 0
        %2654 = vmatpush.bf16.msra.mxu0 0
        %2655 = vmatpush.bf16.msra.mxu0 %v2454
        %2656 = vmatpush.bf16.msra.mxu0 %v2453
        %2657 = vmatpush.bf16.msra.mxu0 %v2452
        %2658 = vmatpush.bf16.msra.mxu0 %v2451
        %2659 = vmatmul.bf16.gmra.mxu0 %v2597
        %v2660 = vpop.f32.mrf.mxu0
        %v2661 = vadd.f32 %v2648, %v2660
        %v2662 = vpop.f32.mrf.mxu0
        %2663 = vdwg.mxu0
        %v2664 = vmax.f32 %v2661, 0.0
        %v2665 = vpack.c.bf16 %v2664, %v2664
        %v2667 = vunpack.c.l.b16 %v2560
        %v2668 = vpack.c.b16 %v2667, %v2667
        %v2670 = vshrl.u32 %v2668, 16
        %2672 = vrot.lane.b32.xlu0 %v2670, 64
        %v2673 = vpop.permute.xlu0 %2672
        %v2675 = vunpack.c.l.b16 %v2665
        %v2676 = vpack.c.b16 %v2675, %v2675
        %v2678 = vshrl.u32 %v2676, 16
        %2680 = vrot.lane.b32.xlu0 %v2678, 64
        %v2681 = vpop.permute.xlu0 %2680
        %v2684 = vsel %vm666, %v2560, %v2673
        %v2688 = vsel %vm666, %v2665, %v2681
        %s2690 = scalar_lea.vmem %s433, 44
        %v2691 = vld [vmem:[%s2690] sm:$0x7]
        %s2692 = scalar_lea.vmem %s433, 48
        %v2693 = vld [vmem:[%s2692] sm:$0x7]
        %s2694 = scalar_lea.vmem %s433, 52
        %v2695 = vld [vmem:[%s2694] sm:$0x7]
        %s2696 = scalar_lea.vmem %s433, 56
        %v2697 = vld [vmem:[%s2696] sm:$0x7]
        %s2698 = scalar_lea.vmem %s433, 60
        %v2699 = vld [vmem:[%s2698] sm:$0x7]
        %s2700 = scalar_lea.vmem %s433, 64
        %v2701 = vld [vmem:[%s2700] sm:$0x7]
        %s2702 = scalar_lea.vmem %s433, 68
        %v2703 = vld [vmem:[%s2702] sm:$0x7]
        %s2704 = scalar_lea.vmem %s433, 72
        %v2705 = vld [vmem:[%s2704] sm:$0x7]
        %s2706 = scalar_lea.vmem %s433, 76
        %v2707 = vld [vmem:[%s2706] sm:$0x7]
        %s2708 = scalar_lea.vmem %s433, 80
        %v2709 = vld [vmem:[%s2708] sm:$0x7]
        %s2710 = scalar_lea.vmem %s433, 84
        %v2711 = vld [vmem:[%s2710] sm:$0x7]
        %s2712 = scalar_lea.vmem %s440, 44
        %v2713 = vld [vmem:[%s2712] sm:$0x7]
        %s2714 = scalar_lea.vmem %s440, 48
        %v2715 = vld [vmem:[%s2714] sm:$0x7]
        %s2716 = scalar_lea.vmem %s440, 52
        %v2717 = vld [vmem:[%s2716] sm:$0x7]
        %s2718 = scalar_lea.vmem %s440, 56
        %v2719 = vld [vmem:[%s2718] sm:$0x7]
        %s2720 = scalar_lea.vmem %s440, 60
        %v2721 = vld [vmem:[%s2720] sm:$0x7]
        %s2722 = scalar_lea.vmem %s440, 64
        %v2723 = vld [vmem:[%s2722] sm:$0x7]
        %s2724 = scalar_lea.vmem %s440, 68
        %v2725 = vld [vmem:[%s2724] sm:$0x7]
        %s2726 = scalar_lea.vmem %s440, 72
        %v2727 = vld [vmem:[%s2726] sm:$0x7]
        %s2728 = scalar_lea.vmem %s440, 76
        %v2729 = vld [vmem:[%s2728] sm:$0x7]
        %s2730 = scalar_lea.vmem %s440, 80
        %v2731 = vld [vmem:[%s2730] sm:$0x7]
        %s2732 = scalar_lea.vmem %s440, 84
        %v2733 = vld [vmem:[%s2732] sm:$0x7]
        %v2735 = vunpack.c.l.b16 %v2713
        %v2736 = vpack.c.b16 %v2735, %v2735
        %2737 = vrot.lane.b32.xlu0 %v2736, 64
        %v2738 = vpop.permute.xlu0 %2737
        %v2740 = vunpack.c.l.b16 %v2715
        %v2741 = vpack.c.b16 %v2740, %v2740
        %2742 = vrot.lane.b32.xlu0 %v2741, 64
        %v2743 = vpop.permute.xlu0 %2742
        %v2746 = vsel %vm666, %v2691, %v2738
        %v2750 = vsel %vm666, %v2693, %v2743
        %v2753 = vunpack.c.l.b16 %v2691
        %v2754 = vpack.c.b16 %v2753, %v2753
        %v2756 = vshrl.u32 %v2754, 16
        %v2758 = vshll.u32 %v2754, 16
        %v2760 = vrot.slane %v2758, 1
        %v2761 = vor.u32 %v2756, %v2760
        %2762 = vrot.lane.b32.xlu0 %v2761, 64
        %v2763 = vpop.permute.xlu0 %2762
        %v2765 = vunpack.c.l.b16 %v2693
        %v2766 = vpack.c.b16 %v2765, %v2765
        %v2768 = vshrl.u32 %v2766, 16
        %v2770 = vshll.u32 %v2766, 16
        %v2772 = vrot.slane %v2770, 1
        %v2773 = vor.u32 %v2768, %v2772
        %2774 = vrot.lane.b32.xlu0 %v2773, 64
        %v2775 = vpop.permute.xlu0 %2774
        %v2778 = vsel %vm666, %v2713, %v2763
        %v2781 = vsel %vm666, %v2715, %v2775
        %v2782 = vshrl.u32 %v2778, 16
        %v2784 = vrot.slane %v2782, 5
        %v2785 = vshll.u32 %v2778, 16
        %v2787 = vrot.slane %v2785, 6
        %v2788 = vor.u32 %v2784, %v2787
        %v2789 = vshrl.u32 %v2781, 16
        %v2791 = vrot.slane %v2789, 5
        %v2792 = vshll.u32 %v2781, 16
        %v2794 = vrot.slane %v2792, 6
        %v2795 = vor.u32 %v2791, %v2794
        %v2798 = vsel %vm723, %v2746, %v2788
        %v2799 = vsel %vm723, %v2750, %v2795
        %2800 = vmatpush.bf16.msra.mxu0 %v800
        %2801 = vmatpush.bf16.msra.mxu0 %v799
        %2802 = vmatpush.bf16.msra.mxu0 %v798
        %2803 = vmatpush.bf16.msra.mxu0 %v797
        %2804 = vmatpush.bf16.msra.mxu0 %v796
        %2805 = vmatpush.bf16.msra.mxu0 %v795
        %2806 = vmatpush.bf16.msra.mxu0 %v794
        %2807 = vmatpush.bf16.msra.mxu0 %v793
        %2808 = vmatmul.bf16.gmra.mxu0 %v2798
        %v2809 = vpop.f32.mrf.mxu0
        %v2810 = vadd.f32 %v727, %v2809
        %v2811 = vpop.f32.mrf.mxu0
        %v2812 = vadd.f32 %v727, %v2811
        %2813 = vdwg.mxu0
        %2814 = vmatpush.bf16.msra.mxu0 %v808
        %2815 = vmatpush.bf16.msra.mxu0 %v807
        %2816 = vmatpush.bf16.msra.mxu0 %v806
        %2817 = vmatpush.bf16.msra.mxu0 %v805
        %2818 = vmatpush.bf16.msra.mxu0 %v804
        %2819 = vmatpush.bf16.msra.mxu0 %v803
        %2820 = vmatpush.bf16.msra.mxu0 %v802
        %2821 = vmatpush.bf16.msra.mxu0 %v801
        %2822 = vmatmul.bf16.gmra.mxu0 %v2799
        %v2823 = vpop.f32.mrf.mxu0
        %v2824 = vadd.f32 %v2810, %v2823
        %v2825 = vpop.f32.mrf.mxu0
        %v2826 = vadd.f32 %v2812, %v2825
        %2827 = vdwg.mxu0
        %v2828 = vmax.f32 %v2824, 0.0
        %v2829 = vmax.f32 %v2826, 0.0
        %v2830 = vpack.c.bf16 %v2828, %v2828
        %v2831 = vpack.c.bf16 %v2829, %v2829
        %v2833 = vunpack.c.l.b16 %v2717
        %v2834 = vpack.c.b16 %v2833, %v2833
        %2835 = vrot.lane.b32.xlu0 %v2834, 64
        %v2836 = vpop.permute.xlu0 %2835
        %v2839 = vsel %vm666, %v2695, %v2836
        %v2842 = vunpack.c.l.b16 %v2695
        %v2843 = vpack.c.b16 %v2842, %v2842
        %v2845 = vshrl.u32 %v2843, 16
        %v2847 = vshll.u32 %v2843, 16
        %v2849 = vrot.slane %v2847, 1
        %v2850 = vor.u32 %v2845, %v2849
        %2851 = vrot.lane.b32.xlu0 %v2850, 64
        %v2852 = vpop.permute.xlu0 %2851
        %v2855 = vsel %vm666, %v2717, %v2852
        %v2856 = vshrl.u32 %v2855, 16
        %v2858 = vrot.slane %v2856, 5
        %v2859 = vshll.u32 %v2855, 16
        %v2861 = vrot.slane %v2859, 6
        %v2862 = vor.u32 %v2858, %v2861
        %v2864 = vsel %vm723, %v2839, %v2862
        %2865 = vmatpush.bf16.msra.mxu0 %v800
        %2866 = vmatpush.bf16.msra.mxu0 %v799
        %2867 = vmatpush.bf16.msra.mxu0 %v798
        %2868 = vmatpush.bf16.msra.mxu0 %v797
        %2869 = vmatpush.bf16.msra.mxu0 %v796
        %2870 = vmatpush.bf16.msra.mxu0 %v795
        %2871 = vmatpush.bf16.msra.mxu0 %v794
        %2872 = vmatpush.bf16.msra.mxu0 %v793
        %2873 = vmatmul.bf16.gmra.mxu0 %v2799
        %v2874 = vpop.f32.mrf.mxu0
        %v2875 = vadd.f32 %v727, %v2874
        %v2876 = vpop.f32.mrf.mxu0
        %v2877 = vadd.f32 %v727, %v2876
        %2878 = vdwg.mxu0
        %2879 = vmatpush.bf16.msra.mxu0 %v808
        %2880 = vmatpush.bf16.msra.mxu0 %v807
        %2881 = vmatpush.bf16.msra.mxu0 %v806
        %2882 = vmatpush.bf16.msra.mxu0 %v805
        %2883 = vmatpush.bf16.msra.mxu0 %v804
        %2884 = vmatpush.bf16.msra.mxu0 %v803
        %2885 = vmatpush.bf16.msra.mxu0 %v802
        %2886 = vmatpush.bf16.msra.mxu0 %v801
        %2887 = vmatmul.bf16.gmra.mxu0 %v2864
        %v2888 = vpop.f32.mrf.mxu0
        %v2889 = vadd.f32 %v2875, %v2888
        %v2890 = vpop.f32.mrf.mxu0
        %v2891 = vadd.f32 %v2877, %v2890
        %2892 = vdwg.mxu0
        %v2893 = vmax.f32 %v2889, 0.0
        %v2894 = vmax.f32 %v2891, 0.0
        %v2895 = vpack.c.bf16 %v2893, %v2893
        %v2896 = vpack.c.bf16 %v2894, %v2894
        %v2898 = vunpack.c.l.b16 %v2719
        %v2899 = vpack.c.b16 %v2898, %v2898
        %2900 = vrot.lane.b32.xlu0 %v2899, 64
        %v2901 = vpop.permute.xlu0 %2900
        %v2904 = vsel %vm666, %v2697, %v2901
        %v2907 = vunpack.c.l.b16 %v2697
        %v2908 = vpack.c.b16 %v2907, %v2907
        %v2910 = vshrl.u32 %v2908, 16
        %v2912 = vshll.u32 %v2908, 16
        %v2914 = vrot.slane %v2912, 1
        %v2915 = vor.u32 %v2910, %v2914
        %2916 = vrot.lane.b32.xlu0 %v2915, 64
        %v2917 = vpop.permute.xlu0 %2916
        %v2920 = vsel %vm666, %v2719, %v2917
        %v2921 = vshrl.u32 %v2920, 16
        %v2923 = vrot.slane %v2921, 5
        %v2924 = vshll.u32 %v2920, 16
        %v2926 = vrot.slane %v2924, 6
        %v2927 = vor.u32 %v2923, %v2926
        %v2929 = vsel %vm723, %v2904, %v2927
        %2930 = vmatpush.bf16.msra.mxu0 %v800
        %2931 = vmatpush.bf16.msra.mxu0 %v799
        %2932 = vmatpush.bf16.msra.mxu0 %v798
        %2933 = vmatpush.bf16.msra.mxu0 %v797
        %2934 = vmatpush.bf16.msra.mxu0 %v796
        %2935 = vmatpush.bf16.msra.mxu0 %v795
        %2936 = vmatpush.bf16.msra.mxu0 %v794
        %2937 = vmatpush.bf16.msra.mxu0 %v793
        %2938 = vmatmul.bf16.gmra.mxu0 %v2864
        %v2939 = vpop.f32.mrf.mxu0
        %v2940 = vadd.f32 %v727, %v2939
        %v2941 = vpop.f32.mrf.mxu0
        %v2942 = vadd.f32 %v727, %v2941
        %2943 = vdwg.mxu0
        %2944 = vmatpush.bf16.msra.mxu0 %v808
        %2945 = vmatpush.bf16.msra.mxu0 %v807
        %2946 = vmatpush.bf16.msra.mxu0 %v806
        %2947 = vmatpush.bf16.msra.mxu0 %v805
        %2948 = vmatpush.bf16.msra.mxu0 %v804
        %2949 = vmatpush.bf16.msra.mxu0 %v803
        %2950 = vmatpush.bf16.msra.mxu0 %v802
        %2951 = vmatpush.bf16.msra.mxu0 %v801
        %2952 = vmatmul.bf16.gmra.mxu0 %v2929
        %v2953 = vpop.f32.mrf.mxu0
        %v2954 = vadd.f32 %v2940, %v2953
        %v2955 = vpop.f32.mrf.mxu0
        %v2956 = vadd.f32 %v2942, %v2955
        %2957 = vdwg.mxu0
        %v2958 = vmax.f32 %v2954, 0.0
        %v2959 = vmax.f32 %v2956, 0.0
        %v2960 = vpack.c.bf16 %v2958, %v2958
        %v2961 = vpack.c.bf16 %v2959, %v2959
        %v2963 = vunpack.c.l.b16 %v2721
        %v2964 = vpack.c.b16 %v2963, %v2963
        %2965 = vrot.lane.b32.xlu0 %v2964, 64
        %v2966 = vpop.permute.xlu0 %2965
        %v2969 = vsel %vm666, %v2699, %v2966
        %v2972 = vunpack.c.l.b16 %v2699
        %v2973 = vpack.c.b16 %v2972, %v2972
        %v2975 = vshrl.u32 %v2973, 16
        %v2977 = vshll.u32 %v2973, 16
        %v2979 = vrot.slane %v2977, 1
        %v2980 = vor.u32 %v2975, %v2979
        %2981 = vrot.lane.b32.xlu0 %v2980, 64
        %v2982 = vpop.permute.xlu0 %2981
        %v2985 = vsel %vm666, %v2721, %v2982
        %v2986 = vshrl.u32 %v2985, 16
        %v2988 = vrot.slane %v2986, 5
        %v2989 = vshll.u32 %v2985, 16
        %v2991 = vrot.slane %v2989, 6
        %v2992 = vor.u32 %v2988, %v2991
        %v2994 = vsel %vm723, %v2969, %v2992
        %2995 = vmatpush.bf16.msra.mxu0 %v800
        %2996 = vmatpush.bf16.msra.mxu0 %v799
        %2997 = vmatpush.bf16.msra.mxu0 %v798
        %2998 = vmatpush.bf16.msra.mxu0 %v797
        %2999 = vmatpush.bf16.msra.mxu0 %v796
        %3000 = vmatpush.bf16.msra.mxu0 %v795
        %3001 = vmatpush.bf16.msra.mxu0 %v794
        %3002 = vmatpush.bf16.msra.mxu0 %v793
        %3003 = vmatmul.bf16.gmra.mxu0 %v2929
        %v3004 = vpop.f32.mrf.mxu0
        %v3005 = vadd.f32 %v727, %v3004
        %v3006 = vpop.f32.mrf.mxu0
        %v3007 = vadd.f32 %v727, %v3006
        %3008 = vdwg.mxu0
        %3009 = vmatpush.bf16.msra.mxu0 %v808
        %3010 = vmatpush.bf16.msra.mxu0 %v807
        %3011 = vmatpush.bf16.msra.mxu0 %v806
        %3012 = vmatpush.bf16.msra.mxu0 %v805
        %3013 = vmatpush.bf16.msra.mxu0 %v804
        %3014 = vmatpush.bf16.msra.mxu0 %v803
        %3015 = vmatpush.bf16.msra.mxu0 %v802
        %3016 = vmatpush.bf16.msra.mxu0 %v801
        %3017 = vmatmul.bf16.gmra.mxu0 %v2994
        %v3018 = vpop.f32.mrf.mxu0
        %v3019 = vadd.f32 %v3005, %v3018
        %v3020 = vpop.f32.mrf.mxu0
        %v3021 = vadd.f32 %v3007, %v3020
        %3022 = vdwg.mxu0
        %v3023 = vmax.f32 %v3019, 0.0
        %v3024 = vmax.f32 %v3021, 0.0
        %v3025 = vpack.c.bf16 %v3023, %v3023
        %v3026 = vpack.c.bf16 %v3024, %v3024
        %v3028 = vunpack.c.l.b16 %v2723
        %v3029 = vpack.c.b16 %v3028, %v3028
        %3030 = vrot.lane.b32.xlu0 %v3029, 64
        %v3031 = vpop.permute.xlu0 %3030
        %v3034 = vsel %vm666, %v2701, %v3031
        %v3037 = vunpack.c.l.b16 %v2701
        %v3038 = vpack.c.b16 %v3037, %v3037
        %v3040 = vshrl.u32 %v3038, 16
        %v3042 = vshll.u32 %v3038, 16
        %v3044 = vrot.slane %v3042, 1
        %v3045 = vor.u32 %v3040, %v3044
        %3046 = vrot.lane.b32.xlu0 %v3045, 64
        %v3047 = vpop.permute.xlu0 %3046
        %v3050 = vsel %vm666, %v2723, %v3047
        %v3051 = vshrl.u32 %v3050, 16
        %v3053 = vrot.slane %v3051, 5
        %v3054 = vshll.u32 %v3050, 16
        %v3056 = vrot.slane %v3054, 6
        %v3057 = vor.u32 %v3053, %v3056
        %v3059 = vsel %vm723, %v3034, %v3057
        %3060 = vmatpush.bf16.msra.mxu0 %v800
        %3061 = vmatpush.bf16.msra.mxu0 %v799
        %3062 = vmatpush.bf16.msra.mxu0 %v798
        %3063 = vmatpush.bf16.msra.mxu0 %v797
        %3064 = vmatpush.bf16.msra.mxu0 %v796
        %3065 = vmatpush.bf16.msra.mxu0 %v795
        %3066 = vmatpush.bf16.msra.mxu0 %v794
        %3067 = vmatpush.bf16.msra.mxu0 %v793
        %3068 = vmatmul.bf16.gmra.mxu0 %v2994
        %v3069 = vpop.f32.mrf.mxu0
        %v3070 = vadd.f32 %v727, %v3069
        %v3071 = vpop.f32.mrf.mxu0
        %v3072 = vadd.f32 %v727, %v3071
        %3073 = vdwg.mxu0
        %3074 = vmatpush.bf16.msra.mxu0 %v808
        %3075 = vmatpush.bf16.msra.mxu0 %v807
        %3076 = vmatpush.bf16.msra.mxu0 %v806
        %3077 = vmatpush.bf16.msra.mxu0 %v805
        %3078 = vmatpush.bf16.msra.mxu0 %v804
        %3079 = vmatpush.bf16.msra.mxu0 %v803
        %3080 = vmatpush.bf16.msra.mxu0 %v802
        %3081 = vmatpush.bf16.msra.mxu0 %v801
        %3082 = vmatmul.bf16.gmra.mxu0 %v3059
        %v3083 = vpop.f32.mrf.mxu0
        %v3084 = vadd.f32 %v3070, %v3083
        %v3085 = vpop.f32.mrf.mxu0
        %v3086 = vadd.f32 %v3072, %v3085
        %3087 = vdwg.mxu0
        %v3088 = vmax.f32 %v3084, 0.0
        %v3089 = vmax.f32 %v3086, 0.0
        %v3090 = vpack.c.bf16 %v3088, %v3088
        %v3091 = vpack.c.bf16 %v3089, %v3089
        %v3093 = vunpack.c.l.b16 %v2725
        %v3094 = vpack.c.b16 %v3093, %v3093
        %3095 = vrot.lane.b32.xlu0 %v3094, 64
        %v3096 = vpop.permute.xlu0 %3095
        %v3099 = vsel %vm666, %v2703, %v3096
        %v3102 = vunpack.c.l.b16 %v2703
        %v3103 = vpack.c.b16 %v3102, %v3102
        %v3105 = vshrl.u32 %v3103, 16
        %v3107 = vshll.u32 %v3103, 16
        %v3109 = vrot.slane %v3107, 1
        %v3110 = vor.u32 %v3105, %v3109
        %3111 = vrot.lane.b32.xlu0 %v3110, 64
        %v3112 = vpop.permute.xlu0 %3111
        %v3115 = vsel %vm666, %v2725, %v3112
        %v3116 = vshrl.u32 %v3115, 16
        %v3118 = vrot.slane %v3116, 5
        %v3119 = vshll.u32 %v3115, 16
        %v3121 = vrot.slane %v3119, 6
        %v3122 = vor.u32 %v3118, %v3121
        %v3124 = vsel %vm723, %v3099, %v3122
        %3125 = vmatpush.bf16.msra.mxu0 %v800
        %3126 = vmatpush.bf16.msra.mxu0 %v799
        %3127 = vmatpush.bf16.msra.mxu0 %v798
        %3128 = vmatpush.bf16.msra.mxu0 %v797
        %3129 = vmatpush.bf16.msra.mxu0 %v796
        %3130 = vmatpush.bf16.msra.mxu0 %v795
        %3131 = vmatpush.bf16.msra.mxu0 %v794
        %3132 = vmatpush.bf16.msra.mxu0 %v793
        %3133 = vmatmul.bf16.gmra.mxu0 %v3059
        %v3134 = vpop.f32.mrf.mxu0
        %v3135 = vadd.f32 %v727, %v3134
        %v3136 = vpop.f32.mrf.mxu0
        %v3137 = vadd.f32 %v727, %v3136
        %3138 = vdwg.mxu0
        %3139 = vmatpush.bf16.msra.mxu0 %v808
        %3140 = vmatpush.bf16.msra.mxu0 %v807
        %3141 = vmatpush.bf16.msra.mxu0 %v806
        %3142 = vmatpush.bf16.msra.mxu0 %v805
        %3143 = vmatpush.bf16.msra.mxu0 %v804
        %3144 = vmatpush.bf16.msra.mxu0 %v803
        %3145 = vmatpush.bf16.msra.mxu0 %v802
        %3146 = vmatpush.bf16.msra.mxu0 %v801
        %3147 = vmatmul.bf16.gmra.mxu0 %v3124
        %v3148 = vpop.f32.mrf.mxu0
        %v3149 = vadd.f32 %v3135, %v3148
        %v3150 = vpop.f32.mrf.mxu0
        %v3151 = vadd.f32 %v3137, %v3150
        %3152 = vdwg.mxu0
        %v3153 = vmax.f32 %v3149, 0.0
        %v3154 = vmax.f32 %v3151, 0.0
        %v3155 = vpack.c.bf16 %v3153, %v3153
        %v3156 = vpack.c.bf16 %v3154, %v3154
        %v3158 = vunpack.c.l.b16 %v2727
        %v3159 = vpack.c.b16 %v3158, %v3158
        %3160 = vrot.lane.b32.xlu0 %v3159, 64
        %v3161 = vpop.permute.xlu0 %3160
        %v3164 = vsel %vm666, %v2705, %v3161
        %v3167 = vunpack.c.l.b16 %v2705
        %v3168 = vpack.c.b16 %v3167, %v3167
        %v3170 = vshrl.u32 %v3168, 16
        %v3172 = vshll.u32 %v3168, 16
        %v3174 = vrot.slane %v3172, 1
        %v3175 = vor.u32 %v3170, %v3174
        %3176 = vrot.lane.b32.xlu0 %v3175, 64
        %v3177 = vpop.permute.xlu0 %3176
        %v3180 = vsel %vm666, %v2727, %v3177
        %v3181 = vshrl.u32 %v3180, 16
        %v3183 = vrot.slane %v3181, 5
        %v3184 = vshll.u32 %v3180, 16
        %v3186 = vrot.slane %v3184, 6
        %v3187 = vor.u32 %v3183, %v3186
        %v3189 = vsel %vm723, %v3164, %v3187
        %3190 = vmatpush.bf16.msra.mxu0 %v800
        %3191 = vmatpush.bf16.msra.mxu0 %v799
        %3192 = vmatpush.bf16.msra.mxu0 %v798
        %3193 = vmatpush.bf16.msra.mxu0 %v797
        %3194 = vmatpush.bf16.msra.mxu0 %v796
        %3195 = vmatpush.bf16.msra.mxu0 %v795
        %3196 = vmatpush.bf16.msra.mxu0 %v794
        %3197 = vmatpush.bf16.msra.mxu0 %v793
        %3198 = vmatmul.bf16.gmra.mxu0 %v3124
        %v3199 = vpop.f32.mrf.mxu0
        %v3200 = vadd.f32 %v727, %v3199
        %v3201 = vpop.f32.mrf.mxu0
        %v3202 = vadd.f32 %v727, %v3201
        %3203 = vdwg.mxu0
        %3204 = vmatpush.bf16.msra.mxu0 %v808
        %3205 = vmatpush.bf16.msra.mxu0 %v807
        %3206 = vmatpush.bf16.msra.mxu0 %v806
        %3207 = vmatpush.bf16.msra.mxu0 %v805
        %3208 = vmatpush.bf16.msra.mxu0 %v804
        %3209 = vmatpush.bf16.msra.mxu0 %v803
        %3210 = vmatpush.bf16.msra.mxu0 %v802
        %3211 = vmatpush.bf16.msra.mxu0 %v801
        %3212 = vmatmul.bf16.gmra.mxu0 %v3189
        %v3213 = vpop.f32.mrf.mxu0
        %v3214 = vadd.f32 %v3200, %v3213
        %v3215 = vpop.f32.mrf.mxu0
        %v3216 = vadd.f32 %v3202, %v3215
        %3217 = vdwg.mxu0
        %v3218 = vmax.f32 %v3214, 0.0
        %v3219 = vmax.f32 %v3216, 0.0
        %v3220 = vpack.c.bf16 %v3218, %v3218
        %v3221 = vpack.c.bf16 %v3219, %v3219
        %v3223 = vunpack.c.l.b16 %v2729
        %v3224 = vpack.c.b16 %v3223, %v3223
        %3225 = vrot.lane.b32.xlu0 %v3224, 64
        %v3226 = vpop.permute.xlu0 %3225
        %v3229 = vsel %vm666, %v2707, %v3226
        %v3232 = vunpack.c.l.b16 %v2707
        %v3233 = vpack.c.b16 %v3232, %v3232
        %v3235 = vshrl.u32 %v3233, 16
        %v3237 = vshll.u32 %v3233, 16
        %v3239 = vrot.slane %v3237, 1
        %v3240 = vor.u32 %v3235, %v3239
        %3241 = vrot.lane.b32.xlu0 %v3240, 64
        %v3242 = vpop.permute.xlu0 %3241
        %v3245 = vsel %vm666, %v2729, %v3242
        %v3246 = vshrl.u32 %v3245, 16
        %v3248 = vrot.slane %v3246, 5
        %v3249 = vshll.u32 %v3245, 16
        %v3251 = vrot.slane %v3249, 6
        %v3252 = vor.u32 %v3248, %v3251
        %v3254 = vsel %vm723, %v3229, %v3252
        %3255 = vmatpush.bf16.msra.mxu0 %v800
        %3256 = vmatpush.bf16.msra.mxu0 %v799
        %3257 = vmatpush.bf16.msra.mxu0 %v798
        %3258 = vmatpush.bf16.msra.mxu0 %v797
        %3259 = vmatpush.bf16.msra.mxu0 %v796
        %3260 = vmatpush.bf16.msra.mxu0 %v795
        %3261 = vmatpush.bf16.msra.mxu0 %v794
        %3262 = vmatpush.bf16.msra.mxu0 %v793
        %3263 = vmatmul.bf16.gmra.mxu0 %v3189
        %v3264 = vpop.f32.mrf.mxu0
        %v3265 = vadd.f32 %v727, %v3264
        %v3266 = vpop.f32.mrf.mxu0
        %v3267 = vadd.f32 %v727, %v3266
        %3268 = vdwg.mxu0
        %3269 = vmatpush.bf16.msra.mxu0 %v808
        %3270 = vmatpush.bf16.msra.mxu0 %v807
        %3271 = vmatpush.bf16.msra.mxu0 %v806
        %3272 = vmatpush.bf16.msra.mxu0 %v805
        %3273 = vmatpush.bf16.msra.mxu0 %v804
        %3274 = vmatpush.bf16.msra.mxu0 %v803
        %3275 = vmatpush.bf16.msra.mxu0 %v802
        %3276 = vmatpush.bf16.msra.mxu0 %v801
        %3277 = vmatmul.bf16.gmra.mxu0 %v3254
        %v3278 = vpop.f32.mrf.mxu0
        %v3279 = vadd.f32 %v3265, %v3278
        %v3280 = vpop.f32.mrf.mxu0
        %v3281 = vadd.f32 %v3267, %v3280
        %3282 = vdwg.mxu0
        %v3283 = vmax.f32 %v3279, 0.0
        %v3284 = vmax.f32 %v3281, 0.0
        %v3285 = vpack.c.bf16 %v3283, %v3283
        %v3286 = vpack.c.bf16 %v3284, %v3284
        %v3288 = vunpack.c.l.b16 %v2731
        %v3289 = vpack.c.b16 %v3288, %v3288
        %3290 = vrot.lane.b32.xlu0 %v3289, 64
        %v3291 = vpop.permute.xlu0 %3290
        %v3294 = vsel %vm666, %v2709, %v3291
        %v3297 = vunpack.c.l.b16 %v2709
        %v3298 = vpack.c.b16 %v3297, %v3297
        %v3300 = vshrl.u32 %v3298, 16
        %v3302 = vshll.u32 %v3298, 16
        %v3304 = vrot.slane %v3302, 1
        %v3305 = vor.u32 %v3300, %v3304
        %3306 = vrot.lane.b32.xlu0 %v3305, 64
        %v3307 = vpop.permute.xlu0 %3306
        %v3310 = vsel %vm666, %v2731, %v3307
        %v3311 = vshrl.u32 %v3310, 16
        %v3313 = vrot.slane %v3311, 5
        %v3314 = vshll.u32 %v3310, 16
        %v3316 = vrot.slane %v3314, 6
        %v3317 = vor.u32 %v3313, %v3316
        %v3319 = vsel %vm723, %v3294, %v3317
        %3320 = vmatpush.bf16.msra.mxu0 %v800
        %3321 = vmatpush.bf16.msra.mxu0 %v799
        %3322 = vmatpush.bf16.msra.mxu0 %v798
        %3323 = vmatpush.bf16.msra.mxu0 %v797
        %3324 = vmatpush.bf16.msra.mxu0 %v796
        %3325 = vmatpush.bf16.msra.mxu0 %v795
        %3326 = vmatpush.bf16.msra.mxu0 %v794
        %3327 = vmatpush.bf16.msra.mxu0 %v793
        %3328 = vmatmul.bf16.gmra.mxu0 %v3254
        %v3329 = vpop.f32.mrf.mxu0
        %v3330 = vadd.f32 %v727, %v3329
        %v3331 = vpop.f32.mrf.mxu0
        %v3332 = vadd.f32 %v727, %v3331
        %3333 = vdwg.mxu0
        %3334 = vmatpush.bf16.msra.mxu0 %v808
        %3335 = vmatpush.bf16.msra.mxu0 %v807
        %3336 = vmatpush.bf16.msra.mxu0 %v806
        %3337 = vmatpush.bf16.msra.mxu0 %v805
        %3338 = vmatpush.bf16.msra.mxu0 %v804
        %3339 = vmatpush.bf16.msra.mxu0 %v803
        %3340 = vmatpush.bf16.msra.mxu0 %v802
        %3341 = vmatpush.bf16.msra.mxu0 %v801
        %3342 = vmatmul.bf16.gmra.mxu0 %v3319
        %v3343 = vpop.f32.mrf.mxu0
        %v3344 = vadd.f32 %v3330, %v3343
        %v3345 = vpop.f32.mrf.mxu0
        %v3346 = vadd.f32 %v3332, %v3345
        %3347 = vdwg.mxu0
        %v3348 = vmax.f32 %v3344, 0.0
        %v3349 = vmax.f32 %v3346, 0.0
        %v3350 = vpack.c.bf16 %v3348, %v3348
        %v3351 = vpack.c.bf16 %v3349, %v3349
        %v3353 = vunpack.c.l.b16 %v2733
        %v3354 = vpack.c.b16 %v3353, %v3353
        %3355 = vrot.lane.b32.xlu0 %v3354, 64
        %v3356 = vpop.permute.xlu0 %3355
        %v3359 = vsel %vm666, %v2711, %v3356
        %v3362 = vunpack.c.l.b16 %v2711
        %v3363 = vpack.c.b16 %v3362, %v3362
        %v3365 = vshrl.u32 %v3363, 16
        %v3367 = vshll.u32 %v3363, 16
        %v3369 = vrot.slane %v3367, 1
        %v3370 = vor.u32 %v3365, %v3369
        %3371 = vrot.lane.b32.xlu0 %v3370, 64
        %v3372 = vpop.permute.xlu0 %3371
        %v3375 = vsel %vm666, %v2733, %v3372
        %v3376 = vshrl.u32 %v3375, 16
        %v3378 = vrot.slane %v3376, 5
        %v3379 = vshll.u32 %v3375, 16
        %v3381 = vrot.slane %v3379, 6
        %v3382 = vor.u32 %v3378, %v3381
        %v3384 = vsel %vm723, %v3359, %v3382
        %3385 = vmatpush.bf16.msra.mxu0 %v800
        %3386 = vmatpush.bf16.msra.mxu0 %v799
        %3387 = vmatpush.bf16.msra.mxu0 %v798
        %3388 = vmatpush.bf16.msra.mxu0 %v797
        %3389 = vmatpush.bf16.msra.mxu0 %v796
        %3390 = vmatpush.bf16.msra.mxu0 %v795
        %3391 = vmatpush.bf16.msra.mxu0 %v794
        %3392 = vmatpush.bf16.msra.mxu0 %v793
        %3393 = vmatmul.bf16.gmra.mxu0 %v3319
        %v3394 = vpop.f32.mrf.mxu0
        %v3395 = vadd.f32 %v727, %v3394
        %v3396 = vpop.f32.mrf.mxu0
        %v3397 = vadd.f32 %v727, %v3396
        %3398 = vdwg.mxu0
        %3399 = vmatpush.bf16.msra.mxu0 %v808
        %3400 = vmatpush.bf16.msra.mxu0 %v807
        %3401 = vmatpush.bf16.msra.mxu0 %v806
        %3402 = vmatpush.bf16.msra.mxu0 %v805
        %3403 = vmatpush.bf16.msra.mxu0 %v804
        %3404 = vmatpush.bf16.msra.mxu0 %v803
        %3405 = vmatpush.bf16.msra.mxu0 %v802
        %3406 = vmatpush.bf16.msra.mxu0 %v801
        %3407 = vmatmul.bf16.gmra.mxu0 %v3384
        %v3408 = vpop.f32.mrf.mxu0
        %v3409 = vadd.f32 %v3395, %v3408
        %v3410 = vpop.f32.mrf.mxu0
        %v3411 = vadd.f32 %v3397, %v3410
        %3412 = vdwg.mxu0
        %v3413 = vmax.f32 %v3409, 0.0
        %v3414 = vmax.f32 %v3411, 0.0
        %v3415 = vpack.c.bf16 %v3413, %v3413
        %v3416 = vpack.c.bf16 %v3414, %v3414
        %v3419 = vunpack.c.l.b16 %v2830
        %v3420 = vunpack.c.l.b16 %v2831
        %v3421 = vpack.c.b16 %v3420, %v3419
        %v3423 = vshrl.u32 %v3421, 16
        %v3425 = vrot.slane %v3423, 2
        %v3426 = vshll.u32 %v3421, 16
        %v3428 = vrot.slane %v3426, 3
        %v3429 = vor.u32 %v3425, %v3428
        %3430 = vrot.lane.b32.xlu0 %v3429, 32
        %v3431 = vpop.permute.xlu0 %3430
        %v3432 = vpack.c.b16 %v3419, %v3419
        %v3434 = vshrl.u32 %v3432, 16
        %v3436 = vshll.u32 %v3432, 16
        %v3438 = vrot.slane %v3436, 1
        %v3439 = vor.u32 %v3434, %v3438
        %3440 = vrot.lane.b32.xlu0 %v3439, 64
        %v3441 = vpop.permute.xlu0 %3440
        %v3442 = vrot.slane %v3421, 3
        %3443 = vrot.lane.b32.xlu0 %v3442, 96
        %v3444 = vpop.permute.xlu0 %3443
        %v3447 = vunpack.c.l.b16 %v2895
        %v3448 = vunpack.c.l.b16 %v2896
        %v3449 = vpack.c.b16 %v3448, %v3447
        %v3451 = vshrl.u32 %v3449, 16
        %v3453 = vrot.slane %v3451, 2
        %v3454 = vshll.u32 %v3449, 16
        %v3456 = vrot.slane %v3454, 3
        %v3457 = vor.u32 %v3453, %v3456
        %3458 = vrot.lane.b32.xlu0 %v3457, 32
        %v3459 = vpop.permute.xlu0 %3458
        %v3460 = vpack.c.b16 %v3447, %v3447
        %v3462 = vshrl.u32 %v3460, 16
        %v3464 = vshll.u32 %v3460, 16
        %v3466 = vrot.slane %v3464, 1
        %v3467 = vor.u32 %v3462, %v3466
        %3468 = vrot.lane.b32.xlu0 %v3467, 64
        %v3469 = vpop.permute.xlu0 %3468
        %v3470 = vrot.slane %v3449, 3
        %3471 = vrot.lane.b32.xlu0 %v3470, 96
        %v3472 = vpop.permute.xlu0 %3471
        %v3475 = vunpack.c.l.b16 %v2960
        %v3476 = vunpack.c.l.b16 %v2961
        %v3477 = vpack.c.b16 %v3476, %v3475
        %v3479 = vshrl.u32 %v3477, 16
        %v3481 = vrot.slane %v3479, 2
        %v3482 = vshll.u32 %v3477, 16
        %v3484 = vrot.slane %v3482, 3
        %v3485 = vor.u32 %v3481, %v3484
        %3486 = vrot.lane.b32.xlu0 %v3485, 32
        %v3487 = vpop.permute.xlu0 %3486
        %v3488 = vpack.c.b16 %v3475, %v3475
        %v3490 = vshrl.u32 %v3488, 16
        %v3492 = vshll.u32 %v3488, 16
        %v3494 = vrot.slane %v3492, 1
        %v3495 = vor.u32 %v3490, %v3494
        %3496 = vrot.lane.b32.xlu0 %v3495, 64
        %v3497 = vpop.permute.xlu0 %3496
        %v3498 = vrot.slane %v3477, 3
        %3499 = vrot.lane.b32.xlu0 %v3498, 96
        %v3500 = vpop.permute.xlu0 %3499
        %v3503 = vunpack.c.l.b16 %v3025
        %v3504 = vunpack.c.l.b16 %v3026
        %v3505 = vpack.c.b16 %v3504, %v3503
        %v3507 = vshrl.u32 %v3505, 16
        %v3509 = vrot.slane %v3507, 2
        %v3510 = vshll.u32 %v3505, 16
        %v3512 = vrot.slane %v3510, 3
        %v3513 = vor.u32 %v3509, %v3512
        %3514 = vrot.lane.b32.xlu0 %v3513, 32
        %v3515 = vpop.permute.xlu0 %3514
        %v3516 = vpack.c.b16 %v3503, %v3503
        %v3518 = vshrl.u32 %v3516, 16
        %v3520 = vshll.u32 %v3516, 16
        %v3522 = vrot.slane %v3520, 1
        %v3523 = vor.u32 %v3518, %v3522
        %3524 = vrot.lane.b32.xlu0 %v3523, 64
        %v3525 = vpop.permute.xlu0 %3524
        %v3526 = vrot.slane %v3505, 3
        %3527 = vrot.lane.b32.xlu0 %v3526, 96
        %v3528 = vpop.permute.xlu0 %3527
        %v3531 = vsel %vm1554, %v2830, %v3431
        %v3533 = vsel %vm666, %v3531, %v3441
        %v3535 = vsel %vm1560, %v3533, %v3444
        %v3539 = vsel %vm1554, %v2895, %v3459
        %v3541 = vsel %vm666, %v3539, %v3469
        %v3543 = vsel %vm1560, %v3541, %v3472
        %v3547 = vsel %vm1554, %v2960, %v3487
        %v3549 = vsel %vm666, %v3547, %v3497
        %v3551 = vsel %vm1560, %v3549, %v3500
        %v3555 = vsel %vm1554, %v3025, %v3515
        %v3557 = vsel %vm666, %v3555, %v3525
        %v3559 = vsel %vm1560, %v3557, %v3528
        %3561 = vmatpush.bf16.msra.mxu0 %v1726
        %3562 = vmatpush.bf16.msra.mxu0 %v1725
        %3563 = vmatpush.bf16.msra.mxu0 %v1724
        %3564 = vmatpush.bf16.msra.mxu0 %v1723
        %3565 = vmatpush.bf16.msra.mxu0 %v1722
        %3566 = vmatpush.bf16.msra.mxu0 %v1721
        %3567 = vmatpush.bf16.msra.mxu0 %v1720
        %3568 = vmatpush.bf16.msra.mxu0 %v1719
        %3569 = vmatmul.bf16.gmra.mxu0 %v3535
        %v3570 = vpop.f32.mrf.mxu0
        %v3571 = vadd.f32 %v1589, %v3570
        %v3572 = vpop.f32.mrf.mxu0
        %3573 = vdwg.mxu0
        %3574 = vmatpush.bf16.msra.mxu0 %v1734
        %3575 = vmatpush.bf16.msra.mxu0 %v1733
        %3576 = vmatpush.bf16.msra.mxu0 %v1732
        %3577 = vmatpush.bf16.msra.mxu0 %v1731
        %3578 = vmatpush.bf16.msra.mxu0 %v1730
        %3579 = vmatpush.bf16.msra.mxu0 %v1729
        %3580 = vmatpush.bf16.msra.mxu0 %v1728
        %3581 = vmatpush.bf16.msra.mxu0 %v1727
        %3582 = vmatmul.bf16.gmra.mxu0 %v3543
        %v3583 = vpop.f32.mrf.mxu0
        %v3584 = vadd.f32 %v3571, %v3583
        %v3585 = vpop.f32.mrf.mxu0
        %3586 = vdwg.mxu0
        %3587 = vmatpush.bf16.msra.mxu0 %v1742
        %3588 = vmatpush.bf16.msra.mxu0 %v1741
        %3589 = vmatpush.bf16.msra.mxu0 %v1740
        %3590 = vmatpush.bf16.msra.mxu0 %v1739
        %3591 = vmatpush.bf16.msra.mxu0 %v1738
        %3592 = vmatpush.bf16.msra.mxu0 %v1737
        %3593 = vmatpush.bf16.msra.mxu0 %v1736
        %3594 = vmatpush.bf16.msra.mxu0 %v1735
        %3595 = vmatmul.bf16.gmra.mxu0 %v3551
        %v3596 = vpop.f32.mrf.mxu0
        %v3597 = vadd.f32 %v3584, %v3596
        %v3598 = vpop.f32.mrf.mxu0
        %3599 = vdwg.mxu0
        %3600 = vmatpush.bf16.msra.mxu0 %v1750
        %3601 = vmatpush.bf16.msra.mxu0 %v1749
        %3602 = vmatpush.bf16.msra.mxu0 %v1748
        %3603 = vmatpush.bf16.msra.mxu0 %v1747
        %3604 = vmatpush.bf16.msra.mxu0 %v1746
        %3605 = vmatpush.bf16.msra.mxu0 %v1745
        %3606 = vmatpush.bf16.msra.mxu0 %v1744
        %3607 = vmatpush.bf16.msra.mxu0 %v1743
        %3608 = vmatmul.bf16.gmra.mxu0 %v3559
        %v3609 = vpop.f32.mrf.mxu0
        %v3610 = vadd.f32 %v3597, %v3609
        %v3611 = vpop.f32.mrf.mxu0
        %3612 = vdwg.mxu0
        %v3613 = vmax.f32 %v3610, 0.0
        %v3614 = vpack.c.bf16 %v3613, %v3613
        %v3617 = vunpack.c.l.b16 %v3090
        %v3618 = vunpack.c.l.b16 %v3091
        %v3619 = vpack.c.b16 %v3618, %v3617
        %v3621 = vshrl.u32 %v3619, 16
        %v3623 = vrot.slane %v3621, 2
        %v3624 = vshll.u32 %v3619, 16
        %v3626 = vrot.slane %v3624, 3
        %v3627 = vor.u32 %v3623, %v3626
        %3628 = vrot.lane.b32.xlu0 %v3627, 32
        %v3629 = vpop.permute.xlu0 %3628
        %v3630 = vpack.c.b16 %v3617, %v3617
        %v3632 = vshrl.u32 %v3630, 16
        %v3634 = vshll.u32 %v3630, 16
        %v3636 = vrot.slane %v3634, 1
        %v3637 = vor.u32 %v3632, %v3636
        %3638 = vrot.lane.b32.xlu0 %v3637, 64
        %v3639 = vpop.permute.xlu0 %3638
        %v3640 = vrot.slane %v3619, 3
        %3641 = vrot.lane.b32.xlu0 %v3640, 96
        %v3642 = vpop.permute.xlu0 %3641
        %v3645 = vunpack.c.l.b16 %v3155
        %v3646 = vunpack.c.l.b16 %v3156
        %v3647 = vpack.c.b16 %v3646, %v3645
        %v3649 = vshrl.u32 %v3647, 16
        %v3651 = vrot.slane %v3649, 2
        %v3652 = vshll.u32 %v3647, 16
        %v3654 = vrot.slane %v3652, 3
        %v3655 = vor.u32 %v3651, %v3654
        %3656 = vrot.lane.b32.xlu0 %v3655, 32
        %v3657 = vpop.permute.xlu0 %3656
        %v3658 = vpack.c.b16 %v3645, %v3645
        %v3660 = vshrl.u32 %v3658, 16
        %v3662 = vshll.u32 %v3658, 16
        %v3664 = vrot.slane %v3662, 1
        %v3665 = vor.u32 %v3660, %v3664
        %3666 = vrot.lane.b32.xlu0 %v3665, 64
        %v3667 = vpop.permute.xlu0 %3666
        %v3668 = vrot.slane %v3647, 3
        %3669 = vrot.lane.b32.xlu0 %v3668, 96
        %v3670 = vpop.permute.xlu0 %3669
        %v3673 = vsel %vm1554, %v3090, %v3629
        %v3675 = vsel %vm666, %v3673, %v3639
        %v3677 = vsel %vm1560, %v3675, %v3642
        %v3681 = vsel %vm1554, %v3155, %v3657
        %v3683 = vsel %vm666, %v3681, %v3667
        %v3685 = vsel %vm1560, %v3683, %v3670
        %3687 = vmatpush.bf16.msra.mxu0 %v1726
        %3688 = vmatpush.bf16.msra.mxu0 %v1725
        %3689 = vmatpush.bf16.msra.mxu0 %v1724
        %3690 = vmatpush.bf16.msra.mxu0 %v1723
        %3691 = vmatpush.bf16.msra.mxu0 %v1722
        %3692 = vmatpush.bf16.msra.mxu0 %v1721
        %3693 = vmatpush.bf16.msra.mxu0 %v1720
        %3694 = vmatpush.bf16.msra.mxu0 %v1719
        %3695 = vmatmul.bf16.gmra.mxu0 %v3551
        %v3696 = vpop.f32.mrf.mxu0
        %v3697 = vadd.f32 %v1589, %v3696
        %v3698 = vpop.f32.mrf.mxu0
        %3699 = vdwg.mxu0
        %3700 = vmatpush.bf16.msra.mxu0 %v1734
        %3701 = vmatpush.bf16.msra.mxu0 %v1733
        %3702 = vmatpush.bf16.msra.mxu0 %v1732
        %3703 = vmatpush.bf16.msra.mxu0 %v1731
        %3704 = vmatpush.bf16.msra.mxu0 %v1730
        %3705 = vmatpush.bf16.msra.mxu0 %v1729
        %3706 = vmatpush.bf16.msra.mxu0 %v1728
        %3707 = vmatpush.bf16.msra.mxu0 %v1727
        %3708 = vmatmul.bf16.gmra.mxu0 %v3559
        %v3709 = vpop.f32.mrf.mxu0
        %v3710 = vadd.f32 %v3697, %v3709
        %v3711 = vpop.f32.mrf.mxu0
        %3712 = vdwg.mxu0
        %3713 = vmatpush.bf16.msra.mxu0 %v1742
        %3714 = vmatpush.bf16.msra.mxu0 %v1741
        %3715 = vmatpush.bf16.msra.mxu0 %v1740
        %3716 = vmatpush.bf16.msra.mxu0 %v1739
        %3717 = vmatpush.bf16.msra.mxu0 %v1738
        %3718 = vmatpush.bf16.msra.mxu0 %v1737
        %3719 = vmatpush.bf16.msra.mxu0 %v1736
        %3720 = vmatpush.bf16.msra.mxu0 %v1735
        %3721 = vmatmul.bf16.gmra.mxu0 %v3677
        %v3722 = vpop.f32.mrf.mxu0
        %v3723 = vadd.f32 %v3710, %v3722
        %v3724 = vpop.f32.mrf.mxu0
        %3725 = vdwg.mxu0
        %3726 = vmatpush.bf16.msra.mxu0 %v1750
        %3727 = vmatpush.bf16.msra.mxu0 %v1749
        %3728 = vmatpush.bf16.msra.mxu0 %v1748
        %3729 = vmatpush.bf16.msra.mxu0 %v1747
        %3730 = vmatpush.bf16.msra.mxu0 %v1746
        %3731 = vmatpush.bf16.msra.mxu0 %v1745
        %3732 = vmatpush.bf16.msra.mxu0 %v1744
        %3733 = vmatpush.bf16.msra.mxu0 %v1743
        %3734 = vmatmul.bf16.gmra.mxu0 %v3685
        %v3735 = vpop.f32.mrf.mxu0
        %v3736 = vadd.f32 %v3723, %v3735
        %v3737 = vpop.f32.mrf.mxu0
        %3738 = vdwg.mxu0
        %v3739 = vmax.f32 %v3736, 0.0
        %v3740 = vpack.c.bf16 %v3739, %v3739
        %v3743 = vunpack.c.l.b16 %v3220
        %v3744 = vunpack.c.l.b16 %v3221
        %v3745 = vpack.c.b16 %v3744, %v3743
        %v3747 = vshrl.u32 %v3745, 16
        %v3749 = vrot.slane %v3747, 2
        %v3750 = vshll.u32 %v3745, 16
        %v3752 = vrot.slane %v3750, 3
        %v3753 = vor.u32 %v3749, %v3752
        %3754 = vrot.lane.b32.xlu0 %v3753, 32
        %v3755 = vpop.permute.xlu0 %3754
        %v3756 = vpack.c.b16 %v3743, %v3743
        %v3758 = vshrl.u32 %v3756, 16
        %v3760 = vshll.u32 %v3756, 16
        %v3762 = vrot.slane %v3760, 1
        %v3763 = vor.u32 %v3758, %v3762
        %3764 = vrot.lane.b32.xlu0 %v3763, 64
        %v3765 = vpop.permute.xlu0 %3764
        %v3766 = vrot.slane %v3745, 3
        %3767 = vrot.lane.b32.xlu0 %v3766, 96
        %v3768 = vpop.permute.xlu0 %3767
        %v3771 = vunpack.c.l.b16 %v3285
        %v3772 = vunpack.c.l.b16 %v3286
        %v3773 = vpack.c.b16 %v3772, %v3771
        %v3775 = vshrl.u32 %v3773, 16
        %v3777 = vrot.slane %v3775, 2
        %v3778 = vshll.u32 %v3773, 16
        %v3780 = vrot.slane %v3778, 3
        %v3781 = vor.u32 %v3777, %v3780
        %3782 = vrot.lane.b32.xlu0 %v3781, 32
        %v3783 = vpop.permute.xlu0 %3782
        %v3784 = vpack.c.b16 %v3771, %v3771
        %v3786 = vshrl.u32 %v3784, 16
        %v3788 = vshll.u32 %v3784, 16
        %v3790 = vrot.slane %v3788, 1
        %v3791 = vor.u32 %v3786, %v3790
        %3792 = vrot.lane.b32.xlu0 %v3791, 64
        %v3793 = vpop.permute.xlu0 %3792
        %v3794 = vrot.slane %v3773, 3
        %3795 = vrot.lane.b32.xlu0 %v3794, 96
        %v3796 = vpop.permute.xlu0 %3795
        %v3799 = vsel %vm1554, %v3220, %v3755
        %v3801 = vsel %vm666, %v3799, %v3765
        %v3803 = vsel %vm1560, %v3801, %v3768
        %v3807 = vsel %vm1554, %v3285, %v3783
        %v3809 = vsel %vm666, %v3807, %v3793
        %v3811 = vsel %vm1560, %v3809, %v3796
        %3813 = vmatpush.bf16.msra.mxu0 %v1726
        %3814 = vmatpush.bf16.msra.mxu0 %v1725
        %3815 = vmatpush.bf16.msra.mxu0 %v1724
        %3816 = vmatpush.bf16.msra.mxu0 %v1723
        %3817 = vmatpush.bf16.msra.mxu0 %v1722
        %3818 = vmatpush.bf16.msra.mxu0 %v1721
        %3819 = vmatpush.bf16.msra.mxu0 %v1720
        %3820 = vmatpush.bf16.msra.mxu0 %v1719
        %3821 = vmatmul.bf16.gmra.mxu0 %v3677
        %v3822 = vpop.f32.mrf.mxu0
        %v3823 = vadd.f32 %v1589, %v3822
        %v3824 = vpop.f32.mrf.mxu0
        %3825 = vdwg.mxu0
        %3826 = vmatpush.bf16.msra.mxu0 %v1734
        %3827 = vmatpush.bf16.msra.mxu0 %v1733
        %3828 = vmatpush.bf16.msra.mxu0 %v1732
        %3829 = vmatpush.bf16.msra.mxu0 %v1731
        %3830 = vmatpush.bf16.msra.mxu0 %v1730
        %3831 = vmatpush.bf16.msra.mxu0 %v1729
        %3832 = vmatpush.bf16.msra.mxu0 %v1728
        %3833 = vmatpush.bf16.msra.mxu0 %v1727
        %3834 = vmatmul.bf16.gmra.mxu0 %v3685
        %v3835 = vpop.f32.mrf.mxu0
        %v3836 = vadd.f32 %v3823, %v3835
        %v3837 = vpop.f32.mrf.mxu0
        %3838 = vdwg.mxu0
        %3839 = vmatpush.bf16.msra.mxu0 %v1742
        %3840 = vmatpush.bf16.msra.mxu0 %v1741
        %3841 = vmatpush.bf16.msra.mxu0 %v1740
        %3842 = vmatpush.bf16.msra.mxu0 %v1739
        %3843 = vmatpush.bf16.msra.mxu0 %v1738
        %3844 = vmatpush.bf16.msra.mxu0 %v1737
        %3845 = vmatpush.bf16.msra.mxu0 %v1736
        %3846 = vmatpush.bf16.msra.mxu0 %v1735
        %3847 = vmatmul.bf16.gmra.mxu0 %v3803
        %v3848 = vpop.f32.mrf.mxu0
        %v3849 = vadd.f32 %v3836, %v3848
        %v3850 = vpop.f32.mrf.mxu0
        %3851 = vdwg.mxu0
        %3852 = vmatpush.bf16.msra.mxu0 %v1750
        %3853 = vmatpush.bf16.msra.mxu0 %v1749
        %3854 = vmatpush.bf16.msra.mxu0 %v1748
        %3855 = vmatpush.bf16.msra.mxu0 %v1747
        %3856 = vmatpush.bf16.msra.mxu0 %v1746
        %3857 = vmatpush.bf16.msra.mxu0 %v1745
        %3858 = vmatpush.bf16.msra.mxu0 %v1744
        %3859 = vmatpush.bf16.msra.mxu0 %v1743
        %3860 = vmatmul.bf16.gmra.mxu0 %v3811
        %v3861 = vpop.f32.mrf.mxu0
        %v3862 = vadd.f32 %v3849, %v3861
        %v3863 = vpop.f32.mrf.mxu0
        %3864 = vdwg.mxu0
        %v3865 = vmax.f32 %v3862, 0.0
        %v3866 = vpack.c.bf16 %v3865, %v3865
        %v3869 = vunpack.c.l.b16 %v3350
        %v3870 = vunpack.c.l.b16 %v3351
        %v3871 = vpack.c.b16 %v3870, %v3869
        %v3873 = vshrl.u32 %v3871, 16
        %v3875 = vrot.slane %v3873, 2
        %v3876 = vshll.u32 %v3871, 16
        %v3878 = vrot.slane %v3876, 3
        %v3879 = vor.u32 %v3875, %v3878
        %3880 = vrot.lane.b32.xlu0 %v3879, 32
        %v3881 = vpop.permute.xlu0 %3880
        %v3882 = vpack.c.b16 %v3869, %v3869
        %v3884 = vshrl.u32 %v3882, 16
        %v3886 = vshll.u32 %v3882, 16
        %v3888 = vrot.slane %v3886, 1
        %v3889 = vor.u32 %v3884, %v3888
        %3890 = vrot.lane.b32.xlu0 %v3889, 64
        %v3891 = vpop.permute.xlu0 %3890
        %v3892 = vrot.slane %v3871, 3
        %3893 = vrot.lane.b32.xlu0 %v3892, 96
        %v3894 = vpop.permute.xlu0 %3893
        %v3897 = vunpack.c.l.b16 %v3415
        %v3898 = vunpack.c.l.b16 %v3416
        %v3899 = vpack.c.b16 %v3898, %v3897
        %v3901 = vshrl.u32 %v3899, 16
        %v3903 = vrot.slane %v3901, 2
        %v3904 = vshll.u32 %v3899, 16
        %v3906 = vrot.slane %v3904, 3
        %v3907 = vor.u32 %v3903, %v3906
        %3908 = vrot.lane.b32.xlu0 %v3907, 32
        %v3909 = vpop.permute.xlu0 %3908
        %v3910 = vpack.c.b16 %v3897, %v3897
        %v3912 = vshrl.u32 %v3910, 16
        %v3914 = vshll.u32 %v3910, 16
        %v3916 = vrot.slane %v3914, 1
        %v3917 = vor.u32 %v3912, %v3916
        %3918 = vrot.lane.b32.xlu0 %v3917, 64
        %v3919 = vpop.permute.xlu0 %3918
        %v3920 = vrot.slane %v3899, 3
        %3921 = vrot.lane.b32.xlu0 %v3920, 96
        %v3922 = vpop.permute.xlu0 %3921
        %v3925 = vsel %vm1554, %v3350, %v3881
        %v3927 = vsel %vm666, %v3925, %v3891
        %v3929 = vsel %vm1560, %v3927, %v3894
        %v3933 = vsel %vm1554, %v3415, %v3909
        %v3935 = vsel %vm666, %v3933, %v3919
        %v3937 = vsel %vm1560, %v3935, %v3922
        %3939 = vmatpush.bf16.msra.mxu0 %v1726
        %3940 = vmatpush.bf16.msra.mxu0 %v1725
        %3941 = vmatpush.bf16.msra.mxu0 %v1724
        %3942 = vmatpush.bf16.msra.mxu0 %v1723
        %3943 = vmatpush.bf16.msra.mxu0 %v1722
        %3944 = vmatpush.bf16.msra.mxu0 %v1721
        %3945 = vmatpush.bf16.msra.mxu0 %v1720
        %3946 = vmatpush.bf16.msra.mxu0 %v1719
        %3947 = vmatmul.bf16.gmra.mxu0 %v3803
        %v3948 = vpop.f32.mrf.mxu0
        %v3949 = vadd.f32 %v1589, %v3948
        %v3950 = vpop.f32.mrf.mxu0
        %3951 = vdwg.mxu0
        %3952 = vmatpush.bf16.msra.mxu0 %v1734
        %3953 = vmatpush.bf16.msra.mxu0 %v1733
        %3954 = vmatpush.bf16.msra.mxu0 %v1732
        %3955 = vmatpush.bf16.msra.mxu0 %v1731
        %3956 = vmatpush.bf16.msra.mxu0 %v1730
        %3957 = vmatpush.bf16.msra.mxu0 %v1729
        %3958 = vmatpush.bf16.msra.mxu0 %v1728
        %3959 = vmatpush.bf16.msra.mxu0 %v1727
        %3960 = vmatmul.bf16.gmra.mxu0 %v3811
        %v3961 = vpop.f32.mrf.mxu0
        %v3962 = vadd.f32 %v3949, %v3961
        %v3963 = vpop.f32.mrf.mxu0
        %3964 = vdwg.mxu0
        %3965 = vmatpush.bf16.msra.mxu0 %v1742
        %3966 = vmatpush.bf16.msra.mxu0 %v1741
        %3967 = vmatpush.bf16.msra.mxu0 %v1740
        %3968 = vmatpush.bf16.msra.mxu0 %v1739
        %3969 = vmatpush.bf16.msra.mxu0 %v1738
        %3970 = vmatpush.bf16.msra.mxu0 %v1737
        %3971 = vmatpush.bf16.msra.mxu0 %v1736
        %3972 = vmatpush.bf16.msra.mxu0 %v1735
        %3973 = vmatmul.bf16.gmra.mxu0 %v3929
        %v3974 = vpop.f32.mrf.mxu0
        %v3975 = vadd.f32 %v3962, %v3974
        %v3976 = vpop.f32.mrf.mxu0
        %3977 = vdwg.mxu0
        %3978 = vmatpush.bf16.msra.mxu0 %v1750
        %3979 = vmatpush.bf16.msra.mxu0 %v1749
        %3980 = vmatpush.bf16.msra.mxu0 %v1748
        %3981 = vmatpush.bf16.msra.mxu0 %v1747
        %3982 = vmatpush.bf16.msra.mxu0 %v1746
        %3983 = vmatpush.bf16.msra.mxu0 %v1745
        %3984 = vmatpush.bf16.msra.mxu0 %v1744
        %3985 = vmatpush.bf16.msra.mxu0 %v1743
        %3986 = vmatmul.bf16.gmra.mxu0 %v3937
        %v3987 = vpop.f32.mrf.mxu0
        %v3988 = vadd.f32 %v3975, %v3987
        %v3989 = vpop.f32.mrf.mxu0
        %3990 = vdwg.mxu0
        %v3991 = vmax.f32 %v3988, 0.0
        %v3992 = vpack.c.bf16 %v3991, %v3991
        %v3994 = vunpack.c.l.b16 %v3614
        %v3995 = vpack.c.b16 %v3994, %v3994
        %v3997 = vshrl.u32 %v3995, 16
        %v3999 = vshll.u32 %v3995, 16
        %v4001 = vrot.slane %v3999, 1
        %v4002 = vor.u32 %v3997, %v4001
        %4003 = vrot.lane.b32.xlu0 %v4002, 64
        %v4004 = vpop.permute.xlu0 %4003
        %v4005 = vrot.slane %v3995, 1
        %v4007 = vunpack.c.l.b16 %v3740
        %v4008 = vpack.c.b16 %v4007, %v4007
        %4009 = vrot.lane.b32.xlu0 %v4008, 64
        %v4010 = vpop.permute.xlu0 %4009
        %v4012 = vshrl.u32 %v4008, 16
        %v4014 = vshll.u32 %v4008, 16
        %v4016 = vrot.slane %v4014, 1
        %v4017 = vor.u32 %v4012, %v4016
        %v4018 = vrot.slane %v4008, 1
        %4019 = vrot.lane.b32.xlu0 %v4018, 64
        %v4020 = vpop.permute.xlu0 %4019
        %v4022 = vunpack.c.l.b16 %v3866
        %v4023 = vpack.c.b16 %v4022, %v4022
        %v4025 = vshrl.u32 %v4023, 16
        %v4027 = vshll.u32 %v4023, 16
        %v4029 = vrot.slane %v4027, 1
        %v4030 = vor.u32 %v4025, %v4029
        %4031 = vrot.lane.b32.xlu0 %v4030, 64
        %v4032 = vpop.permute.xlu0 %4031
        %v4033 = vrot.slane %v4023, 1
        %v4036 = vsel %vm666, %v3614, %v4004
        %v4040 = vsel %vm666, %v4005, %v4010
        %v4044 = vsel %vm666, %v4017, %v4020
        %v4048 = vsel %vm666, %v3866, %v4032
        %v4051 = vsel %vm666, %v4033, 0
        %4053 = vmatpush.bf16.msra.mxu0 %v2426
        %4054 = vmatpush.bf16.msra.mxu0 %v2425
        %4055 = vmatpush.bf16.msra.mxu0 %v2424
        %4056 = vmatpush.bf16.msra.mxu0 %v2423
        %4057 = vmatpush.bf16.msra.mxu0 %v2422
        %4058 = vmatpush.bf16.msra.mxu0 %v2421
        %4059 = vmatpush.bf16.msra.mxu0 %v2420
        %4060 = vmatpush.bf16.msra.mxu0 %v2419
        %4061 = vmatmul.bf16.gmra.mxu0 %v4036
        %v4062 = vpop.f32.mrf.mxu0
        %v4063 = vadd.f32 %v2273, %v4062
        %v4064 = vpop.f32.mrf.mxu0
        %4065 = vdwg.mxu0
        %4066 = vmatpush.bf16.msra.mxu0 %v2434
        %4067 = vmatpush.bf16.msra.mxu0 %v2433
        %4068 = vmatpush.bf16.msra.mxu0 %v2432
        %4069 = vmatpush.bf16.msra.mxu0 %v2431
        %4070 = vmatpush.bf16.msra.mxu0 %v2430
        %4071 = vmatpush.bf16.msra.mxu0 %v2429
        %4072 = vmatpush.bf16.msra.mxu0 %v2428
        %4073 = vmatpush.bf16.msra.mxu0 %v2427
        %4074 = vmatmul.bf16.gmra.mxu0 %v4040
        %v4075 = vpop.f32.mrf.mxu0
        %v4076 = vadd.f32 %v4063, %v4075
        %v4077 = vpop.f32.mrf.mxu0
        %4078 = vdwg.mxu0
        %4079 = vmatpush.bf16.msra.mxu0 %v2442
        %4080 = vmatpush.bf16.msra.mxu0 %v2441
        %4081 = vmatpush.bf16.msra.mxu0 %v2440
        %4082 = vmatpush.bf16.msra.mxu0 %v2439
        %4083 = vmatpush.bf16.msra.mxu0 %v2438
        %4084 = vmatpush.bf16.msra.mxu0 %v2437
        %4085 = vmatpush.bf16.msra.mxu0 %v2436
        %4086 = vmatpush.bf16.msra.mxu0 %v2435
        %4087 = vmatmul.bf16.gmra.mxu0 %v4044
        %v4088 = vpop.f32.mrf.mxu0
        %v4089 = vadd.f32 %v4076, %v4088
        %v4090 = vpop.f32.mrf.mxu0
        %4091 = vdwg.mxu0
        %4092 = vmatpush.bf16.msra.mxu0 %v2450
        %4093 = vmatpush.bf16.msra.mxu0 %v2449
        %4094 = vmatpush.bf16.msra.mxu0 %v2448
        %4095 = vmatpush.bf16.msra.mxu0 %v2447
        %4096 = vmatpush.bf16.msra.mxu0 %v2446
        %4097 = vmatpush.bf16.msra.mxu0 %v2445
        %4098 = vmatpush.bf16.msra.mxu0 %v2444
        %4099 = vmatpush.bf16.msra.mxu0 %v2443
        %4100 = vmatmul.bf16.gmra.mxu0 %v4048
        %v4101 = vpop.f32.mrf.mxu0
        %v4102 = vadd.f32 %v4089, %v4101
        %v4103 = vpop.f32.mrf.mxu0
        %4104 = vdwg.mxu0
        %4105 = vmatpush.bf16.msra.mxu0 0
        %4106 = vmatpush.bf16.msra.mxu0 0
        %4107 = vmatpush.bf16.msra.mxu0 0
        %4108 = vmatpush.bf16.msra.mxu0 0
        %4109 = vmatpush.bf16.msra.mxu0 %v2454
        %4110 = vmatpush.bf16.msra.mxu0 %v2453
        %4111 = vmatpush.bf16.msra.mxu0 %v2452
        %4112 = vmatpush.bf16.msra.mxu0 %v2451
        %4113 = vmatmul.bf16.gmra.mxu0 %v4051
        %v4114 = vpop.f32.mrf.mxu0
        %v4115 = vadd.f32 %v4102, %v4114
        %v4116 = vpop.f32.mrf.mxu0
        %4117 = vdwg.mxu0
        %v4118 = vmax.f32 %v4115, 0.0
        %v4119 = vpack.c.bf16 %v4118, %v4118
        %4120 = vrot.lane.b32.xlu0 %v4017, 64
        %v4121 = vpop.permute.xlu0 %4120
        %4122 = vrot.lane.b32.xlu0 %v4023, 64
        %v4123 = vpop.permute.xlu0 %4122
        %4124 = vrot.lane.b32.xlu0 %v4033, 64
        %v4125 = vpop.permute.xlu0 %4124
        %v4127 = vunpack.c.l.b16 %v3992
        %v4128 = vpack.c.b16 %v4127, %v4127
        %v4130 = vshrl.u32 %v4128, 16
        %v4132 = vshll.u32 %v4128, 16
        %v4134 = vrot.slane %v4132, 1
        %v4135 = vor.u32 %v4130, %v4134
        %4136 = vrot.lane.b32.xlu0 %v4135, 64
        %v4137 = vpop.permute.xlu0 %4136
        %v4138 = vrot.slane %v4128, 1
        %v4141 = vsel %vm666, %v3740, %v4121
        %v4145 = vsel %vm666, %v4018, %v4123
        %v4149 = vsel %vm666, %v4030, %v4125
        %v4153 = vsel %vm666, %v3992, %v4137
        %v4156 = vsel %vm666, %v4138, 0
        %4158 = vmatpush.bf16.msra.mxu0 %v2426
        %4159 = vmatpush.bf16.msra.mxu0 %v2425
        %4160 = vmatpush.bf16.msra.mxu0 %v2424
        %4161 = vmatpush.bf16.msra.mxu0 %v2423
        %4162 = vmatpush.bf16.msra.mxu0 %v2422
        %4163 = vmatpush.bf16.msra.mxu0 %v2421
        %4164 = vmatpush.bf16.msra.mxu0 %v2420
        %4165 = vmatpush.bf16.msra.mxu0 %v2419
        %4166 = vmatmul.bf16.gmra.mxu0 %v4141
        %v4167 = vpop.f32.mrf.mxu0
        %v4168 = vadd.f32 %v2273, %v4167
        %v4169 = vpop.f32.mrf.mxu0
        %4170 = vdwg.mxu0
        %4171 = vmatpush.bf16.msra.mxu0 %v2434
        %4172 = vmatpush.bf16.msra.mxu0 %v2433
        %4173 = vmatpush.bf16.msra.mxu0 %v2432
        %4174 = vmatpush.bf16.msra.mxu0 %v2431
        %4175 = vmatpush.bf16.msra.mxu0 %v2430
        %4176 = vmatpush.bf16.msra.mxu0 %v2429
        %4177 = vmatpush.bf16.msra.mxu0 %v2428
        %4178 = vmatpush.bf16.msra.mxu0 %v2427
        %4179 = vmatmul.bf16.gmra.mxu0 %v4145
        %v4180 = vpop.f32.mrf.mxu0
        %v4181 = vadd.f32 %v4168, %v4180
        %v4182 = vpop.f32.mrf.mxu0
        %4183 = vdwg.mxu0
        %4184 = vmatpush.bf16.msra.mxu0 %v2442
        %4185 = vmatpush.bf16.msra.mxu0 %v2441
        %4186 = vmatpush.bf16.msra.mxu0 %v2440
        %4187 = vmatpush.bf16.msra.mxu0 %v2439
        %4188 = vmatpush.bf16.msra.mxu0 %v2438
        %4189 = vmatpush.bf16.msra.mxu0 %v2437
        %4190 = vmatpush.bf16.msra.mxu0 %v2436
        %4191 = vmatpush.bf16.msra.mxu0 %v2435
        %4192 = vmatmul.bf16.gmra.mxu0 %v4149
        %v4193 = vpop.f32.mrf.mxu0
        %v4194 = vadd.f32 %v4181, %v4193
        %v4195 = vpop.f32.mrf.mxu0
        %4196 = vdwg.mxu0
        %4197 = vmatpush.bf16.msra.mxu0 %v2450
        %4198 = vmatpush.bf16.msra.mxu0 %v2449
        %4199 = vmatpush.bf16.msra.mxu0 %v2448
        %4200 = vmatpush.bf16.msra.mxu0 %v2447
        %4201 = vmatpush.bf16.msra.mxu0 %v2446
        %4202 = vmatpush.bf16.msra.mxu0 %v2445
        %4203 = vmatpush.bf16.msra.mxu0 %v2444
        %4204 = vmatpush.bf16.msra.mxu0 %v2443
        %4205 = vmatmul.bf16.gmra.mxu0 %v4153
        %v4206 = vpop.f32.mrf.mxu0
        %v4207 = vadd.f32 %v4194, %v4206
        %v4208 = vpop.f32.mrf.mxu0
        %4209 = vdwg.mxu0
        %4210 = vmatpush.bf16.msra.mxu0 0
        %4211 = vmatpush.bf16.msra.mxu0 0
        %4212 = vmatpush.bf16.msra.mxu0 0
        %4213 = vmatpush.bf16.msra.mxu0 0
        %4214 = vmatpush.bf16.msra.mxu0 %v2454
        %4215 = vmatpush.bf16.msra.mxu0 %v2453
        %4216 = vmatpush.bf16.msra.mxu0 %v2452
        %4217 = vmatpush.bf16.msra.mxu0 %v2451
        %4218 = vmatmul.bf16.gmra.mxu0 %v4156
        %v4219 = vpop.f32.mrf.mxu0
        %v4220 = vadd.f32 %v4207, %v4219
        %v4221 = vpop.f32.mrf.mxu0
        %4222 = vdwg.mxu0
        %v4223 = vmax.f32 %v4220, 0.0
        %v4224 = vpack.c.bf16 %v4223, %v4223
        %v4226 = vunpack.c.l.b16 %v4119
        %v4227 = vpack.c.b16 %v4226, %v4226
        %v4229 = vshrl.u32 %v4227, 16
        %4231 = vrot.lane.b32.xlu0 %v4229, 64
        %v4232 = vpop.permute.xlu0 %4231
        %v4234 = vunpack.c.l.b16 %v4224
        %v4235 = vpack.c.b16 %v4234, %v4234
        %v4237 = vshrl.u32 %v4235, 16
        %4239 = vrot.lane.b32.xlu0 %v4237, 64
        %v4240 = vpop.permute.xlu0 %4239
        %v4243 = vsel %vm666, %v4119, %v4232
        %v4246 = vsel %vm666, %v4224, %v4240
        %v4247 = vshll.u32 %v4243, 16
        %v4249 = vshll.u32 %v4246, 16
        %vm4253 = vcmask 1040384
        %vm4254 = vsmask.f32 256
        %vm4255 = vmand %vm4253, %vm4254
        %v4256 = vsel %vm4255, %v2684, %v4247
        %v4257 = vsel %vm4255, %v2688, %v4249
        %v4258 = vld [vmem:[%s8] sm:$0xff]
        %v4259 = vld [vmem:[%s8 + $0x8] sm:$0xff]
        %v4260 = vld [vmem:[%s8 + $0x10] sm:$0xff]
        %v4261 = vld [vmem:[%s8 + $0x18] sm:$0xff]
        %v4262 = vld [vmem:[%s8 + $0x20] sm:$0xff]
        %v4263 = vld [vmem:[%s8 + $0x28] sm:$0xff]
        %v4264 = vld [vmem:[%s8 + $0x30] sm:$0xff]
        %v4265 = vld [vmem:[%s8 + $0x38] sm:$0xff]
        %v4266 = vld [vmem:[%s8 + $0x40] sm:$0xff]
        %v4267 = vld [vmem:[%s8 + $0x48] sm:$0xff]
        %v4268 = vld [vmem:[%s8 + $0x50] sm:$0xff]
        %v4269 = vld [vmem:[%s8 + $0x58] sm:$0xff]
        %v4270 = vld [vmem:[%s8 + $0x60] sm:$0xff]
        %v4271 = vld [vmem:[%s8 + $0x68] sm:$0xff]
        %v4272 = vld [vmem:[%s8 + $0x70] sm:$0xff]
        %v4273 = vld [vmem:[%s8 + $0x78] sm:$0xff]
        %v4274 = vld [vmem:[%s8 + $0x80] sm:$0xff]
        %v4275 = vld [vmem:[%s8 + $0x88] sm:$0xff]
        %v4276 = vld [vmem:[%s8 + $0x90] sm:$0xff]
        %v4277 = vld [vmem:[%s8 + $0x98] sm:$0xff]
        %v4278 = vld [vmem:[%s8 + $0xa0] sm:$0xff]
        %v4279 = vld [vmem:[%s8 + $0xa8] sm:$0xff]
        %v4280 = vld [vmem:[%s8 + $0xb0] sm:$0xff]
        %v4281 = vld [vmem:[%s8 + $0xb8] sm:$0xff]
        %v4282 = vld [vmem:[%s8 + $0xc0] sm:$0xff]
        %v4283 = vld [vmem:[%s8 + $0xc8] sm:$0xff]
        %v4284 = vld [vmem:[%s8 + $0xd0] sm:$0xff]
        %v4285 = vld [vmem:[%s8 + $0xd8] sm:$0xff]
        %v4286 = vld [vmem:[%s8 + $0xe0] sm:$0xff]
        %v4287 = vld [vmem:[%s8 + $0xe8] sm:$0xff]
        %v4288 = vld [vmem:[%s8 + $0xf0] sm:$0xff]
        %v4289 = vld [vmem:[%s8 + $0xf8] sm:$0xff]
        %v4290 = vld [vmem:[%s8 + $0x100] sm:$0xff]
        %v4291 = vld [vmem:[%s8 + $0x108] sm:$0xff]
        %v4292 = vld [vmem:[%s8 + $0x110] sm:$0xff]
        %v4293 = vld [vmem:[%s8 + $0x118] sm:$0xff]
        %v4294 = vld [vmem:[%s8 + $0x120] sm:$0xff]
        %v4295 = vld [vmem:[%s8 + $0x128] sm:$0xff]
        %v4296 = vld [vmem:[%s8 + $0x130] sm:$0xff]
        %v4297 = vld [vmem:[%s8 + $0x138] sm:$0xff]
        %v4298 = vld [vmem:[%s8 + $0x140] sm:$0xff]
        %v4299 = vld [vmem:[%s8 + $0x148] sm:$0xff]
        %v4300 = vld [vmem:[%s8 + $0x150] sm:$0xff]
        %v4301 = vld [vmem:[%s8 + $0x158] sm:$0xff]
        %v4302 = vld [vmem:[%s8 + $0x160] sm:$0xff]
        %v4303 = vld [vmem:[%s8 + $0x168] sm:$0xff]
        %v4304 = vld [vmem:[%s8 + $0x170] sm:$0xff]
        %v4305 = vld [vmem:[%s8 + $0x178] sm:$0xff]
        %v4306 = vld [vmem:[%s8 + $0x180] sm:$0xff]
        %v4307 = vld [vmem:[%s8 + $0x188] sm:$0xff]
        %v4308 = vld [vmem:[%s8 + $0x190] sm:$0xff]
        %v4309 = vld [vmem:[%s8 + $0x198] sm:$0xff]
        %v4310 = vld [vmem:[%s8 + $0x1a0] sm:$0xff]
        %v4311 = vld [vmem:[%s8 + $0x1a8] sm:$0xff]
        %v4312 = vld [vmem:[%s8 + $0x1b0] sm:$0xff]
        %v4313 = vld [vmem:[%s8 + $0x1b8] sm:$0xff]
        %v4314 = vld [vmem:[%s8 + $0x1c0] sm:$0xff]
        %v4315 = vld [vmem:[%s8 + $0x1c8] sm:$0xff]
        %v4316 = vld [vmem:[%s8 + $0x1d0] sm:$0xff]
        %v4317 = vld [vmem:[%s8 + $0x1d8] sm:$0xff]
        %v4318 = vld [vmem:[%s8 + $0x1e0] sm:$0xff]
        %v4319 = vld [vmem:[%s8 + $0x1e8] sm:$0xff]
        %v4320 = vld [vmem:[%s8 + $0x1f0] sm:$0xff]
        %v4321 = vld [vmem:[%s8 + $0x1f8] sm:$0xff]
        %v4322 = vld [vmem:[%s9] sm:$0xf]
        %v4324 = vperm.slane %v4322, 0
        %v4325 = vperm.slane %v4322, 1
        %v4326 = vperm.slane %v4322, 2
        %v4327 = vperm.slane %v4322, 3
        %v4396 = vunpack.c.l.b16 %v4258
        %v4397 = vunpack.c.h.b16 %v4258
        %v4398 = vunpack.c.l.b16 %v4259
        %v4399 = vunpack.c.h.b16 %v4259
        %v4400 = vunpack.c.l.b16 %v4260
        %v4401 = vunpack.c.h.b16 %v4260
        %v4402 = vunpack.c.l.b16 %v4261
        %v4403 = vunpack.c.h.b16 %v4261
        %v4404 = vunpack.c.l.b16 %v4262
        %v4405 = vunpack.c.h.b16 %v4262
        %v4406 = vunpack.c.l.b16 %v4263
        %v4407 = vunpack.c.h.b16 %v4263
        %v4408 = vunpack.c.l.b16 %v4264
        %v4409 = vunpack.c.h.b16 %v4264
        %v4410 = vunpack.c.l.b16 %v4265
        %v4411 = vunpack.c.h.b16 %v4265
        %v4412 = vunpack.c.l.b16 %v4266
        %v4413 = vunpack.c.h.b16 %v4266
        %v4414 = vunpack.c.l.b16 %v4267
        %v4415 = vunpack.c.h.b16 %v4267
        %v4416 = vunpack.c.l.b16 %v4268
        %v4417 = vunpack.c.h.b16 %v4268
        %v4418 = vunpack.c.l.b16 %v4269
        %v4419 = vunpack.c.h.b16 %v4269
        %v4420 = vunpack.c.l.b16 %v4270
        %v4421 = vunpack.c.h.b16 %v4270
        %v4422 = vunpack.c.l.b16 %v4271
        %v4423 = vunpack.c.h.b16 %v4271
        %v4424 = vunpack.c.l.b16 %v4272
        %v4425 = vunpack.c.h.b16 %v4272
        %v4426 = vunpack.c.l.b16 %v4273
        %v4427 = vunpack.c.h.b16 %v4273
        %v4428 = vunpack.c.l.b16 %v4274
        %v4429 = vunpack.c.h.b16 %v4274
        %v4430 = vunpack.c.l.b16 %v4275
        %v4431 = vunpack.c.h.b16 %v4275
        %v4432 = vunpack.c.l.b16 %v4276
        %v4433 = vunpack.c.h.b16 %v4276
        %v4434 = vunpack.c.l.b16 %v4277
        %v4435 = vunpack.c.h.b16 %v4277
        %v4436 = vunpack.c.l.b16 %v4278
        %v4437 = vunpack.c.h.b16 %v4278
        %v4438 = vunpack.c.l.b16 %v4279
        %v4439 = vunpack.c.h.b16 %v4279
        %v4440 = vunpack.c.l.b16 %v4280
        %v4441 = vunpack.c.h.b16 %v4280
        %v4442 = vunpack.c.l.b16 %v4281
        %v4443 = vunpack.c.h.b16 %v4281
        %v4444 = vunpack.c.l.b16 %v4282
        %v4445 = vunpack.c.h.b16 %v4282
        %v4446 = vunpack.c.l.b16 %v4283
        %v4447 = vunpack.c.h.b16 %v4283
        %v4448 = vunpack.c.l.b16 %v4284
        %v4449 = vunpack.c.h.b16 %v4284
        %v4450 = vunpack.c.l.b16 %v4285
        %v4451 = vunpack.c.h.b16 %v4285
        %v4452 = vunpack.c.l.b16 %v4286
        %v4453 = vunpack.c.h.b16 %v4286
        %v4454 = vunpack.c.l.b16 %v4287
        %v4455 = vunpack.c.h.b16 %v4287
        %v4456 = vunpack.c.l.b16 %v4288
        %v4457 = vunpack.c.h.b16 %v4288
        %v4458 = vunpack.c.l.b16 %v4289
        %v4459 = vunpack.c.h.b16 %v4289
        %v4460 = vunpack.c.l.b16 %v4290
        %v4461 = vunpack.c.h.b16 %v4290
        %v4462 = vunpack.c.l.b16 %v4291
        %v4463 = vunpack.c.h.b16 %v4291
        %v4464 = vunpack.c.l.b16 %v4292
        %v4465 = vunpack.c.h.b16 %v4292
        %v4466 = vunpack.c.l.b16 %v4293
        %v4467 = vunpack.c.h.b16 %v4293
        %v4468 = vunpack.c.l.b16 %v4294
        %v4469 = vunpack.c.h.b16 %v4294
        %v4470 = vunpack.c.l.b16 %v4295
        %v4471 = vunpack.c.h.b16 %v4295
        %v4472 = vunpack.c.l.b16 %v4296
        %v4473 = vunpack.c.h.b16 %v4296
        %v4474 = vunpack.c.l.b16 %v4297
        %v4475 = vunpack.c.h.b16 %v4297
        %v4476 = vunpack.c.l.b16 %v4298
        %v4477 = vunpack.c.h.b16 %v4298
        %v4478 = vunpack.c.l.b16 %v4299
        %v4479 = vunpack.c.h.b16 %v4299
        %v4480 = vunpack.c.l.b16 %v4300
        %v4481 = vunpack.c.h.b16 %v4300
        %v4482 = vunpack.c.l.b16 %v4301
        %v4483 = vunpack.c.h.b16 %v4301
        %v4484 = vunpack.c.l.b16 %v4302
        %v4485 = vunpack.c.h.b16 %v4302
        %v4486 = vunpack.c.l.b16 %v4303
        %v4487 = vunpack.c.h.b16 %v4303
        %v4488 = vunpack.c.l.b16 %v4304
        %v4489 = vunpack.c.h.b16 %v4304
        %v4490 = vunpack.c.l.b16 %v4305
        %v4491 = vunpack.c.h.b16 %v4305
        %v4492 = vunpack.c.l.b16 %v4306
        %v4493 = vunpack.c.h.b16 %v4306
        %v4494 = vunpack.c.l.b16 %v4307
        %v4495 = vunpack.c.h.b16 %v4307
        %v4496 = vunpack.c.l.b16 %v4308
        %v4497 = vunpack.c.h.b16 %v4308
        %v4498 = vunpack.c.l.b16 %v4309
        %v4499 = vunpack.c.h.b16 %v4309
        %v4500 = vunpack.c.l.b16 %v4310
        %v4501 = vunpack.c.h.b16 %v4310
        %v4502 = vunpack.c.l.b16 %v4311
        %v4503 = vunpack.c.h.b16 %v4311
        %v4504 = vunpack.c.l.b16 %v4312
        %v4505 = vunpack.c.h.b16 %v4312
        %v4506 = vunpack.c.l.b16 %v4313
        %v4507 = vunpack.c.h.b16 %v4313
        %v4508 = vunpack.c.l.b16 %v4314
        %v4509 = vunpack.c.h.b16 %v4314
        %v4510 = vunpack.c.l.b16 %v4315
        %v4511 = vunpack.c.h.b16 %v4315
        %v4512 = vunpack.c.l.b16 %v4316
        %v4513 = vunpack.c.h.b16 %v4316
        %v4514 = vunpack.c.l.b16 %v4317
        %v4515 = vunpack.c.h.b16 %v4317
        %v4516 = vunpack.c.l.b16 %v4318
        %v4517 = vunpack.c.h.b16 %v4318
        %v4518 = vunpack.c.l.b16 %v4319
        %v4519 = vunpack.c.h.b16 %v4319
        %v4520 = vunpack.c.l.b16 %v4320
        %v4521 = vunpack.c.h.b16 %v4320
        %v4522 = vunpack.c.l.b16 %v4321
        %v4523 = vunpack.c.h.b16 %v4321
        %v4524 = vpack.c.b16 %v4400, %v4396
        %v4525 = vpack.c.b16 %v4401, %v4397
        %v4526 = vpack.c.b16 %v4402, %v4398
        %v4527 = vpack.c.b16 %v4403, %v4399
        %v4528 = vpack.c.b16 %v4408, %v4404
        %v4529 = vpack.c.b16 %v4409, %v4405
        %v4530 = vpack.c.b16 %v4410, %v4406
        %v4531 = vpack.c.b16 %v4411, %v4407
        %v4532 = vpack.c.b16 %v4416, %v4412
        %v4533 = vpack.c.b16 %v4417, %v4413
        %v4534 = vpack.c.b16 %v4418, %v4414
        %v4535 = vpack.c.b16 %v4419, %v4415
        %v4536 = vpack.c.b16 %v4424, %v4420
        %v4537 = vpack.c.b16 %v4425, %v4421
        %v4538 = vpack.c.b16 %v4426, %v4422
        %v4539 = vpack.c.b16 %v4427, %v4423
        %v4540 = vpack.c.b16 %v4432, %v4428
        %v4541 = vpack.c.b16 %v4433, %v4429
        %v4542 = vpack.c.b16 %v4434, %v4430
        %v4543 = vpack.c.b16 %v4435, %v4431
        %v4544 = vpack.c.b16 %v4440, %v4436
        %v4545 = vpack.c.b16 %v4441, %v4437
        %v4546 = vpack.c.b16 %v4442, %v4438
        %v4547 = vpack.c.b16 %v4443, %v4439
        %v4548 = vpack.c.b16 %v4448, %v4444
        %v4549 = vpack.c.b16 %v4449, %v4445
        %v4550 = vpack.c.b16 %v4450, %v4446
        %v4551 = vpack.c.b16 %v4451, %v4447
        %v4552 = vpack.c.b16 %v4456, %v4452
        %v4553 = vpack.c.b16 %v4457, %v4453
        %v4554 = vpack.c.b16 %v4458, %v4454
        %v4555 = vpack.c.b16 %v4459, %v4455
        %v4556 = vpack.c.b16 %v4464, %v4460
        %v4557 = vpack.c.b16 %v4465, %v4461
        %v4558 = vpack.c.b16 %v4466, %v4462
        %v4559 = vpack.c.b16 %v4467, %v4463
        %v4560 = vpack.c.b16 %v4472, %v4468
        %v4561 = vpack.c.b16 %v4473, %v4469
        %v4562 = vpack.c.b16 %v4474, %v4470
        %v4563 = vpack.c.b16 %v4475, %v4471
        %v4564 = vpack.c.b16 %v4480, %v4476
        %v4565 = vpack.c.b16 %v4481, %v4477
        %v4566 = vpack.c.b16 %v4482, %v4478
        %v4567 = vpack.c.b16 %v4483, %v4479
        %v4568 = vpack.c.b16 %v4488, %v4484
        %v4569 = vpack.c.b16 %v4489, %v4485
        %v4570 = vpack.c.b16 %v4490, %v4486
        %v4571 = vpack.c.b16 %v4491, %v4487
        %v4572 = vpack.c.b16 %v4496, %v4492
        %v4573 = vpack.c.b16 %v4497, %v4493
        %v4574 = vpack.c.b16 %v4498, %v4494
        %v4575 = vpack.c.b16 %v4499, %v4495
        %v4576 = vpack.c.b16 %v4504, %v4500
        %v4577 = vpack.c.b16 %v4505, %v4501
        %v4578 = vpack.c.b16 %v4506, %v4502
        %v4579 = vpack.c.b16 %v4507, %v4503
        %v4580 = vpack.c.b16 %v4512, %v4508
        %v4581 = vpack.c.b16 %v4513, %v4509
        %v4582 = vpack.c.b16 %v4514, %v4510
        %v4583 = vpack.c.b16 %v4515, %v4511
        %v4584 = vpack.c.b16 %v4520, %v4516
        %v4585 = vpack.c.b16 %v4521, %v4517
        %v4586 = vpack.c.b16 %v4522, %v4518
        %v4587 = vpack.c.b16 %v4523, %v4519
        %4652 = vmatpush.bf16.msra.mxu0 %v4552
        %4653 = vmatpush.bf16.msra.mxu0 %v4548
        %4654 = vmatpush.bf16.msra.mxu0 %v4544
        %4655 = vmatpush.bf16.msra.mxu0 %v4540
        %4656 = vmatpush.bf16.msra.mxu0 %v4536
        %4657 = vmatpush.bf16.msra.mxu0 %v4532
        %4658 = vmatpush.bf16.msra.mxu0 %v4528
        %4659 = vmatpush.bf16.msra.mxu0 %v4524
        %4660 = vmatmul.bf16.gmra.mxu0 %v4256
        %v4661 = vpop.f32.mrf.mxu0
        %v4662 = vadd.f32 %v4324, %v4661
        %v4663 = vpop.f32.mrf.mxu0
        %4664 = vdwg.mxu0
        %4665 = vmatpush.bf16.msra.mxu0 %v4584
        %4666 = vmatpush.bf16.msra.mxu0 %v4580
        %4667 = vmatpush.bf16.msra.mxu0 %v4576
        %4668 = vmatpush.bf16.msra.mxu0 %v4572
        %4669 = vmatpush.bf16.msra.mxu0 %v4568
        %4670 = vmatpush.bf16.msra.mxu0 %v4564
        %4671 = vmatpush.bf16.msra.mxu0 %v4560
        %4672 = vmatpush.bf16.msra.mxu0 %v4556
        %4673 = vmatmul.bf16.gmra.mxu0 %v4257
        %v4674 = vpop.f32.mrf.mxu0
        %v4675 = vadd.f32 %v4662, %v4674
        %v4676 = vpop.f32.mrf.mxu0
        %4677 = vdwg.mxu0
        %4678 = vmatpush.bf16.msra.mxu0 %v4553
        %4679 = vmatpush.bf16.msra.mxu0 %v4549
        %4680 = vmatpush.bf16.msra.mxu0 %v4545
        %4681 = vmatpush.bf16.msra.mxu0 %v4541
        %4682 = vmatpush.bf16.msra.mxu0 %v4537
        %4683 = vmatpush.bf16.msra.mxu0 %v4533
        %4684 = vmatpush.bf16.msra.mxu0 %v4529
        %4685 = vmatpush.bf16.msra.mxu0 %v4525
        %4686 = vmatmul.bf16.gmra.mxu0 %v4256
        %v4687 = vpop.f32.mrf.mxu0
        %v4688 = vadd.f32 %v4325, %v4687
        %v4689 = vpop.f32.mrf.mxu0
        %4690 = vdwg.mxu0
        %4691 = vmatpush.bf16.msra.mxu0 %v4585
        %4692 = vmatpush.bf16.msra.mxu0 %v4581
        %4693 = vmatpush.bf16.msra.mxu0 %v4577
        %4694 = vmatpush.bf16.msra.mxu0 %v4573
        %4695 = vmatpush.bf16.msra.mxu0 %v4569
        %4696 = vmatpush.bf16.msra.mxu0 %v4565
        %4697 = vmatpush.bf16.msra.mxu0 %v4561
        %4698 = vmatpush.bf16.msra.mxu0 %v4557
        %4699 = vmatmul.bf16.gmra.mxu0 %v4257
        %v4700 = vpop.f32.mrf.mxu0
        %v4701 = vadd.f32 %v4688, %v4700
        %v4702 = vpop.f32.mrf.mxu0
        %4703 = vdwg.mxu0
        %4704 = vmatpush.bf16.msra.mxu0 %v4554
        %4705 = vmatpush.bf16.msra.mxu0 %v4550
        %4706 = vmatpush.bf16.msra.mxu0 %v4546
        %4707 = vmatpush.bf16.msra.mxu0 %v4542
        %4708 = vmatpush.bf16.msra.mxu0 %v4538
        %4709 = vmatpush.bf16.msra.mxu0 %v4534
        %4710 = vmatpush.bf16.msra.mxu0 %v4530
        %4711 = vmatpush.bf16.msra.mxu0 %v4526
        %4712 = vmatmul.bf16.gmra.mxu0 %v4256
        %v4713 = vpop.f32.mrf.mxu0
        %v4714 = vadd.f32 %v4326, %v4713
        %v4715 = vpop.f32.mrf.mxu0
        %4716 = vdwg.mxu0
        %4717 = vmatpush.bf16.msra.mxu0 %v4586
        %4718 = vmatpush.bf16.msra.mxu0 %v4582
        %4719 = vmatpush.bf16.msra.mxu0 %v4578
        %4720 = vmatpush.bf16.msra.mxu0 %v4574
        %4721 = vmatpush.bf16.msra.mxu0 %v4570
        %4722 = vmatpush.bf16.msra.mxu0 %v4566
        %4723 = vmatpush.bf16.msra.mxu0 %v4562
        %4724 = vmatpush.bf16.msra.mxu0 %v4558
        %4725 = vmatmul.bf16.gmra.mxu0 %v4257
        %v4726 = vpop.f32.mrf.mxu0
        %v4727 = vadd.f32 %v4714, %v4726
        %v4728 = vpop.f32.mrf.mxu0
        %4729 = vdwg.mxu0
        %4730 = vmatpush.bf16.msra.mxu0 %v4555
        %4731 = vmatpush.bf16.msra.mxu0 %v4551
        %4732 = vmatpush.bf16.msra.mxu0 %v4547
        %4733 = vmatpush.bf16.msra.mxu0 %v4543
        %4734 = vmatpush.bf16.msra.mxu0 %v4539
        %4735 = vmatpush.bf16.msra.mxu0 %v4535
        %4736 = vmatpush.bf16.msra.mxu0 %v4531
        %4737 = vmatpush.bf16.msra.mxu0 %v4527
        %4738 = vmatmul.bf16.gmra.mxu0 %v4256
        %v4739 = vpop.f32.mrf.mxu0
        %v4740 = vadd.f32 %v4327, %v4739
        %v4741 = vpop.f32.mrf.mxu0
        %4742 = vdwg.mxu0
        %4743 = vmatpush.bf16.msra.mxu0 %v4587
        %4744 = vmatpush.bf16.msra.mxu0 %v4583
        %4745 = vmatpush.bf16.msra.mxu0 %v4579
        %4746 = vmatpush.bf16.msra.mxu0 %v4575
        %4747 = vmatpush.bf16.msra.mxu0 %v4571
        %4748 = vmatpush.bf16.msra.mxu0 %v4567
        %4749 = vmatpush.bf16.msra.mxu0 %v4563
        %4750 = vmatpush.bf16.msra.mxu0 %v4559
        %4751 = vmatmul.bf16.gmra.mxu0 %v4257
        %v4752 = vpop.f32.mrf.mxu0
        %v4753 = vadd.f32 %v4740, %v4752
        %v4754 = vpop.f32.mrf.mxu0
        %4755 = vdwg.mxu0
        %v4756 = vmax.f32 %v4675, 0.0
        %v4757 = vmax.f32 %v4701, 0.0
        %v4758 = vmax.f32 %v4727, 0.0
        %v4759 = vmax.f32 %v4753, 0.0
        %v4760 = vpack.c.bf16 %v4756, %v4756
        %v4761 = vpack.c.bf16 %v4757, %v4757
        %v4762 = vpack.c.bf16 %v4758, %v4758
        %v4763 = vpack.c.bf16 %v4759, %v4759
        %v4764 = vld [vmem:[%s10] sm:$0xf]
        %v4765 = vld [vmem:[%s10 + $0x4] sm:$0xf]
        %v4766 = vld [vmem:[%s10 + $0x8] sm:$0xf]
        %v4767 = vld [vmem:[%s10 + $0xc] sm:$0xf]
        %v4768 = vld [vmem:[%s10 + $0x10] sm:$0xf]
        %v4769 = vld [vmem:[%s10 + $0x14] sm:$0xf]
        %v4770 = vld [vmem:[%s10 + $0x18] sm:$0xf]
        %v4771 = vld [vmem:[%s10 + $0x1c] sm:$0xf]
        %v4772 = vld [vmem:[%s10 + $0x20] sm:$0xf]
        %v4773 = vld [vmem:[%s10 + $0x24] sm:$0xf]
        %v4774 = vld [vmem:[%s10 + $0x28] sm:$0xf]
        %v4775 = vld [vmem:[%s10 + $0x2c] sm:$0xf]
        %v4776 = vld [vmem:[%s10 + $0x30] sm:$0xf]
        %v4777 = vld [vmem:[%s10 + $0x34] sm:$0xf]
        %v4778 = vld [vmem:[%s10 + $0x38] sm:$0xf]
        %v4779 = vld [vmem:[%s10 + $0x3c] sm:$0xf]
        %v4780 = vld [vmem:[%s10 + $0x40] sm:$0xf]
        %v4781 = vld [vmem:[%s10 + $0x44] sm:$0xf]
        %v4782 = vld [vmem:[%s10 + $0x48] sm:$0xf]
        %v4783 = vld [vmem:[%s10 + $0x4c] sm:$0xf]
        %v4784 = vld [vmem:[%s10 + $0x50] sm:$0xf]
        %v4785 = vld [vmem:[%s10 + $0x54] sm:$0xf]
        %v4786 = vld [vmem:[%s10 + $0x58] sm:$0xf]
        %v4787 = vld [vmem:[%s10 + $0x5c] sm:$0xf]
        %v4788 = vld [vmem:[%s10 + $0x60] sm:$0xf]
        %v4789 = vld [vmem:[%s10 + $0x64] sm:$0xf]
        %v4790 = vld [vmem:[%s10 + $0x68] sm:$0xf]
        %v4791 = vld [vmem:[%s10 + $0x6c] sm:$0xf]
        %v4792 = vld [vmem:[%s10 + $0x70] sm:$0xf]
        %v4793 = vld [vmem:[%s10 + $0x74] sm:$0xf]
        %v4794 = vld [vmem:[%s10 + $0x78] sm:$0xf]
        %v4795 = vld [vmem:[%s10 + $0x7c] sm:$0xf]
        %v4796 = vld [vmem:[%s10 + $0x80] sm:$0xf]
        %v4797 = vld [vmem:[%s10 + $0x84] sm:$0xf]
        %v4798 = vld [vmem:[%s10 + $0x88] sm:$0xf]
        %v4799 = vld [vmem:[%s10 + $0x8c] sm:$0xf]
        %v4800 = vld [vmem:[%s10 + $0x90] sm:$0xf]
        %v4801 = vld [vmem:[%s10 + $0x94] sm:$0xf]
        %v4802 = vld [vmem:[%s10 + $0x98] sm:$0xf]
        %v4803 = vld [vmem:[%s10 + $0x9c] sm:$0xf]
        %v4804 = vld [vmem:[%s10 + $0xa0] sm:$0xf]
        %v4805 = vld [vmem:[%s10 + $0xa4] sm:$0xf]
        %v4806 = vld [vmem:[%s10 + $0xa8] sm:$0xf]
        %v4807 = vld [vmem:[%s10 + $0xac] sm:$0xf]
        %v4808 = vld [vmem:[%s10 + $0xb0] sm:$0xf]
        %v4809 = vld [vmem:[%s10 + $0xb4] sm:$0xf]
        %v4810 = vld [vmem:[%s10 + $0xb8] sm:$0xf]
        %v4811 = vld [vmem:[%s10 + $0xbc] sm:$0xf]
        %v4812 = vld [vmem:[%s10 + $0xc0] sm:$0xf]
        %v4813 = vld [vmem:[%s10 + $0xc4] sm:$0xf]
        %v4814 = vld [vmem:[%s10 + $0xc8] sm:$0xf]
        %v4815 = vld [vmem:[%s10 + $0xcc] sm:$0xf]
        %v4816 = vld [vmem:[%s10 + $0xd0] sm:$0xf]
        %v4817 = vld [vmem:[%s10 + $0xd4] sm:$0xf]
        %v4818 = vld [vmem:[%s10 + $0xd8] sm:$0xf]
        %v4819 = vld [vmem:[%s10 + $0xdc] sm:$0xf]
        %v4820 = vld [vmem:[%s10 + $0xe0] sm:$0xf]
        %v4821 = vld [vmem:[%s10 + $0xe4] sm:$0xf]
        %v4822 = vld [vmem:[%s10 + $0xe8] sm:$0xf]
        %v4823 = vld [vmem:[%s10 + $0xec] sm:$0xf]
        %v4824 = vld [vmem:[%s10 + $0xf0] sm:$0xf]
        %v4825 = vld [vmem:[%s10 + $0xf4] sm:$0xf]
        %v4826 = vld [vmem:[%s10 + $0xf8] sm:$0xf]
        %v4827 = vld [vmem:[%s10 + $0xfc] sm:$0xf]
        %v4828 = vld [vmem:[%s11] sm:$0x1]
        %v4830 = vperm.slane %v4828, 0
        %v4896 = vunpack.c.l.b16 %v4764
        %v4897 = vunpack.c.l.b16 %v4765
        %v4898 = vunpack.c.l.b16 %v4766
        %v4899 = vunpack.c.l.b16 %v4767
        %v4900 = vunpack.c.l.b16 %v4768
        %v4901 = vunpack.c.l.b16 %v4769
        %v4902 = vunpack.c.l.b16 %v4770
        %v4903 = vunpack.c.l.b16 %v4771
        %v4904 = vunpack.c.l.b16 %v4772
        %v4905 = vunpack.c.l.b16 %v4773
        %v4906 = vunpack.c.l.b16 %v4774
        %v4907 = vunpack.c.l.b16 %v4775
        %v4908 = vunpack.c.l.b16 %v4776
        %v4909 = vunpack.c.l.b16 %v4777
        %v4910 = vunpack.c.l.b16 %v4778
        %v4911 = vunpack.c.l.b16 %v4779
        %v4912 = vunpack.c.l.b16 %v4780
        %v4913 = vunpack.c.l.b16 %v4781
        %v4914 = vunpack.c.l.b16 %v4782
        %v4915 = vunpack.c.l.b16 %v4783
        %v4916 = vunpack.c.l.b16 %v4784
        %v4917 = vunpack.c.l.b16 %v4785
        %v4918 = vunpack.c.l.b16 %v4786
        %v4919 = vunpack.c.l.b16 %v4787
        %v4920 = vunpack.c.l.b16 %v4788
        %v4921 = vunpack.c.l.b16 %v4789
        %v4922 = vunpack.c.l.b16 %v4790
        %v4923 = vunpack.c.l.b16 %v4791
        %v4924 = vunpack.c.l.b16 %v4792
        %v4925 = vunpack.c.l.b16 %v4793
        %v4926 = vunpack.c.l.b16 %v4794
        %v4927 = vunpack.c.l.b16 %v4795
        %v4928 = vunpack.c.l.b16 %v4796
        %v4929 = vunpack.c.l.b16 %v4797
        %v4930 = vunpack.c.l.b16 %v4798
        %v4931 = vunpack.c.l.b16 %v4799
        %v4932 = vunpack.c.l.b16 %v4800
        %v4933 = vunpack.c.l.b16 %v4801
        %v4934 = vunpack.c.l.b16 %v4802
        %v4935 = vunpack.c.l.b16 %v4803
        %v4936 = vunpack.c.l.b16 %v4804
        %v4937 = vunpack.c.l.b16 %v4805
        %v4938 = vunpack.c.l.b16 %v4806
        %v4939 = vunpack.c.l.b16 %v4807
        %v4940 = vunpack.c.l.b16 %v4808
        %v4941 = vunpack.c.l.b16 %v4809
        %v4942 = vunpack.c.l.b16 %v4810
        %v4943 = vunpack.c.l.b16 %v4811
        %v4944 = vunpack.c.l.b16 %v4812
        %v4945 = vunpack.c.l.b16 %v4813
        %v4946 = vunpack.c.l.b16 %v4814
        %v4947 = vunpack.c.l.b16 %v4815
        %v4948 = vunpack.c.l.b16 %v4816
        %v4949 = vunpack.c.l.b16 %v4817
        %v4950 = vunpack.c.l.b16 %v4818
        %v4951 = vunpack.c.l.b16 %v4819
        %v4952 = vunpack.c.l.b16 %v4820
        %v4953 = vunpack.c.l.b16 %v4821
        %v4954 = vunpack.c.l.b16 %v4822
        %v4955 = vunpack.c.l.b16 %v4823
        %v4956 = vunpack.c.l.b16 %v4824
        %v4957 = vunpack.c.l.b16 %v4825
        %v4958 = vunpack.c.l.b16 %v4826
        %v4959 = vunpack.c.l.b16 %v4827
        %v4960 = vpack.c.b16 %v4897, %v4896
        %v4961 = vpack.c.b16 %v4899, %v4898
        %v4962 = vpack.c.b16 %v4901, %v4900
        %v4963 = vpack.c.b16 %v4903, %v4902
        %v4964 = vpack.c.b16 %v4905, %v4904
        %v4965 = vpack.c.b16 %v4907, %v4906
        %v4966 = vpack.c.b16 %v4909, %v4908
        %v4967 = vpack.c.b16 %v4911, %v4910
        %v4968 = vpack.c.b16 %v4913, %v4912
        %v4969 = vpack.c.b16 %v4915, %v4914
        %v4970 = vpack.c.b16 %v4917, %v4916
        %v4971 = vpack.c.b16 %v4919, %v4918
        %v4972 = vpack.c.b16 %v4921, %v4920
        %v4973 = vpack.c.b16 %v4923, %v4922
        %v4974 = vpack.c.b16 %v4925, %v4924
        %v4975 = vpack.c.b16 %v4927, %v4926
        %v4976 = vpack.c.b16 %v4929, %v4928
        %v4977 = vpack.c.b16 %v4931, %v4930
        %v4978 = vpack.c.b16 %v4933, %v4932
        %v4979 = vpack.c.b16 %v4935, %v4934
        %v4980 = vpack.c.b16 %v4937, %v4936
        %v4981 = vpack.c.b16 %v4939, %v4938
        %v4982 = vpack.c.b16 %v4941, %v4940
        %v4983 = vpack.c.b16 %v4943, %v4942
        %v4984 = vpack.c.b16 %v4945, %v4944
        %v4985 = vpack.c.b16 %v4947, %v4946
        %v4986 = vpack.c.b16 %v4949, %v4948
        %v4987 = vpack.c.b16 %v4951, %v4950
        %v4988 = vpack.c.b16 %v4953, %v4952
        %v4989 = vpack.c.b16 %v4955, %v4954
        %v4990 = vpack.c.b16 %v4957, %v4956
        %v4991 = vpack.c.b16 %v4959, %v4958
        %5024 = vmatpush.bf16.msra.mxu0 %v4967
        %5025 = vmatpush.bf16.msra.mxu0 %v4966
        %5026 = vmatpush.bf16.msra.mxu0 %v4965
        %5027 = vmatpush.bf16.msra.mxu0 %v4964
        %5028 = vmatpush.bf16.msra.mxu0 %v4963
        %5029 = vmatpush.bf16.msra.mxu0 %v4962
        %5030 = vmatpush.bf16.msra.mxu0 %v4961
        %5031 = vmatpush.bf16.msra.mxu0 %v4960
        %5032 = vmatmul.bf16.gmra.mxu0 %v4760
        %v5033 = vpop.f32.mrf.mxu0
        %v5034 = vadd.f32 %v4830, %v5033
        %v5035 = vpop.f32.mrf.mxu0
        %5036 = vdwg.mxu0
        %5037 = vmatpush.bf16.msra.mxu0 %v4975
        %5038 = vmatpush.bf16.msra.mxu0 %v4974
        %5039 = vmatpush.bf16.msra.mxu0 %v4973
        %5040 = vmatpush.bf16.msra.mxu0 %v4972
        %5041 = vmatpush.bf16.msra.mxu0 %v4971
        %5042 = vmatpush.bf16.msra.mxu0 %v4970
        %5043 = vmatpush.bf16.msra.mxu0 %v4969
        %5044 = vmatpush.bf16.msra.mxu0 %v4968
        %5045 = vmatmul.bf16.gmra.mxu0 %v4761
        %v5046 = vpop.f32.mrf.mxu0
        %v5047 = vadd.f32 %v5034, %v5046
        %v5048 = vpop.f32.mrf.mxu0
        %5049 = vdwg.mxu0
        %5050 = vmatpush.bf16.msra.mxu0 %v4983
        %5051 = vmatpush.bf16.msra.mxu0 %v4982
        %5052 = vmatpush.bf16.msra.mxu0 %v4981
        %5053 = vmatpush.bf16.msra.mxu0 %v4980
        %5054 = vmatpush.bf16.msra.mxu0 %v4979
        %5055 = vmatpush.bf16.msra.mxu0 %v4978
        %5056 = vmatpush.bf16.msra.mxu0 %v4977
        %5057 = vmatpush.bf16.msra.mxu0 %v4976
        %5058 = vmatmul.bf16.gmra.mxu0 %v4762
        %v5059 = vpop.f32.mrf.mxu0
        %v5060 = vadd.f32 %v5047, %v5059
        %v5061 = vpop.f32.mrf.mxu0
        %5062 = vdwg.mxu0
        %5063 = vmatpush.bf16.msra.mxu0 %v4991
        %5064 = vmatpush.bf16.msra.mxu0 %v4990
        %5065 = vmatpush.bf16.msra.mxu0 %v4989
        %5066 = vmatpush.bf16.msra.mxu0 %v4988
        %5067 = vmatpush.bf16.msra.mxu0 %v4987
        %5068 = vmatpush.bf16.msra.mxu0 %v4986
        %5069 = vmatpush.bf16.msra.mxu0 %v4985
        %5070 = vmatpush.bf16.msra.mxu0 %v4984
        %5071 = vmatmul.bf16.gmra.mxu0 %v4763
        %v5072 = vpop.f32.mrf.mxu0
        %v5073 = vadd.f32 %v5060, %v5072
        %v5074 = vpop.f32.mrf.mxu0
        %5075 = vdwg.mxu0
        %5077 = vset.pattern.permute.xlu0 6
        %5078 = vperm.xlu0 %5077, %v5073
        %v5079 = vpop.permute.xlu0 %5078
        %v5081 = vadd.f32 %v5079, %v5073
        %vm5082 = vcmask 41984
        %v5083 = vsel %vm5082, %v5073, 0.0
        %5084 = vadd.xlane.f32.xlu0 %v5083
        %v5085 = vpop.xlane.xlu0 %5084
        %v5086 = vrcp.pop 6.0
        %v5087 = vmul.f32 6.0, %v5086
        %v5088 = vsub.f32 1.0, %v5087
        %v5089 = vmul.f32 %v5086, %v5088
        %v5090 = vadd.f32 %v5086, %v5089
        %vm5091 = vweird.f32 %v5086
        %v5092 = vsel %vm5091, %v5086, %v5090
        %v5093 = vmul.f32 %v5085, %v5092
        %v5094 = vsub.f32 %v5081, %v5093
        %5095 = vst.msk [vmem:[%s427] sm:$0x3] %vm5082, %v5094
        %s5096 = sand.u32 %s296, 1
        %s5097 = scalar_lea.sflag [#allocation3], %s5096
        %s5098 = sand.u32 %s296, 1
        %s5099 = smul.addr %s5098, 2
        %s5100 = scalar_lea.vmem [#allocation2], %s5099
        // Predicated region
        $region69: #{duel_noisy_dqn_forward.3} parent=67 // pred_check
          %p5101 = pneg %p306
        $region70: #{duel_noisy_dqn_forward.3} parent=67 // pred_check_branch
          %5103 = sbr.rel (%p5101) target = $region72
        $region71: #{duel_noisy_dqn_forward.3} parent=67 // pred_region
          %5105 = vsyncadd %s5097, 0
          %s5106 = smul.addr %s26, 2
          %s5107 = scalar_lea.hbm %s12, %s5106
          %s5109 = sshll.u32 %s5100, 4
          %s5110 = int_to_ptr.vmem [resolvable:$true] %s5109
          %s5111 = sshll.u32 %s5107, 4
          %s5112 = int_to_ptr.hbm [resolvable:$true] %s5111
          %5114 = dma.vmem_to_hbm [thread:$0]  %s5110, 32, %s5112, %s5097
        $region72: #{duel_noisy_dqn_forward.3} parent=67 // pred_fallthru
          _
      $region68: #{duel_noisy_dqn_forward.3} parent=5 // pred_fallthru
        _
      %p5115 = scmp.le.s32.totalorder 2, %s21
      // Predicated region
      $region73: #{duel_noisy_dqn_forward.3} parent=5 // pred_check
        %p5116 = pneg %p5115
      $region74: #{duel_noisy_dqn_forward.3} parent=5 // pred_check_branch
        %5118 = sbr.rel (%p5116) target = $region76
      $region75: #{duel_noisy_dqn_forward.3} parent=5 // pred_region
        %s5119 = ssub.s32 %s21, 2
        // Predicated region
        $region77: #{duel_noisy_dqn_forward.3} parent=75 // pred_check
          %p5120 = pneg %p312
        $region78: #{duel_noisy_dqn_forward.3} parent=75 // pred_check_branch
          %5122 = sbr.rel (%p5120) target = $region80
        $region79: #{duel_noisy_dqn_forward.3} parent=75 // pred_region
          %s5123 = sand.u32 %s297, 1
          %s5124 = scalar_lea.sflag [#allocation3], %s5123
          %s5125 = sand.u32 %s297, 1
          %s5126 = smul.addr %s5125, 2
          %s5127 = scalar_lea.vmem [#allocation2], %s5126
          %5129 = dma.done %s5124, 32
        $region80: #{duel_noisy_dqn_forward.3} parent=75 // pred_fallthru
          _
      $region76: #{duel_noisy_dqn_forward.3} parent=5 // pred_fallthru
        _
    $region6: #{duel_noisy_dqn_forward.3} parent=1 // loop_footer
      %s25 = sadd.s32 1, %s21
    $region7: #{duel_noisy_dqn_forward.3} parent=1 // loop_footer_branch
      %20 = sbr.rel target = $region3
    $region8: #{duel_noisy_dqn_forward.3} parent=1 // loop_exit
      _
    %5130 = vsyncpa [#allocation3], 1
    %s5131 = scalar_lea.sflag [#allocation3], 1
    %5132 = vsyncpa %s5131, 1

</llo_original>
